<compile_context>
chip_gen: v5e
topology: v5e:2x2
jax: 0.10.0
libtpu: 0.0.40
codegen_flags: <defaults>
</compile_context>

<pallas_src>
import math

import jax
import jax.numpy as jnp
from jax.experimental import pallas as pl
from jax.experimental.pallas import tpu as pltpu

HIDDEN = 256                      # CoAttention hidden dim (fixed to 256 in the module)
SCALE = 1.0 / math.sqrt(HIDDEN)


# ----------------------------------------------------------------------------
# In-kernel helpers
# ----------------------------------------------------------------------------
def _attend_mean(q, k, v):
    """mean over query axis of softmax(q k^T / sqrt(H)) @ v.

    q: (B, Sq, H) f32, k/v: (B, Skv, H) f32  ->  (B, H) f32.
    Matmuls run in bf16 on the MXU with f32 accumulation; softmax kept in f32.
    The query-axis mean is linear, so folding it before the PV matmul is exact.
    """
    s = jnp.einsum("bqd,bkd->bqk",
                   q.astype(jnp.bfloat16), k.astype(jnp.bfloat16),
                   preferred_element_type=jnp.float32) * SCALE     # (B, Sq, Skv)
    s = s - jnp.max(s, axis=-1, keepdims=True)
    p = jnp.exp(s)
    p = p * pl.reciprocal(jnp.sum(p, axis=-1, keepdims=True), approx=True)
    p_mean = jnp.mean(p, axis=1, keepdims=True)                    # (B, 1, Skv)
    wv = jnp.einsum("bqk,bkd->bqd",
                    p_mean.astype(jnp.bfloat16), v.astype(jnp.bfloat16),
                    preferred_element_type=jnp.float32)            # (B, 1, H)
    return wv.reshape(wv.shape[0], wv.shape[2])                    # (B, H)


def _fused_kernel(img_ref, txt_ref,
                  w_img_ref, b_img_ref,
                  w_txt_ref, b_txt_ref,
                  wfc_ref, bfc_ref,
                  o_ref):
    b, s_img, _ = img_ref.shape
    _, s_txt, _ = txt_ref.shape

    # Activations arrive already in bf16 (cast in the wrapper).
    img2d = img_ref[...].reshape(b * s_img, -1)                    # (B*Si, 2048)
    txt2d = txt_ref[...].reshape(b * s_txt, -1)                    # (B*St, 768)

    # One merged projection per modality (bf16 x bf16 -> f32 accumulation).
    #   image columns: [0:256]=q1, [256:512]=k2, [512:768]=v2
    #   text  columns: [0:256]=q2, [256:512]=k1, [512:768]=v1
    img_p = (jnp.dot(img2d, w_img_ref[...], preferred_element_type=jnp.float32)
             + b_img_ref[...])                                     # (B*Si, 768)
    txt_p = (jnp.dot(txt2d, w_txt_ref[...], preferred_element_type=jnp.float32)
             + b_txt_ref[...])                                     # (B*St, 768)

    q1 = img_p[:, 0 * HIDDEN:1 * HIDDEN].reshape(b, s_img, HIDDEN)
    k2 = img_p[:, 1 * HIDDEN:2 * HIDDEN].reshape(b, s_img, HIDDEN)
    v2 = img_p[:, 2 * HIDDEN:3 * HIDDEN].reshape(b, s_img, HIDDEN)
    q2 = txt_p[:, 0 * HIDDEN:1 * HIDDEN].reshape(b, s_txt, HIDDEN)
    k1 = txt_p[:, 1 * HIDDEN:2 * HIDDEN].reshape(b, s_txt, HIDDEN)
    v1 = txt_p[:, 2 * HIDDEN:3 * HIDDEN].reshape(b, s_txt, HIDDEN)

    x1 = _attend_mean(q1, k1, v1)        # attn1(image, text), then mean over queries
    x2 = _attend_mean(q2, k2, v2)        # attn2(text, image), then mean over queries

    # fc head: Linear(512 -> 2) on concat([x1, x2])
    z = jnp.concatenate([x1, x2], axis=-1)                         # (B, 512) f32
    o_ref[...] = (jnp.dot(z, wfc_ref[...], preferred_element_type=jnp.float32)
                  + bfc_ref[...])                                  # (B, 2)


# ----------------------------------------------------------------------------
# Wrapper: one gridless pallas_call, every operand single-buffered in VMEM
# ----------------------------------------------------------------------------
def new_classifier_forward(params, image_embedding, text_embedding):
    B = image_embedding.shape[0]

    # bf16 cast on the XLA side: halves activation HBM traffic and removes the
    # in-kernel VPU pack (v5e has no bf16 VPU path).
    img_bf = image_embedding.astype(jnp.bfloat16)
    txt_bf = text_embedding.astype(jnp.bfloat16)

    vmem = pl.BlockSpec(memory_space=pltpu.MemorySpace.VMEM)   # full array, 1 buffer

    return pl.pallas_call(
        _fused_kernel,
        out_shape=jax.ShapeDtypeStruct((B, 2), jnp.float32),
        in_specs=[vmem] * 8,
        out_specs=vmem,
        compiler_params=pltpu.CompilerParams(
            # ~4.3 MiB of bf16 weights + tiny activations; 32 MiB is ample
            # headroom on every generation (v5e/v6e 128 MiB, v7x 64 MiB VMEM).
            vmem_limit_bytes=32 * 1024 * 1024,
        ),
    )(img_bf, txt_bf,
      params["w_img"], params["b_img"],
      params["w_txt"], params["b_txt"],
      params["fc_w"], params["fc_b"])


# ----------------------------------------------------------------------------
# Parameter init (nn.Linear-style), weights pre-transposed to (in, out)
# ----------------------------------------------------------------------------
def _init_linear(key, in_dim, out_dim):
    kw, kb = jax.random.split(key)
    bound = 1.0 / math.sqrt(in_dim)
    w = jax.random.uniform(kw, (in_dim, out_dim), jnp.float32, -bound, bound)
    b = jax.random.uniform(kb, (1, out_dim), jnp.float32, -bound, bound)
    return w, b


def init_params(key):
    ks = jax.random.split(key, 7)
    a1_wq, a1_bq = _init_linear(ks[0], 2048, HIDDEN)    # attn1.Wq
    a1_wk, a1_bk = _init_linear(ks[1], 768, HIDDEN)     # attn1.Wk
    a1_wv, a1_bv = _init_linear(ks[2], 768, HIDDEN)     # attn1.Wv
    a2_wq, a2_bq = _init_linear(ks[3], 768, HIDDEN)     # attn2.Wq
    a2_wk, a2_bk = _init_linear(ks[4], 2048, HIDDEN)    # attn2.Wk
    a2_wv, a2_bv = _init_linear(ks[5], 2048, HIDDEN)    # attn2.Wv
    fc_w, fc_b = _init_linear(ks[6], 2 * HIDDEN, 2)     # fc
    return {
        # everything that consumes the image embedding: q1 | k2 | v2
        "w_img": jnp.concatenate([a1_wq, a2_wk, a2_wv], -1).astype(jnp.bfloat16),
        "b_img": jnp.concatenate([a1_bq, a2_bk, a2_bv], -1),        # (1, 768) f32
        # everything that consumes the text embedding:  q2 | k1 | v1
        "w_txt": jnp.concatenate([a2_wq, a1_wk, a1_wv], -1).astype(jnp.bfloat16),
        "b_txt": jnp.concatenate([a2_bq, a1_bk, a1_bv], -1),        # (1, 768) f32
        "fc_w": fc_w, "fc_b": fc_b,                                 # (512, 2), (1, 2) f32
    }


if __name__ == "__main__":
    key = jax.random.PRNGKey(0)
    k_params, k_img, k_txt = jax.random.split(key, 3)

    B, S_IMG, S_TXT = 2, 8, 8
    image_embedding = jax.random.normal(k_img, (B, S_IMG, 2048), jnp.float32)
    text_embedding = jax.random.normal(k_txt, (B, S_TXT, 768), jnp.float32)

    params = init_params(k_params)
    fwd = jax.jit(new_classifier_forward)
    logits = fwd(params, image_embedding, text_embedding)
    jax.block_until_ready(logits)
    assert logits.shape == (B, 2)
    print("KERNEL_OK")
</pallas_src>

<mosaic_0001>
module attributes {stable_mosaic.version = 11 : i64} {
  func.func @_fused_kernel(%arg0: memref<2x8x2048xbf16, #tpu.memory_space<vmem>>, %arg1: memref<2x8x768xbf16, #tpu.memory_space<vmem>>, %arg2: memref<2048x768xbf16, #tpu.memory_space<vmem>>, %arg3: memref<1x768xf32, #tpu.memory_space<vmem>>, %arg4: memref<768x768xbf16, #tpu.memory_space<vmem>>, %arg5: memref<1x768xf32, #tpu.memory_space<vmem>>, %arg6: memref<512x2xf32, #tpu.memory_space<vmem>>, %arg7: memref<1x2xf32, #tpu.memory_space<vmem>>, %arg8: memref<2x2xf32, #tpu.memory_space<vmem>>) attributes {dimension_semantics = [], scalar_prefetch = 0 : i64, scratch_operands = 0 : i64, tpu.core_type = #tpu.core_type<tc>} {
    %c0 = arith.constant 0 : index
    %c0_0 = arith.constant 0 : index
    %c0_1 = arith.constant 0 : index
    %0 = vector.load %arg0[%c0, %c0_0, %c0_1] : memref<2x8x2048xbf16, #tpu.memory_space<vmem>>, vector<2x8x2048xbf16>
    %1 = vector.shape_cast %0 : vector<2x8x2048xbf16> to vector<16x2048xbf16>
    %c0_2 = arith.constant 0 : index
    %c0_3 = arith.constant 0 : index
    %c0_4 = arith.constant 0 : index
    %2 = vector.load %arg1[%c0_2, %c0_3, %c0_4] : memref<2x8x768xbf16, #tpu.memory_space<vmem>>, vector<2x8x768xbf16>
    %3 = vector.shape_cast %2 : vector<2x8x768xbf16> to vector<16x768xbf16>
    %c0_5 = arith.constant 0 : index
    %c0_6 = arith.constant 0 : index
    %4 = vector.load %arg2[%c0_5, %c0_6] : memref<2048x768xbf16, #tpu.memory_space<vmem>>, vector<2048x768xbf16>
    %cst = arith.constant dense<0.000000e+00> : vector<16x768xf32>
    %5 = tpu.matmul %1, %4, %cst {dimension_numbers = #tpu.dot_dimension_numbers<[1], [0], [0], [1], [0, 0, 1, 1], [], []>} : vector<16x2048xbf16>, vector<2048x768xbf16>, vector<16x768xf32> -> vector<16x768xf32>
    %c0_7 = arith.constant 0 : index
    %c0_8 = arith.constant 0 : index
    %6 = vector.load %arg3[%c0_7, %c0_8] : memref<1x768xf32, #tpu.memory_space<vmem>>, vector<1x768xf32>
    %7 = vector.broadcast %6 : vector<1x768xf32> to vector<16x768xf32>
    %8 = arith.addf %5, %7 : vector<16x768xf32>
    %c0_9 = arith.constant 0 : index
    %c0_10 = arith.constant 0 : index
    %9 = vector.load %arg4[%c0_9, %c0_10] : memref<768x768xbf16, #tpu.memory_space<vmem>>, vector<768x768xbf16>
    %cst_11 = arith.constant dense<0.000000e+00> : vector<16x768xf32>
    %10 = tpu.matmul %3, %9, %cst_11 {dimension_numbers = #tpu.dot_dimension_numbers<[1], [0], [0], [1], [0, 0, 1, 1], [], []>} : vector<16x768xbf16>, vector<768x768xbf16>, vector<16x768xf32> -> vector<16x768xf32>
    %c0_12 = arith.constant 0 : index
    %c0_13 = arith.constant 0 : index
    %11 = vector.load %arg5[%c0_12, %c0_13] : memref<1x768xf32, #tpu.memory_space<vmem>>, vector<1x768xf32>
    %12 = vector.broadcast %11 : vector<1x768xf32> to vector<16x768xf32>
    %13 = arith.addf %10, %12 : vector<16x768xf32>
    %14 = vector.extract_strided_slice %8 {offsets = [0, 0], sizes = [16, 256], strides = [1, 1]} : vector<16x768xf32> to vector<16x256xf32>
    %15 = vector.shape_cast %14 : vector<16x256xf32> to vector<2x8x256xf32>
    %16 = vector.extract_strided_slice %8 {offsets = [0, 256], sizes = [16, 256], strides = [1, 1]} : vector<16x768xf32> to vector<16x256xf32>
    %17 = vector.shape_cast %16 : vector<16x256xf32> to vector<2x8x256xf32>
    %18 = vector.extract_strided_slice %8 {offsets = [0, 512], sizes = [16, 256], strides = [1, 1]} : vector<16x768xf32> to vector<16x256xf32>
    %19 = vector.shape_cast %18 : vector<16x256xf32> to vector<2x8x256xf32>
    %20 = vector.extract_strided_slice %13 {offsets = [0, 0], sizes = [16, 256], strides = [1, 1]} : vector<16x768xf32> to vector<16x256xf32>
    %21 = vector.shape_cast %20 : vector<16x256xf32> to vector<2x8x256xf32>
    %22 = vector.extract_strided_slice %13 {offsets = [0, 256], sizes = [16, 256], strides = [1, 1]} : vector<16x768xf32> to vector<16x256xf32>
    %23 = vector.shape_cast %22 : vector<16x256xf32> to vector<2x8x256xf32>
    %24 = vector.extract_strided_slice %13 {offsets = [0, 512], sizes = [16, 256], strides = [1, 1]} : vector<16x768xf32> to vector<16x256xf32>
    %25 = vector.shape_cast %24 : vector<16x256xf32> to vector<2x8x256xf32>
    %26 = arith.truncf %15 : vector<2x8x256xf32> to vector<2x8x256xbf16>
    %27 = arith.truncf %23 : vector<2x8x256xf32> to vector<2x8x256xbf16>
    "tpu.trace_start"() <{level = 10 : i32, message = "bqd,bkd->bqk"}> : () -> ()
    %cst_14 = arith.constant dense<0.000000e+00> : vector<2x8x8xf32>
    %28 = tpu.matmul %26, %27, %cst_14 {dimension_numbers = #tpu.dot_dimension_numbers<[2], [2], [1], [1], [0, 0, 0, 1, 1, 1], [0], [0]>} : vector<2x8x256xbf16>, vector<2x8x256xbf16>, vector<2x8x8xf32> -> vector<2x8x8xf32>
    "tpu.trace_stop"() : () -> ()
    %cst_15 = arith.constant 6.250000e-02 : f32
    %29 = vector.broadcast %cst_15 : f32 to vector<2x8x8xf32>
    %30 = arith.mulf %28, %29 : vector<2x8x8xf32>
    %cst_16 = arith.constant dense<0xFF800000> : vector<2x8xf32>
    %31 = vector.multi_reduction <maximumf>, %30, %cst_16 [2] : vector<2x8x8xf32> to vector<2x8xf32>
    %32 = vector.shape_cast %31 : vector<2x8xf32> to vector<2x8x1xf32>
    %33 = vector.broadcast %32 : vector<2x8x1xf32> to vector<2x8x8xf32>
    %34 = arith.subf %30, %33 : vector<2x8x8xf32>
    %35 = math.exp %34 : vector<2x8x8xf32>
    %cst_17 = arith.constant dense<0.000000e+00> : vector<2x8xf32>
    %36 = vector.multi_reduction <add>, %35, %cst_17 [2] : vector<2x8x8xf32> to vector<2x8xf32>
    %37 = vector.shape_cast %36 : vector<2x8xf32> to vector<2x8x1xf32>
    %38 = tpu.reciprocal %37 {approx = true} : vector<2x8x1xf32> -> vector<2x8x1xf32>
    %39 = vector.broadcast %38 : vector<2x8x1xf32> to vector<2x8x8xf32>
    %40 = arith.mulf %35, %39 : vector<2x8x8xf32>
    %cst_18 = arith.constant dense<0.000000e+00> : vector<2x8xf32>
    %41 = vector.multi_reduction <add>, %40, %cst_18 [1] : vector<2x8x8xf32> to vector<2x8xf32>
    %42 = vector.shape_cast %41 : vector<2x8xf32> to vector<2x1x8xf32>
    %cst_19 = arith.constant 8.000000e+00 : f32
    %43 = vector.broadcast %cst_19 : f32 to vector<2x1x8xf32>
    %44 = arith.divf %42, %43 : vector<2x1x8xf32>
    %45 = arith.truncf %44 : vector<2x1x8xf32> to vector<2x1x8xbf16>
    %46 = arith.truncf %25 : vector<2x8x256xf32> to vector<2x8x256xbf16>
    "tpu.trace_start"() <{level = 10 : i32, message = "bqk,bkd->bqd"}> : () -> ()
    %cst_20 = arith.constant dense<0.000000e+00> : vector<2x1x256xf32>
    %47 = tpu.matmul %45, %46, %cst_20 {dimension_numbers = #tpu.dot_dimension_numbers<[2], [1], [1], [2], [0, 0, 0, 1, 1, 2], [0], [0]>} : vector<2x1x8xbf16>, vector<2x8x256xbf16>, vector<2x1x256xf32> -> vector<2x1x256xf32>
    "tpu.trace_stop"() : () -> ()
    %48 = vector.shape_cast %47 : vector<2x1x256xf32> to vector<2x256xf32>
    %49 = arith.truncf %21 : vector<2x8x256xf32> to vector<2x8x256xbf16>
    %50 = arith.truncf %17 : vector<2x8x256xf32> to vector<2x8x256xbf16>
    "tpu.trace_start"() <{level = 10 : i32, message = "bqd,bkd->bqk"}> : () -> ()
    %cst_21 = arith.constant dense<0.000000e+00> : vector<2x8x8xf32>
    %51 = tpu.matmul %49, %50, %cst_21 {dimension_numbers = #tpu.dot_dimension_numbers<[2], [2], [1], [1], [0, 0, 0, 1, 1, 1], [0], [0]>} : vector<2x8x256xbf16>, vector<2x8x256xbf16>, vector<2x8x8xf32> -> vector<2x8x8xf32>
    "tpu.trace_stop"() : () -> ()
    %cst_22 = arith.constant 6.250000e-02 : f32
    %52 = vector.broadcast %cst_22 : f32 to vector<2x8x8xf32>
    %53 = arith.mulf %51, %52 : vector<2x8x8xf32>
    %cst_23 = arith.constant dense<0xFF800000> : vector<2x8xf32>
    %54 = vector.multi_reduction <maximumf>, %53, %cst_23 [2] : vector<2x8x8xf32> to vector<2x8xf32>
    %55 = vector.shape_cast %54 : vector<2x8xf32> to vector<2x8x1xf32>
    %56 = vector.broadcast %55 : vector<2x8x1xf32> to vector<2x8x8xf32>
    %57 = arith.subf %53, %56 : vector<2x8x8xf32>
    %58 = math.exp %57 : vector<2x8x8xf32>
    %cst_24 = arith.constant dense<0.000000e+00> : vector<2x8xf32>
    %59 = vector.multi_reduction <add>, %58, %cst_24 [2] : vector<2x8x8xf32> to vector<2x8xf32>
    %60 = vector.shape_cast %59 : vector<2x8xf32> to vector<2x8x1xf32>
    %61 = tpu.reciprocal %60 {approx = true} : vector<2x8x1xf32> -> vector<2x8x1xf32>
    %62 = vector.broadcast %61 : vector<2x8x1xf32> to vector<2x8x8xf32>
    %63 = arith.mulf %58, %62 : vector<2x8x8xf32>
    %cst_25 = arith.constant dense<0.000000e+00> : vector<2x8xf32>
    %64 = vector.multi_reduction <add>, %63, %cst_25 [1] : vector<2x8x8xf32> to vector<2x8xf32>
    %65 = vector.shape_cast %64 : vector<2x8xf32> to vector<2x1x8xf32>
    %cst_26 = arith.constant 8.000000e+00 : f32
    %66 = vector.broadcast %cst_26 : f32 to vector<2x1x8xf32>
    %67 = arith.divf %65, %66 : vector<2x1x8xf32>
    %68 = arith.truncf %67 : vector<2x1x8xf32> to vector<2x1x8xbf16>
    %69 = arith.truncf %19 : vector<2x8x256xf32> to vector<2x8x256xbf16>
    "tpu.trace_start"() <{level = 10 : i32, message = "bqk,bkd->bqd"}> : () -> ()
    %cst_27 = arith.constant dense<0.000000e+00> : vector<2x1x256xf32>
    %70 = tpu.matmul %68, %69, %cst_27 {dimension_numbers = #tpu.dot_dimension_numbers<[2], [1], [1], [2], [0, 0, 0, 1, 1, 2], [0], [0]>} : vector<2x1x8xbf16>, vector<2x8x256xbf16>, vector<2x1x256xf32> -> vector<2x1x256xf32>
    "tpu.trace_stop"() : () -> ()
    %71 = vector.shape_cast %70 : vector<2x1x256xf32> to vector<2x256xf32>
    %72 = tpu.concatenate %48, %71 in 1 : vector<2x256xf32>, vector<2x256xf32> -> vector<2x512xf32>
    %c0_28 = arith.constant 0 : index
    %c0_29 = arith.constant 0 : index
    %73 = vector.load %arg6[%c0_28, %c0_29] : memref<512x2xf32, #tpu.memory_space<vmem>>, vector<512x2xf32>
    %cst_30 = arith.constant dense<0.000000e+00> : vector<2x2xf32>
    %74 = tpu.matmul %72, %73, %cst_30 {dimension_numbers = #tpu.dot_dimension_numbers<[1], [0], [0], [1], [0, 0, 1, 1], [], []>} : vector<2x512xf32>, vector<512x2xf32>, vector<2x2xf32> -> vector<2x2xf32>
    %c0_31 = arith.constant 0 : index
    %c0_32 = arith.constant 0 : index
    %75 = vector.load %arg7[%c0_31, %c0_32] : memref<1x2xf32, #tpu.memory_space<vmem>>, vector<1x2xf32>
    %76 = vector.broadcast %75 : vector<1x2xf32> to vector<2x2xf32>
    %77 = arith.addf %74, %76 : vector<2x2xf32>
    %c0_33 = arith.constant 0 : index
    %c0_34 = arith.constant 0 : index
    %78 = vector.load %arg8[%c0_33, %c0_34] : memref<2x2xf32, #tpu.memory_space<vmem>>, vector<2x2xf32>
    tpu.vector_store %arg8[%c0_33, %c0_34], %77 {strides = array<i32>} : memref<2x2xf32, #tpu.memory_space<vmem>>, vector<2x2xf32>,
    return
  }
}

</mosaic_0001>

<llo_original>
// kernel: new_classifier_forward.1
$region0: #{new_classifier_forward.1}
  #allocation0 [shape = 'u32[]', space=smem, size = 0x4, offset = 0x4, fixed_abs, tag = 'smem constant byte address 0x4 - core index']
  #allocation1 [shape = 'u32[72,128]{1,0:T(1,128)}', space=vmem, size = 0x9000, scoped, tag = 'internal scratch']
  %s0 = inlined_call_operand.vmem [shape: bf16[2,8,2048], index: 0, kind: input, shape index: {}]
  %s1 = inlined_call_operand.vmem [shape: bf16[2,8,768], index: 1, kind: input, shape index: {}]
  %s2 = inlined_call_operand.hbm [shape: bf16[2048,768], index: 2, kind: input, shape index: {}]
  %s3 = inlined_call_operand.hbm [shape: f32[1,768], index: 3, kind: input, shape index: {}]
  %s4 = inlined_call_operand.hbm [shape: bf16[768,768], index: 4, kind: input, shape index: {}]
  %s5 = inlined_call_operand.hbm [shape: f32[1,768], index: 5, kind: input, shape index: {}]
  %s6 = inlined_call_operand.vmem [shape: f32[512,2], index: 6, kind: input, shape index: {}]
  %s7 = inlined_call_operand.hbm [shape: f32[1,2], index: 7, kind: input, shape index: {}]
  %s8 = inlined_call_operand.hbm [shape: f32[2,2], index: 8, kind: output, shape index: {}]
  %s9 = sld [smem:[#allocation0]]
  $region62: #{new_classifier_forward.1} parent=0
    _
  %s11 = ssub.s32 1, %s9
  %s12 = scalar_select 0, %s11, %s9
  $region1: #{new_classifier_forward.1} parent=0
    #allocation2 [shape = 'u8[3145728]{0}', space=vmem, size = 0x300000, scoped, tag = 'input window, operand 2, single buffered']
    #allocation3 [shape = 's32[1]{0}', space=sflag, size = 0x4, scoped, tag = 'scoped memory for new_classifier_forward.1']
    #allocation4 [shape = 's32[1]{0}', space=sflag, size = 0x4, scoped, tag = 'scoped memory for new_classifier_forward.1']
    #allocation5 [shape = 'u8[3072]{0}', space=vmem, size = 0xc00, scoped, tag = 'input window, operand 3, single buffered']
    #allocation6 [shape = 's32[1]{0}', space=sflag, size = 0x4, scoped, tag = 'scoped memory for new_classifier_forward.1']
    #allocation7 [shape = 'u8[1179648]{0}', space=vmem, size = 0x120000, scoped, tag = 'input window, operand 4, single buffered']
    #allocation8 [shape = 'u8[3072]{0}', space=vmem, size = 0xc00, scoped, tag = 'input window, operand 5, single buffered']
    #allocation9 [shape = 's32[1]{0}', space=sflag, size = 0x4, scoped, tag = 'scoped memory for new_classifier_forward.1']
    #allocation10 [shape = 'u8[512]{0}', space=vmem, size = 0x400, scoped, tag = 'input window, operand 7, single buffered']
    #allocation11 [shape = 'u8[1024]{0}', space=vmem, size = 0x400, scoped, tag = 'output window, operand 0, single buffered']
    %13 = vsyncpa [#allocation3], 0
    %14 = vsyncpa [#allocation6], 0
    %15 = vsyncpa [#allocation9], 0
    %16 = vsyncpa [#allocation4], 0
    // Predicated region
    $region2: #{new_classifier_forward.1} parent=1 // pred_check
      _
    $region3: #{new_classifier_forward.1} parent=1 // pred_check_branch
      %18 = sbr.rel (0) target = $region5
    $region4: #{new_classifier_forward.1} parent=1 // pred_region
      _
    $region5: #{new_classifier_forward.1} parent=1 // pred_fallthru
      _
    // Predicated region
    $region6: #{new_classifier_forward.1} parent=1 // pred_check
      _
    $region7: #{new_classifier_forward.1} parent=1 // pred_check_branch
      %20 = sbr.rel (0) target = $region9
    $region8: #{new_classifier_forward.1} parent=1 // pred_region
      _
    $region9: #{new_classifier_forward.1} parent=1 // pred_fallthru
      _
    // Predicated region
    $region10: #{new_classifier_forward.1} parent=1 // pred_check
      _
    $region11: #{new_classifier_forward.1} parent=1 // pred_check_branch
      %22 = sbr.rel (0) target = $region13
    $region12: #{new_classifier_forward.1} parent=1 // pred_region
      %24 = vsyncadd [#allocation3], 0
      %s25 = sshll.u32 %s2, 4
      %s26 = int_to_ptr.hbm [resolvable:$true] %s25
      %s27 = sshll.u32 [#allocation2], 4
      %s28 = int_to_ptr.vmem [resolvable:$true] %s27
      %33 = dma.hbm_to_vmem [thread:$0]  %s26, 98304, %s28, [#allocation3], 384, 384, 24
    $region13: #{new_classifier_forward.1} parent=1 // pred_fallthru
      _
    // Predicated region
    $region14: #{new_classifier_forward.1} parent=1 // pred_check
      _
    $region15: #{new_classifier_forward.1} parent=1 // pred_check_branch
      %35 = sbr.rel (0) target = $region17
    $region16: #{new_classifier_forward.1} parent=1 // pred_region
      %37 = vsyncadd [#allocation6], 0
      %s39 = sshll.u32 %s3, 4
      %s40 = int_to_ptr.hbm [resolvable:$true] %s39
      %s41 = sshll.u32 [#allocation5], 4
      %s42 = int_to_ptr.vmem [resolvable:$true] %s41
      %44 = dma.hbm_to_vmem [thread:$0]  %s40, 96, %s42, [#allocation6]
    $region17: #{new_classifier_forward.1} parent=1 // pred_fallthru
      _
    // Predicated region
    $region18: #{new_classifier_forward.1} parent=1 // pred_check
      _
    $region19: #{new_classifier_forward.1} parent=1 // pred_check_branch
      %46 = sbr.rel (0) target = $region21
    $region20: #{new_classifier_forward.1} parent=1 // pred_region
      %48 = vsyncadd [#allocation6], 0
      %s49 = sshll.u32 %s4, 4
      %s50 = int_to_ptr.hbm [resolvable:$true] %s49
      %s51 = sshll.u32 [#allocation7], 4
      %s52 = int_to_ptr.vmem [resolvable:$true] %s51
      %57 = dma.hbm_to_vmem [thread:$0]  %s50, 36864, %s52, [#allocation6], 384, 384, 24
    $region21: #{new_classifier_forward.1} parent=1 // pred_fallthru
      _
    // Predicated region
    $region22: #{new_classifier_forward.1} parent=1 // pred_check
      _
    $region23: #{new_classifier_forward.1} parent=1 // pred_check_branch
      %59 = sbr.rel (0) target = $region25
    $region24: #{new_classifier_forward.1} parent=1 // pred_region
      %61 = vsyncadd [#allocation9], 0
      %s63 = sshll.u32 %s5, 4
      %s64 = int_to_ptr.hbm [resolvable:$true] %s63
      %s65 = sshll.u32 [#allocation8], 4
      %s66 = int_to_ptr.vmem [resolvable:$true] %s65
      %68 = dma.hbm_to_vmem [thread:$0]  %s64, 96, %s66, [#allocation9]
    $region25: #{new_classifier_forward.1} parent=1 // pred_fallthru
      _
    // Predicated region
    $region26: #{new_classifier_forward.1} parent=1 // pred_check
      _
    $region27: #{new_classifier_forward.1} parent=1 // pred_check_branch
      %70 = sbr.rel (0) target = $region29
    $region28: #{new_classifier_forward.1} parent=1 // pred_region
      _
    $region29: #{new_classifier_forward.1} parent=1 // pred_fallthru
      _
    // Predicated region
    $region30: #{new_classifier_forward.1} parent=1 // pred_check
      _
    $region31: #{new_classifier_forward.1} parent=1 // pred_check_branch
      %72 = sbr.rel (0) target = $region33
    $region32: #{new_classifier_forward.1} parent=1 // pred_region
      %74 = vsyncadd [#allocation9], 0
      %s76 = sshll.u32 %s7, 4
      %s77 = int_to_ptr.hbm [resolvable:$true] %s76
      %s78 = sshll.u32 [#allocation10], 4
      %s79 = int_to_ptr.vmem [resolvable:$true] %s78
      %81 = dma.hbm_to_vmem [thread:$0]  %s77, 16, %s79, [#allocation9]
    $region33: #{new_classifier_forward.1} parent=1 // pred_fallthru
      _
    // Predicated region
    $region34: #{new_classifier_forward.1} parent=1 // pred_check
      _
    $region35: #{new_classifier_forward.1} parent=1 // pred_check_branch
      %83 = sbr.rel (0) target = $region37
    $region36: #{new_classifier_forward.1} parent=1 // pred_region
      %85 = dma.done [#allocation3], 98304
    $region37: #{new_classifier_forward.1} parent=1 // pred_fallthru
      _
    // Predicated region
    $region38: #{new_classifier_forward.1} parent=1 // pred_check
      _
    $region39: #{new_classifier_forward.1} parent=1 // pred_check_branch
      %87 = sbr.rel (0) target = $region41
    $region40: #{new_classifier_forward.1} parent=1 // pred_region
      %89 = dma.done [#allocation6], 96
    $region41: #{new_classifier_forward.1} parent=1 // pred_fallthru
      _
    // Predicated region
    $region42: #{new_classifier_forward.1} parent=1 // pred_check
      _
    $region43: #{new_classifier_forward.1} parent=1 // pred_check_branch
      %91 = sbr.rel (0) target = $region45
    $region44: #{new_classifier_forward.1} parent=1 // pred_region
      %93 = dma.done [#allocation6], 36864
    $region45: #{new_classifier_forward.1} parent=1 // pred_fallthru
      _
    // Predicated region
    $region46: #{new_classifier_forward.1} parent=1 // pred_check
      _
    $region47: #{new_classifier_forward.1} parent=1 // pred_check_branch
      %95 = sbr.rel (0) target = $region49
    $region48: #{new_classifier_forward.1} parent=1 // pred_region
      %97 = dma.done [#allocation9], 96
    $region49: #{new_classifier_forward.1} parent=1 // pred_fallthru
      _
    // Predicated region
    $region50: #{new_classifier_forward.1} parent=1 // pred_check
      _
    $region51: #{new_classifier_forward.1} parent=1 // pred_check_branch
      %99 = sbr.rel (0) target = $region53
    $region52: #{new_classifier_forward.1} parent=1 // pred_region
      %101 = dma.done [#allocation9], 16
    $region53: #{new_classifier_forward.1} parent=1 // pred_fallthru
      _
    %v103 = vld [vmem:[%s0] sm:$0xff]
    %v104 = vld [vmem:[%s0 + $0x8] sm:$0xff]
    %v105 = vld [vmem:[%s0 + $0x10] sm:$0xff]
    %v106 = vld [vmem:[%s0 + $0x18] sm:$0xff]
    %v107 = vld [vmem:[%s0 + $0x20] sm:$0xff]
    %v108 = vld [vmem:[%s0 + $0x28] sm:$0xff]
    %v109 = vld [vmem:[%s0 + $0x30] sm:$0xff]
    %v110 = vld [vmem:[%s0 + $0x38] sm:$0xff]
    %v111 = vld [vmem:[%s0 + $0x40] sm:$0xff]
    %v112 = vld [vmem:[%s0 + $0x48] sm:$0xff]
    %v113 = vld [vmem:[%s0 + $0x50] sm:$0xff]
    %v114 = vld [vmem:[%s0 + $0x58] sm:$0xff]
    %v115 = vld [vmem:[%s0 + $0x60] sm:$0xff]
    %v116 = vld [vmem:[%s0 + $0x68] sm:$0xff]
    %v117 = vld [vmem:[%s0 + $0x70] sm:$0xff]
    %v118 = vld [vmem:[%s0 + $0x78] sm:$0xff]
    %v119 = vld [vmem:[%s1] sm:$0xff]
    %v120 = vld [vmem:[%s1 + $0x8] sm:$0xff]
    %v121 = vld [vmem:[%s1 + $0x10] sm:$0xff]
    %v122 = vld [vmem:[%s1 + $0x18] sm:$0xff]
    %v123 = vld [vmem:[%s1 + $0x20] sm:$0xff]
    %v124 = vld [vmem:[%s1 + $0x28] sm:$0xff]
    %v125 = vld [vmem:[#allocation2] sm:$0xff]
    %v126 = vld [vmem:[#allocation2 + $0x8] sm:$0xff]
    %v127 = vld [vmem:[#allocation2 + $0x10] sm:$0xff]
    %v128 = vld [vmem:[#allocation2 + $0x18] sm:$0xff]
    %v129 = vld [vmem:[#allocation2 + $0x20] sm:$0xff]
    %v130 = vld [vmem:[#allocation2 + $0x28] sm:$0xff]
    %v131 = vld [vmem:[#allocation2 + $0x30] sm:$0xff]
    %v132 = vld [vmem:[#allocation2 + $0x38] sm:$0xff]
    %v133 = vld [vmem:[#allocation2 + $0x40] sm:$0xff]
    %v134 = vld [vmem:[#allocation2 + $0x48] sm:$0xff]
    %v135 = vld [vmem:[#allocation2 + $0x50] sm:$0xff]
    %v136 = vld [vmem:[#allocation2 + $0x58] sm:$0xff]
    %v137 = vld [vmem:[#allocation2 + $0x60] sm:$0xff]
    %v138 = vld [vmem:[#allocation2 + $0x68] sm:$0xff]
    %v139 = vld [vmem:[#allocation2 + $0x70] sm:$0xff]
    %v140 = vld [vmem:[#allocation2 + $0x78] sm:$0xff]
    %v141 = vld [vmem:[#allocation2 + $0x80] sm:$0xff]
    %v142 = vld [vmem:[#allocation2 + $0x88] sm:$0xff]
    %v143 = vld [vmem:[#allocation2 + $0x90] sm:$0xff]
    %v144 = vld [vmem:[#allocation2 + $0x98] sm:$0xff]
    %v145 = vld [vmem:[#allocation2 + $0xa0] sm:$0xff]
    %v146 = vld [vmem:[#allocation2 + $0xa8] sm:$0xff]
    %v147 = vld [vmem:[#allocation2 + $0xb0] sm:$0xff]
    %v148 = vld [vmem:[#allocation2 + $0xb8] sm:$0xff]
    %v149 = vld [vmem:[#allocation2 + $0xc0] sm:$0xff]
    %v150 = vld [vmem:[#allocation2 + $0xc8] sm:$0xff]
    %v151 = vld [vmem:[#allocation2 + $0xd0] sm:$0xff]
    %v152 = vld [vmem:[#allocation2 + $0xd8] sm:$0xff]
    %v153 = vld [vmem:[#allocation2 + $0xe0] sm:$0xff]
    %v154 = vld [vmem:[#allocation2 + $0xe8] sm:$0xff]
    %v155 = vld [vmem:[#allocation2 + $0xf0] sm:$0xff]
    %v156 = vld [vmem:[#allocation2 + $0xf8] sm:$0xff]
    %v157 = vld [vmem:[#allocation2 + $0x100] sm:$0xff]
    %v158 = vld [vmem:[#allocation2 + $0x108] sm:$0xff]
    %v159 = vld [vmem:[#allocation2 + $0x110] sm:$0xff]
    %v160 = vld [vmem:[#allocation2 + $0x118] sm:$0xff]
    %v161 = vld [vmem:[#allocation2 + $0x120] sm:$0xff]
    %v162 = vld [vmem:[#allocation2 + $0x128] sm:$0xff]
    %v163 = vld [vmem:[#allocation2 + $0x130] sm:$0xff]
    %v164 = vld [vmem:[#allocation2 + $0x138] sm:$0xff]
    %v165 = vld [vmem:[#allocation2 + $0x140] sm:$0xff]
    %v166 = vld [vmem:[#allocation2 + $0x148] sm:$0xff]
    %v167 = vld [vmem:[#allocation2 + $0x150] sm:$0xff]
    %v168 = vld [vmem:[#allocation2 + $0x158] sm:$0xff]
    %v169 = vld [vmem:[#allocation2 + $0x160] sm:$0xff]
    %v170 = vld [vmem:[#allocation2 + $0x168] sm:$0xff]
    %v171 = vld [vmem:[#allocation2 + $0x170] sm:$0xff]
    %v172 = vld [vmem:[#allocation2 + $0x178] sm:$0xff]
    %v173 = vld [vmem:[#allocation2 + $0x180] sm:$0xff]
    %v174 = vld [vmem:[#allocation2 + $0x188] sm:$0xff]
    %v175 = vld [vmem:[#allocation2 + $0x190] sm:$0xff]
    %v176 = vld [vmem:[#allocation2 + $0x198] sm:$0xff]
    %v177 = vld [vmem:[#allocation2 + $0x1a0] sm:$0xff]
    %v178 = vld [vmem:[#allocation2 + $0x1a8] sm:$0xff]
    %v179 = vld [vmem:[#allocation2 + $0x1b0] sm:$0xff]
    %v180 = vld [vmem:[#allocation2 + $0x1b8] sm:$0xff]
    %v181 = vld [vmem:[#allocation2 + $0x1c0] sm:$0xff]
    %v182 = vld [vmem:[#allocation2 + $0x1c8] sm:$0xff]
    %v183 = vld [vmem:[#allocation2 + $0x1d0] sm:$0xff]
    %v184 = vld [vmem:[#allocation2 + $0x1d8] sm:$0xff]
    %v185 = vld [vmem:[#allocation2 + $0x1e0] sm:$0xff]
    %v186 = vld [vmem:[#allocation2 + $0x1e8] sm:$0xff]
    %v187 = vld [vmem:[#allocation2 + $0x1f0] sm:$0xff]
    %v188 = vld [vmem:[#allocation2 + $0x1f8] sm:$0xff]
    %v189 = vld [vmem:[#allocation2 + $0x200] sm:$0xff]
    %v190 = vld [vmem:[#allocation2 + $0x208] sm:$0xff]
    %v191 = vld [vmem:[#allocation2 + $0x210] sm:$0xff]
    %v192 = vld [vmem:[#allocation2 + $0x218] sm:$0xff]
    %v193 = vld [vmem:[#allocation2 + $0x220] sm:$0xff]
    %v194 = vld [vmem:[#allocation2 + $0x228] sm:$0xff]
    %v195 = vld [vmem:[#allocation2 + $0x230] sm:$0xff]
    %v196 = vld [vmem:[#allocation2 + $0x238] sm:$0xff]
    %v197 = vld [vmem:[#allocation2 + $0x240] sm:$0xff]
    %v198 = vld [vmem:[#allocation2 + $0x248] sm:$0xff]
    %v199 = vld [vmem:[#allocation2 + $0x250] sm:$0xff]
    %v200 = vld [vmem:[#allocation2 + $0x258] sm:$0xff]
    %v201 = vld [vmem:[#allocation2 + $0x260] sm:$0xff]
    %v202 = vld [vmem:[#allocation2 + $0x268] sm:$0xff]
    %v203 = vld [vmem:[#allocation2 + $0x270] sm:$0xff]
    %v204 = vld [vmem:[#allocation2 + $0x278] sm:$0xff]
    %v205 = vld [vmem:[#allocation2 + $0x280] sm:$0xff]
    %v206 = vld [vmem:[#allocation2 + $0x288] sm:$0xff]
    %v207 = vld [vmem:[#allocation2 + $0x290] sm:$0xff]
    %v208 = vld [vmem:[#allocation2 + $0x298] sm:$0xff]
    %v209 = vld [vmem:[#allocation2 + $0x2a0] sm:$0xff]
    %v210 = vld [vmem:[#allocation2 + $0x2a8] sm:$0xff]
    %v211 = vld [vmem:[#allocation2 + $0x2b0] sm:$0xff]
    %v212 = vld [vmem:[#allocation2 + $0x2b8] sm:$0xff]
    %v213 = vld [vmem:[#allocation2 + $0x2c0] sm:$0xff]
    %v214 = vld [vmem:[#allocation2 + $0x2c8] sm:$0xff]
    %v215 = vld [vmem:[#allocation2 + $0x2d0] sm:$0xff]
    %v216 = vld [vmem:[#allocation2 + $0x2d8] sm:$0xff]
    %v217 = vld [vmem:[#allocation2 + $0x2e0] sm:$0xff]
    %v218 = vld [vmem:[#allocation2 + $0x2e8] sm:$0xff]
    %v219 = vld [vmem:[#allocation2 + $0x2f0] sm:$0xff]
    %v220 = vld [vmem:[#allocation2 + $0x2f8] sm:$0xff]
    %v221 = vld [vmem:[#allocation2 + $0x300] sm:$0xff]
    %v222 = vld [vmem:[#allocation2 + $0x308] sm:$0xff]
    %v223 = vld [vmem:[#allocation2 + $0x310] sm:$0xff]
    %v224 = vld [vmem:[#allocation2 + $0x318] sm:$0xff]
    %v225 = vld [vmem:[#allocation2 + $0x320] sm:$0xff]
    %v226 = vld [vmem:[#allocation2 + $0x328] sm:$0xff]
    %v227 = vld [vmem:[#allocation2 + $0x330] sm:$0xff]
    %v228 = vld [vmem:[#allocation2 + $0x338] sm:$0xff]
    %v229 = vld [vmem:[#allocation2 + $0x340] sm:$0xff]
    %v230 = vld [vmem:[#allocation2 + $0x348] sm:$0xff]
    %v231 = vld [vmem:[#allocation2 + $0x350] sm:$0xff]
    %v232 = vld [vmem:[#allocation2 + $0x358] sm:$0xff]
    %v233 = vld [vmem:[#allocation2 + $0x360] sm:$0xff]
    %v234 = vld [vmem:[#allocation2 + $0x368] sm:$0xff]
    %v235 = vld [vmem:[#allocation2 + $0x370] sm:$0xff]
    %v236 = vld [vmem:[#allocation2 + $0x378] sm:$0xff]
    %v237 = vld [vmem:[#allocation2 + $0x380] sm:$0xff]
    %v238 = vld [vmem:[#allocation2 + $0x388] sm:$0xff]
    %v239 = vld [vmem:[#allocation2 + $0x390] sm:$0xff]
    %v240 = vld [vmem:[#allocation2 + $0x398] sm:$0xff]
    %v241 = vld [vmem:[#allocation2 + $0x3a0] sm:$0xff]
    %v242 = vld [vmem:[#allocation2 + $0x3a8] sm:$0xff]
    %v243 = vld [vmem:[#allocation2 + $0x3b0] sm:$0xff]
    %v244 = vld [vmem:[#allocation2 + $0x3b8] sm:$0xff]
    %v245 = vld [vmem:[#allocation2 + $0x3c0] sm:$0xff]
    %v246 = vld [vmem:[#allocation2 + $0x3c8] sm:$0xff]
    %v247 = vld [vmem:[#allocation2 + $0x3d0] sm:$0xff]
    %v248 = vld [vmem:[#allocation2 + $0x3d8] sm:$0xff]
    %v249 = vld [vmem:[#allocation2 + $0x3e0] sm:$0xff]
    %v250 = vld [vmem:[#allocation2 + $0x3e8] sm:$0xff]
    %v251 = vld [vmem:[#allocation2 + $0x3f0] sm:$0xff]
    %v252 = vld [vmem:[#allocation2 + $0x3f8] sm:$0xff]
    %v253 = vld [vmem:[#allocation2 + $0x400] sm:$0xff]
    %v254 = vld [vmem:[#allocation2 + $0x408] sm:$0xff]
    %v255 = vld [vmem:[#allocation2 + $0x410] sm:$0xff]
    %v256 = vld [vmem:[#allocation2 + $0x418] sm:$0xff]
    %v257 = vld [vmem:[#allocation2 + $0x420] sm:$0xff]
    %v258 = vld [vmem:[#allocation2 + $0x428] sm:$0xff]
    %v259 = vld [vmem:[#allocation2 + $0x430] sm:$0xff]
    %v260 = vld [vmem:[#allocation2 + $0x438] sm:$0xff]
    %v261 = vld [vmem:[#allocation2 + $0x440] sm:$0xff]
    %v262 = vld [vmem:[#allocation2 + $0x448] sm:$0xff]
    %v263 = vld [vmem:[#allocation2 + $0x450] sm:$0xff]
    %v264 = vld [vmem:[#allocation2 + $0x458] sm:$0xff]
    %v265 = vld [vmem:[#allocation2 + $0x460] sm:$0xff]
    %v266 = vld [vmem:[#allocation2 + $0x468] sm:$0xff]
    %v267 = vld [vmem:[#allocation2 + $0x470] sm:$0xff]
    %v268 = vld [vmem:[#allocation2 + $0x478] sm:$0xff]
    %v269 = vld [vmem:[#allocation2 + $0x480] sm:$0xff]
    %v270 = vld [vmem:[#allocation2 + $0x488] sm:$0xff]
    %v271 = vld [vmem:[#allocation2 + $0x490] sm:$0xff]
    %v272 = vld [vmem:[#allocation2 + $0x498] sm:$0xff]
    %v273 = vld [vmem:[#allocation2 + $0x4a0] sm:$0xff]
    %v274 = vld [vmem:[#allocation2 + $0x4a8] sm:$0xff]
    %v275 = vld [vmem:[#allocation2 + $0x4b0] sm:$0xff]
    %v276 = vld [vmem:[#allocation2 + $0x4b8] sm:$0xff]
    %v277 = vld [vmem:[#allocation2 + $0x4c0] sm:$0xff]
    %v278 = vld [vmem:[#allocation2 + $0x4c8] sm:$0xff]
    %v279 = vld [vmem:[#allocation2 + $0x4d0] sm:$0xff]
    %v280 = vld [vmem:[#allocation2 + $0x4d8] sm:$0xff]
    %v281 = vld [vmem:[#allocation2 + $0x4e0] sm:$0xff]
    %v282 = vld [vmem:[#allocation2 + $0x4e8] sm:$0xff]
    %v283 = vld [vmem:[#allocation2 + $0x4f0] sm:$0xff]
    %v284 = vld [vmem:[#allocation2 + $0x4f8] sm:$0xff]
    %v285 = vld [vmem:[#allocation2 + $0x500] sm:$0xff]
    %v286 = vld [vmem:[#allocation2 + $0x508] sm:$0xff]
    %v287 = vld [vmem:[#allocation2 + $0x510] sm:$0xff]
    %v288 = vld [vmem:[#allocation2 + $0x518] sm:$0xff]
    %v289 = vld [vmem:[#allocation2 + $0x520] sm:$0xff]
    %v290 = vld [vmem:[#allocation2 + $0x528] sm:$0xff]
    %v291 = vld [vmem:[#allocation2 + $0x530] sm:$0xff]
    %v292 = vld [vmem:[#allocation2 + $0x538] sm:$0xff]
    %v293 = vld [vmem:[#allocation2 + $0x540] sm:$0xff]
    %v294 = vld [vmem:[#allocation2 + $0x548] sm:$0xff]
    %v295 = vld [vmem:[#allocation2 + $0x550] sm:$0xff]
    %v296 = vld [vmem:[#allocation2 + $0x558] sm:$0xff]
    %v297 = vld [vmem:[#allocation2 + $0x560] sm:$0xff]
    %v298 = vld [vmem:[#allocation2 + $0x568] sm:$0xff]
    %v299 = vld [vmem:[#allocation2 + $0x570] sm:$0xff]
    %v300 = vld [vmem:[#allocation2 + $0x578] sm:$0xff]
    %v301 = vld [vmem:[#allocation2 + $0x580] sm:$0xff]
    %v302 = vld [vmem:[#allocation2 + $0x588] sm:$0xff]
    %v303 = vld [vmem:[#allocation2 + $0x590] sm:$0xff]
    %v304 = vld [vmem:[#allocation2 + $0x598] sm:$0xff]
    %v305 = vld [vmem:[#allocation2 + $0x5a0] sm:$0xff]
    %v306 = vld [vmem:[#allocation2 + $0x5a8] sm:$0xff]
    %v307 = vld [vmem:[#allocation2 + $0x5b0] sm:$0xff]
    %v308 = vld [vmem:[#allocation2 + $0x5b8] sm:$0xff]
    %v309 = vld [vmem:[#allocation2 + $0x5c0] sm:$0xff]
    %v310 = vld [vmem:[#allocation2 + $0x5c8] sm:$0xff]
    %v311 = vld [vmem:[#allocation2 + $0x5d0] sm:$0xff]
    %v312 = vld [vmem:[#allocation2 + $0x5d8] sm:$0xff]
    %v313 = vld [vmem:[#allocation2 + $0x5e0] sm:$0xff]
    %v314 = vld [vmem:[#allocation2 + $0x5e8] sm:$0xff]
    %v315 = vld [vmem:[#allocation2 + $0x5f0] sm:$0xff]
    %v316 = vld [vmem:[#allocation2 + $0x5f8] sm:$0xff]
    %v317 = vld [vmem:[#allocation2 + $0x600] sm:$0xff]
    %v318 = vld [vmem:[#allocation2 + $0x608] sm:$0xff]
    %v319 = vld [vmem:[#allocation2 + $0x610] sm:$0xff]
    %v320 = vld [vmem:[#allocation2 + $0x618] sm:$0xff]
    %v321 = vld [vmem:[#allocation2 + $0x620] sm:$0xff]
    %v322 = vld [vmem:[#allocation2 + $0x628] sm:$0xff]
    %v323 = vld [vmem:[#allocation2 + $0x630] sm:$0xff]
    %v324 = vld [vmem:[#allocation2 + $0x638] sm:$0xff]
    %v325 = vld [vmem:[#allocation2 + $0x640] sm:$0xff]
    %v326 = vld [vmem:[#allocation2 + $0x648] sm:$0xff]
    %v327 = vld [vmem:[#allocation2 + $0x650] sm:$0xff]
    %v328 = vld [vmem:[#allocation2 + $0x658] sm:$0xff]
    %v329 = vld [vmem:[#allocation2 + $0x660] sm:$0xff]
    %v330 = vld [vmem:[#allocation2 + $0x668] sm:$0xff]
    %v331 = vld [vmem:[#allocation2 + $0x670] sm:$0xff]
    %v332 = vld [vmem:[#allocation2 + $0x678] sm:$0xff]
    %v333 = vld [vmem:[#allocation2 + $0x680] sm:$0xff]
    %v334 = vld [vmem:[#allocation2 + $0x688] sm:$0xff]
    %v335 = vld [vmem:[#allocation2 + $0x690] sm:$0xff]
    %v336 = vld [vmem:[#allocation2 + $0x698] sm:$0xff]
    %v337 = vld [vmem:[#allocation2 + $0x6a0] sm:$0xff]
    %v338 = vld [vmem:[#allocation2 + $0x6a8] sm:$0xff]
    %v339 = vld [vmem:[#allocation2 + $0x6b0] sm:$0xff]
    %v340 = vld [vmem:[#allocation2 + $0x6b8] sm:$0xff]
    %v341 = vld [vmem:[#allocation2 + $0x6c0] sm:$0xff]
    %v342 = vld [vmem:[#allocation2 + $0x6c8] sm:$0xff]
    %v343 = vld [vmem:[#allocation2 + $0x6d0] sm:$0xff]
    %v344 = vld [vmem:[#allocation2 + $0x6d8] sm:$0xff]
    %v345 = vld [vmem:[#allocation2 + $0x6e0] sm:$0xff]
    %v346 = vld [vmem:[#allocation2 + $0x6e8] sm:$0xff]
    %v347 = vld [vmem:[#allocation2 + $0x6f0] sm:$0xff]
    %v348 = vld [vmem:[#allocation2 + $0x6f8] sm:$0xff]
    %v349 = vld [vmem:[#allocation2 + $0x700] sm:$0xff]
    %v350 = vld [vmem:[#allocation2 + $0x708] sm:$0xff]
    %v351 = vld [vmem:[#allocation2 + $0x710] sm:$0xff]
    %v352 = vld [vmem:[#allocation2 + $0x718] sm:$0xff]
    %v353 = vld [vmem:[#allocation2 + $0x720] sm:$0xff]
    %v354 = vld [vmem:[#allocation2 + $0x728] sm:$0xff]
    %v355 = vld [vmem:[#allocation2 + $0x730] sm:$0xff]
    %v356 = vld [vmem:[#allocation2 + $0x738] sm:$0xff]
    %v357 = vld [vmem:[#allocation2 + $0x740] sm:$0xff]
    %v358 = vld [vmem:[#allocation2 + $0x748] sm:$0xff]
    %v359 = vld [vmem:[#allocation2 + $0x750] sm:$0xff]
    %v360 = vld [vmem:[#allocation2 + $0x758] sm:$0xff]
    %v361 = vld [vmem:[#allocation2 + $0x760] sm:$0xff]
    %v362 = vld [vmem:[#allocation2 + $0x768] sm:$0xff]
    %v363 = vld [vmem:[#allocation2 + $0x770] sm:$0xff]
    %v364 = vld [vmem:[#allocation2 + $0x778] sm:$0xff]
    %v365 = vld [vmem:[#allocation2 + $0x780] sm:$0xff]
    %v366 = vld [vmem:[#allocation2 + $0x788] sm:$0xff]
    %v367 = vld [vmem:[#allocation2 + $0x790] sm:$0xff]
    %v368 = vld [vmem:[#allocation2 + $0x798] sm:$0xff]
    %v369 = vld [vmem:[#allocation2 + $0x7a0] sm:$0xff]
    %v370 = vld [vmem:[#allocation2 + $0x7a8] sm:$0xff]
    %v371 = vld [vmem:[#allocation2 + $0x7b0] sm:$0xff]
    %v372 = vld [vmem:[#allocation2 + $0x7b8] sm:$0xff]
    %v373 = vld [vmem:[#allocation2 + $0x7c0] sm:$0xff]
    %v374 = vld [vmem:[#allocation2 + $0x7c8] sm:$0xff]
    %v375 = vld [vmem:[#allocation2 + $0x7d0] sm:$0xff]
    %v376 = vld [vmem:[#allocation2 + $0x7d8] sm:$0xff]
    %v377 = vld [vmem:[#allocation2 + $0x7e0] sm:$0xff]
    %v378 = vld [vmem:[#allocation2 + $0x7e8] sm:$0xff]
    %v379 = vld [vmem:[#allocation2 + $0x7f0] sm:$0xff]
    %v380 = vld [vmem:[#allocation2 + $0x7f8] sm:$0xff]
    %v381 = vld [vmem:[#allocation2 + $0x800] sm:$0xff]
    %v382 = vld [vmem:[#allocation2 + $0x808] sm:$0xff]
    %v383 = vld [vmem:[#allocation2 + $0x810] sm:$0xff]
    %v384 = vld [vmem:[#allocation2 + $0x818] sm:$0xff]
    %v385 = vld [vmem:[#allocation2 + $0x820] sm:$0xff]
    %v386 = vld [vmem:[#allocation2 + $0x828] sm:$0xff]
    %v387 = vld [vmem:[#allocation2 + $0x830] sm:$0xff]
    %v388 = vld [vmem:[#allocation2 + $0x838] sm:$0xff]
    %v389 = vld [vmem:[#allocation2 + $0x840] sm:$0xff]
    %v390 = vld [vmem:[#allocation2 + $0x848] sm:$0xff]
    %v391 = vld [vmem:[#allocation2 + $0x850] sm:$0xff]
    %v392 = vld [vmem:[#allocation2 + $0x858] sm:$0xff]
    %v393 = vld [vmem:[#allocation2 + $0x860] sm:$0xff]
    %v394 = vld [vmem:[#allocation2 + $0x868] sm:$0xff]
    %v395 = vld [vmem:[#allocation2 + $0x870] sm:$0xff]
    %v396 = vld [vmem:[#allocation2 + $0x878] sm:$0xff]
    %v397 = vld [vmem:[#allocation2 + $0x880] sm:$0xff]
    %v398 = vld [vmem:[#allocation2 + $0x888] sm:$0xff]
    %v399 = vld [vmem:[#allocation2 + $0x890] sm:$0xff]
    %v400 = vld [vmem:[#allocation2 + $0x898] sm:$0xff]
    %v401 = vld [vmem:[#allocation2 + $0x8a0] sm:$0xff]
    %v402 = vld [vmem:[#allocation2 + $0x8a8] sm:$0xff]
    %v403 = vld [vmem:[#allocation2 + $0x8b0] sm:$0xff]
    %v404 = vld [vmem:[#allocation2 + $0x8b8] sm:$0xff]
    %v405 = vld [vmem:[#allocation2 + $0x8c0] sm:$0xff]
    %v406 = vld [vmem:[#allocation2 + $0x8c8] sm:$0xff]
    %v407 = vld [vmem:[#allocation2 + $0x8d0] sm:$0xff]
    %v408 = vld [vmem:[#allocation2 + $0x8d8] sm:$0xff]
    %v409 = vld [vmem:[#allocation2 + $0x8e0] sm:$0xff]
    %v410 = vld [vmem:[#allocation2 + $0x8e8] sm:$0xff]
    %v411 = vld [vmem:[#allocation2 + $0x8f0] sm:$0xff]
    %v412 = vld [vmem:[#allocation2 + $0x8f8] sm:$0xff]
    %v413 = vld [vmem:[#allocation2 + $0x900] sm:$0xff]
    %v414 = vld [vmem:[#allocation2 + $0x908] sm:$0xff]
    %v415 = vld [vmem:[#allocation2 + $0x910] sm:$0xff]
    %v416 = vld [vmem:[#allocation2 + $0x918] sm:$0xff]
    %v417 = vld [vmem:[#allocation2 + $0x920] sm:$0xff]
    %v418 = vld [vmem:[#allocation2 + $0x928] sm:$0xff]
    %v419 = vld [vmem:[#allocation2 + $0x930] sm:$0xff]
    %v420 = vld [vmem:[#allocation2 + $0x938] sm:$0xff]
    %v421 = vld [vmem:[#allocation2 + $0x940] sm:$0xff]
    %v422 = vld [vmem:[#allocation2 + $0x948] sm:$0xff]
    %v423 = vld [vmem:[#allocation2 + $0x950] sm:$0xff]
    %v424 = vld [vmem:[#allocation2 + $0x958] sm:$0xff]
    %v425 = vld [vmem:[#allocation2 + $0x960] sm:$0xff]
    %v426 = vld [vmem:[#allocation2 + $0x968] sm:$0xff]
    %v427 = vld [vmem:[#allocation2 + $0x970] sm:$0xff]
    %v428 = vld [vmem:[#allocation2 + $0x978] sm:$0xff]
    %v429 = vld [vmem:[#allocation2 + $0x980] sm:$0xff]
    %v430 = vld [vmem:[#allocation2 + $0x988] sm:$0xff]
    %v431 = vld [vmem:[#allocation2 + $0x990] sm:$0xff]
    %v432 = vld [vmem:[#allocation2 + $0x998] sm:$0xff]
    %v433 = vld [vmem:[#allocation2 + $0x9a0] sm:$0xff]
    %v434 = vld [vmem:[#allocation2 + $0x9a8] sm:$0xff]
    %v435 = vld [vmem:[#allocation2 + $0x9b0] sm:$0xff]
    %v436 = vld [vmem:[#allocation2 + $0x9b8] sm:$0xff]
    %v437 = vld [vmem:[#allocation2 + $0x9c0] sm:$0xff]
    %v438 = vld [vmem:[#allocation2 + $0x9c8] sm:$0xff]
    %v439 = vld [vmem:[#allocation2 + $0x9d0] sm:$0xff]
    %v440 = vld [vmem:[#allocation2 + $0x9d8] sm:$0xff]
    %v441 = vld [vmem:[#allocation2 + $0x9e0] sm:$0xff]
    %v442 = vld [vmem:[#allocation2 + $0x9e8] sm:$0xff]
    %v443 = vld [vmem:[#allocation2 + $0x9f0] sm:$0xff]
    %v444 = vld [vmem:[#allocation2 + $0x9f8] sm:$0xff]
    %v445 = vld [vmem:[#allocation2 + $0xa00] sm:$0xff]
    %v446 = vld [vmem:[#allocation2 + $0xa08] sm:$0xff]
    %v447 = vld [vmem:[#allocation2 + $0xa10] sm:$0xff]
    %v448 = vld [vmem:[#allocation2 + $0xa18] sm:$0xff]
    %v449 = vld [vmem:[#allocation2 + $0xa20] sm:$0xff]
    %v450 = vld [vmem:[#allocation2 + $0xa28] sm:$0xff]
    %v451 = vld [vmem:[#allocation2 + $0xa30] sm:$0xff]
    %v452 = vld [vmem:[#allocation2 + $0xa38] sm:$0xff]
    %v453 = vld [vmem:[#allocation2 + $0xa40] sm:$0xff]
    %v454 = vld [vmem:[#allocation2 + $0xa48] sm:$0xff]
    %v455 = vld [vmem:[#allocation2 + $0xa50] sm:$0xff]
    %v456 = vld [vmem:[#allocation2 + $0xa58] sm:$0xff]
    %v457 = vld [vmem:[#allocation2 + $0xa60] sm:$0xff]
    %v458 = vld [vmem:[#allocation2 + $0xa68] sm:$0xff]
    %v459 = vld [vmem:[#allocation2 + $0xa70] sm:$0xff]
    %v460 = vld [vmem:[#allocation2 + $0xa78] sm:$0xff]
    %v461 = vld [vmem:[#allocation2 + $0xa80] sm:$0xff]
    %v462 = vld [vmem:[#allocation2 + $0xa88] sm:$0xff]
    %v463 = vld [vmem:[#allocation2 + $0xa90] sm:$0xff]
    %v464 = vld [vmem:[#allocation2 + $0xa98] sm:$0xff]
    %v465 = vld [vmem:[#allocation2 + $0xaa0] sm:$0xff]
    %v466 = vld [vmem:[#allocation2 + $0xaa8] sm:$0xff]
    %v467 = vld [vmem:[#allocation2 + $0xab0] sm:$0xff]
    %v468 = vld [vmem:[#allocation2 + $0xab8] sm:$0xff]
    %v469 = vld [vmem:[#allocation2 + $0xac0] sm:$0xff]
    %v470 = vld [vmem:[#allocation2 + $0xac8] sm:$0xff]
    %v471 = vld [vmem:[#allocation2 + $0xad0] sm:$0xff]
    %v472 = vld [vmem:[#allocation2 + $0xad8] sm:$0xff]
    %v473 = vld [vmem:[#allocation2 + $0xae0] sm:$0xff]
    %v474 = vld [vmem:[#allocation2 + $0xae8] sm:$0xff]
    %v475 = vld [vmem:[#allocation2 + $0xaf0] sm:$0xff]
    %v476 = vld [vmem:[#allocation2 + $0xaf8] sm:$0xff]
    %v477 = vld [vmem:[#allocation2 + $0xb00] sm:$0xff]
    %v478 = vld [vmem:[#allocation2 + $0xb08] sm:$0xff]
    %v479 = vld [vmem:[#allocation2 + $0xb10] sm:$0xff]
    %v480 = vld [vmem:[#allocation2 + $0xb18] sm:$0xff]
    %v481 = vld [vmem:[#allocation2 + $0xb20] sm:$0xff]
    %v482 = vld [vmem:[#allocation2 + $0xb28] sm:$0xff]
    %v483 = vld [vmem:[#allocation2 + $0xb30] sm:$0xff]
    %v484 = vld [vmem:[#allocation2 + $0xb38] sm:$0xff]
    %v485 = vld [vmem:[#allocation2 + $0xb40] sm:$0xff]
    %v486 = vld [vmem:[#allocation2 + $0xb48] sm:$0xff]
    %v487 = vld [vmem:[#allocation2 + $0xb50] sm:$0xff]
    %v488 = vld [vmem:[#allocation2 + $0xb58] sm:$0xff]
    %v489 = vld [vmem:[#allocation2 + $0xb60] sm:$0xff]
    %v490 = vld [vmem:[#allocation2 + $0xb68] sm:$0xff]
    %v491 = vld [vmem:[#allocation2 + $0xb70] sm:$0xff]
    %v492 = vld [vmem:[#allocation2 + $0xb78] sm:$0xff]
    %v493 = vld [vmem:[#allocation2 + $0xb80] sm:$0xff]
    %v494 = vld [vmem:[#allocation2 + $0xb88] sm:$0xff]
    %v495 = vld [vmem:[#allocation2 + $0xb90] sm:$0xff]
    %v496 = vld [vmem:[#allocation2 + $0xb98] sm:$0xff]
    %v497 = vld [vmem:[#allocation2 + $0xba0] sm:$0xff]
    %v498 = vld [vmem:[#allocation2 + $0xba8] sm:$0xff]
    %v499 = vld [vmem:[#allocation2 + $0xbb0] sm:$0xff]
    %v500 = vld [vmem:[#allocation2 + $0xbb8] sm:$0xff]
    %v501 = vld [vmem:[#allocation2 + $0xbc0] sm:$0xff]
    %v502 = vld [vmem:[#allocation2 + $0xbc8] sm:$0xff]
    %v503 = vld [vmem:[#allocation2 + $0xbd0] sm:$0xff]
    %v504 = vld [vmem:[#allocation2 + $0xbd8] sm:$0xff]
    %v505 = vld [vmem:[#allocation2 + $0xbe0] sm:$0xff]
    %v506 = vld [vmem:[#allocation2 + $0xbe8] sm:$0xff]
    %v507 = vld [vmem:[#allocation2 + $0xbf0] sm:$0xff]
    %v508 = vld [vmem:[#allocation2 + $0xbf8] sm:$0xff]
    %v509 = vld [vmem:[#allocation2 + $0xc00] sm:$0xff]
    %v510 = vld [vmem:[#allocation2 + $0xc08] sm:$0xff]
    %v511 = vld [vmem:[#allocation2 + $0xc10] sm:$0xff]
    %v512 = vld [vmem:[#allocation2 + $0xc18] sm:$0xff]
    %v513 = vld [vmem:[#allocation2 + $0xc20] sm:$0xff]
    %v514 = vld [vmem:[#allocation2 + $0xc28] sm:$0xff]
    %v515 = vld [vmem:[#allocation2 + $0xc30] sm:$0xff]
    %v516 = vld [vmem:[#allocation2 + $0xc38] sm:$0xff]
    %v517 = vld [vmem:[#allocation2 + $0xc40] sm:$0xff]
    %v518 = vld [vmem:[#allocation2 + $0xc48] sm:$0xff]
    %v519 = vld [vmem:[#allocation2 + $0xc50] sm:$0xff]
    %v520 = vld [vmem:[#allocation2 + $0xc58] sm:$0xff]
    %v521 = vld [vmem:[#allocation2 + $0xc60] sm:$0xff]
    %v522 = vld [vmem:[#allocation2 + $0xc68] sm:$0xff]
    %v523 = vld [vmem:[#allocation2 + $0xc70] sm:$0xff]
    %v524 = vld [vmem:[#allocation2 + $0xc78] sm:$0xff]
    %v525 = vld [vmem:[#allocation2 + $0xc80] sm:$0xff]
    %v526 = vld [vmem:[#allocation2 + $0xc88] sm:$0xff]
    %v527 = vld [vmem:[#allocation2 + $0xc90] sm:$0xff]
    %v528 = vld [vmem:[#allocation2 + $0xc98] sm:$0xff]
    %v529 = vld [vmem:[#allocation2 + $0xca0] sm:$0xff]
    %v530 = vld [vmem:[#allocation2 + $0xca8] sm:$0xff]
    %v531 = vld [vmem:[#allocation2 + $0xcb0] sm:$0xff]
    %v532 = vld [vmem:[#allocation2 + $0xcb8] sm:$0xff]
    %v533 = vld [vmem:[#allocation2 + $0xcc0] sm:$0xff]
    %v534 = vld [vmem:[#allocation2 + $0xcc8] sm:$0xff]
    %v535 = vld [vmem:[#allocation2 + $0xcd0] sm:$0xff]
    %v536 = vld [vmem:[#allocation2 + $0xcd8] sm:$0xff]
    %v537 = vld [vmem:[#allocation2 + $0xce0] sm:$0xff]
    %v538 = vld [vmem:[#allocation2 + $0xce8] sm:$0xff]
    %v539 = vld [vmem:[#allocation2 + $0xcf0] sm:$0xff]
    %v540 = vld [vmem:[#allocation2 + $0xcf8] sm:$0xff]
    %v541 = vld [vmem:[#allocation2 + $0xd00] sm:$0xff]
    %v542 = vld [vmem:[#allocation2 + $0xd08] sm:$0xff]
    %v543 = vld [vmem:[#allocation2 + $0xd10] sm:$0xff]
    %v544 = vld [vmem:[#allocation2 + $0xd18] sm:$0xff]
    %v545 = vld [vmem:[#allocation2 + $0xd20] sm:$0xff]
    %v546 = vld [vmem:[#allocation2 + $0xd28] sm:$0xff]
    %v547 = vld [vmem:[#allocation2 + $0xd30] sm:$0xff]
    %v548 = vld [vmem:[#allocation2 + $0xd38] sm:$0xff]
    %v549 = vld [vmem:[#allocation2 + $0xd40] sm:$0xff]
    %v550 = vld [vmem:[#allocation2 + $0xd48] sm:$0xff]
    %v551 = vld [vmem:[#allocation2 + $0xd50] sm:$0xff]
    %v552 = vld [vmem:[#allocation2 + $0xd58] sm:$0xff]
    %v553 = vld [vmem:[#allocation2 + $0xd60] sm:$0xff]
    %v554 = vld [vmem:[#allocation2 + $0xd68] sm:$0xff]
    %v555 = vld [vmem:[#allocation2 + $0xd70] sm:$0xff]
    %v556 = vld [vmem:[#allocation2 + $0xd78] sm:$0xff]
    %v557 = vld [vmem:[#allocation2 + $0xd80] sm:$0xff]
    %v558 = vld [vmem:[#allocation2 + $0xd88] sm:$0xff]
    %v559 = vld [vmem:[#allocation2 + $0xd90] sm:$0xff]
    %v560 = vld [vmem:[#allocation2 + $0xd98] sm:$0xff]
    %v561 = vld [vmem:[#allocation2 + $0xda0] sm:$0xff]
    %v562 = vld [vmem:[#allocation2 + $0xda8] sm:$0xff]
    %v563 = vld [vmem:[#allocation2 + $0xdb0] sm:$0xff]
    %v564 = vld [vmem:[#allocation2 + $0xdb8] sm:$0xff]
    %v565 = vld [vmem:[#allocation2 + $0xdc0] sm:$0xff]
    %v566 = vld [vmem:[#allocation2 + $0xdc8] sm:$0xff]
    %v567 = vld [vmem:[#allocation2 + $0xdd0] sm:$0xff]
    %v568 = vld [vmem:[#allocation2 + $0xdd8] sm:$0xff]
    %v569 = vld [vmem:[#allocation2 + $0xde0] sm:$0xff]
    %v570 = vld [vmem:[#allocation2 + $0xde8] sm:$0xff]
    %v571 = vld [vmem:[#allocation2 + $0xdf0] sm:$0xff]
    %v572 = vld [vmem:[#allocation2 + $0xdf8] sm:$0xff]
    %v573 = vld [vmem:[#allocation2 + $0xe00] sm:$0xff]
    %v574 = vld [vmem:[#allocation2 + $0xe08] sm:$0xff]
    %v575 = vld [vmem:[#allocation2 + $0xe10] sm:$0xff]
    %v576 = vld [vmem:[#allocation2 + $0xe18] sm:$0xff]
    %v577 = vld [vmem:[#allocation2 + $0xe20] sm:$0xff]
    %v578 = vld [vmem:[#allocation2 + $0xe28] sm:$0xff]
    %v579 = vld [vmem:[#allocation2 + $0xe30] sm:$0xff]
    %v580 = vld [vmem:[#allocation2 + $0xe38] sm:$0xff]
    %v581 = vld [vmem:[#allocation2 + $0xe40] sm:$0xff]
    %v582 = vld [vmem:[#allocation2 + $0xe48] sm:$0xff]
    %v583 = vld [vmem:[#allocation2 + $0xe50] sm:$0xff]
    %v584 = vld [vmem:[#allocation2 + $0xe58] sm:$0xff]
    %v585 = vld [vmem:[#allocation2 + $0xe60] sm:$0xff]
    %v586 = vld [vmem:[#allocation2 + $0xe68] sm:$0xff]
    %v587 = vld [vmem:[#allocation2 + $0xe70] sm:$0xff]
    %v588 = vld [vmem:[#allocation2 + $0xe78] sm:$0xff]
    %v589 = vld [vmem:[#allocation2 + $0xe80] sm:$0xff]
    %v590 = vld [vmem:[#allocation2 + $0xe88] sm:$0xff]
    %v591 = vld [vmem:[#allocation2 + $0xe90] sm:$0xff]
    %v592 = vld [vmem:[#allocation2 + $0xe98] sm:$0xff]
    %v593 = vld [vmem:[#allocation2 + $0xea0] sm:$0xff]
    %v594 = vld [vmem:[#allocation2 + $0xea8] sm:$0xff]
    %v595 = vld [vmem:[#allocation2 + $0xeb0] sm:$0xff]
    %v596 = vld [vmem:[#allocation2 + $0xeb8] sm:$0xff]
    %v597 = vld [vmem:[#allocation2 + $0xec0] sm:$0xff]
    %v598 = vld [vmem:[#allocation2 + $0xec8] sm:$0xff]
    %v599 = vld [vmem:[#allocation2 + $0xed0] sm:$0xff]
    %v600 = vld [vmem:[#allocation2 + $0xed8] sm:$0xff]
    %v601 = vld [vmem:[#allocation2 + $0xee0] sm:$0xff]
    %v602 = vld [vmem:[#allocation2 + $0xee8] sm:$0xff]
    %v603 = vld [vmem:[#allocation2 + $0xef0] sm:$0xff]
    %v604 = vld [vmem:[#allocation2 + $0xef8] sm:$0xff]
    %v605 = vld [vmem:[#allocation2 + $0xf00] sm:$0xff]
    %v606 = vld [vmem:[#allocation2 + $0xf08] sm:$0xff]
    %v607 = vld [vmem:[#allocation2 + $0xf10] sm:$0xff]
    %v608 = vld [vmem:[#allocation2 + $0xf18] sm:$0xff]
    %v609 = vld [vmem:[#allocation2 + $0xf20] sm:$0xff]
    %v610 = vld [vmem:[#allocation2 + $0xf28] sm:$0xff]
    %v611 = vld [vmem:[#allocation2 + $0xf30] sm:$0xff]
    %v612 = vld [vmem:[#allocation2 + $0xf38] sm:$0xff]
    %v613 = vld [vmem:[#allocation2 + $0xf40] sm:$0xff]
    %v614 = vld [vmem:[#allocation2 + $0xf48] sm:$0xff]
    %v615 = vld [vmem:[#allocation2 + $0xf50] sm:$0xff]
    %v616 = vld [vmem:[#allocation2 + $0xf58] sm:$0xff]
    %v617 = vld [vmem:[#allocation2 + $0xf60] sm:$0xff]
    %v618 = vld [vmem:[#allocation2 + $0xf68] sm:$0xff]
    %v619 = vld [vmem:[#allocation2 + $0xf70] sm:$0xff]
    %v620 = vld [vmem:[#allocation2 + $0xf78] sm:$0xff]
    %v621 = vld [vmem:[#allocation2 + $0xf80] sm:$0xff]
    %v622 = vld [vmem:[#allocation2 + $0xf88] sm:$0xff]
    %v623 = vld [vmem:[#allocation2 + $0xf90] sm:$0xff]
    %v624 = vld [vmem:[#allocation2 + $0xf98] sm:$0xff]
    %v625 = vld [vmem:[#allocation2 + $0xfa0] sm:$0xff]
    %v626 = vld [vmem:[#allocation2 + $0xfa8] sm:$0xff]
    %v627 = vld [vmem:[#allocation2 + $0xfb0] sm:$0xff]
    %v628 = vld [vmem:[#allocation2 + $0xfb8] sm:$0xff]
    %v629 = vld [vmem:[#allocation2 + $0xfc0] sm:$0xff]
    %v630 = vld [vmem:[#allocation2 + $0xfc8] sm:$0xff]
    %v631 = vld [vmem:[#allocation2 + $0xfd0] sm:$0xff]
    %v632 = vld [vmem:[#allocation2 + $0xfd8] sm:$0xff]
    %v633 = vld [vmem:[#allocation2 + $0xfe0] sm:$0xff]
    %v634 = vld [vmem:[#allocation2 + $0xfe8] sm:$0xff]
    %v635 = vld [vmem:[#allocation2 + $0xff0] sm:$0xff]
    %v636 = vld [vmem:[#allocation2 + $0xff8] sm:$0xff]
    %v637 = vld [vmem:[#allocation2 + $0x1000] sm:$0xff]
    %v638 = vld [vmem:[#allocation2 + $0x1008] sm:$0xff]
    %v639 = vld [vmem:[#allocation2 + $0x1010] sm:$0xff]
    %v640 = vld [vmem:[#allocation2 + $0x1018] sm:$0xff]
    %v641 = vld [vmem:[#allocation2 + $0x1020] sm:$0xff]
    %v642 = vld [vmem:[#allocation2 + $0x1028] sm:$0xff]
    %v643 = vld [vmem:[#allocation2 + $0x1030] sm:$0xff]
    %v644 = vld [vmem:[#allocation2 + $0x1038] sm:$0xff]
    %v645 = vld [vmem:[#allocation2 + $0x1040] sm:$0xff]
    %v646 = vld [vmem:[#allocation2 + $0x1048] sm:$0xff]
    %v647 = vld [vmem:[#allocation2 + $0x1050] sm:$0xff]
    %v648 = vld [vmem:[#allocation2 + $0x1058] sm:$0xff]
    %v649 = vld [vmem:[#allocation2 + $0x1060] sm:$0xff]
    %v650 = vld [vmem:[#allocation2 + $0x1068] sm:$0xff]
    %v651 = vld [vmem:[#allocation2 + $0x1070] sm:$0xff]
    %v652 = vld [vmem:[#allocation2 + $0x1078] sm:$0xff]
    %v653 = vld [vmem:[#allocation2 + $0x1080] sm:$0xff]
    %v654 = vld [vmem:[#allocation2 + $0x1088] sm:$0xff]
    %v655 = vld [vmem:[#allocation2 + $0x1090] sm:$0xff]
    %v656 = vld [vmem:[#allocation2 + $0x1098] sm:$0xff]
    %v657 = vld [vmem:[#allocation2 + $0x10a0] sm:$0xff]
    %v658 = vld [vmem:[#allocation2 + $0x10a8] sm:$0xff]
    %v659 = vld [vmem:[#allocation2 + $0x10b0] sm:$0xff]
    %v660 = vld [vmem:[#allocation2 + $0x10b8] sm:$0xff]
    %v661 = vld [vmem:[#allocation2 + $0x10c0] sm:$0xff]
    %v662 = vld [vmem:[#allocation2 + $0x10c8] sm:$0xff]
    %v663 = vld [vmem:[#allocation2 + $0x10d0] sm:$0xff]
    %v664 = vld [vmem:[#allocation2 + $0x10d8] sm:$0xff]
    %v665 = vld [vmem:[#allocation2 + $0x10e0] sm:$0xff]
    %v666 = vld [vmem:[#allocation2 + $0x10e8] sm:$0xff]
    %v667 = vld [vmem:[#allocation2 + $0x10f0] sm:$0xff]
    %v668 = vld [vmem:[#allocation2 + $0x10f8] sm:$0xff]
    %v669 = vld [vmem:[#allocation2 + $0x1100] sm:$0xff]
    %v670 = vld [vmem:[#allocation2 + $0x1108] sm:$0xff]
    %v671 = vld [vmem:[#allocation2 + $0x1110] sm:$0xff]
    %v672 = vld [vmem:[#allocation2 + $0x1118] sm:$0xff]
    %v673 = vld [vmem:[#allocation2 + $0x1120] sm:$0xff]
    %v674 = vld [vmem:[#allocation2 + $0x1128] sm:$0xff]
    %v675 = vld [vmem:[#allocation2 + $0x1130] sm:$0xff]
    %v676 = vld [vmem:[#allocation2 + $0x1138] sm:$0xff]
    %v677 = vld [vmem:[#allocation2 + $0x1140] sm:$0xff]
    %v678 = vld [vmem:[#allocation2 + $0x1148] sm:$0xff]
    %v679 = vld [vmem:[#allocation2 + $0x1150] sm:$0xff]
    %v680 = vld [vmem:[#allocation2 + $0x1158] sm:$0xff]
    %v681 = vld [vmem:[#allocation2 + $0x1160] sm:$0xff]
    %v682 = vld [vmem:[#allocation2 + $0x1168] sm:$0xff]
    %v683 = vld [vmem:[#allocation2 + $0x1170] sm:$0xff]
    %v684 = vld [vmem:[#allocation2 + $0x1178] sm:$0xff]
    %v685 = vld [vmem:[#allocation2 + $0x1180] sm:$0xff]
    %v686 = vld [vmem:[#allocation2 + $0x1188] sm:$0xff]
    %v687 = vld [vmem:[#allocation2 + $0x1190] sm:$0xff]
    %v688 = vld [vmem:[#allocation2 + $0x1198] sm:$0xff]
    %v689 = vld [vmem:[#allocation2 + $0x11a0] sm:$0xff]
    %v690 = vld [vmem:[#allocation2 + $0x11a8] sm:$0xff]
    %v691 = vld [vmem:[#allocation2 + $0x11b0] sm:$0xff]
    %v692 = vld [vmem:[#allocation2 + $0x11b8] sm:$0xff]
    %v693 = vld [vmem:[#allocation2 + $0x11c0] sm:$0xff]
    %v694 = vld [vmem:[#allocation2 + $0x11c8] sm:$0xff]
    %v695 = vld [vmem:[#allocation2 + $0x11d0] sm:$0xff]
    %v696 = vld [vmem:[#allocation2 + $0x11d8] sm:$0xff]
    %v697 = vld [vmem:[#allocation2 + $0x11e0] sm:$0xff]
    %v698 = vld [vmem:[#allocation2 + $0x11e8] sm:$0xff]
    %v699 = vld [vmem:[#allocation2 + $0x11f0] sm:$0xff]
    %v700 = vld [vmem:[#allocation2 + $0x11f8] sm:$0xff]
    %v701 = vld [vmem:[#allocation2 + $0x1200] sm:$0xff]
    %v702 = vld [vmem:[#allocation2 + $0x1208] sm:$0xff]
    %v703 = vld [vmem:[#allocation2 + $0x1210] sm:$0xff]
    %v704 = vld [vmem:[#allocation2 + $0x1218] sm:$0xff]
    %v705 = vld [vmem:[#allocation2 + $0x1220] sm:$0xff]
    %v706 = vld [vmem:[#allocation2 + $0x1228] sm:$0xff]
    %v707 = vld [vmem:[#allocation2 + $0x1230] sm:$0xff]
    %v708 = vld [vmem:[#allocation2 + $0x1238] sm:$0xff]
    %v709 = vld [vmem:[#allocation2 + $0x1240] sm:$0xff]
    %v710 = vld [vmem:[#allocation2 + $0x1248] sm:$0xff]
    %v711 = vld [vmem:[#allocation2 + $0x1250] sm:$0xff]
    %v712 = vld [vmem:[#allocation2 + $0x1258] sm:$0xff]
    %v713 = vld [vmem:[#allocation2 + $0x1260] sm:$0xff]
    %v714 = vld [vmem:[#allocation2 + $0x1268] sm:$0xff]
    %v715 = vld [vmem:[#allocation2 + $0x1270] sm:$0xff]
    %v716 = vld [vmem:[#allocation2 + $0x1278] sm:$0xff]
    %v717 = vld [vmem:[#allocation2 + $0x1280] sm:$0xff]
    %v718 = vld [vmem:[#allocation2 + $0x1288] sm:$0xff]
    %v719 = vld [vmem:[#allocation2 + $0x1290] sm:$0xff]
    %v720 = vld [vmem:[#allocation2 + $0x1298] sm:$0xff]
    %v721 = vld [vmem:[#allocation2 + $0x12a0] sm:$0xff]
    %v722 = vld [vmem:[#allocation2 + $0x12a8] sm:$0xff]
    %v723 = vld [vmem:[#allocation2 + $0x12b0] sm:$0xff]
    %v724 = vld [vmem:[#allocation2 + $0x12b8] sm:$0xff]
    %v725 = vld [vmem:[#allocation2 + $0x12c0] sm:$0xff]
    %v726 = vld [vmem:[#allocation2 + $0x12c8] sm:$0xff]
    %v727 = vld [vmem:[#allocation2 + $0x12d0] sm:$0xff]
    %v728 = vld [vmem:[#allocation2 + $0x12d8] sm:$0xff]
    %v729 = vld [vmem:[#allocation2 + $0x12e0] sm:$0xff]
    %v730 = vld [vmem:[#allocation2 + $0x12e8] sm:$0xff]
    %v731 = vld [vmem:[#allocation2 + $0x12f0] sm:$0xff]
    %v732 = vld [vmem:[#allocation2 + $0x12f8] sm:$0xff]
    %v733 = vld [vmem:[#allocation2 + $0x1300] sm:$0xff]
    %v734 = vld [vmem:[#allocation2 + $0x1308] sm:$0xff]
    %v735 = vld [vmem:[#allocation2 + $0x1310] sm:$0xff]
    %v736 = vld [vmem:[#allocation2 + $0x1318] sm:$0xff]
    %v737 = vld [vmem:[#allocation2 + $0x1320] sm:$0xff]
    %v738 = vld [vmem:[#allocation2 + $0x1328] sm:$0xff]
    %v739 = vld [vmem:[#allocation2 + $0x1330] sm:$0xff]
    %v740 = vld [vmem:[#allocation2 + $0x1338] sm:$0xff]
    %v741 = vld [vmem:[#allocation2 + $0x1340] sm:$0xff]
    %v742 = vld [vmem:[#allocation2 + $0x1348] sm:$0xff]
    %v743 = vld [vmem:[#allocation2 + $0x1350] sm:$0xff]
    %v744 = vld [vmem:[#allocation2 + $0x1358] sm:$0xff]
    %v745 = vld [vmem:[#allocation2 + $0x1360] sm:$0xff]
    %v746 = vld [vmem:[#allocation2 + $0x1368] sm:$0xff]
    %v747 = vld [vmem:[#allocation2 + $0x1370] sm:$0xff]
    %v748 = vld [vmem:[#allocation2 + $0x1378] sm:$0xff]
    %v749 = vld [vmem:[#allocation2 + $0x1380] sm:$0xff]
    %v750 = vld [vmem:[#allocation2 + $0x1388] sm:$0xff]
    %v751 = vld [vmem:[#allocation2 + $0x1390] sm:$0xff]
    %v752 = vld [vmem:[#allocation2 + $0x1398] sm:$0xff]
    %v753 = vld [vmem:[#allocation2 + $0x13a0] sm:$0xff]
    %v754 = vld [vmem:[#allocation2 + $0x13a8] sm:$0xff]
    %v755 = vld [vmem:[#allocation2 + $0x13b0] sm:$0xff]
    %v756 = vld [vmem:[#allocation2 + $0x13b8] sm:$0xff]
    %v757 = vld [vmem:[#allocation2 + $0x13c0] sm:$0xff]
    %v758 = vld [vmem:[#allocation2 + $0x13c8] sm:$0xff]
    %v759 = vld [vmem:[#allocation2 + $0x13d0] sm:$0xff]
    %v760 = vld [vmem:[#allocation2 + $0x13d8] sm:$0xff]
    %v761 = vld [vmem:[#allocation2 + $0x13e0] sm:$0xff]
    %v762 = vld [vmem:[#allocation2 + $0x13e8] sm:$0xff]
    %v763 = vld [vmem:[#allocation2 + $0x13f0] sm:$0xff]
    %v764 = vld [vmem:[#allocation2 + $0x13f8] sm:$0xff]
    %v765 = vld [vmem:[#allocation2 + $0x1400] sm:$0xff]
    %v766 = vld [vmem:[#allocation2 + $0x1408] sm:$0xff]
    %v767 = vld [vmem:[#allocation2 + $0x1410] sm:$0xff]
    %v768 = vld [vmem:[#allocation2 + $0x1418] sm:$0xff]
    %v769 = vld [vmem:[#allocation2 + $0x1420] sm:$0xff]
    %v770 = vld [vmem:[#allocation2 + $0x1428] sm:$0xff]
    %v771 = vld [vmem:[#allocation2 + $0x1430] sm:$0xff]
    %v772 = vld [vmem:[#allocation2 + $0x1438] sm:$0xff]
    %v773 = vld [vmem:[#allocation2 + $0x1440] sm:$0xff]
    %v774 = vld [vmem:[#allocation2 + $0x1448] sm:$0xff]
    %v775 = vld [vmem:[#allocation2 + $0x1450] sm:$0xff]
    %v776 = vld [vmem:[#allocation2 + $0x1458] sm:$0xff]
    %v777 = vld [vmem:[#allocation2 + $0x1460] sm:$0xff]
    %v778 = vld [vmem:[#allocation2 + $0x1468] sm:$0xff]
    %v779 = vld [vmem:[#allocation2 + $0x1470] sm:$0xff]
    %v780 = vld [vmem:[#allocation2 + $0x1478] sm:$0xff]
    %v781 = vld [vmem:[#allocation2 + $0x1480] sm:$0xff]
    %v782 = vld [vmem:[#allocation2 + $0x1488] sm:$0xff]
    %v783 = vld [vmem:[#allocation2 + $0x1490] sm:$0xff]
    %v784 = vld [vmem:[#allocation2 + $0x1498] sm:$0xff]
    %v785 = vld [vmem:[#allocation2 + $0x14a0] sm:$0xff]
    %v786 = vld [vmem:[#allocation2 + $0x14a8] sm:$0xff]
    %v787 = vld [vmem:[#allocation2 + $0x14b0] sm:$0xff]
    %v788 = vld [vmem:[#allocation2 + $0x14b8] sm:$0xff]
    %v789 = vld [vmem:[#allocation2 + $0x14c0] sm:$0xff]
    %v790 = vld [vmem:[#allocation2 + $0x14c8] sm:$0xff]
    %v791 = vld [vmem:[#allocation2 + $0x14d0] sm:$0xff]
    %v792 = vld [vmem:[#allocation2 + $0x14d8] sm:$0xff]
    %v793 = vld [vmem:[#allocation2 + $0x14e0] sm:$0xff]
    %v794 = vld [vmem:[#allocation2 + $0x14e8] sm:$0xff]
    %v795 = vld [vmem:[#allocation2 + $0x14f0] sm:$0xff]
    %v796 = vld [vmem:[#allocation2 + $0x14f8] sm:$0xff]
    %v797 = vld [vmem:[#allocation2 + $0x1500] sm:$0xff]
    %v798 = vld [vmem:[#allocation2 + $0x1508] sm:$0xff]
    %v799 = vld [vmem:[#allocation2 + $0x1510] sm:$0xff]
    %v800 = vld [vmem:[#allocation2 + $0x1518] sm:$0xff]
    %v801 = vld [vmem:[#allocation2 + $0x1520] sm:$0xff]
    %v802 = vld [vmem:[#allocation2 + $0x1528] sm:$0xff]
    %v803 = vld [vmem:[#allocation2 + $0x1530] sm:$0xff]
    %v804 = vld [vmem:[#allocation2 + $0x1538] sm:$0xff]
    %v805 = vld [vmem:[#allocation2 + $0x1540] sm:$0xff]
    %v806 = vld [vmem:[#allocation2 + $0x1548] sm:$0xff]
    %v807 = vld [vmem:[#allocation2 + $0x1550] sm:$0xff]
    %v808 = vld [vmem:[#allocation2 + $0x1558] sm:$0xff]
    %v809 = vld [vmem:[#allocation2 + $0x1560] sm:$0xff]
    %v810 = vld [vmem:[#allocation2 + $0x1568] sm:$0xff]
    %v811 = vld [vmem:[#allocation2 + $0x1570] sm:$0xff]
    %v812 = vld [vmem:[#allocation2 + $0x1578] sm:$0xff]
    %v813 = vld [vmem:[#allocation2 + $0x1580] sm:$0xff]
    %v814 = vld [vmem:[#allocation2 + $0x1588] sm:$0xff]
    %v815 = vld [vmem:[#allocation2 + $0x1590] sm:$0xff]
    %v816 = vld [vmem:[#allocation2 + $0x1598] sm:$0xff]
    %v817 = vld [vmem:[#allocation2 + $0x15a0] sm:$0xff]
    %v818 = vld [vmem:[#allocation2 + $0x15a8] sm:$0xff]
    %v819 = vld [vmem:[#allocation2 + $0x15b0] sm:$0xff]
    %v820 = vld [vmem:[#allocation2 + $0x15b8] sm:$0xff]
    %v821 = vld [vmem:[#allocation2 + $0x15c0] sm:$0xff]
    %v822 = vld [vmem:[#allocation2 + $0x15c8] sm:$0xff]
    %v823 = vld [vmem:[#allocation2 + $0x15d0] sm:$0xff]
    %v824 = vld [vmem:[#allocation2 + $0x15d8] sm:$0xff]
    %v825 = vld [vmem:[#allocation2 + $0x15e0] sm:$0xff]
    %v826 = vld [vmem:[#allocation2 + $0x15e8] sm:$0xff]
    %v827 = vld [vmem:[#allocation2 + $0x15f0] sm:$0xff]
    %v828 = vld [vmem:[#allocation2 + $0x15f8] sm:$0xff]
    %v829 = vld [vmem:[#allocation2 + $0x1600] sm:$0xff]
    %v830 = vld [vmem:[#allocation2 + $0x1608] sm:$0xff]
    %v831 = vld [vmem:[#allocation2 + $0x1610] sm:$0xff]
    %v832 = vld [vmem:[#allocation2 + $0x1618] sm:$0xff]
    %v833 = vld [vmem:[#allocation2 + $0x1620] sm:$0xff]
    %v834 = vld [vmem:[#allocation2 + $0x1628] sm:$0xff]
    %v835 = vld [vmem:[#allocation2 + $0x1630] sm:$0xff]
    %v836 = vld [vmem:[#allocation2 + $0x1638] sm:$0xff]
    %v837 = vld [vmem:[#allocation2 + $0x1640] sm:$0xff]
    %v838 = vld [vmem:[#allocation2 + $0x1648] sm:$0xff]
    %v839 = vld [vmem:[#allocation2 + $0x1650] sm:$0xff]
    %v840 = vld [vmem:[#allocation2 + $0x1658] sm:$0xff]
    %v841 = vld [vmem:[#allocation2 + $0x1660] sm:$0xff]
    %v842 = vld [vmem:[#allocation2 + $0x1668] sm:$0xff]
    %v843 = vld [vmem:[#allocation2 + $0x1670] sm:$0xff]
    %v844 = vld [vmem:[#allocation2 + $0x1678] sm:$0xff]
    %v845 = vld [vmem:[#allocation2 + $0x1680] sm:$0xff]
    %v846 = vld [vmem:[#allocation2 + $0x1688] sm:$0xff]
    %v847 = vld [vmem:[#allocation2 + $0x1690] sm:$0xff]
    %v848 = vld [vmem:[#allocation2 + $0x1698] sm:$0xff]
    %v849 = vld [vmem:[#allocation2 + $0x16a0] sm:$0xff]
    %v850 = vld [vmem:[#allocation2 + $0x16a8] sm:$0xff]
    %v851 = vld [vmem:[#allocation2 + $0x16b0] sm:$0xff]
    %v852 = vld [vmem:[#allocation2 + $0x16b8] sm:$0xff]
    %v853 = vld [vmem:[#allocation2 + $0x16c0] sm:$0xff]
    %v854 = vld [vmem:[#allocation2 + $0x16c8] sm:$0xff]
    %v855 = vld [vmem:[#allocation2 + $0x16d0] sm:$0xff]
    %v856 = vld [vmem:[#allocation2 + $0x16d8] sm:$0xff]
    %v857 = vld [vmem:[#allocation2 + $0x16e0] sm:$0xff]
    %v858 = vld [vmem:[#allocation2 + $0x16e8] sm:$0xff]
    %v859 = vld [vmem:[#allocation2 + $0x16f0] sm:$0xff]
    %v860 = vld [vmem:[#allocation2 + $0x16f8] sm:$0xff]
    %v861 = vld [vmem:[#allocation2 + $0x1700] sm:$0xff]
    %v862 = vld [vmem:[#allocation2 + $0x1708] sm:$0xff]
    %v863 = vld [vmem:[#allocation2 + $0x1710] sm:$0xff]
    %v864 = vld [vmem:[#allocation2 + $0x1718] sm:$0xff]
    %v865 = vld [vmem:[#allocation2 + $0x1720] sm:$0xff]
    %v866 = vld [vmem:[#allocation2 + $0x1728] sm:$0xff]
    %v867 = vld [vmem:[#allocation2 + $0x1730] sm:$0xff]
    %v868 = vld [vmem:[#allocation2 + $0x1738] sm:$0xff]
    %v869 = vld [vmem:[#allocation2 + $0x1740] sm:$0xff]
    %v870 = vld [vmem:[#allocation2 + $0x1748] sm:$0xff]
    %v871 = vld [vmem:[#allocation2 + $0x1750] sm:$0xff]
    %v872 = vld [vmem:[#allocation2 + $0x1758] sm:$0xff]
    %v873 = vld [vmem:[#allocation2 + $0x1760] sm:$0xff]
    %v874 = vld [vmem:[#allocation2 + $0x1768] sm:$0xff]
    %v875 = vld [vmem:[#allocation2 + $0x1770] sm:$0xff]
    %v876 = vld [vmem:[#allocation2 + $0x1778] sm:$0xff]
    %v877 = vld [vmem:[#allocation2 + $0x1780] sm:$0xff]
    %v878 = vld [vmem:[#allocation2 + $0x1788] sm:$0xff]
    %v879 = vld [vmem:[#allocation2 + $0x1790] sm:$0xff]
    %v880 = vld [vmem:[#allocation2 + $0x1798] sm:$0xff]
    %v881 = vld [vmem:[#allocation2 + $0x17a0] sm:$0xff]
    %v882 = vld [vmem:[#allocation2 + $0x17a8] sm:$0xff]
    %v883 = vld [vmem:[#allocation2 + $0x17b0] sm:$0xff]
    %v884 = vld [vmem:[#allocation2 + $0x17b8] sm:$0xff]
    %v885 = vld [vmem:[#allocation2 + $0x17c0] sm:$0xff]
    %v886 = vld [vmem:[#allocation2 + $0x17c8] sm:$0xff]
    %v887 = vld [vmem:[#allocation2 + $0x17d0] sm:$0xff]
    %v888 = vld [vmem:[#allocation2 + $0x17d8] sm:$0xff]
    %v889 = vld [vmem:[#allocation2 + $0x17e0] sm:$0xff]
    %v890 = vld [vmem:[#allocation2 + $0x17e8] sm:$0xff]
    %v891 = vld [vmem:[#allocation2 + $0x17f0] sm:$0xff]
    %v892 = vld [vmem:[#allocation2 + $0x17f8] sm:$0xff]
    %v893 = vld [vmem:[#allocation5] sm:$0x3f]
    %v895 = vperm.slane %v893, 0
    %v896 = vperm.slane %v893, 1
    %v897 = vperm.slane %v893, 2
    %v898 = vperm.slane %v893, 3
    %v899 = vperm.slane %v893, 4
    %v900 = vperm.slane %v893, 5
    %v923 = vunpack.c.l.b16 %v103
    %v924 = vunpack.c.h.b16 %v103
    %v925 = vunpack.c.l.b16 %v104
    %v926 = vunpack.c.h.b16 %v104
    %v927 = vunpack.c.l.b16 %v105
    %v928 = vunpack.c.h.b16 %v105
    %v929 = vunpack.c.l.b16 %v106
    %v930 = vunpack.c.h.b16 %v106
    %v931 = vunpack.c.l.b16 %v107
    %v932 = vunpack.c.h.b16 %v107
    %v933 = vunpack.c.l.b16 %v108
    %v934 = vunpack.c.h.b16 %v108
    %v935 = vunpack.c.l.b16 %v109
    %v936 = vunpack.c.h.b16 %v109
    %v937 = vunpack.c.l.b16 %v110
    %v938 = vunpack.c.h.b16 %v110
    %v939 = vunpack.c.l.b16 %v111
    %v940 = vunpack.c.h.b16 %v111
    %v941 = vunpack.c.l.b16 %v112
    %v942 = vunpack.c.h.b16 %v112
    %v943 = vunpack.c.l.b16 %v113
    %v944 = vunpack.c.h.b16 %v113
    %v945 = vunpack.c.l.b16 %v114
    %v946 = vunpack.c.h.b16 %v114
    %v947 = vunpack.c.l.b16 %v115
    %v948 = vunpack.c.h.b16 %v115
    %v949 = vunpack.c.l.b16 %v116
    %v950 = vunpack.c.h.b16 %v116
    %v951 = vunpack.c.l.b16 %v117
    %v952 = vunpack.c.h.b16 %v117
    %v953 = vunpack.c.l.b16 %v118
    %v954 = vunpack.c.h.b16 %v118
    %v955 = vpack.c.b16 %v939, %v923
    %v956 = vpack.c.b16 %v940, %v924
    %v957 = vpack.c.b16 %v941, %v925
    %v958 = vpack.c.b16 %v942, %v926
    %v959 = vpack.c.b16 %v943, %v927
    %v960 = vpack.c.b16 %v944, %v928
    %v961 = vpack.c.b16 %v945, %v929
    %v962 = vpack.c.b16 %v946, %v930
    %v963 = vpack.c.b16 %v947, %v931
    %v964 = vpack.c.b16 %v948, %v932
    %v965 = vpack.c.b16 %v949, %v933
    %v966 = vpack.c.b16 %v950, %v934
    %v967 = vpack.c.b16 %v951, %v935
    %v968 = vpack.c.b16 %v952, %v936
    %v969 = vpack.c.b16 %v953, %v937
    %v970 = vpack.c.b16 %v954, %v938
    %v1755 = vunpack.c.l.b16 %v125
    %v1756 = vunpack.c.h.b16 %v125
    %v1757 = vunpack.c.l.b16 %v126
    %v1758 = vunpack.c.h.b16 %v126
    %v1759 = vunpack.c.l.b16 %v127
    %v1760 = vunpack.c.h.b16 %v127
    %v1761 = vunpack.c.l.b16 %v128
    %v1762 = vunpack.c.h.b16 %v128
    %v1763 = vunpack.c.l.b16 %v129
    %v1764 = vunpack.c.h.b16 %v129
    %v1765 = vunpack.c.l.b16 %v130
    %v1766 = vunpack.c.h.b16 %v130
    %v1767 = vunpack.c.l.b16 %v131
    %v1768 = vunpack.c.h.b16 %v131
    %v1769 = vunpack.c.l.b16 %v132
    %v1770 = vunpack.c.h.b16 %v132
    %v1771 = vunpack.c.l.b16 %v133
    %v1772 = vunpack.c.h.b16 %v133
    %v1773 = vunpack.c.l.b16 %v134
    %v1774 = vunpack.c.h.b16 %v134
    %v1775 = vunpack.c.l.b16 %v135
    %v1776 = vunpack.c.h.b16 %v135
    %v1777 = vunpack.c.l.b16 %v136
    %v1778 = vunpack.c.h.b16 %v136
    %v1779 = vunpack.c.l.b16 %v137
    %v1780 = vunpack.c.h.b16 %v137
    %v1781 = vunpack.c.l.b16 %v138
    %v1782 = vunpack.c.h.b16 %v138
    %v1783 = vunpack.c.l.b16 %v139
    %v1784 = vunpack.c.h.b16 %v139
    %v1785 = vunpack.c.l.b16 %v140
    %v1786 = vunpack.c.h.b16 %v140
    %v1787 = vunpack.c.l.b16 %v141
    %v1788 = vunpack.c.h.b16 %v141
    %v1789 = vunpack.c.l.b16 %v142
    %v1790 = vunpack.c.h.b16 %v142
    %v1791 = vunpack.c.l.b16 %v143
    %v1792 = vunpack.c.h.b16 %v143
    %v1793 = vunpack.c.l.b16 %v144
    %v1794 = vunpack.c.h.b16 %v144
    %v1795 = vunpack.c.l.b16 %v145
    %v1796 = vunpack.c.h.b16 %v145
    %v1797 = vunpack.c.l.b16 %v146
    %v1798 = vunpack.c.h.b16 %v146
    %v1799 = vunpack.c.l.b16 %v147
    %v1800 = vunpack.c.h.b16 %v147
    %v1801 = vunpack.c.l.b16 %v148
    %v1802 = vunpack.c.h.b16 %v148
    %v1803 = vunpack.c.l.b16 %v149
    %v1804 = vunpack.c.h.b16 %v149
    %v1805 = vunpack.c.l.b16 %v150
    %v1806 = vunpack.c.h.b16 %v150
    %v1807 = vunpack.c.l.b16 %v151
    %v1808 = vunpack.c.h.b16 %v151
    %v1809 = vunpack.c.l.b16 %v152
    %v1810 = vunpack.c.h.b16 %v152
    %v1811 = vunpack.c.l.b16 %v153
    %v1812 = vunpack.c.h.b16 %v153
    %v1813 = vunpack.c.l.b16 %v154
    %v1814 = vunpack.c.h.b16 %v154
    %v1815 = vunpack.c.l.b16 %v155
    %v1816 = vunpack.c.h.b16 %v155
    %v1817 = vunpack.c.l.b16 %v156
    %v1818 = vunpack.c.h.b16 %v156
    %v1819 = vunpack.c.l.b16 %v157
    %v1820 = vunpack.c.h.b16 %v157
    %v1821 = vunpack.c.l.b16 %v158
    %v1822 = vunpack.c.h.b16 %v158
    %v1823 = vunpack.c.l.b16 %v159
    %v1824 = vunpack.c.h.b16 %v159
    %v1825 = vunpack.c.l.b16 %v160
    %v1826 = vunpack.c.h.b16 %v160
    %v1827 = vunpack.c.l.b16 %v161
    %v1828 = vunpack.c.h.b16 %v161
    %v1829 = vunpack.c.l.b16 %v162
    %v1830 = vunpack.c.h.b16 %v162
    %v1831 = vunpack.c.l.b16 %v163
    %v1832 = vunpack.c.h.b16 %v163
    %v1833 = vunpack.c.l.b16 %v164
    %v1834 = vunpack.c.h.b16 %v164
    %v1835 = vunpack.c.l.b16 %v165
    %v1836 = vunpack.c.h.b16 %v165
    %v1837 = vunpack.c.l.b16 %v166
    %v1838 = vunpack.c.h.b16 %v166
    %v1839 = vunpack.c.l.b16 %v167
    %v1840 = vunpack.c.h.b16 %v167
    %v1841 = vunpack.c.l.b16 %v168
    %v1842 = vunpack.c.h.b16 %v168
    %v1843 = vunpack.c.l.b16 %v169
    %v1844 = vunpack.c.h.b16 %v169
    %v1845 = vunpack.c.l.b16 %v170
    %v1846 = vunpack.c.h.b16 %v170
    %v1847 = vunpack.c.l.b16 %v171
    %v1848 = vunpack.c.h.b16 %v171
    %v1849 = vunpack.c.l.b16 %v172
    %v1850 = vunpack.c.h.b16 %v172
    %v1851 = vunpack.c.l.b16 %v173
    %v1852 = vunpack.c.h.b16 %v173
    %v1853 = vunpack.c.l.b16 %v174
    %v1854 = vunpack.c.h.b16 %v174
    %v1855 = vunpack.c.l.b16 %v175
    %v1856 = vunpack.c.h.b16 %v175
    %v1857 = vunpack.c.l.b16 %v176
    %v1858 = vunpack.c.h.b16 %v176
    %v1859 = vunpack.c.l.b16 %v177
    %v1860 = vunpack.c.h.b16 %v177
    %v1861 = vunpack.c.l.b16 %v178
    %v1862 = vunpack.c.h.b16 %v178
    %v1863 = vunpack.c.l.b16 %v179
    %v1864 = vunpack.c.h.b16 %v179
    %v1865 = vunpack.c.l.b16 %v180
    %v1866 = vunpack.c.h.b16 %v180
    %v1867 = vunpack.c.l.b16 %v181
    %v1868 = vunpack.c.h.b16 %v181
    %v1869 = vunpack.c.l.b16 %v182
    %v1870 = vunpack.c.h.b16 %v182
    %v1871 = vunpack.c.l.b16 %v183
    %v1872 = vunpack.c.h.b16 %v183
    %v1873 = vunpack.c.l.b16 %v184
    %v1874 = vunpack.c.h.b16 %v184
    %v1875 = vunpack.c.l.b16 %v185
    %v1876 = vunpack.c.h.b16 %v185
    %v1877 = vunpack.c.l.b16 %v186
    %v1878 = vunpack.c.h.b16 %v186
    %v1879 = vunpack.c.l.b16 %v187
    %v1880 = vunpack.c.h.b16 %v187
    %v1881 = vunpack.c.l.b16 %v188
    %v1882 = vunpack.c.h.b16 %v188
    %v1883 = vunpack.c.l.b16 %v189
    %v1884 = vunpack.c.h.b16 %v189
    %v1885 = vunpack.c.l.b16 %v190
    %v1886 = vunpack.c.h.b16 %v190
    %v1887 = vunpack.c.l.b16 %v191
    %v1888 = vunpack.c.h.b16 %v191
    %v1889 = vunpack.c.l.b16 %v192
    %v1890 = vunpack.c.h.b16 %v192
    %v1891 = vunpack.c.l.b16 %v193
    %v1892 = vunpack.c.h.b16 %v193
    %v1893 = vunpack.c.l.b16 %v194
    %v1894 = vunpack.c.h.b16 %v194
    %v1895 = vunpack.c.l.b16 %v195
    %v1896 = vunpack.c.h.b16 %v195
    %v1897 = vunpack.c.l.b16 %v196
    %v1898 = vunpack.c.h.b16 %v196
    %v1899 = vunpack.c.l.b16 %v197
    %v1900 = vunpack.c.h.b16 %v197
    %v1901 = vunpack.c.l.b16 %v198
    %v1902 = vunpack.c.h.b16 %v198
    %v1903 = vunpack.c.l.b16 %v199
    %v1904 = vunpack.c.h.b16 %v199
    %v1905 = vunpack.c.l.b16 %v200
    %v1906 = vunpack.c.h.b16 %v200
    %v1907 = vunpack.c.l.b16 %v201
    %v1908 = vunpack.c.h.b16 %v201
    %v1909 = vunpack.c.l.b16 %v202
    %v1910 = vunpack.c.h.b16 %v202
    %v1911 = vunpack.c.l.b16 %v203
    %v1912 = vunpack.c.h.b16 %v203
    %v1913 = vunpack.c.l.b16 %v204
    %v1914 = vunpack.c.h.b16 %v204
    %v1915 = vunpack.c.l.b16 %v205
    %v1916 = vunpack.c.h.b16 %v205
    %v1917 = vunpack.c.l.b16 %v206
    %v1918 = vunpack.c.h.b16 %v206
    %v1919 = vunpack.c.l.b16 %v207
    %v1920 = vunpack.c.h.b16 %v207
    %v1921 = vunpack.c.l.b16 %v208
    %v1922 = vunpack.c.h.b16 %v208
    %v1923 = vunpack.c.l.b16 %v209
    %v1924 = vunpack.c.h.b16 %v209
    %v1925 = vunpack.c.l.b16 %v210
    %v1926 = vunpack.c.h.b16 %v210
    %v1927 = vunpack.c.l.b16 %v211
    %v1928 = vunpack.c.h.b16 %v211
    %v1929 = vunpack.c.l.b16 %v212
    %v1930 = vunpack.c.h.b16 %v212
    %v1931 = vunpack.c.l.b16 %v213
    %v1932 = vunpack.c.h.b16 %v213
    %v1933 = vunpack.c.l.b16 %v214
    %v1934 = vunpack.c.h.b16 %v214
    %v1935 = vunpack.c.l.b16 %v215
    %v1936 = vunpack.c.h.b16 %v215
    %v1937 = vunpack.c.l.b16 %v216
    %v1938 = vunpack.c.h.b16 %v216
    %v1939 = vunpack.c.l.b16 %v217
    %v1940 = vunpack.c.h.b16 %v217
    %v1941 = vunpack.c.l.b16 %v218
    %v1942 = vunpack.c.h.b16 %v218
    %v1943 = vunpack.c.l.b16 %v219
    %v1944 = vunpack.c.h.b16 %v219
    %v1945 = vunpack.c.l.b16 %v220
    %v1946 = vunpack.c.h.b16 %v220
    %v1947 = vunpack.c.l.b16 %v221
    %v1948 = vunpack.c.h.b16 %v221
    %v1949 = vunpack.c.l.b16 %v222
    %v1950 = vunpack.c.h.b16 %v222
    %v1951 = vunpack.c.l.b16 %v223
    %v1952 = vunpack.c.h.b16 %v223
    %v1953 = vunpack.c.l.b16 %v224
    %v1954 = vunpack.c.h.b16 %v224
    %v1955 = vunpack.c.l.b16 %v225
    %v1956 = vunpack.c.h.b16 %v225
    %v1957 = vunpack.c.l.b16 %v226
    %v1958 = vunpack.c.h.b16 %v226
    %v1959 = vunpack.c.l.b16 %v227
    %v1960 = vunpack.c.h.b16 %v227
    %v1961 = vunpack.c.l.b16 %v228
    %v1962 = vunpack.c.h.b16 %v228
    %v1963 = vunpack.c.l.b16 %v229
    %v1964 = vunpack.c.h.b16 %v229
    %v1965 = vunpack.c.l.b16 %v230
    %v1966 = vunpack.c.h.b16 %v230
    %v1967 = vunpack.c.l.b16 %v231
    %v1968 = vunpack.c.h.b16 %v231
    %v1969 = vunpack.c.l.b16 %v232
    %v1970 = vunpack.c.h.b16 %v232
    %v1971 = vunpack.c.l.b16 %v233
    %v1972 = vunpack.c.h.b16 %v233
    %v1973 = vunpack.c.l.b16 %v234
    %v1974 = vunpack.c.h.b16 %v234
    %v1975 = vunpack.c.l.b16 %v235
    %v1976 = vunpack.c.h.b16 %v235
    %v1977 = vunpack.c.l.b16 %v236
    %v1978 = vunpack.c.h.b16 %v236
    %v1979 = vunpack.c.l.b16 %v237
    %v1980 = vunpack.c.h.b16 %v237
    %v1981 = vunpack.c.l.b16 %v238
    %v1982 = vunpack.c.h.b16 %v238
    %v1983 = vunpack.c.l.b16 %v239
    %v1984 = vunpack.c.h.b16 %v239
    %v1985 = vunpack.c.l.b16 %v240
    %v1986 = vunpack.c.h.b16 %v240
    %v1987 = vunpack.c.l.b16 %v241
    %v1988 = vunpack.c.h.b16 %v241
    %v1989 = vunpack.c.l.b16 %v242
    %v1990 = vunpack.c.h.b16 %v242
    %v1991 = vunpack.c.l.b16 %v243
    %v1992 = vunpack.c.h.b16 %v243
    %v1993 = vunpack.c.l.b16 %v244
    %v1994 = vunpack.c.h.b16 %v244
    %v1995 = vunpack.c.l.b16 %v245
    %v1996 = vunpack.c.h.b16 %v245
    %v1997 = vunpack.c.l.b16 %v246
    %v1998 = vunpack.c.h.b16 %v246
    %v1999 = vunpack.c.l.b16 %v247
    %v2000 = vunpack.c.h.b16 %v247
    %v2001 = vunpack.c.l.b16 %v248
    %v2002 = vunpack.c.h.b16 %v248
    %v2003 = vunpack.c.l.b16 %v249
    %v2004 = vunpack.c.h.b16 %v249
    %v2005 = vunpack.c.l.b16 %v250
    %v2006 = vunpack.c.h.b16 %v250
    %v2007 = vunpack.c.l.b16 %v251
    %v2008 = vunpack.c.h.b16 %v251
    %v2009 = vunpack.c.l.b16 %v252
    %v2010 = vunpack.c.h.b16 %v252
    %v2011 = vunpack.c.l.b16 %v253
    %v2012 = vunpack.c.h.b16 %v253
    %v2013 = vunpack.c.l.b16 %v254
    %v2014 = vunpack.c.h.b16 %v254
    %v2015 = vunpack.c.l.b16 %v255
    %v2016 = vunpack.c.h.b16 %v255
    %v2017 = vunpack.c.l.b16 %v256
    %v2018 = vunpack.c.h.b16 %v256
    %v2019 = vunpack.c.l.b16 %v257
    %v2020 = vunpack.c.h.b16 %v257
    %v2021 = vunpack.c.l.b16 %v258
    %v2022 = vunpack.c.h.b16 %v258
    %v2023 = vunpack.c.l.b16 %v259
    %v2024 = vunpack.c.h.b16 %v259
    %v2025 = vunpack.c.l.b16 %v260
    %v2026 = vunpack.c.h.b16 %v260
    %v2027 = vunpack.c.l.b16 %v261
    %v2028 = vunpack.c.h.b16 %v261
    %v2029 = vunpack.c.l.b16 %v262
    %v2030 = vunpack.c.h.b16 %v262
    %v2031 = vunpack.c.l.b16 %v263
    %v2032 = vunpack.c.h.b16 %v263
    %v2033 = vunpack.c.l.b16 %v264
    %v2034 = vunpack.c.h.b16 %v264
    %v2035 = vunpack.c.l.b16 %v265
    %v2036 = vunpack.c.h.b16 %v265
    %v2037 = vunpack.c.l.b16 %v266
    %v2038 = vunpack.c.h.b16 %v266
    %v2039 = vunpack.c.l.b16 %v267
    %v2040 = vunpack.c.h.b16 %v267
    %v2041 = vunpack.c.l.b16 %v268
    %v2042 = vunpack.c.h.b16 %v268
    %v2043 = vunpack.c.l.b16 %v269
    %v2044 = vunpack.c.h.b16 %v269
    %v2045 = vunpack.c.l.b16 %v270
    %v2046 = vunpack.c.h.b16 %v270
    %v2047 = vunpack.c.l.b16 %v271
    %v2048 = vunpack.c.h.b16 %v271
    %v2049 = vunpack.c.l.b16 %v272
    %v2050 = vunpack.c.h.b16 %v272
    %v2051 = vunpack.c.l.b16 %v273
    %v2052 = vunpack.c.h.b16 %v273
    %v2053 = vunpack.c.l.b16 %v274
    %v2054 = vunpack.c.h.b16 %v274
    %v2055 = vunpack.c.l.b16 %v275
    %v2056 = vunpack.c.h.b16 %v275
    %v2057 = vunpack.c.l.b16 %v276
    %v2058 = vunpack.c.h.b16 %v276
    %v2059 = vunpack.c.l.b16 %v277
    %v2060 = vunpack.c.h.b16 %v277
    %v2061 = vunpack.c.l.b16 %v278
    %v2062 = vunpack.c.h.b16 %v278
    %v2063 = vunpack.c.l.b16 %v279
    %v2064 = vunpack.c.h.b16 %v279
    %v2065 = vunpack.c.l.b16 %v280
    %v2066 = vunpack.c.h.b16 %v280
    %v2067 = vunpack.c.l.b16 %v281
    %v2068 = vunpack.c.h.b16 %v281
    %v2069 = vunpack.c.l.b16 %v282
    %v2070 = vunpack.c.h.b16 %v282
    %v2071 = vunpack.c.l.b16 %v283
    %v2072 = vunpack.c.h.b16 %v283
    %v2073 = vunpack.c.l.b16 %v284
    %v2074 = vunpack.c.h.b16 %v284
    %v2075 = vunpack.c.l.b16 %v285
    %v2076 = vunpack.c.h.b16 %v285
    %v2077 = vunpack.c.l.b16 %v286
    %v2078 = vunpack.c.h.b16 %v286
    %v2079 = vunpack.c.l.b16 %v287
    %v2080 = vunpack.c.h.b16 %v287
    %v2081 = vunpack.c.l.b16 %v288
    %v2082 = vunpack.c.h.b16 %v288
    %v2083 = vunpack.c.l.b16 %v289
    %v2084 = vunpack.c.h.b16 %v289
    %v2085 = vunpack.c.l.b16 %v290
    %v2086 = vunpack.c.h.b16 %v290
    %v2087 = vunpack.c.l.b16 %v291
    %v2088 = vunpack.c.h.b16 %v291
    %v2089 = vunpack.c.l.b16 %v292
    %v2090 = vunpack.c.h.b16 %v292
    %v2091 = vunpack.c.l.b16 %v293
    %v2092 = vunpack.c.h.b16 %v293
    %v2093 = vunpack.c.l.b16 %v294
    %v2094 = vunpack.c.h.b16 %v294
    %v2095 = vunpack.c.l.b16 %v295
    %v2096 = vunpack.c.h.b16 %v295
    %v2097 = vunpack.c.l.b16 %v296
    %v2098 = vunpack.c.h.b16 %v296
    %v2099 = vunpack.c.l.b16 %v297
    %v2100 = vunpack.c.h.b16 %v297
    %v2101 = vunpack.c.l.b16 %v298
    %v2102 = vunpack.c.h.b16 %v298
    %v2103 = vunpack.c.l.b16 %v299
    %v2104 = vunpack.c.h.b16 %v299
    %v2105 = vunpack.c.l.b16 %v300
    %v2106 = vunpack.c.h.b16 %v300
    %v2107 = vunpack.c.l.b16 %v301
    %v2108 = vunpack.c.h.b16 %v301
    %v2109 = vunpack.c.l.b16 %v302
    %v2110 = vunpack.c.h.b16 %v302
    %v2111 = vunpack.c.l.b16 %v303
    %v2112 = vunpack.c.h.b16 %v303
    %v2113 = vunpack.c.l.b16 %v304
    %v2114 = vunpack.c.h.b16 %v304
    %v2115 = vunpack.c.l.b16 %v305
    %v2116 = vunpack.c.h.b16 %v305
    %v2117 = vunpack.c.l.b16 %v306
    %v2118 = vunpack.c.h.b16 %v306
    %v2119 = vunpack.c.l.b16 %v307
    %v2120 = vunpack.c.h.b16 %v307
    %v2121 = vunpack.c.l.b16 %v308
    %v2122 = vunpack.c.h.b16 %v308
    %v2123 = vunpack.c.l.b16 %v309
    %v2124 = vunpack.c.h.b16 %v309
    %v2125 = vunpack.c.l.b16 %v310
    %v2126 = vunpack.c.h.b16 %v310
    %v2127 = vunpack.c.l.b16 %v311
    %v2128 = vunpack.c.h.b16 %v311
    %v2129 = vunpack.c.l.b16 %v312
    %v2130 = vunpack.c.h.b16 %v312
    %v2131 = vunpack.c.l.b16 %v313
    %v2132 = vunpack.c.h.b16 %v313
    %v2133 = vunpack.c.l.b16 %v314
    %v2134 = vunpack.c.h.b16 %v314
    %v2135 = vunpack.c.l.b16 %v315
    %v2136 = vunpack.c.h.b16 %v315
    %v2137 = vunpack.c.l.b16 %v316
    %v2138 = vunpack.c.h.b16 %v316
    %v2139 = vunpack.c.l.b16 %v317
    %v2140 = vunpack.c.h.b16 %v317
    %v2141 = vunpack.c.l.b16 %v318
    %v2142 = vunpack.c.h.b16 %v318
    %v2143 = vunpack.c.l.b16 %v319
    %v2144 = vunpack.c.h.b16 %v319
    %v2145 = vunpack.c.l.b16 %v320
    %v2146 = vunpack.c.h.b16 %v320
    %v2147 = vunpack.c.l.b16 %v321
    %v2148 = vunpack.c.h.b16 %v321
    %v2149 = vunpack.c.l.b16 %v322
    %v2150 = vunpack.c.h.b16 %v322
    %v2151 = vunpack.c.l.b16 %v323
    %v2152 = vunpack.c.h.b16 %v323
    %v2153 = vunpack.c.l.b16 %v324
    %v2154 = vunpack.c.h.b16 %v324
    %v2155 = vunpack.c.l.b16 %v325
    %v2156 = vunpack.c.h.b16 %v325
    %v2157 = vunpack.c.l.b16 %v326
    %v2158 = vunpack.c.h.b16 %v326
    %v2159 = vunpack.c.l.b16 %v327
    %v2160 = vunpack.c.h.b16 %v327
    %v2161 = vunpack.c.l.b16 %v328
    %v2162 = vunpack.c.h.b16 %v328
    %v2163 = vunpack.c.l.b16 %v329
    %v2164 = vunpack.c.h.b16 %v329
    %v2165 = vunpack.c.l.b16 %v330
    %v2166 = vunpack.c.h.b16 %v330
    %v2167 = vunpack.c.l.b16 %v331
    %v2168 = vunpack.c.h.b16 %v331
    %v2169 = vunpack.c.l.b16 %v332
    %v2170 = vunpack.c.h.b16 %v332
    %v2171 = vunpack.c.l.b16 %v333
    %v2172 = vunpack.c.h.b16 %v333
    %v2173 = vunpack.c.l.b16 %v334
    %v2174 = vunpack.c.h.b16 %v334
    %v2175 = vunpack.c.l.b16 %v335
    %v2176 = vunpack.c.h.b16 %v335
    %v2177 = vunpack.c.l.b16 %v336
    %v2178 = vunpack.c.h.b16 %v336
    %v2179 = vunpack.c.l.b16 %v337
    %v2180 = vunpack.c.h.b16 %v337
    %v2181 = vunpack.c.l.b16 %v338
    %v2182 = vunpack.c.h.b16 %v338
    %v2183 = vunpack.c.l.b16 %v339
    %v2184 = vunpack.c.h.b16 %v339
    %v2185 = vunpack.c.l.b16 %v340
    %v2186 = vunpack.c.h.b16 %v340
    %v2187 = vunpack.c.l.b16 %v341
    %v2188 = vunpack.c.h.b16 %v341
    %v2189 = vunpack.c.l.b16 %v342
    %v2190 = vunpack.c.h.b16 %v342
    %v2191 = vunpack.c.l.b16 %v343
    %v2192 = vunpack.c.h.b16 %v343
    %v2193 = vunpack.c.l.b16 %v344
    %v2194 = vunpack.c.h.b16 %v344
    %v2195 = vunpack.c.l.b16 %v345
    %v2196 = vunpack.c.h.b16 %v345
    %v2197 = vunpack.c.l.b16 %v346
    %v2198 = vunpack.c.h.b16 %v346
    %v2199 = vunpack.c.l.b16 %v347
    %v2200 = vunpack.c.h.b16 %v347
    %v2201 = vunpack.c.l.b16 %v348
    %v2202 = vunpack.c.h.b16 %v348
    %v2203 = vunpack.c.l.b16 %v349
    %v2204 = vunpack.c.h.b16 %v349
    %v2205 = vunpack.c.l.b16 %v350
    %v2206 = vunpack.c.h.b16 %v350
    %v2207 = vunpack.c.l.b16 %v351
    %v2208 = vunpack.c.h.b16 %v351
    %v2209 = vunpack.c.l.b16 %v352
    %v2210 = vunpack.c.h.b16 %v352
    %v2211 = vunpack.c.l.b16 %v353
    %v2212 = vunpack.c.h.b16 %v353
    %v2213 = vunpack.c.l.b16 %v354
    %v2214 = vunpack.c.h.b16 %v354
    %v2215 = vunpack.c.l.b16 %v355
    %v2216 = vunpack.c.h.b16 %v355
    %v2217 = vunpack.c.l.b16 %v356
    %v2218 = vunpack.c.h.b16 %v356
    %v2219 = vunpack.c.l.b16 %v357
    %v2220 = vunpack.c.h.b16 %v357
    %v2221 = vunpack.c.l.b16 %v358
    %v2222 = vunpack.c.h.b16 %v358
    %v2223 = vunpack.c.l.b16 %v359
    %v2224 = vunpack.c.h.b16 %v359
    %v2225 = vunpack.c.l.b16 %v360
    %v2226 = vunpack.c.h.b16 %v360
    %v2227 = vunpack.c.l.b16 %v361
    %v2228 = vunpack.c.h.b16 %v361
    %v2229 = vunpack.c.l.b16 %v362
    %v2230 = vunpack.c.h.b16 %v362
    %v2231 = vunpack.c.l.b16 %v363
    %v2232 = vunpack.c.h.b16 %v363
    %v2233 = vunpack.c.l.b16 %v364
    %v2234 = vunpack.c.h.b16 %v364
    %v2235 = vunpack.c.l.b16 %v365
    %v2236 = vunpack.c.h.b16 %v365
    %v2237 = vunpack.c.l.b16 %v366
    %v2238 = vunpack.c.h.b16 %v366
    %v2239 = vunpack.c.l.b16 %v367
    %v2240 = vunpack.c.h.b16 %v367
    %v2241 = vunpack.c.l.b16 %v368
    %v2242 = vunpack.c.h.b16 %v368
    %v2243 = vunpack.c.l.b16 %v369
    %v2244 = vunpack.c.h.b16 %v369
    %v2245 = vunpack.c.l.b16 %v370
    %v2246 = vunpack.c.h.b16 %v370
    %v2247 = vunpack.c.l.b16 %v371
    %v2248 = vunpack.c.h.b16 %v371
    %v2249 = vunpack.c.l.b16 %v372
    %v2250 = vunpack.c.h.b16 %v372
    %v2251 = vunpack.c.l.b16 %v373
    %v2252 = vunpack.c.h.b16 %v373
    %v2253 = vunpack.c.l.b16 %v374
    %v2254 = vunpack.c.h.b16 %v374
    %v2255 = vunpack.c.l.b16 %v375
    %v2256 = vunpack.c.h.b16 %v375
    %v2257 = vunpack.c.l.b16 %v376
    %v2258 = vunpack.c.h.b16 %v376
    %v2259 = vunpack.c.l.b16 %v377
    %v2260 = vunpack.c.h.b16 %v377
    %v2261 = vunpack.c.l.b16 %v378
    %v2262 = vunpack.c.h.b16 %v378
    %v2263 = vunpack.c.l.b16 %v379
    %v2264 = vunpack.c.h.b16 %v379
    %v2265 = vunpack.c.l.b16 %v380
    %v2266 = vunpack.c.h.b16 %v380
    %v2267 = vunpack.c.l.b16 %v381
    %v2268 = vunpack.c.h.b16 %v381
    %v2269 = vunpack.c.l.b16 %v382
    %v2270 = vunpack.c.h.b16 %v382
    %v2271 = vunpack.c.l.b16 %v383
    %v2272 = vunpack.c.h.b16 %v383
    %v2273 = vunpack.c.l.b16 %v384
    %v2274 = vunpack.c.h.b16 %v384
    %v2275 = vunpack.c.l.b16 %v385
    %v2276 = vunpack.c.h.b16 %v385
    %v2277 = vunpack.c.l.b16 %v386
    %v2278 = vunpack.c.h.b16 %v386
    %v2279 = vunpack.c.l.b16 %v387
    %v2280 = vunpack.c.h.b16 %v387
    %v2281 = vunpack.c.l.b16 %v388
    %v2282 = vunpack.c.h.b16 %v388
    %v2283 = vunpack.c.l.b16 %v389
    %v2284 = vunpack.c.h.b16 %v389
    %v2285 = vunpack.c.l.b16 %v390
    %v2286 = vunpack.c.h.b16 %v390
    %v2287 = vunpack.c.l.b16 %v391
    %v2288 = vunpack.c.h.b16 %v391
    %v2289 = vunpack.c.l.b16 %v392
    %v2290 = vunpack.c.h.b16 %v392
    %v2291 = vunpack.c.l.b16 %v393
    %v2292 = vunpack.c.h.b16 %v393
    %v2293 = vunpack.c.l.b16 %v394
    %v2294 = vunpack.c.h.b16 %v394
    %v2295 = vunpack.c.l.b16 %v395
    %v2296 = vunpack.c.h.b16 %v395
    %v2297 = vunpack.c.l.b16 %v396
    %v2298 = vunpack.c.h.b16 %v396
    %v2299 = vunpack.c.l.b16 %v397
    %v2300 = vunpack.c.h.b16 %v397
    %v2301 = vunpack.c.l.b16 %v398
    %v2302 = vunpack.c.h.b16 %v398
    %v2303 = vunpack.c.l.b16 %v399
    %v2304 = vunpack.c.h.b16 %v399
    %v2305 = vunpack.c.l.b16 %v400
    %v2306 = vunpack.c.h.b16 %v400
    %v2307 = vunpack.c.l.b16 %v401
    %v2308 = vunpack.c.h.b16 %v401
    %v2309 = vunpack.c.l.b16 %v402
    %v2310 = vunpack.c.h.b16 %v402
    %v2311 = vunpack.c.l.b16 %v403
    %v2312 = vunpack.c.h.b16 %v403
    %v2313 = vunpack.c.l.b16 %v404
    %v2314 = vunpack.c.h.b16 %v404
    %v2315 = vunpack.c.l.b16 %v405
    %v2316 = vunpack.c.h.b16 %v405
    %v2317 = vunpack.c.l.b16 %v406
    %v2318 = vunpack.c.h.b16 %v406
    %v2319 = vunpack.c.l.b16 %v407
    %v2320 = vunpack.c.h.b16 %v407
    %v2321 = vunpack.c.l.b16 %v408
    %v2322 = vunpack.c.h.b16 %v408
    %v2323 = vunpack.c.l.b16 %v409
    %v2324 = vunpack.c.h.b16 %v409
    %v2325 = vunpack.c.l.b16 %v410
    %v2326 = vunpack.c.h.b16 %v410
    %v2327 = vunpack.c.l.b16 %v411
    %v2328 = vunpack.c.h.b16 %v411
    %v2329 = vunpack.c.l.b16 %v412
    %v2330 = vunpack.c.h.b16 %v412
    %v2331 = vunpack.c.l.b16 %v413
    %v2332 = vunpack.c.h.b16 %v413
    %v2333 = vunpack.c.l.b16 %v414
    %v2334 = vunpack.c.h.b16 %v414
    %v2335 = vunpack.c.l.b16 %v415
    %v2336 = vunpack.c.h.b16 %v415
    %v2337 = vunpack.c.l.b16 %v416
    %v2338 = vunpack.c.h.b16 %v416
    %v2339 = vunpack.c.l.b16 %v417
    %v2340 = vunpack.c.h.b16 %v417
    %v2341 = vunpack.c.l.b16 %v418
    %v2342 = vunpack.c.h.b16 %v418
    %v2343 = vunpack.c.l.b16 %v419
    %v2344 = vunpack.c.h.b16 %v419
    %v2345 = vunpack.c.l.b16 %v420
    %v2346 = vunpack.c.h.b16 %v420
    %v2347 = vunpack.c.l.b16 %v421
    %v2348 = vunpack.c.h.b16 %v421
    %v2349 = vunpack.c.l.b16 %v422
    %v2350 = vunpack.c.h.b16 %v422
    %v2351 = vunpack.c.l.b16 %v423
    %v2352 = vunpack.c.h.b16 %v423
    %v2353 = vunpack.c.l.b16 %v424
    %v2354 = vunpack.c.h.b16 %v424
    %v2355 = vunpack.c.l.b16 %v425
    %v2356 = vunpack.c.h.b16 %v425
    %v2357 = vunpack.c.l.b16 %v426
    %v2358 = vunpack.c.h.b16 %v426
    %v2359 = vunpack.c.l.b16 %v427
    %v2360 = vunpack.c.h.b16 %v427
    %v2361 = vunpack.c.l.b16 %v428
    %v2362 = vunpack.c.h.b16 %v428
    %v2363 = vunpack.c.l.b16 %v429
    %v2364 = vunpack.c.h.b16 %v429
    %v2365 = vunpack.c.l.b16 %v430
    %v2366 = vunpack.c.h.b16 %v430
    %v2367 = vunpack.c.l.b16 %v431
    %v2368 = vunpack.c.h.b16 %v431
    %v2369 = vunpack.c.l.b16 %v432
    %v2370 = vunpack.c.h.b16 %v432
    %v2371 = vunpack.c.l.b16 %v433
    %v2372 = vunpack.c.h.b16 %v433
    %v2373 = vunpack.c.l.b16 %v434
    %v2374 = vunpack.c.h.b16 %v434
    %v2375 = vunpack.c.l.b16 %v435
    %v2376 = vunpack.c.h.b16 %v435
    %v2377 = vunpack.c.l.b16 %v436
    %v2378 = vunpack.c.h.b16 %v436
    %v2379 = vunpack.c.l.b16 %v437
    %v2380 = vunpack.c.h.b16 %v437
    %v2381 = vunpack.c.l.b16 %v438
    %v2382 = vunpack.c.h.b16 %v438
    %v2383 = vunpack.c.l.b16 %v439
    %v2384 = vunpack.c.h.b16 %v439
    %v2385 = vunpack.c.l.b16 %v440
    %v2386 = vunpack.c.h.b16 %v440
    %v2387 = vunpack.c.l.b16 %v441
    %v2388 = vunpack.c.h.b16 %v441
    %v2389 = vunpack.c.l.b16 %v442
    %v2390 = vunpack.c.h.b16 %v442
    %v2391 = vunpack.c.l.b16 %v443
    %v2392 = vunpack.c.h.b16 %v443
    %v2393 = vunpack.c.l.b16 %v444
    %v2394 = vunpack.c.h.b16 %v444
    %v2395 = vunpack.c.l.b16 %v445
    %v2396 = vunpack.c.h.b16 %v445
    %v2397 = vunpack.c.l.b16 %v446
    %v2398 = vunpack.c.h.b16 %v446
    %v2399 = vunpack.c.l.b16 %v447
    %v2400 = vunpack.c.h.b16 %v447
    %v2401 = vunpack.c.l.b16 %v448
    %v2402 = vunpack.c.h.b16 %v448
    %v2403 = vunpack.c.l.b16 %v449
    %v2404 = vunpack.c.h.b16 %v449
    %v2405 = vunpack.c.l.b16 %v450
    %v2406 = vunpack.c.h.b16 %v450
    %v2407 = vunpack.c.l.b16 %v451
    %v2408 = vunpack.c.h.b16 %v451
    %v2409 = vunpack.c.l.b16 %v452
    %v2410 = vunpack.c.h.b16 %v452
    %v2411 = vunpack.c.l.b16 %v453
    %v2412 = vunpack.c.h.b16 %v453
    %v2413 = vunpack.c.l.b16 %v454
    %v2414 = vunpack.c.h.b16 %v454
    %v2415 = vunpack.c.l.b16 %v455
    %v2416 = vunpack.c.h.b16 %v455
    %v2417 = vunpack.c.l.b16 %v456
    %v2418 = vunpack.c.h.b16 %v456
    %v2419 = vunpack.c.l.b16 %v457
    %v2420 = vunpack.c.h.b16 %v457
    %v2421 = vunpack.c.l.b16 %v458
    %v2422 = vunpack.c.h.b16 %v458
    %v2423 = vunpack.c.l.b16 %v459
    %v2424 = vunpack.c.h.b16 %v459
    %v2425 = vunpack.c.l.b16 %v460
    %v2426 = vunpack.c.h.b16 %v460
    %v2427 = vunpack.c.l.b16 %v461
    %v2428 = vunpack.c.h.b16 %v461
    %v2429 = vunpack.c.l.b16 %v462
    %v2430 = vunpack.c.h.b16 %v462
    %v2431 = vunpack.c.l.b16 %v463
    %v2432 = vunpack.c.h.b16 %v463
    %v2433 = vunpack.c.l.b16 %v464
    %v2434 = vunpack.c.h.b16 %v464
    %v2435 = vunpack.c.l.b16 %v465
    %v2436 = vunpack.c.h.b16 %v465
    %v2437 = vunpack.c.l.b16 %v466
    %v2438 = vunpack.c.h.b16 %v466
    %v2439 = vunpack.c.l.b16 %v467
    %v2440 = vunpack.c.h.b16 %v467
    %v2441 = vunpack.c.l.b16 %v468
    %v2442 = vunpack.c.h.b16 %v468
    %v2443 = vunpack.c.l.b16 %v469
    %v2444 = vunpack.c.h.b16 %v469
    %v2445 = vunpack.c.l.b16 %v470
    %v2446 = vunpack.c.h.b16 %v470
    %v2447 = vunpack.c.l.b16 %v471
    %v2448 = vunpack.c.h.b16 %v471
    %v2449 = vunpack.c.l.b16 %v472
    %v2450 = vunpack.c.h.b16 %v472
    %v2451 = vunpack.c.l.b16 %v473
    %v2452 = vunpack.c.h.b16 %v473
    %v2453 = vunpack.c.l.b16 %v474
    %v2454 = vunpack.c.h.b16 %v474
    %v2455 = vunpack.c.l.b16 %v475
    %v2456 = vunpack.c.h.b16 %v475
    %v2457 = vunpack.c.l.b16 %v476
    %v2458 = vunpack.c.h.b16 %v476
    %v2459 = vunpack.c.l.b16 %v477
    %v2460 = vunpack.c.h.b16 %v477
    %v2461 = vunpack.c.l.b16 %v478
    %v2462 = vunpack.c.h.b16 %v478
    %v2463 = vunpack.c.l.b16 %v479
    %v2464 = vunpack.c.h.b16 %v479
    %v2465 = vunpack.c.l.b16 %v480
    %v2466 = vunpack.c.h.b16 %v480
    %v2467 = vunpack.c.l.b16 %v481
    %v2468 = vunpack.c.h.b16 %v481
    %v2469 = vunpack.c.l.b16 %v482
    %v2470 = vunpack.c.h.b16 %v482
    %v2471 = vunpack.c.l.b16 %v483
    %v2472 = vunpack.c.h.b16 %v483
    %v2473 = vunpack.c.l.b16 %v484
    %v2474 = vunpack.c.h.b16 %v484
    %v2475 = vunpack.c.l.b16 %v485
    %v2476 = vunpack.c.h.b16 %v485
    %v2477 = vunpack.c.l.b16 %v486
    %v2478 = vunpack.c.h.b16 %v486
    %v2479 = vunpack.c.l.b16 %v487
    %v2480 = vunpack.c.h.b16 %v487
    %v2481 = vunpack.c.l.b16 %v488
    %v2482 = vunpack.c.h.b16 %v488
    %v2483 = vunpack.c.l.b16 %v489
    %v2484 = vunpack.c.h.b16 %v489
    %v2485 = vunpack.c.l.b16 %v490
    %v2486 = vunpack.c.h.b16 %v490
    %v2487 = vunpack.c.l.b16 %v491
    %v2488 = vunpack.c.h.b16 %v491
    %v2489 = vunpack.c.l.b16 %v492
    %v2490 = vunpack.c.h.b16 %v492
    %v2491 = vunpack.c.l.b16 %v493
    %v2492 = vunpack.c.h.b16 %v493
    %v2493 = vunpack.c.l.b16 %v494
    %v2494 = vunpack.c.h.b16 %v494
    %v2495 = vunpack.c.l.b16 %v495
    %v2496 = vunpack.c.h.b16 %v495
    %v2497 = vunpack.c.l.b16 %v496
    %v2498 = vunpack.c.h.b16 %v496
    %v2499 = vunpack.c.l.b16 %v497
    %v2500 = vunpack.c.h.b16 %v497
    %v2501 = vunpack.c.l.b16 %v498
    %v2502 = vunpack.c.h.b16 %v498
    %v2503 = vunpack.c.l.b16 %v499
    %v2504 = vunpack.c.h.b16 %v499
    %v2505 = vunpack.c.l.b16 %v500
    %v2506 = vunpack.c.h.b16 %v500
    %v2507 = vunpack.c.l.b16 %v501
    %v2508 = vunpack.c.h.b16 %v501
    %v2509 = vunpack.c.l.b16 %v502
    %v2510 = vunpack.c.h.b16 %v502
    %v2511 = vunpack.c.l.b16 %v503
    %v2512 = vunpack.c.h.b16 %v503
    %v2513 = vunpack.c.l.b16 %v504
    %v2514 = vunpack.c.h.b16 %v504
    %v2515 = vunpack.c.l.b16 %v505
    %v2516 = vunpack.c.h.b16 %v505
    %v2517 = vunpack.c.l.b16 %v506
    %v2518 = vunpack.c.h.b16 %v506
    %v2519 = vunpack.c.l.b16 %v507
    %v2520 = vunpack.c.h.b16 %v507
    %v2521 = vunpack.c.l.b16 %v508
    %v2522 = vunpack.c.h.b16 %v508
    %v2523 = vunpack.c.l.b16 %v509
    %v2524 = vunpack.c.h.b16 %v509
    %v2525 = vunpack.c.l.b16 %v510
    %v2526 = vunpack.c.h.b16 %v510
    %v2527 = vunpack.c.l.b16 %v511
    %v2528 = vunpack.c.h.b16 %v511
    %v2529 = vunpack.c.l.b16 %v512
    %v2530 = vunpack.c.h.b16 %v512
    %v2531 = vunpack.c.l.b16 %v513
    %v2532 = vunpack.c.h.b16 %v513
    %v2533 = vunpack.c.l.b16 %v514
    %v2534 = vunpack.c.h.b16 %v514
    %v2535 = vunpack.c.l.b16 %v515
    %v2536 = vunpack.c.h.b16 %v515
    %v2537 = vunpack.c.l.b16 %v516
    %v2538 = vunpack.c.h.b16 %v516
    %v2539 = vunpack.c.l.b16 %v517
    %v2540 = vunpack.c.h.b16 %v517
    %v2541 = vunpack.c.l.b16 %v518
    %v2542 = vunpack.c.h.b16 %v518
    %v2543 = vunpack.c.l.b16 %v519
    %v2544 = vunpack.c.h.b16 %v519
    %v2545 = vunpack.c.l.b16 %v520
    %v2546 = vunpack.c.h.b16 %v520
    %v2547 = vunpack.c.l.b16 %v521
    %v2548 = vunpack.c.h.b16 %v521
    %v2549 = vunpack.c.l.b16 %v522
    %v2550 = vunpack.c.h.b16 %v522
    %v2551 = vunpack.c.l.b16 %v523
    %v2552 = vunpack.c.h.b16 %v523
    %v2553 = vunpack.c.l.b16 %v524
    %v2554 = vunpack.c.h.b16 %v524
    %v2555 = vunpack.c.l.b16 %v525
    %v2556 = vunpack.c.h.b16 %v525
    %v2557 = vunpack.c.l.b16 %v526
    %v2558 = vunpack.c.h.b16 %v526
    %v2559 = vunpack.c.l.b16 %v527
    %v2560 = vunpack.c.h.b16 %v527
    %v2561 = vunpack.c.l.b16 %v528
    %v2562 = vunpack.c.h.b16 %v528
    %v2563 = vunpack.c.l.b16 %v529
    %v2564 = vunpack.c.h.b16 %v529
    %v2565 = vunpack.c.l.b16 %v530
    %v2566 = vunpack.c.h.b16 %v530
    %v2567 = vunpack.c.l.b16 %v531
    %v2568 = vunpack.c.h.b16 %v531
    %v2569 = vunpack.c.l.b16 %v532
    %v2570 = vunpack.c.h.b16 %v532
    %v2571 = vunpack.c.l.b16 %v533
    %v2572 = vunpack.c.h.b16 %v533
    %v2573 = vunpack.c.l.b16 %v534
    %v2574 = vunpack.c.h.b16 %v534
    %v2575 = vunpack.c.l.b16 %v535
    %v2576 = vunpack.c.h.b16 %v535
    %v2577 = vunpack.c.l.b16 %v536
    %v2578 = vunpack.c.h.b16 %v536
    %v2579 = vunpack.c.l.b16 %v537
    %v2580 = vunpack.c.h.b16 %v537
    %v2581 = vunpack.c.l.b16 %v538
    %v2582 = vunpack.c.h.b16 %v538
    %v2583 = vunpack.c.l.b16 %v539
    %v2584 = vunpack.c.h.b16 %v539
    %v2585 = vunpack.c.l.b16 %v540
    %v2586 = vunpack.c.h.b16 %v540
    %v2587 = vunpack.c.l.b16 %v541
    %v2588 = vunpack.c.h.b16 %v541
    %v2589 = vunpack.c.l.b16 %v542
    %v2590 = vunpack.c.h.b16 %v542
    %v2591 = vunpack.c.l.b16 %v543
    %v2592 = vunpack.c.h.b16 %v543
    %v2593 = vunpack.c.l.b16 %v544
    %v2594 = vunpack.c.h.b16 %v544
    %v2595 = vunpack.c.l.b16 %v545
    %v2596 = vunpack.c.h.b16 %v545
    %v2597 = vunpack.c.l.b16 %v546
    %v2598 = vunpack.c.h.b16 %v546
    %v2599 = vunpack.c.l.b16 %v547
    %v2600 = vunpack.c.h.b16 %v547
    %v2601 = vunpack.c.l.b16 %v548
    %v2602 = vunpack.c.h.b16 %v548
    %v2603 = vunpack.c.l.b16 %v549
    %v2604 = vunpack.c.h.b16 %v549
    %v2605 = vunpack.c.l.b16 %v550
    %v2606 = vunpack.c.h.b16 %v550
    %v2607 = vunpack.c.l.b16 %v551
    %v2608 = vunpack.c.h.b16 %v551
    %v2609 = vunpack.c.l.b16 %v552
    %v2610 = vunpack.c.h.b16 %v552
    %v2611 = vunpack.c.l.b16 %v553
    %v2612 = vunpack.c.h.b16 %v553
    %v2613 = vunpack.c.l.b16 %v554
    %v2614 = vunpack.c.h.b16 %v554
    %v2615 = vunpack.c.l.b16 %v555
    %v2616 = vunpack.c.h.b16 %v555
    %v2617 = vunpack.c.l.b16 %v556
    %v2618 = vunpack.c.h.b16 %v556
    %v2619 = vunpack.c.l.b16 %v557
    %v2620 = vunpack.c.h.b16 %v557
    %v2621 = vunpack.c.l.b16 %v558
    %v2622 = vunpack.c.h.b16 %v558
    %v2623 = vunpack.c.l.b16 %v559
    %v2624 = vunpack.c.h.b16 %v559
    %v2625 = vunpack.c.l.b16 %v560
    %v2626 = vunpack.c.h.b16 %v560
    %v2627 = vunpack.c.l.b16 %v561
    %v2628 = vunpack.c.h.b16 %v561
    %v2629 = vunpack.c.l.b16 %v562
    %v2630 = vunpack.c.h.b16 %v562
    %v2631 = vunpack.c.l.b16 %v563
    %v2632 = vunpack.c.h.b16 %v563
    %v2633 = vunpack.c.l.b16 %v564
    %v2634 = vunpack.c.h.b16 %v564
    %v2635 = vunpack.c.l.b16 %v565
    %v2636 = vunpack.c.h.b16 %v565
    %v2637 = vunpack.c.l.b16 %v566
    %v2638 = vunpack.c.h.b16 %v566
    %v2639 = vunpack.c.l.b16 %v567
    %v2640 = vunpack.c.h.b16 %v567
    %v2641 = vunpack.c.l.b16 %v568
    %v2642 = vunpack.c.h.b16 %v568
    %v2643 = vunpack.c.l.b16 %v569
    %v2644 = vunpack.c.h.b16 %v569
    %v2645 = vunpack.c.l.b16 %v570
    %v2646 = vunpack.c.h.b16 %v570
    %v2647 = vunpack.c.l.b16 %v571
    %v2648 = vunpack.c.h.b16 %v571
    %v2649 = vunpack.c.l.b16 %v572
    %v2650 = vunpack.c.h.b16 %v572
    %v2651 = vunpack.c.l.b16 %v573
    %v2652 = vunpack.c.h.b16 %v573
    %v2653 = vunpack.c.l.b16 %v574
    %v2654 = vunpack.c.h.b16 %v574
    %v2655 = vunpack.c.l.b16 %v575
    %v2656 = vunpack.c.h.b16 %v575
    %v2657 = vunpack.c.l.b16 %v576
    %v2658 = vunpack.c.h.b16 %v576
    %v2659 = vunpack.c.l.b16 %v577
    %v2660 = vunpack.c.h.b16 %v577
    %v2661 = vunpack.c.l.b16 %v578
    %v2662 = vunpack.c.h.b16 %v578
    %v2663 = vunpack.c.l.b16 %v579
    %v2664 = vunpack.c.h.b16 %v579
    %v2665 = vunpack.c.l.b16 %v580
    %v2666 = vunpack.c.h.b16 %v580
    %v2667 = vunpack.c.l.b16 %v581
    %v2668 = vunpack.c.h.b16 %v581
    %v2669 = vunpack.c.l.b16 %v582
    %v2670 = vunpack.c.h.b16 %v582
    %v2671 = vunpack.c.l.b16 %v583
    %v2672 = vunpack.c.h.b16 %v583
    %v2673 = vunpack.c.l.b16 %v584
    %v2674 = vunpack.c.h.b16 %v584
    %v2675 = vunpack.c.l.b16 %v585
    %v2676 = vunpack.c.h.b16 %v585
    %v2677 = vunpack.c.l.b16 %v586
    %v2678 = vunpack.c.h.b16 %v586
    %v2679 = vunpack.c.l.b16 %v587
    %v2680 = vunpack.c.h.b16 %v587
    %v2681 = vunpack.c.l.b16 %v588
    %v2682 = vunpack.c.h.b16 %v588
    %v2683 = vunpack.c.l.b16 %v589
    %v2684 = vunpack.c.h.b16 %v589
    %v2685 = vunpack.c.l.b16 %v590
    %v2686 = vunpack.c.h.b16 %v590
    %v2687 = vunpack.c.l.b16 %v591
    %v2688 = vunpack.c.h.b16 %v591
    %v2689 = vunpack.c.l.b16 %v592
    %v2690 = vunpack.c.h.b16 %v592
    %v2691 = vunpack.c.l.b16 %v593
    %v2692 = vunpack.c.h.b16 %v593
    %v2693 = vunpack.c.l.b16 %v594
    %v2694 = vunpack.c.h.b16 %v594
    %v2695 = vunpack.c.l.b16 %v595
    %v2696 = vunpack.c.h.b16 %v595
    %v2697 = vunpack.c.l.b16 %v596
    %v2698 = vunpack.c.h.b16 %v596
    %v2699 = vunpack.c.l.b16 %v597
    %v2700 = vunpack.c.h.b16 %v597
    %v2701 = vunpack.c.l.b16 %v598
    %v2702 = vunpack.c.h.b16 %v598
    %v2703 = vunpack.c.l.b16 %v599
    %v2704 = vunpack.c.h.b16 %v599
    %v2705 = vunpack.c.l.b16 %v600
    %v2706 = vunpack.c.h.b16 %v600
    %v2707 = vunpack.c.l.b16 %v601
    %v2708 = vunpack.c.h.b16 %v601
    %v2709 = vunpack.c.l.b16 %v602
    %v2710 = vunpack.c.h.b16 %v602
    %v2711 = vunpack.c.l.b16 %v603
    %v2712 = vunpack.c.h.b16 %v603
    %v2713 = vunpack.c.l.b16 %v604
    %v2714 = vunpack.c.h.b16 %v604
    %v2715 = vunpack.c.l.b16 %v605
    %v2716 = vunpack.c.h.b16 %v605
    %v2717 = vunpack.c.l.b16 %v606
    %v2718 = vunpack.c.h.b16 %v606
    %v2719 = vunpack.c.l.b16 %v607
    %v2720 = vunpack.c.h.b16 %v607
    %v2721 = vunpack.c.l.b16 %v608
    %v2722 = vunpack.c.h.b16 %v608
    %v2723 = vunpack.c.l.b16 %v609
    %v2724 = vunpack.c.h.b16 %v609
    %v2725 = vunpack.c.l.b16 %v610
    %v2726 = vunpack.c.h.b16 %v610
    %v2727 = vunpack.c.l.b16 %v611
    %v2728 = vunpack.c.h.b16 %v611
    %v2729 = vunpack.c.l.b16 %v612
    %v2730 = vunpack.c.h.b16 %v612
    %v2731 = vunpack.c.l.b16 %v613
    %v2732 = vunpack.c.h.b16 %v613
    %v2733 = vunpack.c.l.b16 %v614
    %v2734 = vunpack.c.h.b16 %v614
    %v2735 = vunpack.c.l.b16 %v615
    %v2736 = vunpack.c.h.b16 %v615
    %v2737 = vunpack.c.l.b16 %v616
    %v2738 = vunpack.c.h.b16 %v616
    %v2739 = vunpack.c.l.b16 %v617
    %v2740 = vunpack.c.h.b16 %v617
    %v2741 = vunpack.c.l.b16 %v618
    %v2742 = vunpack.c.h.b16 %v618
    %v2743 = vunpack.c.l.b16 %v619
    %v2744 = vunpack.c.h.b16 %v619
    %v2745 = vunpack.c.l.b16 %v620
    %v2746 = vunpack.c.h.b16 %v620
    %v2747 = vunpack.c.l.b16 %v621
    %v2748 = vunpack.c.h.b16 %v621
    %v2749 = vunpack.c.l.b16 %v622
    %v2750 = vunpack.c.h.b16 %v622
    %v2751 = vunpack.c.l.b16 %v623
    %v2752 = vunpack.c.h.b16 %v623
    %v2753 = vunpack.c.l.b16 %v624
    %v2754 = vunpack.c.h.b16 %v624
    %v2755 = vunpack.c.l.b16 %v625
    %v2756 = vunpack.c.h.b16 %v625
    %v2757 = vunpack.c.l.b16 %v626
    %v2758 = vunpack.c.h.b16 %v626
    %v2759 = vunpack.c.l.b16 %v627
    %v2760 = vunpack.c.h.b16 %v627
    %v2761 = vunpack.c.l.b16 %v628
    %v2762 = vunpack.c.h.b16 %v628
    %v2763 = vunpack.c.l.b16 %v629
    %v2764 = vunpack.c.h.b16 %v629
    %v2765 = vunpack.c.l.b16 %v630
    %v2766 = vunpack.c.h.b16 %v630
    %v2767 = vunpack.c.l.b16 %v631
    %v2768 = vunpack.c.h.b16 %v631
    %v2769 = vunpack.c.l.b16 %v632
    %v2770 = vunpack.c.h.b16 %v632
    %v2771 = vunpack.c.l.b16 %v633
    %v2772 = vunpack.c.h.b16 %v633
    %v2773 = vunpack.c.l.b16 %v634
    %v2774 = vunpack.c.h.b16 %v634
    %v2775 = vunpack.c.l.b16 %v635
    %v2776 = vunpack.c.h.b16 %v635
    %v2777 = vunpack.c.l.b16 %v636
    %v2778 = vunpack.c.h.b16 %v636
    %v2779 = vunpack.c.l.b16 %v637
    %v2780 = vunpack.c.h.b16 %v637
    %v2781 = vunpack.c.l.b16 %v638
    %v2782 = vunpack.c.h.b16 %v638
    %v2783 = vunpack.c.l.b16 %v639
    %v2784 = vunpack.c.h.b16 %v639
    %v2785 = vunpack.c.l.b16 %v640
    %v2786 = vunpack.c.h.b16 %v640
    %v2787 = vunpack.c.l.b16 %v641
    %v2788 = vunpack.c.h.b16 %v641
    %v2789 = vunpack.c.l.b16 %v642
    %v2790 = vunpack.c.h.b16 %v642
    %v2791 = vunpack.c.l.b16 %v643
    %v2792 = vunpack.c.h.b16 %v643
    %v2793 = vunpack.c.l.b16 %v644
    %v2794 = vunpack.c.h.b16 %v644
    %v2795 = vunpack.c.l.b16 %v645
    %v2796 = vunpack.c.h.b16 %v645
    %v2797 = vunpack.c.l.b16 %v646
    %v2798 = vunpack.c.h.b16 %v646
    %v2799 = vunpack.c.l.b16 %v647
    %v2800 = vunpack.c.h.b16 %v647
    %v2801 = vunpack.c.l.b16 %v648
    %v2802 = vunpack.c.h.b16 %v648
    %v2803 = vunpack.c.l.b16 %v649
    %v2804 = vunpack.c.h.b16 %v649
    %v2805 = vunpack.c.l.b16 %v650
    %v2806 = vunpack.c.h.b16 %v650
    %v2807 = vunpack.c.l.b16 %v651
    %v2808 = vunpack.c.h.b16 %v651
    %v2809 = vunpack.c.l.b16 %v652
    %v2810 = vunpack.c.h.b16 %v652
    %v2811 = vunpack.c.l.b16 %v653
    %v2812 = vunpack.c.h.b16 %v653
    %v2813 = vunpack.c.l.b16 %v654
    %v2814 = vunpack.c.h.b16 %v654
    %v2815 = vunpack.c.l.b16 %v655
    %v2816 = vunpack.c.h.b16 %v655
    %v2817 = vunpack.c.l.b16 %v656
    %v2818 = vunpack.c.h.b16 %v656
    %v2819 = vunpack.c.l.b16 %v657
    %v2820 = vunpack.c.h.b16 %v657
    %v2821 = vunpack.c.l.b16 %v658
    %v2822 = vunpack.c.h.b16 %v658
    %v2823 = vunpack.c.l.b16 %v659
    %v2824 = vunpack.c.h.b16 %v659
    %v2825 = vunpack.c.l.b16 %v660
    %v2826 = vunpack.c.h.b16 %v660
    %v2827 = vunpack.c.l.b16 %v661
    %v2828 = vunpack.c.h.b16 %v661
    %v2829 = vunpack.c.l.b16 %v662
    %v2830 = vunpack.c.h.b16 %v662
    %v2831 = vunpack.c.l.b16 %v663
    %v2832 = vunpack.c.h.b16 %v663
    %v2833 = vunpack.c.l.b16 %v664
    %v2834 = vunpack.c.h.b16 %v664
    %v2835 = vunpack.c.l.b16 %v665
    %v2836 = vunpack.c.h.b16 %v665
    %v2837 = vunpack.c.l.b16 %v666
    %v2838 = vunpack.c.h.b16 %v666
    %v2839 = vunpack.c.l.b16 %v667
    %v2840 = vunpack.c.h.b16 %v667
    %v2841 = vunpack.c.l.b16 %v668
    %v2842 = vunpack.c.h.b16 %v668
    %v2843 = vunpack.c.l.b16 %v669
    %v2844 = vunpack.c.h.b16 %v669
    %v2845 = vunpack.c.l.b16 %v670
    %v2846 = vunpack.c.h.b16 %v670
    %v2847 = vunpack.c.l.b16 %v671
    %v2848 = vunpack.c.h.b16 %v671
    %v2849 = vunpack.c.l.b16 %v672
    %v2850 = vunpack.c.h.b16 %v672
    %v2851 = vunpack.c.l.b16 %v673
    %v2852 = vunpack.c.h.b16 %v673
    %v2853 = vunpack.c.l.b16 %v674
    %v2854 = vunpack.c.h.b16 %v674
    %v2855 = vunpack.c.l.b16 %v675
    %v2856 = vunpack.c.h.b16 %v675
    %v2857 = vunpack.c.l.b16 %v676
    %v2858 = vunpack.c.h.b16 %v676
    %v2859 = vunpack.c.l.b16 %v677
    %v2860 = vunpack.c.h.b16 %v677
    %v2861 = vunpack.c.l.b16 %v678
    %v2862 = vunpack.c.h.b16 %v678
    %v2863 = vunpack.c.l.b16 %v679
    %v2864 = vunpack.c.h.b16 %v679
    %v2865 = vunpack.c.l.b16 %v680
    %v2866 = vunpack.c.h.b16 %v680
    %v2867 = vunpack.c.l.b16 %v681
    %v2868 = vunpack.c.h.b16 %v681
    %v2869 = vunpack.c.l.b16 %v682
    %v2870 = vunpack.c.h.b16 %v682
    %v2871 = vunpack.c.l.b16 %v683
    %v2872 = vunpack.c.h.b16 %v683
    %v2873 = vunpack.c.l.b16 %v684
    %v2874 = vunpack.c.h.b16 %v684
    %v2875 = vunpack.c.l.b16 %v685
    %v2876 = vunpack.c.h.b16 %v685
    %v2877 = vunpack.c.l.b16 %v686
    %v2878 = vunpack.c.h.b16 %v686
    %v2879 = vunpack.c.l.b16 %v687
    %v2880 = vunpack.c.h.b16 %v687
    %v2881 = vunpack.c.l.b16 %v688
    %v2882 = vunpack.c.h.b16 %v688
    %v2883 = vunpack.c.l.b16 %v689
    %v2884 = vunpack.c.h.b16 %v689
    %v2885 = vunpack.c.l.b16 %v690
    %v2886 = vunpack.c.h.b16 %v690
    %v2887 = vunpack.c.l.b16 %v691
    %v2888 = vunpack.c.h.b16 %v691
    %v2889 = vunpack.c.l.b16 %v692
    %v2890 = vunpack.c.h.b16 %v692
    %v2891 = vunpack.c.l.b16 %v693
    %v2892 = vunpack.c.h.b16 %v693
    %v2893 = vunpack.c.l.b16 %v694
    %v2894 = vunpack.c.h.b16 %v694
    %v2895 = vunpack.c.l.b16 %v695
    %v2896 = vunpack.c.h.b16 %v695
    %v2897 = vunpack.c.l.b16 %v696
    %v2898 = vunpack.c.h.b16 %v696
    %v2899 = vunpack.c.l.b16 %v697
    %v2900 = vunpack.c.h.b16 %v697
    %v2901 = vunpack.c.l.b16 %v698
    %v2902 = vunpack.c.h.b16 %v698
    %v2903 = vunpack.c.l.b16 %v699
    %v2904 = vunpack.c.h.b16 %v699
    %v2905 = vunpack.c.l.b16 %v700
    %v2906 = vunpack.c.h.b16 %v700
    %v2907 = vunpack.c.l.b16 %v701
    %v2908 = vunpack.c.h.b16 %v701
    %v2909 = vunpack.c.l.b16 %v702
    %v2910 = vunpack.c.h.b16 %v702
    %v2911 = vunpack.c.l.b16 %v703
    %v2912 = vunpack.c.h.b16 %v703
    %v2913 = vunpack.c.l.b16 %v704
    %v2914 = vunpack.c.h.b16 %v704
    %v2915 = vunpack.c.l.b16 %v705
    %v2916 = vunpack.c.h.b16 %v705
    %v2917 = vunpack.c.l.b16 %v706
    %v2918 = vunpack.c.h.b16 %v706
    %v2919 = vunpack.c.l.b16 %v707
    %v2920 = vunpack.c.h.b16 %v707
    %v2921 = vunpack.c.l.b16 %v708
    %v2922 = vunpack.c.h.b16 %v708
    %v2923 = vunpack.c.l.b16 %v709
    %v2924 = vunpack.c.h.b16 %v709
    %v2925 = vunpack.c.l.b16 %v710
    %v2926 = vunpack.c.h.b16 %v710
    %v2927 = vunpack.c.l.b16 %v711
    %v2928 = vunpack.c.h.b16 %v711
    %v2929 = vunpack.c.l.b16 %v712
    %v2930 = vunpack.c.h.b16 %v712
    %v2931 = vunpack.c.l.b16 %v713
    %v2932 = vunpack.c.h.b16 %v713
    %v2933 = vunpack.c.l.b16 %v714
    %v2934 = vunpack.c.h.b16 %v714
    %v2935 = vunpack.c.l.b16 %v715
    %v2936 = vunpack.c.h.b16 %v715
    %v2937 = vunpack.c.l.b16 %v716
    %v2938 = vunpack.c.h.b16 %v716
    %v2939 = vunpack.c.l.b16 %v717
    %v2940 = vunpack.c.h.b16 %v717
    %v2941 = vunpack.c.l.b16 %v718
    %v2942 = vunpack.c.h.b16 %v718
    %v2943 = vunpack.c.l.b16 %v719
    %v2944 = vunpack.c.h.b16 %v719
    %v2945 = vunpack.c.l.b16 %v720
    %v2946 = vunpack.c.h.b16 %v720
    %v2947 = vunpack.c.l.b16 %v721
    %v2948 = vunpack.c.h.b16 %v721
    %v2949 = vunpack.c.l.b16 %v722
    %v2950 = vunpack.c.h.b16 %v722
    %v2951 = vunpack.c.l.b16 %v723
    %v2952 = vunpack.c.h.b16 %v723
    %v2953 = vunpack.c.l.b16 %v724
    %v2954 = vunpack.c.h.b16 %v724
    %v2955 = vunpack.c.l.b16 %v725
    %v2956 = vunpack.c.h.b16 %v725
    %v2957 = vunpack.c.l.b16 %v726
    %v2958 = vunpack.c.h.b16 %v726
    %v2959 = vunpack.c.l.b16 %v727
    %v2960 = vunpack.c.h.b16 %v727
    %v2961 = vunpack.c.l.b16 %v728
    %v2962 = vunpack.c.h.b16 %v728
    %v2963 = vunpack.c.l.b16 %v729
    %v2964 = vunpack.c.h.b16 %v729
    %v2965 = vunpack.c.l.b16 %v730
    %v2966 = vunpack.c.h.b16 %v730
    %v2967 = vunpack.c.l.b16 %v731
    %v2968 = vunpack.c.h.b16 %v731
    %v2969 = vunpack.c.l.b16 %v732
    %v2970 = vunpack.c.h.b16 %v732
    %v2971 = vunpack.c.l.b16 %v733
    %v2972 = vunpack.c.h.b16 %v733
    %v2973 = vunpack.c.l.b16 %v734
    %v2974 = vunpack.c.h.b16 %v734
    %v2975 = vunpack.c.l.b16 %v735
    %v2976 = vunpack.c.h.b16 %v735
    %v2977 = vunpack.c.l.b16 %v736
    %v2978 = vunpack.c.h.b16 %v736
    %v2979 = vunpack.c.l.b16 %v737
    %v2980 = vunpack.c.h.b16 %v737
    %v2981 = vunpack.c.l.b16 %v738
    %v2982 = vunpack.c.h.b16 %v738
    %v2983 = vunpack.c.l.b16 %v739
    %v2984 = vunpack.c.h.b16 %v739
    %v2985 = vunpack.c.l.b16 %v740
    %v2986 = vunpack.c.h.b16 %v740
    %v2987 = vunpack.c.l.b16 %v741
    %v2988 = vunpack.c.h.b16 %v741
    %v2989 = vunpack.c.l.b16 %v742
    %v2990 = vunpack.c.h.b16 %v742
    %v2991 = vunpack.c.l.b16 %v743
    %v2992 = vunpack.c.h.b16 %v743
    %v2993 = vunpack.c.l.b16 %v744
    %v2994 = vunpack.c.h.b16 %v744
    %v2995 = vunpack.c.l.b16 %v745
    %v2996 = vunpack.c.h.b16 %v745
    %v2997 = vunpack.c.l.b16 %v746
    %v2998 = vunpack.c.h.b16 %v746
    %v2999 = vunpack.c.l.b16 %v747
    %v3000 = vunpack.c.h.b16 %v747
    %v3001 = vunpack.c.l.b16 %v748
    %v3002 = vunpack.c.h.b16 %v748
    %v3003 = vunpack.c.l.b16 %v749
    %v3004 = vunpack.c.h.b16 %v749
    %v3005 = vunpack.c.l.b16 %v750
    %v3006 = vunpack.c.h.b16 %v750
    %v3007 = vunpack.c.l.b16 %v751
    %v3008 = vunpack.c.h.b16 %v751
    %v3009 = vunpack.c.l.b16 %v752
    %v3010 = vunpack.c.h.b16 %v752
    %v3011 = vunpack.c.l.b16 %v753
    %v3012 = vunpack.c.h.b16 %v753
    %v3013 = vunpack.c.l.b16 %v754
    %v3014 = vunpack.c.h.b16 %v754
    %v3015 = vunpack.c.l.b16 %v755
    %v3016 = vunpack.c.h.b16 %v755
    %v3017 = vunpack.c.l.b16 %v756
    %v3018 = vunpack.c.h.b16 %v756
    %v3019 = vunpack.c.l.b16 %v757
    %v3020 = vunpack.c.h.b16 %v757
    %v3021 = vunpack.c.l.b16 %v758
    %v3022 = vunpack.c.h.b16 %v758
    %v3023 = vunpack.c.l.b16 %v759
    %v3024 = vunpack.c.h.b16 %v759
    %v3025 = vunpack.c.l.b16 %v760
    %v3026 = vunpack.c.h.b16 %v760
    %v3027 = vunpack.c.l.b16 %v761
    %v3028 = vunpack.c.h.b16 %v761
    %v3029 = vunpack.c.l.b16 %v762
    %v3030 = vunpack.c.h.b16 %v762
    %v3031 = vunpack.c.l.b16 %v763
    %v3032 = vunpack.c.h.b16 %v763
    %v3033 = vunpack.c.l.b16 %v764
    %v3034 = vunpack.c.h.b16 %v764
    %v3035 = vunpack.c.l.b16 %v765
    %v3036 = vunpack.c.h.b16 %v765
    %v3037 = vunpack.c.l.b16 %v766
    %v3038 = vunpack.c.h.b16 %v766
    %v3039 = vunpack.c.l.b16 %v767
    %v3040 = vunpack.c.h.b16 %v767
    %v3041 = vunpack.c.l.b16 %v768
    %v3042 = vunpack.c.h.b16 %v768
    %v3043 = vunpack.c.l.b16 %v769
    %v3044 = vunpack.c.h.b16 %v769
    %v3045 = vunpack.c.l.b16 %v770
    %v3046 = vunpack.c.h.b16 %v770
    %v3047 = vunpack.c.l.b16 %v771
    %v3048 = vunpack.c.h.b16 %v771
    %v3049 = vunpack.c.l.b16 %v772
    %v3050 = vunpack.c.h.b16 %v772
    %v3051 = vunpack.c.l.b16 %v773
    %v3052 = vunpack.c.h.b16 %v773
    %v3053 = vunpack.c.l.b16 %v774
    %v3054 = vunpack.c.h.b16 %v774
    %v3055 = vunpack.c.l.b16 %v775
    %v3056 = vunpack.c.h.b16 %v775
    %v3057 = vunpack.c.l.b16 %v776
    %v3058 = vunpack.c.h.b16 %v776
    %v3059 = vunpack.c.l.b16 %v777
    %v3060 = vunpack.c.h.b16 %v777
    %v3061 = vunpack.c.l.b16 %v778
    %v3062 = vunpack.c.h.b16 %v778
    %v3063 = vunpack.c.l.b16 %v779
    %v3064 = vunpack.c.h.b16 %v779
    %v3065 = vunpack.c.l.b16 %v780
    %v3066 = vunpack.c.h.b16 %v780
    %v3067 = vunpack.c.l.b16 %v781
    %v3068 = vunpack.c.h.b16 %v781
    %v3069 = vunpack.c.l.b16 %v782
    %v3070 = vunpack.c.h.b16 %v782
    %v3071 = vunpack.c.l.b16 %v783
    %v3072 = vunpack.c.h.b16 %v783
    %v3073 = vunpack.c.l.b16 %v784
    %v3074 = vunpack.c.h.b16 %v784
    %v3075 = vunpack.c.l.b16 %v785
    %v3076 = vunpack.c.h.b16 %v785
    %v3077 = vunpack.c.l.b16 %v786
    %v3078 = vunpack.c.h.b16 %v786
    %v3079 = vunpack.c.l.b16 %v787
    %v3080 = vunpack.c.h.b16 %v787
    %v3081 = vunpack.c.l.b16 %v788
    %v3082 = vunpack.c.h.b16 %v788
    %v3083 = vunpack.c.l.b16 %v789
    %v3084 = vunpack.c.h.b16 %v789
    %v3085 = vunpack.c.l.b16 %v790
    %v3086 = vunpack.c.h.b16 %v790
    %v3087 = vunpack.c.l.b16 %v791
    %v3088 = vunpack.c.h.b16 %v791
    %v3089 = vunpack.c.l.b16 %v792
    %v3090 = vunpack.c.h.b16 %v792
    %v3091 = vunpack.c.l.b16 %v793
    %v3092 = vunpack.c.h.b16 %v793
    %v3093 = vunpack.c.l.b16 %v794
    %v3094 = vunpack.c.h.b16 %v794
    %v3095 = vunpack.c.l.b16 %v795
    %v3096 = vunpack.c.h.b16 %v795
    %v3097 = vunpack.c.l.b16 %v796
    %v3098 = vunpack.c.h.b16 %v796
    %v3099 = vunpack.c.l.b16 %v797
    %v3100 = vunpack.c.h.b16 %v797
    %v3101 = vunpack.c.l.b16 %v798
    %v3102 = vunpack.c.h.b16 %v798
    %v3103 = vunpack.c.l.b16 %v799
    %v3104 = vunpack.c.h.b16 %v799
    %v3105 = vunpack.c.l.b16 %v800
    %v3106 = vunpack.c.h.b16 %v800
    %v3107 = vunpack.c.l.b16 %v801
    %v3108 = vunpack.c.h.b16 %v801
    %v3109 = vunpack.c.l.b16 %v802
    %v3110 = vunpack.c.h.b16 %v802
    %v3111 = vunpack.c.l.b16 %v803
    %v3112 = vunpack.c.h.b16 %v803
    %v3113 = vunpack.c.l.b16 %v804
    %v3114 = vunpack.c.h.b16 %v804
    %v3115 = vunpack.c.l.b16 %v805
    %v3116 = vunpack.c.h.b16 %v805
    %v3117 = vunpack.c.l.b16 %v806
    %v3118 = vunpack.c.h.b16 %v806
    %v3119 = vunpack.c.l.b16 %v807
    %v3120 = vunpack.c.h.b16 %v807
    %v3121 = vunpack.c.l.b16 %v808
    %v3122 = vunpack.c.h.b16 %v808
    %v3123 = vunpack.c.l.b16 %v809
    %v3124 = vunpack.c.h.b16 %v809
    %v3125 = vunpack.c.l.b16 %v810
    %v3126 = vunpack.c.h.b16 %v810
    %v3127 = vunpack.c.l.b16 %v811
    %v3128 = vunpack.c.h.b16 %v811
    %v3129 = vunpack.c.l.b16 %v812
    %v3130 = vunpack.c.h.b16 %v812
    %v3131 = vunpack.c.l.b16 %v813
    %v3132 = vunpack.c.h.b16 %v813
    %v3133 = vunpack.c.l.b16 %v814
    %v3134 = vunpack.c.h.b16 %v814
    %v3135 = vunpack.c.l.b16 %v815
    %v3136 = vunpack.c.h.b16 %v815
    %v3137 = vunpack.c.l.b16 %v816
    %v3138 = vunpack.c.h.b16 %v816
    %v3139 = vunpack.c.l.b16 %v817
    %v3140 = vunpack.c.h.b16 %v817
    %v3141 = vunpack.c.l.b16 %v818
    %v3142 = vunpack.c.h.b16 %v818
    %v3143 = vunpack.c.l.b16 %v819
    %v3144 = vunpack.c.h.b16 %v819
    %v3145 = vunpack.c.l.b16 %v820
    %v3146 = vunpack.c.h.b16 %v820
    %v3147 = vunpack.c.l.b16 %v821
    %v3148 = vunpack.c.h.b16 %v821
    %v3149 = vunpack.c.l.b16 %v822
    %v3150 = vunpack.c.h.b16 %v822
    %v3151 = vunpack.c.l.b16 %v823
    %v3152 = vunpack.c.h.b16 %v823
    %v3153 = vunpack.c.l.b16 %v824
    %v3154 = vunpack.c.h.b16 %v824
    %v3155 = vunpack.c.l.b16 %v825
    %v3156 = vunpack.c.h.b16 %v825
    %v3157 = vunpack.c.l.b16 %v826
    %v3158 = vunpack.c.h.b16 %v826
    %v3159 = vunpack.c.l.b16 %v827
    %v3160 = vunpack.c.h.b16 %v827
    %v3161 = vunpack.c.l.b16 %v828
    %v3162 = vunpack.c.h.b16 %v828
    %v3163 = vunpack.c.l.b16 %v829
    %v3164 = vunpack.c.h.b16 %v829
    %v3165 = vunpack.c.l.b16 %v830
    %v3166 = vunpack.c.h.b16 %v830
    %v3167 = vunpack.c.l.b16 %v831
    %v3168 = vunpack.c.h.b16 %v831
    %v3169 = vunpack.c.l.b16 %v832
    %v3170 = vunpack.c.h.b16 %v832
    %v3171 = vunpack.c.l.b16 %v833
    %v3172 = vunpack.c.h.b16 %v833
    %v3173 = vunpack.c.l.b16 %v834
    %v3174 = vunpack.c.h.b16 %v834
    %v3175 = vunpack.c.l.b16 %v835
    %v3176 = vunpack.c.h.b16 %v835
    %v3177 = vunpack.c.l.b16 %v836
    %v3178 = vunpack.c.h.b16 %v836
    %v3179 = vunpack.c.l.b16 %v837
    %v3180 = vunpack.c.h.b16 %v837
    %v3181 = vunpack.c.l.b16 %v838
    %v3182 = vunpack.c.h.b16 %v838
    %v3183 = vunpack.c.l.b16 %v839
    %v3184 = vunpack.c.h.b16 %v839
    %v3185 = vunpack.c.l.b16 %v840
    %v3186 = vunpack.c.h.b16 %v840
    %v3187 = vunpack.c.l.b16 %v841
    %v3188 = vunpack.c.h.b16 %v841
    %v3189 = vunpack.c.l.b16 %v842
    %v3190 = vunpack.c.h.b16 %v842
    %v3191 = vunpack.c.l.b16 %v843
    %v3192 = vunpack.c.h.b16 %v843
    %v3193 = vunpack.c.l.b16 %v844
    %v3194 = vunpack.c.h.b16 %v844
    %v3195 = vunpack.c.l.b16 %v845
    %v3196 = vunpack.c.h.b16 %v845
    %v3197 = vunpack.c.l.b16 %v846
    %v3198 = vunpack.c.h.b16 %v846
    %v3199 = vunpack.c.l.b16 %v847
    %v3200 = vunpack.c.h.b16 %v847
    %v3201 = vunpack.c.l.b16 %v848
    %v3202 = vunpack.c.h.b16 %v848
    %v3203 = vunpack.c.l.b16 %v849
    %v3204 = vunpack.c.h.b16 %v849
    %v3205 = vunpack.c.l.b16 %v850
    %v3206 = vunpack.c.h.b16 %v850
    %v3207 = vunpack.c.l.b16 %v851
    %v3208 = vunpack.c.h.b16 %v851
    %v3209 = vunpack.c.l.b16 %v852
    %v3210 = vunpack.c.h.b16 %v852
    %v3211 = vunpack.c.l.b16 %v853
    %v3212 = vunpack.c.h.b16 %v853
    %v3213 = vunpack.c.l.b16 %v854
    %v3214 = vunpack.c.h.b16 %v854
    %v3215 = vunpack.c.l.b16 %v855
    %v3216 = vunpack.c.h.b16 %v855
    %v3217 = vunpack.c.l.b16 %v856
    %v3218 = vunpack.c.h.b16 %v856
    %v3219 = vunpack.c.l.b16 %v857
    %v3220 = vunpack.c.h.b16 %v857
    %v3221 = vunpack.c.l.b16 %v858
    %v3222 = vunpack.c.h.b16 %v858
    %v3223 = vunpack.c.l.b16 %v859
    %v3224 = vunpack.c.h.b16 %v859
    %v3225 = vunpack.c.l.b16 %v860
    %v3226 = vunpack.c.h.b16 %v860
    %v3227 = vunpack.c.l.b16 %v861
    %v3228 = vunpack.c.h.b16 %v861
    %v3229 = vunpack.c.l.b16 %v862
    %v3230 = vunpack.c.h.b16 %v862
    %v3231 = vunpack.c.l.b16 %v863
    %v3232 = vunpack.c.h.b16 %v863
    %v3233 = vunpack.c.l.b16 %v864
    %v3234 = vunpack.c.h.b16 %v864
    %v3235 = vunpack.c.l.b16 %v865
    %v3236 = vunpack.c.h.b16 %v865
    %v3237 = vunpack.c.l.b16 %v866
    %v3238 = vunpack.c.h.b16 %v866
    %v3239 = vunpack.c.l.b16 %v867
    %v3240 = vunpack.c.h.b16 %v867
    %v3241 = vunpack.c.l.b16 %v868
    %v3242 = vunpack.c.h.b16 %v868
    %v3243 = vunpack.c.l.b16 %v869
    %v3244 = vunpack.c.h.b16 %v869
    %v3245 = vunpack.c.l.b16 %v870
    %v3246 = vunpack.c.h.b16 %v870
    %v3247 = vunpack.c.l.b16 %v871
    %v3248 = vunpack.c.h.b16 %v871
    %v3249 = vunpack.c.l.b16 %v872
    %v3250 = vunpack.c.h.b16 %v872
    %v3251 = vunpack.c.l.b16 %v873
    %v3252 = vunpack.c.h.b16 %v873
    %v3253 = vunpack.c.l.b16 %v874
    %v3254 = vunpack.c.h.b16 %v874
    %v3255 = vunpack.c.l.b16 %v875
    %v3256 = vunpack.c.h.b16 %v875
    %v3257 = vunpack.c.l.b16 %v876
    %v3258 = vunpack.c.h.b16 %v876
    %v3259 = vunpack.c.l.b16 %v877
    %v3260 = vunpack.c.h.b16 %v877
    %v3261 = vunpack.c.l.b16 %v878
    %v3262 = vunpack.c.h.b16 %v878
    %v3263 = vunpack.c.l.b16 %v879
    %v3264 = vunpack.c.h.b16 %v879
    %v3265 = vunpack.c.l.b16 %v880
    %v3266 = vunpack.c.h.b16 %v880
    %v3267 = vunpack.c.l.b16 %v881
    %v3268 = vunpack.c.h.b16 %v881
    %v3269 = vunpack.c.l.b16 %v882
    %v3270 = vunpack.c.h.b16 %v882
    %v3271 = vunpack.c.l.b16 %v883
    %v3272 = vunpack.c.h.b16 %v883
    %v3273 = vunpack.c.l.b16 %v884
    %v3274 = vunpack.c.h.b16 %v884
    %v3275 = vunpack.c.l.b16 %v885
    %v3276 = vunpack.c.h.b16 %v885
    %v3277 = vunpack.c.l.b16 %v886
    %v3278 = vunpack.c.h.b16 %v886
    %v3279 = vunpack.c.l.b16 %v887
    %v3280 = vunpack.c.h.b16 %v887
    %v3281 = vunpack.c.l.b16 %v888
    %v3282 = vunpack.c.h.b16 %v888
    %v3283 = vunpack.c.l.b16 %v889
    %v3284 = vunpack.c.h.b16 %v889
    %v3285 = vunpack.c.l.b16 %v890
    %v3286 = vunpack.c.h.b16 %v890
    %v3287 = vunpack.c.l.b16 %v891
    %v3288 = vunpack.c.h.b16 %v891
    %v3289 = vunpack.c.l.b16 %v892
    %v3290 = vunpack.c.h.b16 %v892
    %v3291 = vpack.c.b16 %v1761, %v1755
    %v3292 = vpack.c.b16 %v1762, %v1756
    %v3293 = vpack.c.b16 %v1763, %v1757
    %v3294 = vpack.c.b16 %v1764, %v1758
    %v3295 = vpack.c.b16 %v1765, %v1759
    %v3296 = vpack.c.b16 %v1766, %v1760
    %v3297 = vpack.c.b16 %v1773, %v1767
    %v3298 = vpack.c.b16 %v1774, %v1768
    %v3299 = vpack.c.b16 %v1775, %v1769
    %v3300 = vpack.c.b16 %v1776, %v1770
    %v3301 = vpack.c.b16 %v1777, %v1771
    %v3302 = vpack.c.b16 %v1778, %v1772
    %v3303 = vpack.c.b16 %v1785, %v1779
    %v3304 = vpack.c.b16 %v1786, %v1780
    %v3305 = vpack.c.b16 %v1787, %v1781
    %v3306 = vpack.c.b16 %v1788, %v1782
    %v3307 = vpack.c.b16 %v1789, %v1783
    %v3308 = vpack.c.b16 %v1790, %v1784
    %v3309 = vpack.c.b16 %v1797, %v1791
    %v3310 = vpack.c.b16 %v1798, %v1792
    %v3311 = vpack.c.b16 %v1799, %v1793
    %v3312 = vpack.c.b16 %v1800, %v1794
    %v3313 = vpack.c.b16 %v1801, %v1795
    %v3314 = vpack.c.b16 %v1802, %v1796
    %v3315 = vpack.c.b16 %v1809, %v1803
    %v3316 = vpack.c.b16 %v1810, %v1804
    %v3317 = vpack.c.b16 %v1811, %v1805
    %v3318 = vpack.c.b16 %v1812, %v1806
    %v3319 = vpack.c.b16 %v1813, %v1807
    %v3320 = vpack.c.b16 %v1814, %v1808
    %v3321 = vpack.c.b16 %v1821, %v1815
    %v3322 = vpack.c.b16 %v1822, %v1816
    %v3323 = vpack.c.b16 %v1823, %v1817
    %v3324 = vpack.c.b16 %v1824, %v1818
    %v3325 = vpack.c.b16 %v1825, %v1819
    %v3326 = vpack.c.b16 %v1826, %v1820
    %v3327 = vpack.c.b16 %v1833, %v1827
    %v3328 = vpack.c.b16 %v1834, %v1828
    %v3329 = vpack.c.b16 %v1835, %v1829
    %v3330 = vpack.c.b16 %v1836, %v1830
    %v3331 = vpack.c.b16 %v1837, %v1831
    %v3332 = vpack.c.b16 %v1838, %v1832
    %v3333 = vpack.c.b16 %v1845, %v1839
    %v3334 = vpack.c.b16 %v1846, %v1840
    %v3335 = vpack.c.b16 %v1847, %v1841
    %v3336 = vpack.c.b16 %v1848, %v1842
    %v3337 = vpack.c.b16 %v1849, %v1843
    %v3338 = vpack.c.b16 %v1850, %v1844
    %v3339 = vpack.c.b16 %v1857, %v1851
    %v3340 = vpack.c.b16 %v1858, %v1852
    %v3341 = vpack.c.b16 %v1859, %v1853
    %v3342 = vpack.c.b16 %v1860, %v1854
    %v3343 = vpack.c.b16 %v1861, %v1855
    %v3344 = vpack.c.b16 %v1862, %v1856
    %v3345 = vpack.c.b16 %v1869, %v1863
    %v3346 = vpack.c.b16 %v1870, %v1864
    %v3347 = vpack.c.b16 %v1871, %v1865
    %v3348 = vpack.c.b16 %v1872, %v1866
    %v3349 = vpack.c.b16 %v1873, %v1867
    %v3350 = vpack.c.b16 %v1874, %v1868
    %v3351 = vpack.c.b16 %v1881, %v1875
    %v3352 = vpack.c.b16 %v1882, %v1876
    %v3353 = vpack.c.b16 %v1883, %v1877
    %v3354 = vpack.c.b16 %v1884, %v1878
    %v3355 = vpack.c.b16 %v1885, %v1879
    %v3356 = vpack.c.b16 %v1886, %v1880
    %v3357 = vpack.c.b16 %v1893, %v1887
    %v3358 = vpack.c.b16 %v1894, %v1888
    %v3359 = vpack.c.b16 %v1895, %v1889
    %v3360 = vpack.c.b16 %v1896, %v1890
    %v3361 = vpack.c.b16 %v1897, %v1891
    %v3362 = vpack.c.b16 %v1898, %v1892
    %v3363 = vpack.c.b16 %v1905, %v1899
    %v3364 = vpack.c.b16 %v1906, %v1900
    %v3365 = vpack.c.b16 %v1907, %v1901
    %v3366 = vpack.c.b16 %v1908, %v1902
    %v3367 = vpack.c.b16 %v1909, %v1903
    %v3368 = vpack.c.b16 %v1910, %v1904
    %v3369 = vpack.c.b16 %v1917, %v1911
    %v3370 = vpack.c.b16 %v1918, %v1912
    %v3371 = vpack.c.b16 %v1919, %v1913
    %v3372 = vpack.c.b16 %v1920, %v1914
    %v3373 = vpack.c.b16 %v1921, %v1915
    %v3374 = vpack.c.b16 %v1922, %v1916
    %v3375 = vpack.c.b16 %v1929, %v1923
    %v3376 = vpack.c.b16 %v1930, %v1924
    %v3377 = vpack.c.b16 %v1931, %v1925
    %v3378 = vpack.c.b16 %v1932, %v1926
    %v3379 = vpack.c.b16 %v1933, %v1927
    %v3380 = vpack.c.b16 %v1934, %v1928
    %v3381 = vpack.c.b16 %v1941, %v1935
    %v3382 = vpack.c.b16 %v1942, %v1936
    %v3383 = vpack.c.b16 %v1943, %v1937
    %v3384 = vpack.c.b16 %v1944, %v1938
    %v3385 = vpack.c.b16 %v1945, %v1939
    %v3386 = vpack.c.b16 %v1946, %v1940
    %v3387 = vpack.c.b16 %v1953, %v1947
    %v3388 = vpack.c.b16 %v1954, %v1948
    %v3389 = vpack.c.b16 %v1955, %v1949
    %v3390 = vpack.c.b16 %v1956, %v1950
    %v3391 = vpack.c.b16 %v1957, %v1951
    %v3392 = vpack.c.b16 %v1958, %v1952
    %v3393 = vpack.c.b16 %v1965, %v1959
    %v3394 = vpack.c.b16 %v1966, %v1960
    %v3395 = vpack.c.b16 %v1967, %v1961
    %v3396 = vpack.c.b16 %v1968, %v1962
    %v3397 = vpack.c.b16 %v1969, %v1963
    %v3398 = vpack.c.b16 %v1970, %v1964
    %v3399 = vpack.c.b16 %v1977, %v1971
    %v3400 = vpack.c.b16 %v1978, %v1972
    %v3401 = vpack.c.b16 %v1979, %v1973
    %v3402 = vpack.c.b16 %v1980, %v1974
    %v3403 = vpack.c.b16 %v1981, %v1975
    %v3404 = vpack.c.b16 %v1982, %v1976
    %v3405 = vpack.c.b16 %v1989, %v1983
    %v3406 = vpack.c.b16 %v1990, %v1984
    %v3407 = vpack.c.b16 %v1991, %v1985
    %v3408 = vpack.c.b16 %v1992, %v1986
    %v3409 = vpack.c.b16 %v1993, %v1987
    %v3410 = vpack.c.b16 %v1994, %v1988
    %v3411 = vpack.c.b16 %v2001, %v1995
    %v3412 = vpack.c.b16 %v2002, %v1996
    %v3413 = vpack.c.b16 %v2003, %v1997
    %v3414 = vpack.c.b16 %v2004, %v1998
    %v3415 = vpack.c.b16 %v2005, %v1999
    %v3416 = vpack.c.b16 %v2006, %v2000
    %v3417 = vpack.c.b16 %v2013, %v2007
    %v3418 = vpack.c.b16 %v2014, %v2008
    %v3419 = vpack.c.b16 %v2015, %v2009
    %v3420 = vpack.c.b16 %v2016, %v2010
    %v3421 = vpack.c.b16 %v2017, %v2011
    %v3422 = vpack.c.b16 %v2018, %v2012
    %v3423 = vpack.c.b16 %v2025, %v2019
    %v3424 = vpack.c.b16 %v2026, %v2020
    %v3425 = vpack.c.b16 %v2027, %v2021
    %v3426 = vpack.c.b16 %v2028, %v2022
    %v3427 = vpack.c.b16 %v2029, %v2023
    %v3428 = vpack.c.b16 %v2030, %v2024
    %v3429 = vpack.c.b16 %v2037, %v2031
    %v3430 = vpack.c.b16 %v2038, %v2032
    %v3431 = vpack.c.b16 %v2039, %v2033
    %v3432 = vpack.c.b16 %v2040, %v2034
    %v3433 = vpack.c.b16 %v2041, %v2035
    %v3434 = vpack.c.b16 %v2042, %v2036
    %v3435 = vpack.c.b16 %v2049, %v2043
    %v3436 = vpack.c.b16 %v2050, %v2044
    %v3437 = vpack.c.b16 %v2051, %v2045
    %v3438 = vpack.c.b16 %v2052, %v2046
    %v3439 = vpack.c.b16 %v2053, %v2047
    %v3440 = vpack.c.b16 %v2054, %v2048
    %v3441 = vpack.c.b16 %v2061, %v2055
    %v3442 = vpack.c.b16 %v2062, %v2056
    %v3443 = vpack.c.b16 %v2063, %v2057
    %v3444 = vpack.c.b16 %v2064, %v2058
    %v3445 = vpack.c.b16 %v2065, %v2059
    %v3446 = vpack.c.b16 %v2066, %v2060
    %v3447 = vpack.c.b16 %v2073, %v2067
    %v3448 = vpack.c.b16 %v2074, %v2068
    %v3449 = vpack.c.b16 %v2075, %v2069
    %v3450 = vpack.c.b16 %v2076, %v2070
    %v3451 = vpack.c.b16 %v2077, %v2071
    %v3452 = vpack.c.b16 %v2078, %v2072
    %v3453 = vpack.c.b16 %v2085, %v2079
    %v3454 = vpack.c.b16 %v2086, %v2080
    %v3455 = vpack.c.b16 %v2087, %v2081
    %v3456 = vpack.c.b16 %v2088, %v2082
    %v3457 = vpack.c.b16 %v2089, %v2083
    %v3458 = vpack.c.b16 %v2090, %v2084
    %v3459 = vpack.c.b16 %v2097, %v2091
    %v3460 = vpack.c.b16 %v2098, %v2092
    %v3461 = vpack.c.b16 %v2099, %v2093
    %v3462 = vpack.c.b16 %v2100, %v2094
    %v3463 = vpack.c.b16 %v2101, %v2095
    %v3464 = vpack.c.b16 %v2102, %v2096
    %v3465 = vpack.c.b16 %v2109, %v2103
    %v3466 = vpack.c.b16 %v2110, %v2104
    %v3467 = vpack.c.b16 %v2111, %v2105
    %v3468 = vpack.c.b16 %v2112, %v2106
    %v3469 = vpack.c.b16 %v2113, %v2107
    %v3470 = vpack.c.b16 %v2114, %v2108
    %v3471 = vpack.c.b16 %v2121, %v2115
    %v3472 = vpack.c.b16 %v2122, %v2116
    %v3473 = vpack.c.b16 %v2123, %v2117
    %v3474 = vpack.c.b16 %v2124, %v2118
    %v3475 = vpack.c.b16 %v2125, %v2119
    %v3476 = vpack.c.b16 %v2126, %v2120
    %v3477 = vpack.c.b16 %v2133, %v2127
    %v3478 = vpack.c.b16 %v2134, %v2128
    %v3479 = vpack.c.b16 %v2135, %v2129
    %v3480 = vpack.c.b16 %v2136, %v2130
    %v3481 = vpack.c.b16 %v2137, %v2131
    %v3482 = vpack.c.b16 %v2138, %v2132
    %v3483 = vpack.c.b16 %v2145, %v2139
    %v3484 = vpack.c.b16 %v2146, %v2140
    %v3485 = vpack.c.b16 %v2147, %v2141
    %v3486 = vpack.c.b16 %v2148, %v2142
    %v3487 = vpack.c.b16 %v2149, %v2143
    %v3488 = vpack.c.b16 %v2150, %v2144
    %v3489 = vpack.c.b16 %v2157, %v2151
    %v3490 = vpack.c.b16 %v2158, %v2152
    %v3491 = vpack.c.b16 %v2159, %v2153
    %v3492 = vpack.c.b16 %v2160, %v2154
    %v3493 = vpack.c.b16 %v2161, %v2155
    %v3494 = vpack.c.b16 %v2162, %v2156
    %v3495 = vpack.c.b16 %v2169, %v2163
    %v3496 = vpack.c.b16 %v2170, %v2164
    %v3497 = vpack.c.b16 %v2171, %v2165
    %v3498 = vpack.c.b16 %v2172, %v2166
    %v3499 = vpack.c.b16 %v2173, %v2167
    %v3500 = vpack.c.b16 %v2174, %v2168
    %v3501 = vpack.c.b16 %v2181, %v2175
    %v3502 = vpack.c.b16 %v2182, %v2176
    %v3503 = vpack.c.b16 %v2183, %v2177
    %v3504 = vpack.c.b16 %v2184, %v2178
    %v3505 = vpack.c.b16 %v2185, %v2179
    %v3506 = vpack.c.b16 %v2186, %v2180
    %v3507 = vpack.c.b16 %v2193, %v2187
    %v3508 = vpack.c.b16 %v2194, %v2188
    %v3509 = vpack.c.b16 %v2195, %v2189
    %v3510 = vpack.c.b16 %v2196, %v2190
    %v3511 = vpack.c.b16 %v2197, %v2191
    %v3512 = vpack.c.b16 %v2198, %v2192
    %v3513 = vpack.c.b16 %v2205, %v2199
    %v3514 = vpack.c.b16 %v2206, %v2200
    %v3515 = vpack.c.b16 %v2207, %v2201
    %v3516 = vpack.c.b16 %v2208, %v2202
    %v3517 = vpack.c.b16 %v2209, %v2203
    %v3518 = vpack.c.b16 %v2210, %v2204
    %v3519 = vpack.c.b16 %v2217, %v2211
    %v3520 = vpack.c.b16 %v2218, %v2212
    %v3521 = vpack.c.b16 %v2219, %v2213
    %v3522 = vpack.c.b16 %v2220, %v2214
    %v3523 = vpack.c.b16 %v2221, %v2215
    %v3524 = vpack.c.b16 %v2222, %v2216
    %v3525 = vpack.c.b16 %v2229, %v2223
    %v3526 = vpack.c.b16 %v2230, %v2224
    %v3527 = vpack.c.b16 %v2231, %v2225
    %v3528 = vpack.c.b16 %v2232, %v2226
    %v3529 = vpack.c.b16 %v2233, %v2227
    %v3530 = vpack.c.b16 %v2234, %v2228
    %v3531 = vpack.c.b16 %v2241, %v2235
    %v3532 = vpack.c.b16 %v2242, %v2236
    %v3533 = vpack.c.b16 %v2243, %v2237
    %v3534 = vpack.c.b16 %v2244, %v2238
    %v3535 = vpack.c.b16 %v2245, %v2239
    %v3536 = vpack.c.b16 %v2246, %v2240
    %v3537 = vpack.c.b16 %v2253, %v2247
    %v3538 = vpack.c.b16 %v2254, %v2248
    %v3539 = vpack.c.b16 %v2255, %v2249
    %v3540 = vpack.c.b16 %v2256, %v2250
    %v3541 = vpack.c.b16 %v2257, %v2251
    %v3542 = vpack.c.b16 %v2258, %v2252
    %v3543 = vpack.c.b16 %v2265, %v2259
    %v3544 = vpack.c.b16 %v2266, %v2260
    %v3545 = vpack.c.b16 %v2267, %v2261
    %v3546 = vpack.c.b16 %v2268, %v2262
    %v3547 = vpack.c.b16 %v2269, %v2263
    %v3548 = vpack.c.b16 %v2270, %v2264
    %v3549 = vpack.c.b16 %v2277, %v2271
    %v3550 = vpack.c.b16 %v2278, %v2272
    %v3551 = vpack.c.b16 %v2279, %v2273
    %v3552 = vpack.c.b16 %v2280, %v2274
    %v3553 = vpack.c.b16 %v2281, %v2275
    %v3554 = vpack.c.b16 %v2282, %v2276
    %v3555 = vpack.c.b16 %v2289, %v2283
    %v3556 = vpack.c.b16 %v2290, %v2284
    %v3557 = vpack.c.b16 %v2291, %v2285
    %v3558 = vpack.c.b16 %v2292, %v2286
    %v3559 = vpack.c.b16 %v2293, %v2287
    %v3560 = vpack.c.b16 %v2294, %v2288
    %v3561 = vpack.c.b16 %v2301, %v2295
    %v3562 = vpack.c.b16 %v2302, %v2296
    %v3563 = vpack.c.b16 %v2303, %v2297
    %v3564 = vpack.c.b16 %v2304, %v2298
    %v3565 = vpack.c.b16 %v2305, %v2299
    %v3566 = vpack.c.b16 %v2306, %v2300
    %v3567 = vpack.c.b16 %v2313, %v2307
    %v3568 = vpack.c.b16 %v2314, %v2308
    %v3569 = vpack.c.b16 %v2315, %v2309
    %v3570 = vpack.c.b16 %v2316, %v2310
    %v3571 = vpack.c.b16 %v2317, %v2311
    %v3572 = vpack.c.b16 %v2318, %v2312
    %v3573 = vpack.c.b16 %v2325, %v2319
    %v3574 = vpack.c.b16 %v2326, %v2320
    %v3575 = vpack.c.b16 %v2327, %v2321
    %v3576 = vpack.c.b16 %v2328, %v2322
    %v3577 = vpack.c.b16 %v2329, %v2323
    %v3578 = vpack.c.b16 %v2330, %v2324
    %v3579 = vpack.c.b16 %v2337, %v2331
    %v3580 = vpack.c.b16 %v2338, %v2332
    %v3581 = vpack.c.b16 %v2339, %v2333
    %v3582 = vpack.c.b16 %v2340, %v2334
    %v3583 = vpack.c.b16 %v2341, %v2335
    %v3584 = vpack.c.b16 %v2342, %v2336
    %v3585 = vpack.c.b16 %v2349, %v2343
    %v3586 = vpack.c.b16 %v2350, %v2344
    %v3587 = vpack.c.b16 %v2351, %v2345
    %v3588 = vpack.c.b16 %v2352, %v2346
    %v3589 = vpack.c.b16 %v2353, %v2347
    %v3590 = vpack.c.b16 %v2354, %v2348
    %v3591 = vpack.c.b16 %v2361, %v2355
    %v3592 = vpack.c.b16 %v2362, %v2356
    %v3593 = vpack.c.b16 %v2363, %v2357
    %v3594 = vpack.c.b16 %v2364, %v2358
    %v3595 = vpack.c.b16 %v2365, %v2359
    %v3596 = vpack.c.b16 %v2366, %v2360
    %v3597 = vpack.c.b16 %v2373, %v2367
    %v3598 = vpack.c.b16 %v2374, %v2368
    %v3599 = vpack.c.b16 %v2375, %v2369
    %v3600 = vpack.c.b16 %v2376, %v2370
    %v3601 = vpack.c.b16 %v2377, %v2371
    %v3602 = vpack.c.b16 %v2378, %v2372
    %v3603 = vpack.c.b16 %v2385, %v2379
    %v3604 = vpack.c.b16 %v2386, %v2380
    %v3605 = vpack.c.b16 %v2387, %v2381
    %v3606 = vpack.c.b16 %v2388, %v2382
    %v3607 = vpack.c.b16 %v2389, %v2383
    %v3608 = vpack.c.b16 %v2390, %v2384
    %v3609 = vpack.c.b16 %v2397, %v2391
    %v3610 = vpack.c.b16 %v2398, %v2392
    %v3611 = vpack.c.b16 %v2399, %v2393
    %v3612 = vpack.c.b16 %v2400, %v2394
    %v3613 = vpack.c.b16 %v2401, %v2395
    %v3614 = vpack.c.b16 %v2402, %v2396
    %v3615 = vpack.c.b16 %v2409, %v2403
    %v3616 = vpack.c.b16 %v2410, %v2404
    %v3617 = vpack.c.b16 %v2411, %v2405
    %v3618 = vpack.c.b16 %v2412, %v2406
    %v3619 = vpack.c.b16 %v2413, %v2407
    %v3620 = vpack.c.b16 %v2414, %v2408
    %v3621 = vpack.c.b16 %v2421, %v2415
    %v3622 = vpack.c.b16 %v2422, %v2416
    %v3623 = vpack.c.b16 %v2423, %v2417
    %v3624 = vpack.c.b16 %v2424, %v2418
    %v3625 = vpack.c.b16 %v2425, %v2419
    %v3626 = vpack.c.b16 %v2426, %v2420
    %v3627 = vpack.c.b16 %v2433, %v2427
    %v3628 = vpack.c.b16 %v2434, %v2428
    %v3629 = vpack.c.b16 %v2435, %v2429
    %v3630 = vpack.c.b16 %v2436, %v2430
    %v3631 = vpack.c.b16 %v2437, %v2431
    %v3632 = vpack.c.b16 %v2438, %v2432
    %v3633 = vpack.c.b16 %v2445, %v2439
    %v3634 = vpack.c.b16 %v2446, %v2440
    %v3635 = vpack.c.b16 %v2447, %v2441
    %v3636 = vpack.c.b16 %v2448, %v2442
    %v3637 = vpack.c.b16 %v2449, %v2443
    %v3638 = vpack.c.b16 %v2450, %v2444
    %v3639 = vpack.c.b16 %v2457, %v2451
    %v3640 = vpack.c.b16 %v2458, %v2452
    %v3641 = vpack.c.b16 %v2459, %v2453
    %v3642 = vpack.c.b16 %v2460, %v2454
    %v3643 = vpack.c.b16 %v2461, %v2455
    %v3644 = vpack.c.b16 %v2462, %v2456
    %v3645 = vpack.c.b16 %v2469, %v2463
    %v3646 = vpack.c.b16 %v2470, %v2464
    %v3647 = vpack.c.b16 %v2471, %v2465
    %v3648 = vpack.c.b16 %v2472, %v2466
    %v3649 = vpack.c.b16 %v2473, %v2467
    %v3650 = vpack.c.b16 %v2474, %v2468
    %v3651 = vpack.c.b16 %v2481, %v2475
    %v3652 = vpack.c.b16 %v2482, %v2476
    %v3653 = vpack.c.b16 %v2483, %v2477
    %v3654 = vpack.c.b16 %v2484, %v2478
    %v3655 = vpack.c.b16 %v2485, %v2479
    %v3656 = vpack.c.b16 %v2486, %v2480
    %v3657 = vpack.c.b16 %v2493, %v2487
    %v3658 = vpack.c.b16 %v2494, %v2488
    %v3659 = vpack.c.b16 %v2495, %v2489
    %v3660 = vpack.c.b16 %v2496, %v2490
    %v3661 = vpack.c.b16 %v2497, %v2491
    %v3662 = vpack.c.b16 %v2498, %v2492
    %v3663 = vpack.c.b16 %v2505, %v2499
    %v3664 = vpack.c.b16 %v2506, %v2500
    %v3665 = vpack.c.b16 %v2507, %v2501
    %v3666 = vpack.c.b16 %v2508, %v2502
    %v3667 = vpack.c.b16 %v2509, %v2503
    %v3668 = vpack.c.b16 %v2510, %v2504
    %v3669 = vpack.c.b16 %v2517, %v2511
    %v3670 = vpack.c.b16 %v2518, %v2512
    %v3671 = vpack.c.b16 %v2519, %v2513
    %v3672 = vpack.c.b16 %v2520, %v2514
    %v3673 = vpack.c.b16 %v2521, %v2515
    %v3674 = vpack.c.b16 %v2522, %v2516
    %v3675 = vpack.c.b16 %v2529, %v2523
    %v3676 = vpack.c.b16 %v2530, %v2524
    %v3677 = vpack.c.b16 %v2531, %v2525
    %v3678 = vpack.c.b16 %v2532, %v2526
    %v3679 = vpack.c.b16 %v2533, %v2527
    %v3680 = vpack.c.b16 %v2534, %v2528
    %v3681 = vpack.c.b16 %v2541, %v2535
    %v3682 = vpack.c.b16 %v2542, %v2536
    %v3683 = vpack.c.b16 %v2543, %v2537
    %v3684 = vpack.c.b16 %v2544, %v2538
    %v3685 = vpack.c.b16 %v2545, %v2539
    %v3686 = vpack.c.b16 %v2546, %v2540
    %v3687 = vpack.c.b16 %v2553, %v2547
    %v3688 = vpack.c.b16 %v2554, %v2548
    %v3689 = vpack.c.b16 %v2555, %v2549
    %v3690 = vpack.c.b16 %v2556, %v2550
    %v3691 = vpack.c.b16 %v2557, %v2551
    %v3692 = vpack.c.b16 %v2558, %v2552
    %v3693 = vpack.c.b16 %v2565, %v2559
    %v3694 = vpack.c.b16 %v2566, %v2560
    %v3695 = vpack.c.b16 %v2567, %v2561
    %v3696 = vpack.c.b16 %v2568, %v2562
    %v3697 = vpack.c.b16 %v2569, %v2563
    %v3698 = vpack.c.b16 %v2570, %v2564
    %v3699 = vpack.c.b16 %v2577, %v2571
    %v3700 = vpack.c.b16 %v2578, %v2572
    %v3701 = vpack.c.b16 %v2579, %v2573
    %v3702 = vpack.c.b16 %v2580, %v2574
    %v3703 = vpack.c.b16 %v2581, %v2575
    %v3704 = vpack.c.b16 %v2582, %v2576
    %v3705 = vpack.c.b16 %v2589, %v2583
    %v3706 = vpack.c.b16 %v2590, %v2584
    %v3707 = vpack.c.b16 %v2591, %v2585
    %v3708 = vpack.c.b16 %v2592, %v2586
    %v3709 = vpack.c.b16 %v2593, %v2587
    %v3710 = vpack.c.b16 %v2594, %v2588
    %v3711 = vpack.c.b16 %v2601, %v2595
    %v3712 = vpack.c.b16 %v2602, %v2596
    %v3713 = vpack.c.b16 %v2603, %v2597
    %v3714 = vpack.c.b16 %v2604, %v2598
    %v3715 = vpack.c.b16 %v2605, %v2599
    %v3716 = vpack.c.b16 %v2606, %v2600
    %v3717 = vpack.c.b16 %v2613, %v2607
    %v3718 = vpack.c.b16 %v2614, %v2608
    %v3719 = vpack.c.b16 %v2615, %v2609
    %v3720 = vpack.c.b16 %v2616, %v2610
    %v3721 = vpack.c.b16 %v2617, %v2611
    %v3722 = vpack.c.b16 %v2618, %v2612
    %v3723 = vpack.c.b16 %v2625, %v2619
    %v3724 = vpack.c.b16 %v2626, %v2620
    %v3725 = vpack.c.b16 %v2627, %v2621
    %v3726 = vpack.c.b16 %v2628, %v2622
    %v3727 = vpack.c.b16 %v2629, %v2623
    %v3728 = vpack.c.b16 %v2630, %v2624
    %v3729 = vpack.c.b16 %v2637, %v2631
    %v3730 = vpack.c.b16 %v2638, %v2632
    %v3731 = vpack.c.b16 %v2639, %v2633
    %v3732 = vpack.c.b16 %v2640, %v2634
    %v3733 = vpack.c.b16 %v2641, %v2635
    %v3734 = vpack.c.b16 %v2642, %v2636
    %v3735 = vpack.c.b16 %v2649, %v2643
    %v3736 = vpack.c.b16 %v2650, %v2644
    %v3737 = vpack.c.b16 %v2651, %v2645
    %v3738 = vpack.c.b16 %v2652, %v2646
    %v3739 = vpack.c.b16 %v2653, %v2647
    %v3740 = vpack.c.b16 %v2654, %v2648
    %v3741 = vpack.c.b16 %v2661, %v2655
    %v3742 = vpack.c.b16 %v2662, %v2656
    %v3743 = vpack.c.b16 %v2663, %v2657
    %v3744 = vpack.c.b16 %v2664, %v2658
    %v3745 = vpack.c.b16 %v2665, %v2659
    %v3746 = vpack.c.b16 %v2666, %v2660
    %v3747 = vpack.c.b16 %v2673, %v2667
    %v3748 = vpack.c.b16 %v2674, %v2668
    %v3749 = vpack.c.b16 %v2675, %v2669
    %v3750 = vpack.c.b16 %v2676, %v2670
    %v3751 = vpack.c.b16 %v2677, %v2671
    %v3752 = vpack.c.b16 %v2678, %v2672
    %v3753 = vpack.c.b16 %v2685, %v2679
    %v3754 = vpack.c.b16 %v2686, %v2680
    %v3755 = vpack.c.b16 %v2687, %v2681
    %v3756 = vpack.c.b16 %v2688, %v2682
    %v3757 = vpack.c.b16 %v2689, %v2683
    %v3758 = vpack.c.b16 %v2690, %v2684
    %v3759 = vpack.c.b16 %v2697, %v2691
    %v3760 = vpack.c.b16 %v2698, %v2692
    %v3761 = vpack.c.b16 %v2699, %v2693
    %v3762 = vpack.c.b16 %v2700, %v2694
    %v3763 = vpack.c.b16 %v2701, %v2695
    %v3764 = vpack.c.b16 %v2702, %v2696
    %v3765 = vpack.c.b16 %v2709, %v2703
    %v3766 = vpack.c.b16 %v2710, %v2704
    %v3767 = vpack.c.b16 %v2711, %v2705
    %v3768 = vpack.c.b16 %v2712, %v2706
    %v3769 = vpack.c.b16 %v2713, %v2707
    %v3770 = vpack.c.b16 %v2714, %v2708
    %v3771 = vpack.c.b16 %v2721, %v2715
    %v3772 = vpack.c.b16 %v2722, %v2716
    %v3773 = vpack.c.b16 %v2723, %v2717
    %v3774 = vpack.c.b16 %v2724, %v2718
    %v3775 = vpack.c.b16 %v2725, %v2719
    %v3776 = vpack.c.b16 %v2726, %v2720
    %v3777 = vpack.c.b16 %v2733, %v2727
    %v3778 = vpack.c.b16 %v2734, %v2728
    %v3779 = vpack.c.b16 %v2735, %v2729
    %v3780 = vpack.c.b16 %v2736, %v2730
    %v3781 = vpack.c.b16 %v2737, %v2731
    %v3782 = vpack.c.b16 %v2738, %v2732
    %v3783 = vpack.c.b16 %v2745, %v2739
    %v3784 = vpack.c.b16 %v2746, %v2740
    %v3785 = vpack.c.b16 %v2747, %v2741
    %v3786 = vpack.c.b16 %v2748, %v2742
    %v3787 = vpack.c.b16 %v2749, %v2743
    %v3788 = vpack.c.b16 %v2750, %v2744
    %v3789 = vpack.c.b16 %v2757, %v2751
    %v3790 = vpack.c.b16 %v2758, %v2752
    %v3791 = vpack.c.b16 %v2759, %v2753
    %v3792 = vpack.c.b16 %v2760, %v2754
    %v3793 = vpack.c.b16 %v2761, %v2755
    %v3794 = vpack.c.b16 %v2762, %v2756
    %v3795 = vpack.c.b16 %v2769, %v2763
    %v3796 = vpack.c.b16 %v2770, %v2764
    %v3797 = vpack.c.b16 %v2771, %v2765
    %v3798 = vpack.c.b16 %v2772, %v2766
    %v3799 = vpack.c.b16 %v2773, %v2767
    %v3800 = vpack.c.b16 %v2774, %v2768
    %v3801 = vpack.c.b16 %v2781, %v2775
    %v3802 = vpack.c.b16 %v2782, %v2776
    %v3803 = vpack.c.b16 %v2783, %v2777
    %v3804 = vpack.c.b16 %v2784, %v2778
    %v3805 = vpack.c.b16 %v2785, %v2779
    %v3806 = vpack.c.b16 %v2786, %v2780
    %v3807 = vpack.c.b16 %v2793, %v2787
    %v3808 = vpack.c.b16 %v2794, %v2788
    %v3809 = vpack.c.b16 %v2795, %v2789
    %v3810 = vpack.c.b16 %v2796, %v2790
    %v3811 = vpack.c.b16 %v2797, %v2791
    %v3812 = vpack.c.b16 %v2798, %v2792
    %v3813 = vpack.c.b16 %v2805, %v2799
    %v3814 = vpack.c.b16 %v2806, %v2800
    %v3815 = vpack.c.b16 %v2807, %v2801
    %v3816 = vpack.c.b16 %v2808, %v2802
    %v3817 = vpack.c.b16 %v2809, %v2803
    %v3818 = vpack.c.b16 %v2810, %v2804
    %v3819 = vpack.c.b16 %v2817, %v2811
    %v3820 = vpack.c.b16 %v2818, %v2812
    %v3821 = vpack.c.b16 %v2819, %v2813
    %v3822 = vpack.c.b16 %v2820, %v2814
    %v3823 = vpack.c.b16 %v2821, %v2815
    %v3824 = vpack.c.b16 %v2822, %v2816
    %v3825 = vpack.c.b16 %v2829, %v2823
    %v3826 = vpack.c.b16 %v2830, %v2824
    %v3827 = vpack.c.b16 %v2831, %v2825
    %v3828 = vpack.c.b16 %v2832, %v2826
    %v3829 = vpack.c.b16 %v2833, %v2827
    %v3830 = vpack.c.b16 %v2834, %v2828
    %v3831 = vpack.c.b16 %v2841, %v2835
    %v3832 = vpack.c.b16 %v2842, %v2836
    %v3833 = vpack.c.b16 %v2843, %v2837
    %v3834 = vpack.c.b16 %v2844, %v2838
    %v3835 = vpack.c.b16 %v2845, %v2839
    %v3836 = vpack.c.b16 %v2846, %v2840
    %v3837 = vpack.c.b16 %v2853, %v2847
    %v3838 = vpack.c.b16 %v2854, %v2848
    %v3839 = vpack.c.b16 %v2855, %v2849
    %v3840 = vpack.c.b16 %v2856, %v2850
    %v3841 = vpack.c.b16 %v2857, %v2851
    %v3842 = vpack.c.b16 %v2858, %v2852
    %v3843 = vpack.c.b16 %v2865, %v2859
    %v3844 = vpack.c.b16 %v2866, %v2860
    %v3845 = vpack.c.b16 %v2867, %v2861
    %v3846 = vpack.c.b16 %v2868, %v2862
    %v3847 = vpack.c.b16 %v2869, %v2863
    %v3848 = vpack.c.b16 %v2870, %v2864
    %v3849 = vpack.c.b16 %v2877, %v2871
    %v3850 = vpack.c.b16 %v2878, %v2872
    %v3851 = vpack.c.b16 %v2879, %v2873
    %v3852 = vpack.c.b16 %v2880, %v2874
    %v3853 = vpack.c.b16 %v2881, %v2875
    %v3854 = vpack.c.b16 %v2882, %v2876
    %v3855 = vpack.c.b16 %v2889, %v2883
    %v3856 = vpack.c.b16 %v2890, %v2884
    %v3857 = vpack.c.b16 %v2891, %v2885
    %v3858 = vpack.c.b16 %v2892, %v2886
    %v3859 = vpack.c.b16 %v2893, %v2887
    %v3860 = vpack.c.b16 %v2894, %v2888
    %v3861 = vpack.c.b16 %v2901, %v2895
    %v3862 = vpack.c.b16 %v2902, %v2896
    %v3863 = vpack.c.b16 %v2903, %v2897
    %v3864 = vpack.c.b16 %v2904, %v2898
    %v3865 = vpack.c.b16 %v2905, %v2899
    %v3866 = vpack.c.b16 %v2906, %v2900
    %v3867 = vpack.c.b16 %v2913, %v2907
    %v3868 = vpack.c.b16 %v2914, %v2908
    %v3869 = vpack.c.b16 %v2915, %v2909
    %v3870 = vpack.c.b16 %v2916, %v2910
    %v3871 = vpack.c.b16 %v2917, %v2911
    %v3872 = vpack.c.b16 %v2918, %v2912
    %v3873 = vpack.c.b16 %v2925, %v2919
    %v3874 = vpack.c.b16 %v2926, %v2920
    %v3875 = vpack.c.b16 %v2927, %v2921
    %v3876 = vpack.c.b16 %v2928, %v2922
    %v3877 = vpack.c.b16 %v2929, %v2923
    %v3878 = vpack.c.b16 %v2930, %v2924
    %v3879 = vpack.c.b16 %v2937, %v2931
    %v3880 = vpack.c.b16 %v2938, %v2932
    %v3881 = vpack.c.b16 %v2939, %v2933
    %v3882 = vpack.c.b16 %v2940, %v2934
    %v3883 = vpack.c.b16 %v2941, %v2935
    %v3884 = vpack.c.b16 %v2942, %v2936
    %v3885 = vpack.c.b16 %v2949, %v2943
    %v3886 = vpack.c.b16 %v2950, %v2944
    %v3887 = vpack.c.b16 %v2951, %v2945
    %v3888 = vpack.c.b16 %v2952, %v2946
    %v3889 = vpack.c.b16 %v2953, %v2947
    %v3890 = vpack.c.b16 %v2954, %v2948
    %v3891 = vpack.c.b16 %v2961, %v2955
    %v3892 = vpack.c.b16 %v2962, %v2956
    %v3893 = vpack.c.b16 %v2963, %v2957
    %v3894 = vpack.c.b16 %v2964, %v2958
    %v3895 = vpack.c.b16 %v2965, %v2959
    %v3896 = vpack.c.b16 %v2966, %v2960
    %v3897 = vpack.c.b16 %v2973, %v2967
    %v3898 = vpack.c.b16 %v2974, %v2968
    %v3899 = vpack.c.b16 %v2975, %v2969
    %v3900 = vpack.c.b16 %v2976, %v2970
    %v3901 = vpack.c.b16 %v2977, %v2971
    %v3902 = vpack.c.b16 %v2978, %v2972
    %v3903 = vpack.c.b16 %v2985, %v2979
    %v3904 = vpack.c.b16 %v2986, %v2980
    %v3905 = vpack.c.b16 %v2987, %v2981
    %v3906 = vpack.c.b16 %v2988, %v2982
    %v3907 = vpack.c.b16 %v2989, %v2983
    %v3908 = vpack.c.b16 %v2990, %v2984
    %v3909 = vpack.c.b16 %v2997, %v2991
    %v3910 = vpack.c.b16 %v2998, %v2992
    %v3911 = vpack.c.b16 %v2999, %v2993
    %v3912 = vpack.c.b16 %v3000, %v2994
    %v3913 = vpack.c.b16 %v3001, %v2995
    %v3914 = vpack.c.b16 %v3002, %v2996
    %v3915 = vpack.c.b16 %v3009, %v3003
    %v3916 = vpack.c.b16 %v3010, %v3004
    %v3917 = vpack.c.b16 %v3011, %v3005
    %v3918 = vpack.c.b16 %v3012, %v3006
    %v3919 = vpack.c.b16 %v3013, %v3007
    %v3920 = vpack.c.b16 %v3014, %v3008
    %v3921 = vpack.c.b16 %v3021, %v3015
    %v3922 = vpack.c.b16 %v3022, %v3016
    %v3923 = vpack.c.b16 %v3023, %v3017
    %v3924 = vpack.c.b16 %v3024, %v3018
    %v3925 = vpack.c.b16 %v3025, %v3019
    %v3926 = vpack.c.b16 %v3026, %v3020
    %v3927 = vpack.c.b16 %v3033, %v3027
    %v3928 = vpack.c.b16 %v3034, %v3028
    %v3929 = vpack.c.b16 %v3035, %v3029
    %v3930 = vpack.c.b16 %v3036, %v3030
    %v3931 = vpack.c.b16 %v3037, %v3031
    %v3932 = vpack.c.b16 %v3038, %v3032
    %v3933 = vpack.c.b16 %v3045, %v3039
    %v3934 = vpack.c.b16 %v3046, %v3040
    %v3935 = vpack.c.b16 %v3047, %v3041
    %v3936 = vpack.c.b16 %v3048, %v3042
    %v3937 = vpack.c.b16 %v3049, %v3043
    %v3938 = vpack.c.b16 %v3050, %v3044
    %v3939 = vpack.c.b16 %v3057, %v3051
    %v3940 = vpack.c.b16 %v3058, %v3052
    %v3941 = vpack.c.b16 %v3059, %v3053
    %v3942 = vpack.c.b16 %v3060, %v3054
    %v3943 = vpack.c.b16 %v3061, %v3055
    %v3944 = vpack.c.b16 %v3062, %v3056
    %v3945 = vpack.c.b16 %v3069, %v3063
    %v3946 = vpack.c.b16 %v3070, %v3064
    %v3947 = vpack.c.b16 %v3071, %v3065
    %v3948 = vpack.c.b16 %v3072, %v3066
    %v3949 = vpack.c.b16 %v3073, %v3067
    %v3950 = vpack.c.b16 %v3074, %v3068
    %v3951 = vpack.c.b16 %v3081, %v3075
    %v3952 = vpack.c.b16 %v3082, %v3076
    %v3953 = vpack.c.b16 %v3083, %v3077
    %v3954 = vpack.c.b16 %v3084, %v3078
    %v3955 = vpack.c.b16 %v3085, %v3079
    %v3956 = vpack.c.b16 %v3086, %v3080
    %v3957 = vpack.c.b16 %v3093, %v3087
    %v3958 = vpack.c.b16 %v3094, %v3088
    %v3959 = vpack.c.b16 %v3095, %v3089
    %v3960 = vpack.c.b16 %v3096, %v3090
    %v3961 = vpack.c.b16 %v3097, %v3091
    %v3962 = vpack.c.b16 %v3098, %v3092
    %v3963 = vpack.c.b16 %v3105, %v3099
    %v3964 = vpack.c.b16 %v3106, %v3100
    %v3965 = vpack.c.b16 %v3107, %v3101
    %v3966 = vpack.c.b16 %v3108, %v3102
    %v3967 = vpack.c.b16 %v3109, %v3103
    %v3968 = vpack.c.b16 %v3110, %v3104
    %v3969 = vpack.c.b16 %v3117, %v3111
    %v3970 = vpack.c.b16 %v3118, %v3112
    %v3971 = vpack.c.b16 %v3119, %v3113
    %v3972 = vpack.c.b16 %v3120, %v3114
    %v3973 = vpack.c.b16 %v3121, %v3115
    %v3974 = vpack.c.b16 %v3122, %v3116
    %v3975 = vpack.c.b16 %v3129, %v3123
    %v3976 = vpack.c.b16 %v3130, %v3124
    %v3977 = vpack.c.b16 %v3131, %v3125
    %v3978 = vpack.c.b16 %v3132, %v3126
    %v3979 = vpack.c.b16 %v3133, %v3127
    %v3980 = vpack.c.b16 %v3134, %v3128
    %v3981 = vpack.c.b16 %v3141, %v3135
    %v3982 = vpack.c.b16 %v3142, %v3136
    %v3983 = vpack.c.b16 %v3143, %v3137
    %v3984 = vpack.c.b16 %v3144, %v3138
    %v3985 = vpack.c.b16 %v3145, %v3139
    %v3986 = vpack.c.b16 %v3146, %v3140
    %v3987 = vpack.c.b16 %v3153, %v3147
    %v3988 = vpack.c.b16 %v3154, %v3148
    %v3989 = vpack.c.b16 %v3155, %v3149
    %v3990 = vpack.c.b16 %v3156, %v3150
    %v3991 = vpack.c.b16 %v3157, %v3151
    %v3992 = vpack.c.b16 %v3158, %v3152
    %v3993 = vpack.c.b16 %v3165, %v3159
    %v3994 = vpack.c.b16 %v3166, %v3160
    %v3995 = vpack.c.b16 %v3167, %v3161
    %v3996 = vpack.c.b16 %v3168, %v3162
    %v3997 = vpack.c.b16 %v3169, %v3163
    %v3998 = vpack.c.b16 %v3170, %v3164
    %v3999 = vpack.c.b16 %v3177, %v3171
    %v4000 = vpack.c.b16 %v3178, %v3172
    %v4001 = vpack.c.b16 %v3179, %v3173
    %v4002 = vpack.c.b16 %v3180, %v3174
    %v4003 = vpack.c.b16 %v3181, %v3175
    %v4004 = vpack.c.b16 %v3182, %v3176
    %v4005 = vpack.c.b16 %v3189, %v3183
    %v4006 = vpack.c.b16 %v3190, %v3184
    %v4007 = vpack.c.b16 %v3191, %v3185
    %v4008 = vpack.c.b16 %v3192, %v3186
    %v4009 = vpack.c.b16 %v3193, %v3187
    %v4010 = vpack.c.b16 %v3194, %v3188
    %v4011 = vpack.c.b16 %v3201, %v3195
    %v4012 = vpack.c.b16 %v3202, %v3196
    %v4013 = vpack.c.b16 %v3203, %v3197
    %v4014 = vpack.c.b16 %v3204, %v3198
    %v4015 = vpack.c.b16 %v3205, %v3199
    %v4016 = vpack.c.b16 %v3206, %v3200
    %v4017 = vpack.c.b16 %v3213, %v3207
    %v4018 = vpack.c.b16 %v3214, %v3208
    %v4019 = vpack.c.b16 %v3215, %v3209
    %v4020 = vpack.c.b16 %v3216, %v3210
    %v4021 = vpack.c.b16 %v3217, %v3211
    %v4022 = vpack.c.b16 %v3218, %v3212
    %v4023 = vpack.c.b16 %v3225, %v3219
    %v4024 = vpack.c.b16 %v3226, %v3220
    %v4025 = vpack.c.b16 %v3227, %v3221
    %v4026 = vpack.c.b16 %v3228, %v3222
    %v4027 = vpack.c.b16 %v3229, %v3223
    %v4028 = vpack.c.b16 %v3230, %v3224
    %v4029 = vpack.c.b16 %v3237, %v3231
    %v4030 = vpack.c.b16 %v3238, %v3232
    %v4031 = vpack.c.b16 %v3239, %v3233
    %v4032 = vpack.c.b16 %v3240, %v3234
    %v4033 = vpack.c.b16 %v3241, %v3235
    %v4034 = vpack.c.b16 %v3242, %v3236
    %v4035 = vpack.c.b16 %v3249, %v3243
    %v4036 = vpack.c.b16 %v3250, %v3244
    %v4037 = vpack.c.b16 %v3251, %v3245
    %v4038 = vpack.c.b16 %v3252, %v3246
    %v4039 = vpack.c.b16 %v3253, %v3247
    %v4040 = vpack.c.b16 %v3254, %v3248
    %v4041 = vpack.c.b16 %v3261, %v3255
    %v4042 = vpack.c.b16 %v3262, %v3256
    %v4043 = vpack.c.b16 %v3263, %v3257
    %v4044 = vpack.c.b16 %v3264, %v3258
    %v4045 = vpack.c.b16 %v3265, %v3259
    %v4046 = vpack.c.b16 %v3266, %v3260
    %v4047 = vpack.c.b16 %v3273, %v3267
    %v4048 = vpack.c.b16 %v3274, %v3268
    %v4049 = vpack.c.b16 %v3275, %v3269
    %v4050 = vpack.c.b16 %v3276, %v3270
    %v4051 = vpack.c.b16 %v3277, %v3271
    %v4052 = vpack.c.b16 %v3278, %v3272
    %v4053 = vpack.c.b16 %v3285, %v3279
    %v4054 = vpack.c.b16 %v3286, %v3280
    %v4055 = vpack.c.b16 %v3287, %v3281
    %v4056 = vpack.c.b16 %v3288, %v3282
    %v4057 = vpack.c.b16 %v3289, %v3283
    %v4058 = vpack.c.b16 %v3290, %v3284
    %4827 = vmatpush.bf16.msra.mxu0 %v3333
    %4828 = vmatpush.bf16.msra.mxu0 %v3327
    %4829 = vmatpush.bf16.msra.mxu0 %v3321
    %4830 = vmatpush.bf16.msra.mxu0 %v3315
    %4831 = vmatpush.bf16.msra.mxu0 %v3309
    %4832 = vmatpush.bf16.msra.mxu0 %v3303
    %4833 = vmatpush.bf16.msra.mxu0 %v3297
    %4834 = vmatpush.bf16.msra.mxu0 %v3291
    %4835 = vmatmul.bf16.gmra.mxu0 %v955
    %v4836 = vpop.f32.mrf.mxu0
    %v4837 = vadd.f32 %v895, %v4836
    %v4838 = vpop.f32.mrf.mxu0
    %v4839 = vadd.f32 %v895, %v4838
    %4840 = vdwg.mxu0
    %4841 = vmatpush.bf16.msra.mxu0 %v3381
    %4842 = vmatpush.bf16.msra.mxu0 %v3375
    %4843 = vmatpush.bf16.msra.mxu0 %v3369
    %4844 = vmatpush.bf16.msra.mxu0 %v3363
    %4845 = vmatpush.bf16.msra.mxu0 %v3357
    %4846 = vmatpush.bf16.msra.mxu0 %v3351
    %4847 = vmatpush.bf16.msra.mxu0 %v3345
    %4848 = vmatpush.bf16.msra.mxu0 %v3339
    %4849 = vmatmul.bf16.gmra.mxu0 %v956
    %v4850 = vpop.f32.mrf.mxu0
    %v4851 = vadd.f32 %v4837, %v4850
    %v4852 = vpop.f32.mrf.mxu0
    %v4853 = vadd.f32 %v4839, %v4852
    %4854 = vdwg.mxu0
    %4855 = vmatpush.bf16.msra.mxu0 %v3429
    %4856 = vmatpush.bf16.msra.mxu0 %v3423
    %4857 = vmatpush.bf16.msra.mxu0 %v3417
    %4858 = vmatpush.bf16.msra.mxu0 %v3411
    %4859 = vmatpush.bf16.msra.mxu0 %v3405
    %4860 = vmatpush.bf16.msra.mxu0 %v3399
    %4861 = vmatpush.bf16.msra.mxu0 %v3393
    %4862 = vmatpush.bf16.msra.mxu0 %v3387
    %4863 = vmatmul.bf16.gmra.mxu0 %v957
    %v4864 = vpop.f32.mrf.mxu0
    %v4865 = vadd.f32 %v4851, %v4864
    %v4866 = vpop.f32.mrf.mxu0
    %v4867 = vadd.f32 %v4853, %v4866
    %4868 = vdwg.mxu0
    %4869 = vmatpush.bf16.msra.mxu0 %v3477
    %4870 = vmatpush.bf16.msra.mxu0 %v3471
    %4871 = vmatpush.bf16.msra.mxu0 %v3465
    %4872 = vmatpush.bf16.msra.mxu0 %v3459
    %4873 = vmatpush.bf16.msra.mxu0 %v3453
    %4874 = vmatpush.bf16.msra.mxu0 %v3447
    %4875 = vmatpush.bf16.msra.mxu0 %v3441
    %4876 = vmatpush.bf16.msra.mxu0 %v3435
    %4877 = vmatmul.bf16.gmra.mxu0 %v958
    %v4878 = vpop.f32.mrf.mxu0
    %v4879 = vadd.f32 %v4865, %v4878
    %v4880 = vpop.f32.mrf.mxu0
    %v4881 = vadd.f32 %v4867, %v4880
    %4882 = vdwg.mxu0
    %4883 = vmatpush.bf16.msra.mxu0 %v3525
    %4884 = vmatpush.bf16.msra.mxu0 %v3519
    %4885 = vmatpush.bf16.msra.mxu0 %v3513
    %4886 = vmatpush.bf16.msra.mxu0 %v3507
    %4887 = vmatpush.bf16.msra.mxu0 %v3501
    %4888 = vmatpush.bf16.msra.mxu0 %v3495
    %4889 = vmatpush.bf16.msra.mxu0 %v3489
    %4890 = vmatpush.bf16.msra.mxu0 %v3483
    %4891 = vmatmul.bf16.gmra.mxu0 %v959
    %v4892 = vpop.f32.mrf.mxu0
    %v4893 = vadd.f32 %v4879, %v4892
    %v4894 = vpop.f32.mrf.mxu0
    %v4895 = vadd.f32 %v4881, %v4894
    %4896 = vdwg.mxu0
    %4897 = vmatpush.bf16.msra.mxu0 %v3573
    %4898 = vmatpush.bf16.msra.mxu0 %v3567
    %4899 = vmatpush.bf16.msra.mxu0 %v3561
    %4900 = vmatpush.bf16.msra.mxu0 %v3555
    %4901 = vmatpush.bf16.msra.mxu0 %v3549
    %4902 = vmatpush.bf16.msra.mxu0 %v3543
    %4903 = vmatpush.bf16.msra.mxu0 %v3537
    %4904 = vmatpush.bf16.msra.mxu0 %v3531
    %4905 = vmatmul.bf16.gmra.mxu0 %v960
    %v4906 = vpop.f32.mrf.mxu0
    %v4907 = vadd.f32 %v4893, %v4906
    %v4908 = vpop.f32.mrf.mxu0
    %v4909 = vadd.f32 %v4895, %v4908
    %4910 = vdwg.mxu0
    %4911 = vmatpush.bf16.msra.mxu0 %v3621
    %4912 = vmatpush.bf16.msra.mxu0 %v3615
    %4913 = vmatpush.bf16.msra.mxu0 %v3609
    %4914 = vmatpush.bf16.msra.mxu0 %v3603
    %4915 = vmatpush.bf16.msra.mxu0 %v3597
    %4916 = vmatpush.bf16.msra.mxu0 %v3591
    %4917 = vmatpush.bf16.msra.mxu0 %v3585
    %4918 = vmatpush.bf16.msra.mxu0 %v3579
    %4919 = vmatmul.bf16.gmra.mxu0 %v961
    %v4920 = vpop.f32.mrf.mxu0
    %v4921 = vadd.f32 %v4907, %v4920
    %v4922 = vpop.f32.mrf.mxu0
    %v4923 = vadd.f32 %v4909, %v4922
    %4924 = vdwg.mxu0
    %4925 = vmatpush.bf16.msra.mxu0 %v3669
    %4926 = vmatpush.bf16.msra.mxu0 %v3663
    %4927 = vmatpush.bf16.msra.mxu0 %v3657
    %4928 = vmatpush.bf16.msra.mxu0 %v3651
    %4929 = vmatpush.bf16.msra.mxu0 %v3645
    %4930 = vmatpush.bf16.msra.mxu0 %v3639
    %4931 = vmatpush.bf16.msra.mxu0 %v3633
    %4932 = vmatpush.bf16.msra.mxu0 %v3627
    %4933 = vmatmul.bf16.gmra.mxu0 %v962
    %v4934 = vpop.f32.mrf.mxu0
    %v4935 = vadd.f32 %v4921, %v4934
    %v4936 = vpop.f32.mrf.mxu0
    %v4937 = vadd.f32 %v4923, %v4936
    %4938 = vdwg.mxu0
    %4939 = vmatpush.bf16.msra.mxu0 %v3717
    %4940 = vmatpush.bf16.msra.mxu0 %v3711
    %4941 = vmatpush.bf16.msra.mxu0 %v3705
    %4942 = vmatpush.bf16.msra.mxu0 %v3699
    %4943 = vmatpush.bf16.msra.mxu0 %v3693
    %4944 = vmatpush.bf16.msra.mxu0 %v3687
    %4945 = vmatpush.bf16.msra.mxu0 %v3681
    %4946 = vmatpush.bf16.msra.mxu0 %v3675
    %4947 = vmatmul.bf16.gmra.mxu0 %v963
    %v4948 = vpop.f32.mrf.mxu0
    %v4949 = vadd.f32 %v4935, %v4948
    %v4950 = vpop.f32.mrf.mxu0
    %v4951 = vadd.f32 %v4937, %v4950
    %4952 = vdwg.mxu0
    %4953 = vmatpush.bf16.msra.mxu0 %v3765
    %4954 = vmatpush.bf16.msra.mxu0 %v3759
    %4955 = vmatpush.bf16.msra.mxu0 %v3753
    %4956 = vmatpush.bf16.msra.mxu0 %v3747
    %4957 = vmatpush.bf16.msra.mxu0 %v3741
    %4958 = vmatpush.bf16.msra.mxu0 %v3735
    %4959 = vmatpush.bf16.msra.mxu0 %v3729
    %4960 = vmatpush.bf16.msra.mxu0 %v3723
    %4961 = vmatmul.bf16.gmra.mxu0 %v964
    %v4962 = vpop.f32.mrf.mxu0
    %v4963 = vadd.f32 %v4949, %v4962
    %v4964 = vpop.f32.mrf.mxu0
    %v4965 = vadd.f32 %v4951, %v4964
    %4966 = vdwg.mxu0
    %4967 = vmatpush.bf16.msra.mxu0 %v3813
    %4968 = vmatpush.bf16.msra.mxu0 %v3807
    %4969 = vmatpush.bf16.msra.mxu0 %v3801
    %4970 = vmatpush.bf16.msra.mxu0 %v3795
    %4971 = vmatpush.bf16.msra.mxu0 %v3789
    %4972 = vmatpush.bf16.msra.mxu0 %v3783
    %4973 = vmatpush.bf16.msra.mxu0 %v3777
    %4974 = vmatpush.bf16.msra.mxu0 %v3771
    %4975 = vmatmul.bf16.gmra.mxu0 %v965
    %v4976 = vpop.f32.mrf.mxu0
    %v4977 = vadd.f32 %v4963, %v4976
    %v4978 = vpop.f32.mrf.mxu0
    %v4979 = vadd.f32 %v4965, %v4978
    %4980 = vdwg.mxu0
    %4981 = vmatpush.bf16.msra.mxu0 %v3861
    %4982 = vmatpush.bf16.msra.mxu0 %v3855
    %4983 = vmatpush.bf16.msra.mxu0 %v3849
    %4984 = vmatpush.bf16.msra.mxu0 %v3843
    %4985 = vmatpush.bf16.msra.mxu0 %v3837
    %4986 = vmatpush.bf16.msra.mxu0 %v3831
    %4987 = vmatpush.bf16.msra.mxu0 %v3825
    %4988 = vmatpush.bf16.msra.mxu0 %v3819
    %4989 = vmatmul.bf16.gmra.mxu0 %v966
    %v4990 = vpop.f32.mrf.mxu0
    %v4991 = vadd.f32 %v4977, %v4990
    %v4992 = vpop.f32.mrf.mxu0
    %v4993 = vadd.f32 %v4979, %v4992
    %4994 = vdwg.mxu0
    %4995 = vmatpush.bf16.msra.mxu0 %v3909
    %4996 = vmatpush.bf16.msra.mxu0 %v3903
    %4997 = vmatpush.bf16.msra.mxu0 %v3897
    %4998 = vmatpush.bf16.msra.mxu0 %v3891
    %4999 = vmatpush.bf16.msra.mxu0 %v3885
    %5000 = vmatpush.bf16.msra.mxu0 %v3879
    %5001 = vmatpush.bf16.msra.mxu0 %v3873
    %5002 = vmatpush.bf16.msra.mxu0 %v3867
    %5003 = vmatmul.bf16.gmra.mxu0 %v967
    %v5004 = vpop.f32.mrf.mxu0
    %v5005 = vadd.f32 %v4991, %v5004
    %v5006 = vpop.f32.mrf.mxu0
    %v5007 = vadd.f32 %v4993, %v5006
    %5008 = vdwg.mxu0
    %5009 = vmatpush.bf16.msra.mxu0 %v3957
    %5010 = vmatpush.bf16.msra.mxu0 %v3951
    %5011 = vmatpush.bf16.msra.mxu0 %v3945
    %5012 = vmatpush.bf16.msra.mxu0 %v3939
    %5013 = vmatpush.bf16.msra.mxu0 %v3933
    %5014 = vmatpush.bf16.msra.mxu0 %v3927
    %5015 = vmatpush.bf16.msra.mxu0 %v3921
    %5016 = vmatpush.bf16.msra.mxu0 %v3915
    %5017 = vmatmul.bf16.gmra.mxu0 %v968
    %v5018 = vpop.f32.mrf.mxu0
    %v5019 = vadd.f32 %v5005, %v5018
    %v5020 = vpop.f32.mrf.mxu0
    %v5021 = vadd.f32 %v5007, %v5020
    %5022 = vdwg.mxu0
    %5023 = vmatpush.bf16.msra.mxu0 %v4005
    %5024 = vmatpush.bf16.msra.mxu0 %v3999
    %5025 = vmatpush.bf16.msra.mxu0 %v3993
    %5026 = vmatpush.bf16.msra.mxu0 %v3987
    %5027 = vmatpush.bf16.msra.mxu0 %v3981
    %5028 = vmatpush.bf16.msra.mxu0 %v3975
    %5029 = vmatpush.bf16.msra.mxu0 %v3969
    %5030 = vmatpush.bf16.msra.mxu0 %v3963
    %5031 = vmatmul.bf16.gmra.mxu0 %v969
    %v5032 = vpop.f32.mrf.mxu0
    %v5033 = vadd.f32 %v5019, %v5032
    %v5034 = vpop.f32.mrf.mxu0
    %v5035 = vadd.f32 %v5021, %v5034
    %5036 = vdwg.mxu0
    %5037 = vmatpush.bf16.msra.mxu0 %v4053
    %5038 = vmatpush.bf16.msra.mxu0 %v4047
    %5039 = vmatpush.bf16.msra.mxu0 %v4041
    %5040 = vmatpush.bf16.msra.mxu0 %v4035
    %5041 = vmatpush.bf16.msra.mxu0 %v4029
    %5042 = vmatpush.bf16.msra.mxu0 %v4023
    %5043 = vmatpush.bf16.msra.mxu0 %v4017
    %5044 = vmatpush.bf16.msra.mxu0 %v4011
    %5045 = vmatmul.bf16.gmra.mxu0 %v970
    %v5046 = vpop.f32.mrf.mxu0
    %v5047 = vadd.f32 %v5033, %v5046
    %v5048 = vpop.f32.mrf.mxu0
    %v5049 = vadd.f32 %v5035, %v5048
    %5050 = vdwg.mxu0
    %5051 = vmatpush.bf16.msra.mxu0 %v3334
    %5052 = vmatpush.bf16.msra.mxu0 %v3328
    %5053 = vmatpush.bf16.msra.mxu0 %v3322
    %5054 = vmatpush.bf16.msra.mxu0 %v3316
    %5055 = vmatpush.bf16.msra.mxu0 %v3310
    %5056 = vmatpush.bf16.msra.mxu0 %v3304
    %5057 = vmatpush.bf16.msra.mxu0 %v3298
    %5058 = vmatpush.bf16.msra.mxu0 %v3292
    %5059 = vmatmul.bf16.gmra.mxu0 %v955
    %v5060 = vpop.f32.mrf.mxu0
    %v5061 = vadd.f32 %v896, %v5060
    %v5062 = vpop.f32.mrf.mxu0
    %v5063 = vadd.f32 %v896, %v5062
    %5064 = vdwg.mxu0
    %5065 = vmatpush.bf16.msra.mxu0 %v3382
    %5066 = vmatpush.bf16.msra.mxu0 %v3376
    %5067 = vmatpush.bf16.msra.mxu0 %v3370
    %5068 = vmatpush.bf16.msra.mxu0 %v3364
    %5069 = vmatpush.bf16.msra.mxu0 %v3358
    %5070 = vmatpush.bf16.msra.mxu0 %v3352
    %5071 = vmatpush.bf16.msra.mxu0 %v3346
    %5072 = vmatpush.bf16.msra.mxu0 %v3340
    %5073 = vmatmul.bf16.gmra.mxu0 %v956
    %v5074 = vpop.f32.mrf.mxu0
    %v5075 = vadd.f32 %v5061, %v5074
    %v5076 = vpop.f32.mrf.mxu0
    %v5077 = vadd.f32 %v5063, %v5076
    %5078 = vdwg.mxu0
    %5079 = vmatpush.bf16.msra.mxu0 %v3430
    %5080 = vmatpush.bf16.msra.mxu0 %v3424
    %5081 = vmatpush.bf16.msra.mxu0 %v3418
    %5082 = vmatpush.bf16.msra.mxu0 %v3412
    %5083 = vmatpush.bf16.msra.mxu0 %v3406
    %5084 = vmatpush.bf16.msra.mxu0 %v3400
    %5085 = vmatpush.bf16.msra.mxu0 %v3394
    %5086 = vmatpush.bf16.msra.mxu0 %v3388
    %5087 = vmatmul.bf16.gmra.mxu0 %v957
    %v5088 = vpop.f32.mrf.mxu0
    %v5089 = vadd.f32 %v5075, %v5088
    %v5090 = vpop.f32.mrf.mxu0
    %v5091 = vadd.f32 %v5077, %v5090
    %5092 = vdwg.mxu0
    %5093 = vmatpush.bf16.msra.mxu0 %v3478
    %5094 = vmatpush.bf16.msra.mxu0 %v3472
    %5095 = vmatpush.bf16.msra.mxu0 %v3466
    %5096 = vmatpush.bf16.msra.mxu0 %v3460
    %5097 = vmatpush.bf16.msra.mxu0 %v3454
    %5098 = vmatpush.bf16.msra.mxu0 %v3448
    %5099 = vmatpush.bf16.msra.mxu0 %v3442
    %5100 = vmatpush.bf16.msra.mxu0 %v3436
    %5101 = vmatmul.bf16.gmra.mxu0 %v958
    %v5102 = vpop.f32.mrf.mxu0
    %v5103 = vadd.f32 %v5089, %v5102
    %v5104 = vpop.f32.mrf.mxu0
    %v5105 = vadd.f32 %v5091, %v5104
    %5106 = vdwg.mxu0
    %5107 = vmatpush.bf16.msra.mxu0 %v3526
    %5108 = vmatpush.bf16.msra.mxu0 %v3520
    %5109 = vmatpush.bf16.msra.mxu0 %v3514
    %5110 = vmatpush.bf16.msra.mxu0 %v3508
    %5111 = vmatpush.bf16.msra.mxu0 %v3502
    %5112 = vmatpush.bf16.msra.mxu0 %v3496
    %5113 = vmatpush.bf16.msra.mxu0 %v3490
    %5114 = vmatpush.bf16.msra.mxu0 %v3484
    %5115 = vmatmul.bf16.gmra.mxu0 %v959
    %v5116 = vpop.f32.mrf.mxu0
    %v5117 = vadd.f32 %v5103, %v5116
    %v5118 = vpop.f32.mrf.mxu0
    %v5119 = vadd.f32 %v5105, %v5118
    %5120 = vdwg.mxu0
    %5121 = vmatpush.bf16.msra.mxu0 %v3574
    %5122 = vmatpush.bf16.msra.mxu0 %v3568
    %5123 = vmatpush.bf16.msra.mxu0 %v3562
    %5124 = vmatpush.bf16.msra.mxu0 %v3556
    %5125 = vmatpush.bf16.msra.mxu0 %v3550
    %5126 = vmatpush.bf16.msra.mxu0 %v3544
    %5127 = vmatpush.bf16.msra.mxu0 %v3538
    %5128 = vmatpush.bf16.msra.mxu0 %v3532
    %5129 = vmatmul.bf16.gmra.mxu0 %v960
    %v5130 = vpop.f32.mrf.mxu0
    %v5131 = vadd.f32 %v5117, %v5130
    %v5132 = vpop.f32.mrf.mxu0
    %v5133 = vadd.f32 %v5119, %v5132
    %5134 = vdwg.mxu0
    %5135 = vmatpush.bf16.msra.mxu0 %v3622
    %5136 = vmatpush.bf16.msra.mxu0 %v3616
    %5137 = vmatpush.bf16.msra.mxu0 %v3610
    %5138 = vmatpush.bf16.msra.mxu0 %v3604
    %5139 = vmatpush.bf16.msra.mxu0 %v3598
    %5140 = vmatpush.bf16.msra.mxu0 %v3592
    %5141 = vmatpush.bf16.msra.mxu0 %v3586
    %5142 = vmatpush.bf16.msra.mxu0 %v3580
    %5143 = vmatmul.bf16.gmra.mxu0 %v961
    %v5144 = vpop.f32.mrf.mxu0
    %v5145 = vadd.f32 %v5131, %v5144
    %v5146 = vpop.f32.mrf.mxu0
    %v5147 = vadd.f32 %v5133, %v5146
    %5148 = vdwg.mxu0
    %5149 = vmatpush.bf16.msra.mxu0 %v3670
    %5150 = vmatpush.bf16.msra.mxu0 %v3664
    %5151 = vmatpush.bf16.msra.mxu0 %v3658
    %5152 = vmatpush.bf16.msra.mxu0 %v3652
    %5153 = vmatpush.bf16.msra.mxu0 %v3646
    %5154 = vmatpush.bf16.msra.mxu0 %v3640
    %5155 = vmatpush.bf16.msra.mxu0 %v3634
    %5156 = vmatpush.bf16.msra.mxu0 %v3628
    %5157 = vmatmul.bf16.gmra.mxu0 %v962
    %v5158 = vpop.f32.mrf.mxu0
    %v5159 = vadd.f32 %v5145, %v5158
    %v5160 = vpop.f32.mrf.mxu0
    %v5161 = vadd.f32 %v5147, %v5160
    %5162 = vdwg.mxu0
    %5163 = vmatpush.bf16.msra.mxu0 %v3718
    %5164 = vmatpush.bf16.msra.mxu0 %v3712
    %5165 = vmatpush.bf16.msra.mxu0 %v3706
    %5166 = vmatpush.bf16.msra.mxu0 %v3700
    %5167 = vmatpush.bf16.msra.mxu0 %v3694
    %5168 = vmatpush.bf16.msra.mxu0 %v3688
    %5169 = vmatpush.bf16.msra.mxu0 %v3682
    %5170 = vmatpush.bf16.msra.mxu0 %v3676
    %5171 = vmatmul.bf16.gmra.mxu0 %v963
    %v5172 = vpop.f32.mrf.mxu0
    %v5173 = vadd.f32 %v5159, %v5172
    %v5174 = vpop.f32.mrf.mxu0
    %v5175 = vadd.f32 %v5161, %v5174
    %5176 = vdwg.mxu0
    %5177 = vmatpush.bf16.msra.mxu0 %v3766
    %5178 = vmatpush.bf16.msra.mxu0 %v3760
    %5179 = vmatpush.bf16.msra.mxu0 %v3754
    %5180 = vmatpush.bf16.msra.mxu0 %v3748
    %5181 = vmatpush.bf16.msra.mxu0 %v3742
    %5182 = vmatpush.bf16.msra.mxu0 %v3736
    %5183 = vmatpush.bf16.msra.mxu0 %v3730
    %5184 = vmatpush.bf16.msra.mxu0 %v3724
    %5185 = vmatmul.bf16.gmra.mxu0 %v964
    %v5186 = vpop.f32.mrf.mxu0
    %v5187 = vadd.f32 %v5173, %v5186
    %v5188 = vpop.f32.mrf.mxu0
    %v5189 = vadd.f32 %v5175, %v5188
    %5190 = vdwg.mxu0
    %5191 = vmatpush.bf16.msra.mxu0 %v3814
    %5192 = vmatpush.bf16.msra.mxu0 %v3808
    %5193 = vmatpush.bf16.msra.mxu0 %v3802
    %5194 = vmatpush.bf16.msra.mxu0 %v3796
    %5195 = vmatpush.bf16.msra.mxu0 %v3790
    %5196 = vmatpush.bf16.msra.mxu0 %v3784
    %5197 = vmatpush.bf16.msra.mxu0 %v3778
    %5198 = vmatpush.bf16.msra.mxu0 %v3772
    %5199 = vmatmul.bf16.gmra.mxu0 %v965
    %v5200 = vpop.f32.mrf.mxu0
    %v5201 = vadd.f32 %v5187, %v5200
    %v5202 = vpop.f32.mrf.mxu0
    %v5203 = vadd.f32 %v5189, %v5202
    %5204 = vdwg.mxu0
    %5205 = vmatpush.bf16.msra.mxu0 %v3862
    %5206 = vmatpush.bf16.msra.mxu0 %v3856
    %5207 = vmatpush.bf16.msra.mxu0 %v3850
    %5208 = vmatpush.bf16.msra.mxu0 %v3844
    %5209 = vmatpush.bf16.msra.mxu0 %v3838
    %5210 = vmatpush.bf16.msra.mxu0 %v3832
    %5211 = vmatpush.bf16.msra.mxu0 %v3826
    %5212 = vmatpush.bf16.msra.mxu0 %v3820
    %5213 = vmatmul.bf16.gmra.mxu0 %v966
    %v5214 = vpop.f32.mrf.mxu0
    %v5215 = vadd.f32 %v5201, %v5214
    %v5216 = vpop.f32.mrf.mxu0
    %v5217 = vadd.f32 %v5203, %v5216
    %5218 = vdwg.mxu0
    %5219 = vmatpush.bf16.msra.mxu0 %v3910
    %5220 = vmatpush.bf16.msra.mxu0 %v3904
    %5221 = vmatpush.bf16.msra.mxu0 %v3898
    %5222 = vmatpush.bf16.msra.mxu0 %v3892
    %5223 = vmatpush.bf16.msra.mxu0 %v3886
    %5224 = vmatpush.bf16.msra.mxu0 %v3880
    %5225 = vmatpush.bf16.msra.mxu0 %v3874
    %5226 = vmatpush.bf16.msra.mxu0 %v3868
    %5227 = vmatmul.bf16.gmra.mxu0 %v967
    %v5228 = vpop.f32.mrf.mxu0
    %v5229 = vadd.f32 %v5215, %v5228
    %v5230 = vpop.f32.mrf.mxu0
    %v5231 = vadd.f32 %v5217, %v5230
    %5232 = vdwg.mxu0
    %5233 = vmatpush.bf16.msra.mxu0 %v3958
    %5234 = vmatpush.bf16.msra.mxu0 %v3952
    %5235 = vmatpush.bf16.msra.mxu0 %v3946
    %5236 = vmatpush.bf16.msra.mxu0 %v3940
    %5237 = vmatpush.bf16.msra.mxu0 %v3934
    %5238 = vmatpush.bf16.msra.mxu0 %v3928
    %5239 = vmatpush.bf16.msra.mxu0 %v3922
    %5240 = vmatpush.bf16.msra.mxu0 %v3916
    %5241 = vmatmul.bf16.gmra.mxu0 %v968
    %v5242 = vpop.f32.mrf.mxu0
    %v5243 = vadd.f32 %v5229, %v5242
    %v5244 = vpop.f32.mrf.mxu0
    %v5245 = vadd.f32 %v5231, %v5244
    %5246 = vdwg.mxu0
    %5247 = vmatpush.bf16.msra.mxu0 %v4006
    %5248 = vmatpush.bf16.msra.mxu0 %v4000
    %5249 = vmatpush.bf16.msra.mxu0 %v3994
    %5250 = vmatpush.bf16.msra.mxu0 %v3988
    %5251 = vmatpush.bf16.msra.mxu0 %v3982
    %5252 = vmatpush.bf16.msra.mxu0 %v3976
    %5253 = vmatpush.bf16.msra.mxu0 %v3970
    %5254 = vmatpush.bf16.msra.mxu0 %v3964
    %5255 = vmatmul.bf16.gmra.mxu0 %v969
    %v5256 = vpop.f32.mrf.mxu0
    %v5257 = vadd.f32 %v5243, %v5256
    %v5258 = vpop.f32.mrf.mxu0
    %v5259 = vadd.f32 %v5245, %v5258
    %5260 = vdwg.mxu0
    %5261 = vmatpush.bf16.msra.mxu0 %v4054
    %5262 = vmatpush.bf16.msra.mxu0 %v4048
    %5263 = vmatpush.bf16.msra.mxu0 %v4042
    %5264 = vmatpush.bf16.msra.mxu0 %v4036
    %5265 = vmatpush.bf16.msra.mxu0 %v4030
    %5266 = vmatpush.bf16.msra.mxu0 %v4024
    %5267 = vmatpush.bf16.msra.mxu0 %v4018
    %5268 = vmatpush.bf16.msra.mxu0 %v4012
    %5269 = vmatmul.bf16.gmra.mxu0 %v970
    %v5270 = vpop.f32.mrf.mxu0
    %v5271 = vadd.f32 %v5257, %v5270
    %v5272 = vpop.f32.mrf.mxu0
    %v5273 = vadd.f32 %v5259, %v5272
    %5274 = vdwg.mxu0
    %5275 = vmatpush.bf16.msra.mxu0 %v3335
    %5276 = vmatpush.bf16.msra.mxu0 %v3329
    %5277 = vmatpush.bf16.msra.mxu0 %v3323
    %5278 = vmatpush.bf16.msra.mxu0 %v3317
    %5279 = vmatpush.bf16.msra.mxu0 %v3311
    %5280 = vmatpush.bf16.msra.mxu0 %v3305
    %5281 = vmatpush.bf16.msra.mxu0 %v3299
    %5282 = vmatpush.bf16.msra.mxu0 %v3293
    %5283 = vmatmul.bf16.gmra.mxu0 %v955
    %v5284 = vpop.f32.mrf.mxu0
    %v5285 = vadd.f32 %v897, %v5284
    %v5286 = vpop.f32.mrf.mxu0
    %v5287 = vadd.f32 %v897, %v5286
    %5288 = vdwg.mxu0
    %5289 = vmatpush.bf16.msra.mxu0 %v3383
    %5290 = vmatpush.bf16.msra.mxu0 %v3377
    %5291 = vmatpush.bf16.msra.mxu0 %v3371
    %5292 = vmatpush.bf16.msra.mxu0 %v3365
    %5293 = vmatpush.bf16.msra.mxu0 %v3359
    %5294 = vmatpush.bf16.msra.mxu0 %v3353
    %5295 = vmatpush.bf16.msra.mxu0 %v3347
    %5296 = vmatpush.bf16.msra.mxu0 %v3341
    %5297 = vmatmul.bf16.gmra.mxu0 %v956
    %v5298 = vpop.f32.mrf.mxu0
    %v5299 = vadd.f32 %v5285, %v5298
    %v5300 = vpop.f32.mrf.mxu0
    %v5301 = vadd.f32 %v5287, %v5300
    %5302 = vdwg.mxu0
    %5303 = vmatpush.bf16.msra.mxu0 %v3431
    %5304 = vmatpush.bf16.msra.mxu0 %v3425
    %5305 = vmatpush.bf16.msra.mxu0 %v3419
    %5306 = vmatpush.bf16.msra.mxu0 %v3413
    %5307 = vmatpush.bf16.msra.mxu0 %v3407
    %5308 = vmatpush.bf16.msra.mxu0 %v3401
    %5309 = vmatpush.bf16.msra.mxu0 %v3395
    %5310 = vmatpush.bf16.msra.mxu0 %v3389
    %5311 = vmatmul.bf16.gmra.mxu0 %v957
    %v5312 = vpop.f32.mrf.mxu0
    %v5313 = vadd.f32 %v5299, %v5312
    %v5314 = vpop.f32.mrf.mxu0
    %v5315 = vadd.f32 %v5301, %v5314
    %5316 = vdwg.mxu0
    %5317 = vmatpush.bf16.msra.mxu0 %v3479
    %5318 = vmatpush.bf16.msra.mxu0 %v3473
    %5319 = vmatpush.bf16.msra.mxu0 %v3467
    %5320 = vmatpush.bf16.msra.mxu0 %v3461
    %5321 = vmatpush.bf16.msra.mxu0 %v3455
    %5322 = vmatpush.bf16.msra.mxu0 %v3449
    %5323 = vmatpush.bf16.msra.mxu0 %v3443
    %5324 = vmatpush.bf16.msra.mxu0 %v3437
    %5325 = vmatmul.bf16.gmra.mxu0 %v958
    %v5326 = vpop.f32.mrf.mxu0
    %v5327 = vadd.f32 %v5313, %v5326
    %v5328 = vpop.f32.mrf.mxu0
    %v5329 = vadd.f32 %v5315, %v5328
    %5330 = vdwg.mxu0
    %5331 = vmatpush.bf16.msra.mxu0 %v3527
    %5332 = vmatpush.bf16.msra.mxu0 %v3521
    %5333 = vmatpush.bf16.msra.mxu0 %v3515
    %5334 = vmatpush.bf16.msra.mxu0 %v3509
    %5335 = vmatpush.bf16.msra.mxu0 %v3503
    %5336 = vmatpush.bf16.msra.mxu0 %v3497
    %5337 = vmatpush.bf16.msra.mxu0 %v3491
    %5338 = vmatpush.bf16.msra.mxu0 %v3485
    %5339 = vmatmul.bf16.gmra.mxu0 %v959
    %v5340 = vpop.f32.mrf.mxu0
    %v5341 = vadd.f32 %v5327, %v5340
    %v5342 = vpop.f32.mrf.mxu0
    %v5343 = vadd.f32 %v5329, %v5342
    %5344 = vdwg.mxu0
    %5345 = vmatpush.bf16.msra.mxu0 %v3575
    %5346 = vmatpush.bf16.msra.mxu0 %v3569
    %5347 = vmatpush.bf16.msra.mxu0 %v3563
    %5348 = vmatpush.bf16.msra.mxu0 %v3557
    %5349 = vmatpush.bf16.msra.mxu0 %v3551
    %5350 = vmatpush.bf16.msra.mxu0 %v3545
    %5351 = vmatpush.bf16.msra.mxu0 %v3539
    %5352 = vmatpush.bf16.msra.mxu0 %v3533
    %5353 = vmatmul.bf16.gmra.mxu0 %v960
    %v5354 = vpop.f32.mrf.mxu0
    %v5355 = vadd.f32 %v5341, %v5354
    %v5356 = vpop.f32.mrf.mxu0
    %v5357 = vadd.f32 %v5343, %v5356
    %5358 = vdwg.mxu0
    %5359 = vmatpush.bf16.msra.mxu0 %v3623
    %5360 = vmatpush.bf16.msra.mxu0 %v3617
    %5361 = vmatpush.bf16.msra.mxu0 %v3611
    %5362 = vmatpush.bf16.msra.mxu0 %v3605
    %5363 = vmatpush.bf16.msra.mxu0 %v3599
    %5364 = vmatpush.bf16.msra.mxu0 %v3593
    %5365 = vmatpush.bf16.msra.mxu0 %v3587
    %5366 = vmatpush.bf16.msra.mxu0 %v3581
    %5367 = vmatmul.bf16.gmra.mxu0 %v961
    %v5368 = vpop.f32.mrf.mxu0
    %v5369 = vadd.f32 %v5355, %v5368
    %v5370 = vpop.f32.mrf.mxu0
    %v5371 = vadd.f32 %v5357, %v5370
    %5372 = vdwg.mxu0
    %5373 = vmatpush.bf16.msra.mxu0 %v3671
    %5374 = vmatpush.bf16.msra.mxu0 %v3665
    %5375 = vmatpush.bf16.msra.mxu0 %v3659
    %5376 = vmatpush.bf16.msra.mxu0 %v3653
    %5377 = vmatpush.bf16.msra.mxu0 %v3647
    %5378 = vmatpush.bf16.msra.mxu0 %v3641
    %5379 = vmatpush.bf16.msra.mxu0 %v3635
    %5380 = vmatpush.bf16.msra.mxu0 %v3629
    %5381 = vmatmul.bf16.gmra.mxu0 %v962
    %v5382 = vpop.f32.mrf.mxu0
    %v5383 = vadd.f32 %v5369, %v5382
    %v5384 = vpop.f32.mrf.mxu0
    %v5385 = vadd.f32 %v5371, %v5384
    %5386 = vdwg.mxu0
    %5387 = vmatpush.bf16.msra.mxu0 %v3719
    %5388 = vmatpush.bf16.msra.mxu0 %v3713
    %5389 = vmatpush.bf16.msra.mxu0 %v3707
    %5390 = vmatpush.bf16.msra.mxu0 %v3701
    %5391 = vmatpush.bf16.msra.mxu0 %v3695
    %5392 = vmatpush.bf16.msra.mxu0 %v3689
    %5393 = vmatpush.bf16.msra.mxu0 %v3683
    %5394 = vmatpush.bf16.msra.mxu0 %v3677
    %5395 = vmatmul.bf16.gmra.mxu0 %v963
    %v5396 = vpop.f32.mrf.mxu0
    %v5397 = vadd.f32 %v5383, %v5396
    %v5398 = vpop.f32.mrf.mxu0
    %v5399 = vadd.f32 %v5385, %v5398
    %5400 = vdwg.mxu0
    %5401 = vmatpush.bf16.msra.mxu0 %v3767
    %5402 = vmatpush.bf16.msra.mxu0 %v3761
    %5403 = vmatpush.bf16.msra.mxu0 %v3755
    %5404 = vmatpush.bf16.msra.mxu0 %v3749
    %5405 = vmatpush.bf16.msra.mxu0 %v3743
    %5406 = vmatpush.bf16.msra.mxu0 %v3737
    %5407 = vmatpush.bf16.msra.mxu0 %v3731
    %5408 = vmatpush.bf16.msra.mxu0 %v3725
    %5409 = vmatmul.bf16.gmra.mxu0 %v964
    %v5410 = vpop.f32.mrf.mxu0
    %v5411 = vadd.f32 %v5397, %v5410
    %v5412 = vpop.f32.mrf.mxu0
    %v5413 = vadd.f32 %v5399, %v5412
    %5414 = vdwg.mxu0
    %5415 = vmatpush.bf16.msra.mxu0 %v3815
    %5416 = vmatpush.bf16.msra.mxu0 %v3809
    %5417 = vmatpush.bf16.msra.mxu0 %v3803
    %5418 = vmatpush.bf16.msra.mxu0 %v3797
    %5419 = vmatpush.bf16.msra.mxu0 %v3791
    %5420 = vmatpush.bf16.msra.mxu0 %v3785
    %5421 = vmatpush.bf16.msra.mxu0 %v3779
    %5422 = vmatpush.bf16.msra.mxu0 %v3773
    %5423 = vmatmul.bf16.gmra.mxu0 %v965
    %v5424 = vpop.f32.mrf.mxu0
    %v5425 = vadd.f32 %v5411, %v5424
    %v5426 = vpop.f32.mrf.mxu0
    %v5427 = vadd.f32 %v5413, %v5426
    %5428 = vdwg.mxu0
    %5429 = vmatpush.bf16.msra.mxu0 %v3863
    %5430 = vmatpush.bf16.msra.mxu0 %v3857
    %5431 = vmatpush.bf16.msra.mxu0 %v3851
    %5432 = vmatpush.bf16.msra.mxu0 %v3845
    %5433 = vmatpush.bf16.msra.mxu0 %v3839
    %5434 = vmatpush.bf16.msra.mxu0 %v3833
    %5435 = vmatpush.bf16.msra.mxu0 %v3827
    %5436 = vmatpush.bf16.msra.mxu0 %v3821
    %5437 = vmatmul.bf16.gmra.mxu0 %v966
    %v5438 = vpop.f32.mrf.mxu0
    %v5439 = vadd.f32 %v5425, %v5438
    %v5440 = vpop.f32.mrf.mxu0
    %v5441 = vadd.f32 %v5427, %v5440
    %5442 = vdwg.mxu0
    %5443 = vmatpush.bf16.msra.mxu0 %v3911
    %5444 = vmatpush.bf16.msra.mxu0 %v3905
    %5445 = vmatpush.bf16.msra.mxu0 %v3899
    %5446 = vmatpush.bf16.msra.mxu0 %v3893
    %5447 = vmatpush.bf16.msra.mxu0 %v3887
    %5448 = vmatpush.bf16.msra.mxu0 %v3881
    %5449 = vmatpush.bf16.msra.mxu0 %v3875
    %5450 = vmatpush.bf16.msra.mxu0 %v3869
    %5451 = vmatmul.bf16.gmra.mxu0 %v967
    %v5452 = vpop.f32.mrf.mxu0
    %v5453 = vadd.f32 %v5439, %v5452
    %v5454 = vpop.f32.mrf.mxu0
    %v5455 = vadd.f32 %v5441, %v5454
    %5456 = vdwg.mxu0
    %5457 = vmatpush.bf16.msra.mxu0 %v3959
    %5458 = vmatpush.bf16.msra.mxu0 %v3953
    %5459 = vmatpush.bf16.msra.mxu0 %v3947
    %5460 = vmatpush.bf16.msra.mxu0 %v3941
    %5461 = vmatpush.bf16.msra.mxu0 %v3935
    %5462 = vmatpush.bf16.msra.mxu0 %v3929
    %5463 = vmatpush.bf16.msra.mxu0 %v3923
    %5464 = vmatpush.bf16.msra.mxu0 %v3917
    %5465 = vmatmul.bf16.gmra.mxu0 %v968
    %v5466 = vpop.f32.mrf.mxu0
    %v5467 = vadd.f32 %v5453, %v5466
    %v5468 = vpop.f32.mrf.mxu0
    %v5469 = vadd.f32 %v5455, %v5468
    %5470 = vdwg.mxu0
    %5471 = vmatpush.bf16.msra.mxu0 %v4007
    %5472 = vmatpush.bf16.msra.mxu0 %v4001
    %5473 = vmatpush.bf16.msra.mxu0 %v3995
    %5474 = vmatpush.bf16.msra.mxu0 %v3989
    %5475 = vmatpush.bf16.msra.mxu0 %v3983
    %5476 = vmatpush.bf16.msra.mxu0 %v3977
    %5477 = vmatpush.bf16.msra.mxu0 %v3971
    %5478 = vmatpush.bf16.msra.mxu0 %v3965
    %5479 = vmatmul.bf16.gmra.mxu0 %v969
    %v5480 = vpop.f32.mrf.mxu0
    %v5481 = vadd.f32 %v5467, %v5480
    %v5482 = vpop.f32.mrf.mxu0
    %v5483 = vadd.f32 %v5469, %v5482
    %5484 = vdwg.mxu0
    %5485 = vmatpush.bf16.msra.mxu0 %v4055
    %5486 = vmatpush.bf16.msra.mxu0 %v4049
    %5487 = vmatpush.bf16.msra.mxu0 %v4043
    %5488 = vmatpush.bf16.msra.mxu0 %v4037
    %5489 = vmatpush.bf16.msra.mxu0 %v4031
    %5490 = vmatpush.bf16.msra.mxu0 %v4025
    %5491 = vmatpush.bf16.msra.mxu0 %v4019
    %5492 = vmatpush.bf16.msra.mxu0 %v4013
    %5493 = vmatmul.bf16.gmra.mxu0 %v970
    %v5494 = vpop.f32.mrf.mxu0
    %v5495 = vadd.f32 %v5481, %v5494
    %v5496 = vpop.f32.mrf.mxu0
    %v5497 = vadd.f32 %v5483, %v5496
    %5498 = vdwg.mxu0
    %5499 = vmatpush.bf16.msra.mxu0 %v3336
    %5500 = vmatpush.bf16.msra.mxu0 %v3330
    %5501 = vmatpush.bf16.msra.mxu0 %v3324
    %5502 = vmatpush.bf16.msra.mxu0 %v3318
    %5503 = vmatpush.bf16.msra.mxu0 %v3312
    %5504 = vmatpush.bf16.msra.mxu0 %v3306
    %5505 = vmatpush.bf16.msra.mxu0 %v3300
    %5506 = vmatpush.bf16.msra.mxu0 %v3294
    %5507 = vmatmul.bf16.gmra.mxu0 %v955
    %v5508 = vpop.f32.mrf.mxu0
    %v5509 = vadd.f32 %v898, %v5508
    %v5510 = vpop.f32.mrf.mxu0
    %v5511 = vadd.f32 %v898, %v5510
    %5512 = vdwg.mxu0
    %5513 = vmatpush.bf16.msra.mxu0 %v3384
    %5514 = vmatpush.bf16.msra.mxu0 %v3378
    %5515 = vmatpush.bf16.msra.mxu0 %v3372
    %5516 = vmatpush.bf16.msra.mxu0 %v3366
    %5517 = vmatpush.bf16.msra.mxu0 %v3360
    %5518 = vmatpush.bf16.msra.mxu0 %v3354
    %5519 = vmatpush.bf16.msra.mxu0 %v3348
    %5520 = vmatpush.bf16.msra.mxu0 %v3342
    %5521 = vmatmul.bf16.gmra.mxu0 %v956
    %v5522 = vpop.f32.mrf.mxu0
    %v5523 = vadd.f32 %v5509, %v5522
    %v5524 = vpop.f32.mrf.mxu0
    %v5525 = vadd.f32 %v5511, %v5524
    %5526 = vdwg.mxu0
    %5527 = vmatpush.bf16.msra.mxu0 %v3432
    %5528 = vmatpush.bf16.msra.mxu0 %v3426
    %5529 = vmatpush.bf16.msra.mxu0 %v3420
    %5530 = vmatpush.bf16.msra.mxu0 %v3414
    %5531 = vmatpush.bf16.msra.mxu0 %v3408
    %5532 = vmatpush.bf16.msra.mxu0 %v3402
    %5533 = vmatpush.bf16.msra.mxu0 %v3396
    %5534 = vmatpush.bf16.msra.mxu0 %v3390
    %5535 = vmatmul.bf16.gmra.mxu0 %v957
    %v5536 = vpop.f32.mrf.mxu0
    %v5537 = vadd.f32 %v5523, %v5536
    %v5538 = vpop.f32.mrf.mxu0
    %v5539 = vadd.f32 %v5525, %v5538
    %5540 = vdwg.mxu0
    %5541 = vmatpush.bf16.msra.mxu0 %v3480
    %5542 = vmatpush.bf16.msra.mxu0 %v3474
    %5543 = vmatpush.bf16.msra.mxu0 %v3468
    %5544 = vmatpush.bf16.msra.mxu0 %v3462
    %5545 = vmatpush.bf16.msra.mxu0 %v3456
    %5546 = vmatpush.bf16.msra.mxu0 %v3450
    %5547 = vmatpush.bf16.msra.mxu0 %v3444
    %5548 = vmatpush.bf16.msra.mxu0 %v3438
    %5549 = vmatmul.bf16.gmra.mxu0 %v958
    %v5550 = vpop.f32.mrf.mxu0
    %v5551 = vadd.f32 %v5537, %v5550
    %v5552 = vpop.f32.mrf.mxu0
    %v5553 = vadd.f32 %v5539, %v5552
    %5554 = vdwg.mxu0
    %5555 = vmatpush.bf16.msra.mxu0 %v3528
    %5556 = vmatpush.bf16.msra.mxu0 %v3522
    %5557 = vmatpush.bf16.msra.mxu0 %v3516
    %5558 = vmatpush.bf16.msra.mxu0 %v3510
    %5559 = vmatpush.bf16.msra.mxu0 %v3504
    %5560 = vmatpush.bf16.msra.mxu0 %v3498
    %5561 = vmatpush.bf16.msra.mxu0 %v3492
    %5562 = vmatpush.bf16.msra.mxu0 %v3486
    %5563 = vmatmul.bf16.gmra.mxu0 %v959
    %v5564 = vpop.f32.mrf.mxu0
    %v5565 = vadd.f32 %v5551, %v5564
    %v5566 = vpop.f32.mrf.mxu0
    %v5567 = vadd.f32 %v5553, %v5566
    %5568 = vdwg.mxu0
    %5569 = vmatpush.bf16.msra.mxu0 %v3576
    %5570 = vmatpush.bf16.msra.mxu0 %v3570
    %5571 = vmatpush.bf16.msra.mxu0 %v3564
    %5572 = vmatpush.bf16.msra.mxu0 %v3558
    %5573 = vmatpush.bf16.msra.mxu0 %v3552
    %5574 = vmatpush.bf16.msra.mxu0 %v3546
    %5575 = vmatpush.bf16.msra.mxu0 %v3540
    %5576 = vmatpush.bf16.msra.mxu0 %v3534
    %5577 = vmatmul.bf16.gmra.mxu0 %v960
    %v5578 = vpop.f32.mrf.mxu0
    %v5579 = vadd.f32 %v5565, %v5578
    %v5580 = vpop.f32.mrf.mxu0
    %v5581 = vadd.f32 %v5567, %v5580
    %5582 = vdwg.mxu0
    %5583 = vmatpush.bf16.msra.mxu0 %v3624
    %5584 = vmatpush.bf16.msra.mxu0 %v3618
    %5585 = vmatpush.bf16.msra.mxu0 %v3612
    %5586 = vmatpush.bf16.msra.mxu0 %v3606
    %5587 = vmatpush.bf16.msra.mxu0 %v3600
    %5588 = vmatpush.bf16.msra.mxu0 %v3594
    %5589 = vmatpush.bf16.msra.mxu0 %v3588
    %5590 = vmatpush.bf16.msra.mxu0 %v3582
    %5591 = vmatmul.bf16.gmra.mxu0 %v961
    %v5592 = vpop.f32.mrf.mxu0
    %v5593 = vadd.f32 %v5579, %v5592
    %v5594 = vpop.f32.mrf.mxu0
    %v5595 = vadd.f32 %v5581, %v5594
    %5596 = vdwg.mxu0
    %5597 = vmatpush.bf16.msra.mxu0 %v3672
    %5598 = vmatpush.bf16.msra.mxu0 %v3666
    %5599 = vmatpush.bf16.msra.mxu0 %v3660
    %5600 = vmatpush.bf16.msra.mxu0 %v3654
    %5601 = vmatpush.bf16.msra.mxu0 %v3648
    %5602 = vmatpush.bf16.msra.mxu0 %v3642
    %5603 = vmatpush.bf16.msra.mxu0 %v3636
    %5604 = vmatpush.bf16.msra.mxu0 %v3630
    %5605 = vmatmul.bf16.gmra.mxu0 %v962
    %v5606 = vpop.f32.mrf.mxu0
    %v5607 = vadd.f32 %v5593, %v5606
    %v5608 = vpop.f32.mrf.mxu0
    %v5609 = vadd.f32 %v5595, %v5608
    %5610 = vdwg.mxu0
    %5611 = vmatpush.bf16.msra.mxu0 %v3720
    %5612 = vmatpush.bf16.msra.mxu0 %v3714
    %5613 = vmatpush.bf16.msra.mxu0 %v3708
    %5614 = vmatpush.bf16.msra.mxu0 %v3702
    %5615 = vmatpush.bf16.msra.mxu0 %v3696
    %5616 = vmatpush.bf16.msra.mxu0 %v3690
    %5617 = vmatpush.bf16.msra.mxu0 %v3684
    %5618 = vmatpush.bf16.msra.mxu0 %v3678
    %5619 = vmatmul.bf16.gmra.mxu0 %v963
    %v5620 = vpop.f32.mrf.mxu0
    %v5621 = vadd.f32 %v5607, %v5620
    %v5622 = vpop.f32.mrf.mxu0
    %v5623 = vadd.f32 %v5609, %v5622
    %5624 = vdwg.mxu0
    %5625 = vmatpush.bf16.msra.mxu0 %v3768
    %5626 = vmatpush.bf16.msra.mxu0 %v3762
    %5627 = vmatpush.bf16.msra.mxu0 %v3756
    %5628 = vmatpush.bf16.msra.mxu0 %v3750
    %5629 = vmatpush.bf16.msra.mxu0 %v3744
    %5630 = vmatpush.bf16.msra.mxu0 %v3738
    %5631 = vmatpush.bf16.msra.mxu0 %v3732
    %5632 = vmatpush.bf16.msra.mxu0 %v3726
    %5633 = vmatmul.bf16.gmra.mxu0 %v964
    %v5634 = vpop.f32.mrf.mxu0
    %v5635 = vadd.f32 %v5621, %v5634
    %v5636 = vpop.f32.mrf.mxu0
    %v5637 = vadd.f32 %v5623, %v5636
    %5638 = vdwg.mxu0
    %5639 = vmatpush.bf16.msra.mxu0 %v3816
    %5640 = vmatpush.bf16.msra.mxu0 %v3810
    %5641 = vmatpush.bf16.msra.mxu0 %v3804
    %5642 = vmatpush.bf16.msra.mxu0 %v3798
    %5643 = vmatpush.bf16.msra.mxu0 %v3792
    %5644 = vmatpush.bf16.msra.mxu0 %v3786
    %5645 = vmatpush.bf16.msra.mxu0 %v3780
    %5646 = vmatpush.bf16.msra.mxu0 %v3774
    %5647 = vmatmul.bf16.gmra.mxu0 %v965
    %v5648 = vpop.f32.mrf.mxu0
    %v5649 = vadd.f32 %v5635, %v5648
    %v5650 = vpop.f32.mrf.mxu0
    %v5651 = vadd.f32 %v5637, %v5650
    %5652 = vdwg.mxu0
    %5653 = vmatpush.bf16.msra.mxu0 %v3864
    %5654 = vmatpush.bf16.msra.mxu0 %v3858
    %5655 = vmatpush.bf16.msra.mxu0 %v3852
    %5656 = vmatpush.bf16.msra.mxu0 %v3846
    %5657 = vmatpush.bf16.msra.mxu0 %v3840
    %5658 = vmatpush.bf16.msra.mxu0 %v3834
    %5659 = vmatpush.bf16.msra.mxu0 %v3828
    %5660 = vmatpush.bf16.msra.mxu0 %v3822
    %5661 = vmatmul.bf16.gmra.mxu0 %v966
    %v5662 = vpop.f32.mrf.mxu0
    %v5663 = vadd.f32 %v5649, %v5662
    %v5664 = vpop.f32.mrf.mxu0
    %v5665 = vadd.f32 %v5651, %v5664
    %5666 = vdwg.mxu0
    %5667 = vmatpush.bf16.msra.mxu0 %v3912
    %5668 = vmatpush.bf16.msra.mxu0 %v3906
    %5669 = vmatpush.bf16.msra.mxu0 %v3900
    %5670 = vmatpush.bf16.msra.mxu0 %v3894
    %5671 = vmatpush.bf16.msra.mxu0 %v3888
    %5672 = vmatpush.bf16.msra.mxu0 %v3882
    %5673 = vmatpush.bf16.msra.mxu0 %v3876
    %5674 = vmatpush.bf16.msra.mxu0 %v3870
    %5675 = vmatmul.bf16.gmra.mxu0 %v967
    %v5676 = vpop.f32.mrf.mxu0
    %v5677 = vadd.f32 %v5663, %v5676
    %v5678 = vpop.f32.mrf.mxu0
    %v5679 = vadd.f32 %v5665, %v5678
    %5680 = vdwg.mxu0
    %5681 = vmatpush.bf16.msra.mxu0 %v3960
    %5682 = vmatpush.bf16.msra.mxu0 %v3954
    %5683 = vmatpush.bf16.msra.mxu0 %v3948
    %5684 = vmatpush.bf16.msra.mxu0 %v3942
    %5685 = vmatpush.bf16.msra.mxu0 %v3936
    %5686 = vmatpush.bf16.msra.mxu0 %v3930
    %5687 = vmatpush.bf16.msra.mxu0 %v3924
    %5688 = vmatpush.bf16.msra.mxu0 %v3918
    %5689 = vmatmul.bf16.gmra.mxu0 %v968
    %v5690 = vpop.f32.mrf.mxu0
    %v5691 = vadd.f32 %v5677, %v5690
    %v5692 = vpop.f32.mrf.mxu0
    %v5693 = vadd.f32 %v5679, %v5692
    %5694 = vdwg.mxu0
    %5695 = vmatpush.bf16.msra.mxu0 %v4008
    %5696 = vmatpush.bf16.msra.mxu0 %v4002
    %5697 = vmatpush.bf16.msra.mxu0 %v3996
    %5698 = vmatpush.bf16.msra.mxu0 %v3990
    %5699 = vmatpush.bf16.msra.mxu0 %v3984
    %5700 = vmatpush.bf16.msra.mxu0 %v3978
    %5701 = vmatpush.bf16.msra.mxu0 %v3972
    %5702 = vmatpush.bf16.msra.mxu0 %v3966
    %5703 = vmatmul.bf16.gmra.mxu0 %v969
    %v5704 = vpop.f32.mrf.mxu0
    %v5705 = vadd.f32 %v5691, %v5704
    %v5706 = vpop.f32.mrf.mxu0
    %v5707 = vadd.f32 %v5693, %v5706
    %5708 = vdwg.mxu0
    %5709 = vmatpush.bf16.msra.mxu0 %v4056
    %5710 = vmatpush.bf16.msra.mxu0 %v4050
    %5711 = vmatpush.bf16.msra.mxu0 %v4044
    %5712 = vmatpush.bf16.msra.mxu0 %v4038
    %5713 = vmatpush.bf16.msra.mxu0 %v4032
    %5714 = vmatpush.bf16.msra.mxu0 %v4026
    %5715 = vmatpush.bf16.msra.mxu0 %v4020
    %5716 = vmatpush.bf16.msra.mxu0 %v4014
    %5717 = vmatmul.bf16.gmra.mxu0 %v970
    %v5718 = vpop.f32.mrf.mxu0
    %v5719 = vadd.f32 %v5705, %v5718
    %v5720 = vpop.f32.mrf.mxu0
    %v5721 = vadd.f32 %v5707, %v5720
    %5722 = vdwg.mxu0
    %5723 = vmatpush.bf16.msra.mxu0 %v3337
    %5724 = vmatpush.bf16.msra.mxu0 %v3331
    %5725 = vmatpush.bf16.msra.mxu0 %v3325
    %5726 = vmatpush.bf16.msra.mxu0 %v3319
    %5727 = vmatpush.bf16.msra.mxu0 %v3313
    %5728 = vmatpush.bf16.msra.mxu0 %v3307
    %5729 = vmatpush.bf16.msra.mxu0 %v3301
    %5730 = vmatpush.bf16.msra.mxu0 %v3295
    %5731 = vmatmul.bf16.gmra.mxu0 %v955
    %v5732 = vpop.f32.mrf.mxu0
    %v5733 = vadd.f32 %v899, %v5732
    %v5734 = vpop.f32.mrf.mxu0
    %v5735 = vadd.f32 %v899, %v5734
    %5736 = vdwg.mxu0
    %5737 = vmatpush.bf16.msra.mxu0 %v3385
    %5738 = vmatpush.bf16.msra.mxu0 %v3379
    %5739 = vmatpush.bf16.msra.mxu0 %v3373
    %5740 = vmatpush.bf16.msra.mxu0 %v3367
    %5741 = vmatpush.bf16.msra.mxu0 %v3361
    %5742 = vmatpush.bf16.msra.mxu0 %v3355
    %5743 = vmatpush.bf16.msra.mxu0 %v3349
    %5744 = vmatpush.bf16.msra.mxu0 %v3343
    %5745 = vmatmul.bf16.gmra.mxu0 %v956
    %v5746 = vpop.f32.mrf.mxu0
    %v5747 = vadd.f32 %v5733, %v5746
    %v5748 = vpop.f32.mrf.mxu0
    %v5749 = vadd.f32 %v5735, %v5748
    %5750 = vdwg.mxu0
    %5751 = vmatpush.bf16.msra.mxu0 %v3433
    %5752 = vmatpush.bf16.msra.mxu0 %v3427
    %5753 = vmatpush.bf16.msra.mxu0 %v3421
    %5754 = vmatpush.bf16.msra.mxu0 %v3415
    %5755 = vmatpush.bf16.msra.mxu0 %v3409
    %5756 = vmatpush.bf16.msra.mxu0 %v3403
    %5757 = vmatpush.bf16.msra.mxu0 %v3397
    %5758 = vmatpush.bf16.msra.mxu0 %v3391
    %5759 = vmatmul.bf16.gmra.mxu0 %v957
    %v5760 = vpop.f32.mrf.mxu0
    %v5761 = vadd.f32 %v5747, %v5760
    %v5762 = vpop.f32.mrf.mxu0
    %v5763 = vadd.f32 %v5749, %v5762
    %5764 = vdwg.mxu0
    %5765 = vmatpush.bf16.msra.mxu0 %v3481
    %5766 = vmatpush.bf16.msra.mxu0 %v3475
    %5767 = vmatpush.bf16.msra.mxu0 %v3469
    %5768 = vmatpush.bf16.msra.mxu0 %v3463
    %5769 = vmatpush.bf16.msra.mxu0 %v3457
    %5770 = vmatpush.bf16.msra.mxu0 %v3451
    %5771 = vmatpush.bf16.msra.mxu0 %v3445
    %5772 = vmatpush.bf16.msra.mxu0 %v3439
    %5773 = vmatmul.bf16.gmra.mxu0 %v958
    %v5774 = vpop.f32.mrf.mxu0
    %v5775 = vadd.f32 %v5761, %v5774
    %v5776 = vpop.f32.mrf.mxu0
    %v5777 = vadd.f32 %v5763, %v5776
    %5778 = vdwg.mxu0
    %5779 = vmatpush.bf16.msra.mxu0 %v3529
    %5780 = vmatpush.bf16.msra.mxu0 %v3523
    %5781 = vmatpush.bf16.msra.mxu0 %v3517
    %5782 = vmatpush.bf16.msra.mxu0 %v3511
    %5783 = vmatpush.bf16.msra.mxu0 %v3505
    %5784 = vmatpush.bf16.msra.mxu0 %v3499
    %5785 = vmatpush.bf16.msra.mxu0 %v3493
    %5786 = vmatpush.bf16.msra.mxu0 %v3487
    %5787 = vmatmul.bf16.gmra.mxu0 %v959
    %v5788 = vpop.f32.mrf.mxu0
    %v5789 = vadd.f32 %v5775, %v5788
    %v5790 = vpop.f32.mrf.mxu0
    %v5791 = vadd.f32 %v5777, %v5790
    %5792 = vdwg.mxu0
    %5793 = vmatpush.bf16.msra.mxu0 %v3577
    %5794 = vmatpush.bf16.msra.mxu0 %v3571
    %5795 = vmatpush.bf16.msra.mxu0 %v3565
    %5796 = vmatpush.bf16.msra.mxu0 %v3559
    %5797 = vmatpush.bf16.msra.mxu0 %v3553
    %5798 = vmatpush.bf16.msra.mxu0 %v3547
    %5799 = vmatpush.bf16.msra.mxu0 %v3541
    %5800 = vmatpush.bf16.msra.mxu0 %v3535
    %5801 = vmatmul.bf16.gmra.mxu0 %v960
    %v5802 = vpop.f32.mrf.mxu0
    %v5803 = vadd.f32 %v5789, %v5802
    %v5804 = vpop.f32.mrf.mxu0
    %v5805 = vadd.f32 %v5791, %v5804
    %5806 = vdwg.mxu0
    %5807 = vmatpush.bf16.msra.mxu0 %v3625
    %5808 = vmatpush.bf16.msra.mxu0 %v3619
    %5809 = vmatpush.bf16.msra.mxu0 %v3613
    %5810 = vmatpush.bf16.msra.mxu0 %v3607
    %5811 = vmatpush.bf16.msra.mxu0 %v3601
    %5812 = vmatpush.bf16.msra.mxu0 %v3595
    %5813 = vmatpush.bf16.msra.mxu0 %v3589
    %5814 = vmatpush.bf16.msra.mxu0 %v3583
    %5815 = vmatmul.bf16.gmra.mxu0 %v961
    %v5816 = vpop.f32.mrf.mxu0
    %v5817 = vadd.f32 %v5803, %v5816
    %v5818 = vpop.f32.mrf.mxu0
    %v5819 = vadd.f32 %v5805, %v5818
    %5820 = vdwg.mxu0
    %5821 = vmatpush.bf16.msra.mxu0 %v3673
    %5822 = vmatpush.bf16.msra.mxu0 %v3667
    %5823 = vmatpush.bf16.msra.mxu0 %v3661
    %5824 = vmatpush.bf16.msra.mxu0 %v3655
    %5825 = vmatpush.bf16.msra.mxu0 %v3649
    %5826 = vmatpush.bf16.msra.mxu0 %v3643
    %5827 = vmatpush.bf16.msra.mxu0 %v3637
    %5828 = vmatpush.bf16.msra.mxu0 %v3631
    %5829 = vmatmul.bf16.gmra.mxu0 %v962
    %v5830 = vpop.f32.mrf.mxu0
    %v5831 = vadd.f32 %v5817, %v5830
    %v5832 = vpop.f32.mrf.mxu0
    %v5833 = vadd.f32 %v5819, %v5832
    %5834 = vdwg.mxu0
    %5835 = vmatpush.bf16.msra.mxu0 %v3721
    %5836 = vmatpush.bf16.msra.mxu0 %v3715
    %5837 = vmatpush.bf16.msra.mxu0 %v3709
    %5838 = vmatpush.bf16.msra.mxu0 %v3703
    %5839 = vmatpush.bf16.msra.mxu0 %v3697
    %5840 = vmatpush.bf16.msra.mxu0 %v3691
    %5841 = vmatpush.bf16.msra.mxu0 %v3685
    %5842 = vmatpush.bf16.msra.mxu0 %v3679
    %5843 = vmatmul.bf16.gmra.mxu0 %v963
    %v5844 = vpop.f32.mrf.mxu0
    %v5845 = vadd.f32 %v5831, %v5844
    %v5846 = vpop.f32.mrf.mxu0
    %v5847 = vadd.f32 %v5833, %v5846
    %5848 = vdwg.mxu0
    %5849 = vmatpush.bf16.msra.mxu0 %v3769
    %5850 = vmatpush.bf16.msra.mxu0 %v3763
    %5851 = vmatpush.bf16.msra.mxu0 %v3757
    %5852 = vmatpush.bf16.msra.mxu0 %v3751
    %5853 = vmatpush.bf16.msra.mxu0 %v3745
    %5854 = vmatpush.bf16.msra.mxu0 %v3739
    %5855 = vmatpush.bf16.msra.mxu0 %v3733
    %5856 = vmatpush.bf16.msra.mxu0 %v3727
    %5857 = vmatmul.bf16.gmra.mxu0 %v964
    %v5858 = vpop.f32.mrf.mxu0
    %v5859 = vadd.f32 %v5845, %v5858
    %v5860 = vpop.f32.mrf.mxu0
    %v5861 = vadd.f32 %v5847, %v5860
    %5862 = vdwg.mxu0
    %5863 = vmatpush.bf16.msra.mxu0 %v3817
    %5864 = vmatpush.bf16.msra.mxu0 %v3811
    %5865 = vmatpush.bf16.msra.mxu0 %v3805
    %5866 = vmatpush.bf16.msra.mxu0 %v3799
    %5867 = vmatpush.bf16.msra.mxu0 %v3793
    %5868 = vmatpush.bf16.msra.mxu0 %v3787
    %5869 = vmatpush.bf16.msra.mxu0 %v3781
    %5870 = vmatpush.bf16.msra.mxu0 %v3775
    %5871 = vmatmul.bf16.gmra.mxu0 %v965
    %v5872 = vpop.f32.mrf.mxu0
    %v5873 = vadd.f32 %v5859, %v5872
    %v5874 = vpop.f32.mrf.mxu0
    %v5875 = vadd.f32 %v5861, %v5874
    %5876 = vdwg.mxu0
    %5877 = vmatpush.bf16.msra.mxu0 %v3865
    %5878 = vmatpush.bf16.msra.mxu0 %v3859
    %5879 = vmatpush.bf16.msra.mxu0 %v3853
    %5880 = vmatpush.bf16.msra.mxu0 %v3847
    %5881 = vmatpush.bf16.msra.mxu0 %v3841
    %5882 = vmatpush.bf16.msra.mxu0 %v3835
    %5883 = vmatpush.bf16.msra.mxu0 %v3829
    %5884 = vmatpush.bf16.msra.mxu0 %v3823
    %5885 = vmatmul.bf16.gmra.mxu0 %v966
    %v5886 = vpop.f32.mrf.mxu0
    %v5887 = vadd.f32 %v5873, %v5886
    %v5888 = vpop.f32.mrf.mxu0
    %v5889 = vadd.f32 %v5875, %v5888
    %5890 = vdwg.mxu0
    %5891 = vmatpush.bf16.msra.mxu0 %v3913
    %5892 = vmatpush.bf16.msra.mxu0 %v3907
    %5893 = vmatpush.bf16.msra.mxu0 %v3901
    %5894 = vmatpush.bf16.msra.mxu0 %v3895
    %5895 = vmatpush.bf16.msra.mxu0 %v3889
    %5896 = vmatpush.bf16.msra.mxu0 %v3883
    %5897 = vmatpush.bf16.msra.mxu0 %v3877
    %5898 = vmatpush.bf16.msra.mxu0 %v3871
    %5899 = vmatmul.bf16.gmra.mxu0 %v967
    %v5900 = vpop.f32.mrf.mxu0
    %v5901 = vadd.f32 %v5887, %v5900
    %v5902 = vpop.f32.mrf.mxu0
    %v5903 = vadd.f32 %v5889, %v5902
    %5904 = vdwg.mxu0
    %5905 = vmatpush.bf16.msra.mxu0 %v3961
    %5906 = vmatpush.bf16.msra.mxu0 %v3955
    %5907 = vmatpush.bf16.msra.mxu0 %v3949
    %5908 = vmatpush.bf16.msra.mxu0 %v3943
    %5909 = vmatpush.bf16.msra.mxu0 %v3937
    %5910 = vmatpush.bf16.msra.mxu0 %v3931
    %5911 = vmatpush.bf16.msra.mxu0 %v3925
    %5912 = vmatpush.bf16.msra.mxu0 %v3919
    %5913 = vmatmul.bf16.gmra.mxu0 %v968
    %v5914 = vpop.f32.mrf.mxu0
    %v5915 = vadd.f32 %v5901, %v5914
    %v5916 = vpop.f32.mrf.mxu0
    %v5917 = vadd.f32 %v5903, %v5916
    %5918 = vdwg.mxu0
    %5919 = vmatpush.bf16.msra.mxu0 %v4009
    %5920 = vmatpush.bf16.msra.mxu0 %v4003
    %5921 = vmatpush.bf16.msra.mxu0 %v3997
    %5922 = vmatpush.bf16.msra.mxu0 %v3991
    %5923 = vmatpush.bf16.msra.mxu0 %v3985
    %5924 = vmatpush.bf16.msra.mxu0 %v3979
    %5925 = vmatpush.bf16.msra.mxu0 %v3973
    %5926 = vmatpush.bf16.msra.mxu0 %v3967
    %5927 = vmatmul.bf16.gmra.mxu0 %v969
    %v5928 = vpop.f32.mrf.mxu0
    %v5929 = vadd.f32 %v5915, %v5928
    %v5930 = vpop.f32.mrf.mxu0
    %v5931 = vadd.f32 %v5917, %v5930
    %5932 = vdwg.mxu0
    %5933 = vmatpush.bf16.msra.mxu0 %v4057
    %5934 = vmatpush.bf16.msra.mxu0 %v4051
    %5935 = vmatpush.bf16.msra.mxu0 %v4045
    %5936 = vmatpush.bf16.msra.mxu0 %v4039
    %5937 = vmatpush.bf16.msra.mxu0 %v4033
    %5938 = vmatpush.bf16.msra.mxu0 %v4027
    %5939 = vmatpush.bf16.msra.mxu0 %v4021
    %5940 = vmatpush.bf16.msra.mxu0 %v4015
    %5941 = vmatmul.bf16.gmra.mxu0 %v970
    %v5942 = vpop.f32.mrf.mxu0
    %v5943 = vadd.f32 %v5929, %v5942
    %v5944 = vpop.f32.mrf.mxu0
    %v5945 = vadd.f32 %v5931, %v5944
    %5946 = vdwg.mxu0
    %5947 = vmatpush.bf16.msra.mxu0 %v3338
    %5948 = vmatpush.bf16.msra.mxu0 %v3332
    %5949 = vmatpush.bf16.msra.mxu0 %v3326
    %5950 = vmatpush.bf16.msra.mxu0 %v3320
    %5951 = vmatpush.bf16.msra.mxu0 %v3314
    %5952 = vmatpush.bf16.msra.mxu0 %v3308
    %5953 = vmatpush.bf16.msra.mxu0 %v3302
    %5954 = vmatpush.bf16.msra.mxu0 %v3296
    %5955 = vmatmul.bf16.gmra.mxu0 %v955
    %v5956 = vpop.f32.mrf.mxu0
    %v5957 = vadd.f32 %v900, %v5956
    %v5958 = vpop.f32.mrf.mxu0
    %v5959 = vadd.f32 %v900, %v5958
    %5960 = vdwg.mxu0
    %5961 = vmatpush.bf16.msra.mxu0 %v3386
    %5962 = vmatpush.bf16.msra.mxu0 %v3380
    %5963 = vmatpush.bf16.msra.mxu0 %v3374
    %5964 = vmatpush.bf16.msra.mxu0 %v3368
    %5965 = vmatpush.bf16.msra.mxu0 %v3362
    %5966 = vmatpush.bf16.msra.mxu0 %v3356
    %5967 = vmatpush.bf16.msra.mxu0 %v3350
    %5968 = vmatpush.bf16.msra.mxu0 %v3344
    %5969 = vmatmul.bf16.gmra.mxu0 %v956
    %v5970 = vpop.f32.mrf.mxu0
    %v5971 = vadd.f32 %v5957, %v5970
    %v5972 = vpop.f32.mrf.mxu0
    %v5973 = vadd.f32 %v5959, %v5972
    %5974 = vdwg.mxu0
    %5975 = vmatpush.bf16.msra.mxu0 %v3434
    %5976 = vmatpush.bf16.msra.mxu0 %v3428
    %5977 = vmatpush.bf16.msra.mxu0 %v3422
    %5978 = vmatpush.bf16.msra.mxu0 %v3416
    %5979 = vmatpush.bf16.msra.mxu0 %v3410
    %5980 = vmatpush.bf16.msra.mxu0 %v3404
    %5981 = vmatpush.bf16.msra.mxu0 %v3398
    %5982 = vmatpush.bf16.msra.mxu0 %v3392
    %5983 = vmatmul.bf16.gmra.mxu0 %v957
    %v5984 = vpop.f32.mrf.mxu0
    %v5985 = vadd.f32 %v5971, %v5984
    %v5986 = vpop.f32.mrf.mxu0
    %v5987 = vadd.f32 %v5973, %v5986
    %5988 = vdwg.mxu0
    %5989 = vmatpush.bf16.msra.mxu0 %v3482
    %5990 = vmatpush.bf16.msra.mxu0 %v3476
    %5991 = vmatpush.bf16.msra.mxu0 %v3470
    %5992 = vmatpush.bf16.msra.mxu0 %v3464
    %5993 = vmatpush.bf16.msra.mxu0 %v3458
    %5994 = vmatpush.bf16.msra.mxu0 %v3452
    %5995 = vmatpush.bf16.msra.mxu0 %v3446
    %5996 = vmatpush.bf16.msra.mxu0 %v3440
    %5997 = vmatmul.bf16.gmra.mxu0 %v958
    %v5998 = vpop.f32.mrf.mxu0
    %v5999 = vadd.f32 %v5985, %v5998
    %v6000 = vpop.f32.mrf.mxu0
    %v6001 = vadd.f32 %v5987, %v6000
    %6002 = vdwg.mxu0
    %6003 = vmatpush.bf16.msra.mxu0 %v3530
    %6004 = vmatpush.bf16.msra.mxu0 %v3524
    %6005 = vmatpush.bf16.msra.mxu0 %v3518
    %6006 = vmatpush.bf16.msra.mxu0 %v3512
    %6007 = vmatpush.bf16.msra.mxu0 %v3506
    %6008 = vmatpush.bf16.msra.mxu0 %v3500
    %6009 = vmatpush.bf16.msra.mxu0 %v3494
    %6010 = vmatpush.bf16.msra.mxu0 %v3488
    %6011 = vmatmul.bf16.gmra.mxu0 %v959
    %v6012 = vpop.f32.mrf.mxu0
    %v6013 = vadd.f32 %v5999, %v6012
    %v6014 = vpop.f32.mrf.mxu0
    %v6015 = vadd.f32 %v6001, %v6014
    %6016 = vdwg.mxu0
    %6017 = vmatpush.bf16.msra.mxu0 %v3578
    %6018 = vmatpush.bf16.msra.mxu0 %v3572
    %6019 = vmatpush.bf16.msra.mxu0 %v3566
    %6020 = vmatpush.bf16.msra.mxu0 %v3560
    %6021 = vmatpush.bf16.msra.mxu0 %v3554
    %6022 = vmatpush.bf16.msra.mxu0 %v3548
    %6023 = vmatpush.bf16.msra.mxu0 %v3542
    %6024 = vmatpush.bf16.msra.mxu0 %v3536
    %6025 = vmatmul.bf16.gmra.mxu0 %v960
    %v6026 = vpop.f32.mrf.mxu0
    %v6027 = vadd.f32 %v6013, %v6026
    %v6028 = vpop.f32.mrf.mxu0
    %v6029 = vadd.f32 %v6015, %v6028
    %6030 = vdwg.mxu0
    %6031 = vmatpush.bf16.msra.mxu0 %v3626
    %6032 = vmatpush.bf16.msra.mxu0 %v3620
    %6033 = vmatpush.bf16.msra.mxu0 %v3614
    %6034 = vmatpush.bf16.msra.mxu0 %v3608
    %6035 = vmatpush.bf16.msra.mxu0 %v3602
    %6036 = vmatpush.bf16.msra.mxu0 %v3596
    %6037 = vmatpush.bf16.msra.mxu0 %v3590
    %6038 = vmatpush.bf16.msra.mxu0 %v3584
    %6039 = vmatmul.bf16.gmra.mxu0 %v961
    %v6040 = vpop.f32.mrf.mxu0
    %v6041 = vadd.f32 %v6027, %v6040
    %v6042 = vpop.f32.mrf.mxu0
    %v6043 = vadd.f32 %v6029, %v6042
    %6044 = vdwg.mxu0
    %6045 = vmatpush.bf16.msra.mxu0 %v3674
    %6046 = vmatpush.bf16.msra.mxu0 %v3668
    %6047 = vmatpush.bf16.msra.mxu0 %v3662
    %6048 = vmatpush.bf16.msra.mxu0 %v3656
    %6049 = vmatpush.bf16.msra.mxu0 %v3650
    %6050 = vmatpush.bf16.msra.mxu0 %v3644
    %6051 = vmatpush.bf16.msra.mxu0 %v3638
    %6052 = vmatpush.bf16.msra.mxu0 %v3632
    %6053 = vmatmul.bf16.gmra.mxu0 %v962
    %v6054 = vpop.f32.mrf.mxu0
    %v6055 = vadd.f32 %v6041, %v6054
    %v6056 = vpop.f32.mrf.mxu0
    %v6057 = vadd.f32 %v6043, %v6056
    %6058 = vdwg.mxu0
    %6059 = vmatpush.bf16.msra.mxu0 %v3722
    %6060 = vmatpush.bf16.msra.mxu0 %v3716
    %6061 = vmatpush.bf16.msra.mxu0 %v3710
    %6062 = vmatpush.bf16.msra.mxu0 %v3704
    %6063 = vmatpush.bf16.msra.mxu0 %v3698
    %6064 = vmatpush.bf16.msra.mxu0 %v3692
    %6065 = vmatpush.bf16.msra.mxu0 %v3686
    %6066 = vmatpush.bf16.msra.mxu0 %v3680
    %6067 = vmatmul.bf16.gmra.mxu0 %v963
    %v6068 = vpop.f32.mrf.mxu0
    %v6069 = vadd.f32 %v6055, %v6068
    %v6070 = vpop.f32.mrf.mxu0
    %v6071 = vadd.f32 %v6057, %v6070
    %6072 = vdwg.mxu0
    %6073 = vmatpush.bf16.msra.mxu0 %v3770
    %6074 = vmatpush.bf16.msra.mxu0 %v3764
    %6075 = vmatpush.bf16.msra.mxu0 %v3758
    %6076 = vmatpush.bf16.msra.mxu0 %v3752
    %6077 = vmatpush.bf16.msra.mxu0 %v3746
    %6078 = vmatpush.bf16.msra.mxu0 %v3740
    %6079 = vmatpush.bf16.msra.mxu0 %v3734
    %6080 = vmatpush.bf16.msra.mxu0 %v3728
    %6081 = vmatmul.bf16.gmra.mxu0 %v964
    %v6082 = vpop.f32.mrf.mxu0
    %v6083 = vadd.f32 %v6069, %v6082
    %v6084 = vpop.f32.mrf.mxu0
    %v6085 = vadd.f32 %v6071, %v6084
    %6086 = vdwg.mxu0
    %6087 = vmatpush.bf16.msra.mxu0 %v3818
    %6088 = vmatpush.bf16.msra.mxu0 %v3812
    %6089 = vmatpush.bf16.msra.mxu0 %v3806
    %6090 = vmatpush.bf16.msra.mxu0 %v3800
    %6091 = vmatpush.bf16.msra.mxu0 %v3794
    %6092 = vmatpush.bf16.msra.mxu0 %v3788
    %6093 = vmatpush.bf16.msra.mxu0 %v3782
    %6094 = vmatpush.bf16.msra.mxu0 %v3776
    %6095 = vmatmul.bf16.gmra.mxu0 %v965
    %v6096 = vpop.f32.mrf.mxu0
    %v6097 = vadd.f32 %v6083, %v6096
    %v6098 = vpop.f32.mrf.mxu0
    %v6099 = vadd.f32 %v6085, %v6098
    %6100 = vdwg.mxu0
    %6101 = vmatpush.bf16.msra.mxu0 %v3866
    %6102 = vmatpush.bf16.msra.mxu0 %v3860
    %6103 = vmatpush.bf16.msra.mxu0 %v3854
    %6104 = vmatpush.bf16.msra.mxu0 %v3848
    %6105 = vmatpush.bf16.msra.mxu0 %v3842
    %6106 = vmatpush.bf16.msra.mxu0 %v3836
    %6107 = vmatpush.bf16.msra.mxu0 %v3830
    %6108 = vmatpush.bf16.msra.mxu0 %v3824
    %6109 = vmatmul.bf16.gmra.mxu0 %v966
    %v6110 = vpop.f32.mrf.mxu0
    %v6111 = vadd.f32 %v6097, %v6110
    %v6112 = vpop.f32.mrf.mxu0
    %v6113 = vadd.f32 %v6099, %v6112
    %6114 = vdwg.mxu0
    %6115 = vmatpush.bf16.msra.mxu0 %v3914
    %6116 = vmatpush.bf16.msra.mxu0 %v3908
    %6117 = vmatpush.bf16.msra.mxu0 %v3902
    %6118 = vmatpush.bf16.msra.mxu0 %v3896
    %6119 = vmatpush.bf16.msra.mxu0 %v3890
    %6120 = vmatpush.bf16.msra.mxu0 %v3884
    %6121 = vmatpush.bf16.msra.mxu0 %v3878
    %6122 = vmatpush.bf16.msra.mxu0 %v3872
    %6123 = vmatmul.bf16.gmra.mxu0 %v967
    %v6124 = vpop.f32.mrf.mxu0
    %v6125 = vadd.f32 %v6111, %v6124
    %v6126 = vpop.f32.mrf.mxu0
    %v6127 = vadd.f32 %v6113, %v6126
    %6128 = vdwg.mxu0
    %6129 = vmatpush.bf16.msra.mxu0 %v3962
    %6130 = vmatpush.bf16.msra.mxu0 %v3956
    %6131 = vmatpush.bf16.msra.mxu0 %v3950
    %6132 = vmatpush.bf16.msra.mxu0 %v3944
    %6133 = vmatpush.bf16.msra.mxu0 %v3938
    %6134 = vmatpush.bf16.msra.mxu0 %v3932
    %6135 = vmatpush.bf16.msra.mxu0 %v3926
    %6136 = vmatpush.bf16.msra.mxu0 %v3920
    %6137 = vmatmul.bf16.gmra.mxu0 %v968
    %v6138 = vpop.f32.mrf.mxu0
    %v6139 = vadd.f32 %v6125, %v6138
    %v6140 = vpop.f32.mrf.mxu0
    %v6141 = vadd.f32 %v6127, %v6140
    %6142 = vdwg.mxu0
    %6143 = vmatpush.bf16.msra.mxu0 %v4010
    %6144 = vmatpush.bf16.msra.mxu0 %v4004
    %6145 = vmatpush.bf16.msra.mxu0 %v3998
    %6146 = vmatpush.bf16.msra.mxu0 %v3992
    %6147 = vmatpush.bf16.msra.mxu0 %v3986
    %6148 = vmatpush.bf16.msra.mxu0 %v3980
    %6149 = vmatpush.bf16.msra.mxu0 %v3974
    %6150 = vmatpush.bf16.msra.mxu0 %v3968
    %6151 = vmatmul.bf16.gmra.mxu0 %v969
    %v6152 = vpop.f32.mrf.mxu0
    %v6153 = vadd.f32 %v6139, %v6152
    %v6154 = vpop.f32.mrf.mxu0
    %v6155 = vadd.f32 %v6141, %v6154
    %6156 = vdwg.mxu0
    %6157 = vmatpush.bf16.msra.mxu0 %v4058
    %6158 = vmatpush.bf16.msra.mxu0 %v4052
    %6159 = vmatpush.bf16.msra.mxu0 %v4046
    %6160 = vmatpush.bf16.msra.mxu0 %v4040
    %6161 = vmatpush.bf16.msra.mxu0 %v4034
    %6162 = vmatpush.bf16.msra.mxu0 %v4028
    %6163 = vmatpush.bf16.msra.mxu0 %v4022
    %6164 = vmatpush.bf16.msra.mxu0 %v4016
    %6165 = vmatmul.bf16.gmra.mxu0 %v970
    %v6166 = vpop.f32.mrf.mxu0
    %v6167 = vadd.f32 %v6153, %v6166
    %v6168 = vpop.f32.mrf.mxu0
    %v6169 = vadd.f32 %v6155, %v6168
    %6170 = vdwg.mxu0
    %v6171 = vld [vmem:[#allocation7] sm:$0xff]
    %v6172 = vld [vmem:[#allocation7 + $0x8] sm:$0xff]
    %v6173 = vld [vmem:[#allocation7 + $0x10] sm:$0xff]
    %v6174 = vld [vmem:[#allocation7 + $0x18] sm:$0xff]
    %v6175 = vld [vmem:[#allocation7 + $0x20] sm:$0xff]
    %v6176 = vld [vmem:[#allocation7 + $0x28] sm:$0xff]
    %v6177 = vld [vmem:[#allocation7 + $0x30] sm:$0xff]
    %v6178 = vld [vmem:[#allocation7 + $0x38] sm:$0xff]
    %v6179 = vld [vmem:[#allocation7 + $0x40] sm:$0xff]
    %v6180 = vld [vmem:[#allocation7 + $0x48] sm:$0xff]
    %v6181 = vld [vmem:[#allocation7 + $0x50] sm:$0xff]
    %v6182 = vld [vmem:[#allocation7 + $0x58] sm:$0xff]
    %v6183 = vld [vmem:[#allocation7 + $0x60] sm:$0xff]
    %v6184 = vld [vmem:[#allocation7 + $0x68] sm:$0xff]
    %v6185 = vld [vmem:[#allocation7 + $0x70] sm:$0xff]
    %v6186 = vld [vmem:[#allocation7 + $0x78] sm:$0xff]
    %v6187 = vld [vmem:[#allocation7 + $0x80] sm:$0xff]
    %v6188 = vld [vmem:[#allocation7 + $0x88] sm:$0xff]
    %v6189 = vld [vmem:[#allocation7 + $0x90] sm:$0xff]
    %v6190 = vld [vmem:[#allocation7 + $0x98] sm:$0xff]
    %v6191 = vld [vmem:[#allocation7 + $0xa0] sm:$0xff]
    %v6192 = vld [vmem:[#allocation7 + $0xa8] sm:$0xff]
    %v6193 = vld [vmem:[#allocation7 + $0xb0] sm:$0xff]
    %v6194 = vld [vmem:[#allocation7 + $0xb8] sm:$0xff]
    %v6195 = vld [vmem:[#allocation7 + $0xc0] sm:$0xff]
    %v6196 = vld [vmem:[#allocation7 + $0xc8] sm:$0xff]
    %v6197 = vld [vmem:[#allocation7 + $0xd0] sm:$0xff]
    %v6198 = vld [vmem:[#allocation7 + $0xd8] sm:$0xff]
    %v6199 = vld [vmem:[#allocation7 + $0xe0] sm:$0xff]
    %v6200 = vld [vmem:[#allocation7 + $0xe8] sm:$0xff]
    %v6201 = vld [vmem:[#allocation7 + $0xf0] sm:$0xff]
    %v6202 = vld [vmem:[#allocation7 + $0xf8] sm:$0xff]
    %v6203 = vld [vmem:[#allocation7 + $0x100] sm:$0xff]
    %v6204 = vld [vmem:[#allocation7 + $0x108] sm:$0xff]
    %v6205 = vld [vmem:[#allocation7 + $0x110] sm:$0xff]
    %v6206 = vld [vmem:[#allocation7 + $0x118] sm:$0xff]
    %v6207 = vld [vmem:[#allocation7 + $0x120] sm:$0xff]
    %v6208 = vld [vmem:[#allocation7 + $0x128] sm:$0xff]
    %v6209 = vld [vmem:[#allocation7 + $0x130] sm:$0xff]
    %v6210 = vld [vmem:[#allocation7 + $0x138] sm:$0xff]
    %v6211 = vld [vmem:[#allocation7 + $0x140] sm:$0xff]
    %v6212 = vld [vmem:[#allocation7 + $0x148] sm:$0xff]
    %v6213 = vld [vmem:[#allocation7 + $0x150] sm:$0xff]
    %v6214 = vld [vmem:[#allocation7 + $0x158] sm:$0xff]
    %v6215 = vld [vmem:[#allocation7 + $0x160] sm:$0xff]
    %v6216 = vld [vmem:[#allocation7 + $0x168] sm:$0xff]
    %v6217 = vld [vmem:[#allocation7 + $0x170] sm:$0xff]
    %v6218 = vld [vmem:[#allocation7 + $0x178] sm:$0xff]
    %v6219 = vld [vmem:[#allocation7 + $0x180] sm:$0xff]
    %v6220 = vld [vmem:[#allocation7 + $0x188] sm:$0xff]
    %v6221 = vld [vmem:[#allocation7 + $0x190] sm:$0xff]
    %v6222 = vld [vmem:[#allocation7 + $0x198] sm:$0xff]
    %v6223 = vld [vmem:[#allocation7 + $0x1a0] sm:$0xff]
    %v6224 = vld [vmem:[#allocation7 + $0x1a8] sm:$0xff]
    %v6225 = vld [vmem:[#allocation7 + $0x1b0] sm:$0xff]
    %v6226 = vld [vmem:[#allocation7 + $0x1b8] sm:$0xff]
    %v6227 = vld [vmem:[#allocation7 + $0x1c0] sm:$0xff]
    %v6228 = vld [vmem:[#allocation7 + $0x1c8] sm:$0xff]
    %v6229 = vld [vmem:[#allocation7 + $0x1d0] sm:$0xff]
    %v6230 = vld [vmem:[#allocation7 + $0x1d8] sm:$0xff]
    %v6231 = vld [vmem:[#allocation7 + $0x1e0] sm:$0xff]
    %v6232 = vld [vmem:[#allocation7 + $0x1e8] sm:$0xff]
    %v6233 = vld [vmem:[#allocation7 + $0x1f0] sm:$0xff]
    %v6234 = vld [vmem:[#allocation7 + $0x1f8] sm:$0xff]
    %v6235 = vld [vmem:[#allocation7 + $0x200] sm:$0xff]
    %v6236 = vld [vmem:[#allocation7 + $0x208] sm:$0xff]
    %v6237 = vld [vmem:[#allocation7 + $0x210] sm:$0xff]
    %v6238 = vld [vmem:[#allocation7 + $0x218] sm:$0xff]
    %v6239 = vld [vmem:[#allocation7 + $0x220] sm:$0xff]
    %v6240 = vld [vmem:[#allocation7 + $0x228] sm:$0xff]
    %v6241 = vld [vmem:[#allocation7 + $0x230] sm:$0xff]
    %v6242 = vld [vmem:[#allocation7 + $0x238] sm:$0xff]
    %v6243 = vld [vmem:[#allocation7 + $0x240] sm:$0xff]
    %v6244 = vld [vmem:[#allocation7 + $0x248] sm:$0xff]
    %v6245 = vld [vmem:[#allocation7 + $0x250] sm:$0xff]
    %v6246 = vld [vmem:[#allocation7 + $0x258] sm:$0xff]
    %v6247 = vld [vmem:[#allocation7 + $0x260] sm:$0xff]
    %v6248 = vld [vmem:[#allocation7 + $0x268] sm:$0xff]
    %v6249 = vld [vmem:[#allocation7 + $0x270] sm:$0xff]
    %v6250 = vld [vmem:[#allocation7 + $0x278] sm:$0xff]
    %v6251 = vld [vmem:[#allocation7 + $0x280] sm:$0xff]
    %v6252 = vld [vmem:[#allocation7 + $0x288] sm:$0xff]
    %v6253 = vld [vmem:[#allocation7 + $0x290] sm:$0xff]
    %v6254 = vld [vmem:[#allocation7 + $0x298] sm:$0xff]
    %v6255 = vld [vmem:[#allocation7 + $0x2a0] sm:$0xff]
    %v6256 = vld [vmem:[#allocation7 + $0x2a8] sm:$0xff]
    %v6257 = vld [vmem:[#allocation7 + $0x2b0] sm:$0xff]
    %v6258 = vld [vmem:[#allocation7 + $0x2b8] sm:$0xff]
    %v6259 = vld [vmem:[#allocation7 + $0x2c0] sm:$0xff]
    %v6260 = vld [vmem:[#allocation7 + $0x2c8] sm:$0xff]
    %v6261 = vld [vmem:[#allocation7 + $0x2d0] sm:$0xff]
    %v6262 = vld [vmem:[#allocation7 + $0x2d8] sm:$0xff]
    %v6263 = vld [vmem:[#allocation7 + $0x2e0] sm:$0xff]
    %v6264 = vld [vmem:[#allocation7 + $0x2e8] sm:$0xff]
    %v6265 = vld [vmem:[#allocation7 + $0x2f0] sm:$0xff]
    %v6266 = vld [vmem:[#allocation7 + $0x2f8] sm:$0xff]
    %v6267 = vld [vmem:[#allocation7 + $0x300] sm:$0xff]
    %v6268 = vld [vmem:[#allocation7 + $0x308] sm:$0xff]
    %v6269 = vld [vmem:[#allocation7 + $0x310] sm:$0xff]
    %v6270 = vld [vmem:[#allocation7 + $0x318] sm:$0xff]
    %v6271 = vld [vmem:[#allocation7 + $0x320] sm:$0xff]
    %v6272 = vld [vmem:[#allocation7 + $0x328] sm:$0xff]
    %v6273 = vld [vmem:[#allocation7 + $0x330] sm:$0xff]
    %v6274 = vld [vmem:[#allocation7 + $0x338] sm:$0xff]
    %v6275 = vld [vmem:[#allocation7 + $0x340] sm:$0xff]
    %v6276 = vld [vmem:[#allocation7 + $0x348] sm:$0xff]
    %v6277 = vld [vmem:[#allocation7 + $0x350] sm:$0xff]
    %v6278 = vld [vmem:[#allocation7 + $0x358] sm:$0xff]
    %v6279 = vld [vmem:[#allocation7 + $0x360] sm:$0xff]
    %v6280 = vld [vmem:[#allocation7 + $0x368] sm:$0xff]
    %v6281 = vld [vmem:[#allocation7 + $0x370] sm:$0xff]
    %v6282 = vld [vmem:[#allocation7 + $0x378] sm:$0xff]
    %v6283 = vld [vmem:[#allocation7 + $0x380] sm:$0xff]
    %v6284 = vld [vmem:[#allocation7 + $0x388] sm:$0xff]
    %v6285 = vld [vmem:[#allocation7 + $0x390] sm:$0xff]
    %v6286 = vld [vmem:[#allocation7 + $0x398] sm:$0xff]
    %v6287 = vld [vmem:[#allocation7 + $0x3a0] sm:$0xff]
    %v6288 = vld [vmem:[#allocation7 + $0x3a8] sm:$0xff]
    %v6289 = vld [vmem:[#allocation7 + $0x3b0] sm:$0xff]
    %v6290 = vld [vmem:[#allocation7 + $0x3b8] sm:$0xff]
    %v6291 = vld [vmem:[#allocation7 + $0x3c0] sm:$0xff]
    %v6292 = vld [vmem:[#allocation7 + $0x3c8] sm:$0xff]
    %v6293 = vld [vmem:[#allocation7 + $0x3d0] sm:$0xff]
    %v6294 = vld [vmem:[#allocation7 + $0x3d8] sm:$0xff]
    %v6295 = vld [vmem:[#allocation7 + $0x3e0] sm:$0xff]
    %v6296 = vld [vmem:[#allocation7 + $0x3e8] sm:$0xff]
    %v6297 = vld [vmem:[#allocation7 + $0x3f0] sm:$0xff]
    %v6298 = vld [vmem:[#allocation7 + $0x3f8] sm:$0xff]
    %v6299 = vld [vmem:[#allocation7 + $0x400] sm:$0xff]
    %v6300 = vld [vmem:[#allocation7 + $0x408] sm:$0xff]
    %v6301 = vld [vmem:[#allocation7 + $0x410] sm:$0xff]
    %v6302 = vld [vmem:[#allocation7 + $0x418] sm:$0xff]
    %v6303 = vld [vmem:[#allocation7 + $0x420] sm:$0xff]
    %v6304 = vld [vmem:[#allocation7 + $0x428] sm:$0xff]
    %v6305 = vld [vmem:[#allocation7 + $0x430] sm:$0xff]
    %v6306 = vld [vmem:[#allocation7 + $0x438] sm:$0xff]
    %v6307 = vld [vmem:[#allocation7 + $0x440] sm:$0xff]
    %v6308 = vld [vmem:[#allocation7 + $0x448] sm:$0xff]
    %v6309 = vld [vmem:[#allocation7 + $0x450] sm:$0xff]
    %v6310 = vld [vmem:[#allocation7 + $0x458] sm:$0xff]
    %v6311 = vld [vmem:[#allocation7 + $0x460] sm:$0xff]
    %v6312 = vld [vmem:[#allocation7 + $0x468] sm:$0xff]
    %v6313 = vld [vmem:[#allocation7 + $0x470] sm:$0xff]
    %v6314 = vld [vmem:[#allocation7 + $0x478] sm:$0xff]
    %v6315 = vld [vmem:[#allocation7 + $0x480] sm:$0xff]
    %v6316 = vld [vmem:[#allocation7 + $0x488] sm:$0xff]
    %v6317 = vld [vmem:[#allocation7 + $0x490] sm:$0xff]
    %v6318 = vld [vmem:[#allocation7 + $0x498] sm:$0xff]
    %v6319 = vld [vmem:[#allocation7 + $0x4a0] sm:$0xff]
    %v6320 = vld [vmem:[#allocation7 + $0x4a8] sm:$0xff]
    %v6321 = vld [vmem:[#allocation7 + $0x4b0] sm:$0xff]
    %v6322 = vld [vmem:[#allocation7 + $0x4b8] sm:$0xff]
    %v6323 = vld [vmem:[#allocation7 + $0x4c0] sm:$0xff]
    %v6324 = vld [vmem:[#allocation7 + $0x4c8] sm:$0xff]
    %v6325 = vld [vmem:[#allocation7 + $0x4d0] sm:$0xff]
    %v6326 = vld [vmem:[#allocation7 + $0x4d8] sm:$0xff]
    %v6327 = vld [vmem:[#allocation7 + $0x4e0] sm:$0xff]
    %v6328 = vld [vmem:[#allocation7 + $0x4e8] sm:$0xff]
    %v6329 = vld [vmem:[#allocation7 + $0x4f0] sm:$0xff]
    %v6330 = vld [vmem:[#allocation7 + $0x4f8] sm:$0xff]
    %v6331 = vld [vmem:[#allocation7 + $0x500] sm:$0xff]
    %v6332 = vld [vmem:[#allocation7 + $0x508] sm:$0xff]
    %v6333 = vld [vmem:[#allocation7 + $0x510] sm:$0xff]
    %v6334 = vld [vmem:[#allocation7 + $0x518] sm:$0xff]
    %v6335 = vld [vmem:[#allocation7 + $0x520] sm:$0xff]
    %v6336 = vld [vmem:[#allocation7 + $0x528] sm:$0xff]
    %v6337 = vld [vmem:[#allocation7 + $0x530] sm:$0xff]
    %v6338 = vld [vmem:[#allocation7 + $0x538] sm:$0xff]
    %v6339 = vld [vmem:[#allocation7 + $0x540] sm:$0xff]
    %v6340 = vld [vmem:[#allocation7 + $0x548] sm:$0xff]
    %v6341 = vld [vmem:[#allocation7 + $0x550] sm:$0xff]
    %v6342 = vld [vmem:[#allocation7 + $0x558] sm:$0xff]
    %v6343 = vld [vmem:[#allocation7 + $0x560] sm:$0xff]
    %v6344 = vld [vmem:[#allocation7 + $0x568] sm:$0xff]
    %v6345 = vld [vmem:[#allocation7 + $0x570] sm:$0xff]
    %v6346 = vld [vmem:[#allocation7 + $0x578] sm:$0xff]
    %v6347 = vld [vmem:[#allocation7 + $0x580] sm:$0xff]
    %v6348 = vld [vmem:[#allocation7 + $0x588] sm:$0xff]
    %v6349 = vld [vmem:[#allocation7 + $0x590] sm:$0xff]
    %v6350 = vld [vmem:[#allocation7 + $0x598] sm:$0xff]
    %v6351 = vld [vmem:[#allocation7 + $0x5a0] sm:$0xff]
    %v6352 = vld [vmem:[#allocation7 + $0x5a8] sm:$0xff]
    %v6353 = vld [vmem:[#allocation7 + $0x5b0] sm:$0xff]
    %v6354 = vld [vmem:[#allocation7 + $0x5b8] sm:$0xff]
    %v6355 = vld [vmem:[#allocation7 + $0x5c0] sm:$0xff]
    %v6356 = vld [vmem:[#allocation7 + $0x5c8] sm:$0xff]
    %v6357 = vld [vmem:[#allocation7 + $0x5d0] sm:$0xff]
    %v6358 = vld [vmem:[#allocation7 + $0x5d8] sm:$0xff]
    %v6359 = vld [vmem:[#allocation7 + $0x5e0] sm:$0xff]
    %v6360 = vld [vmem:[#allocation7 + $0x5e8] sm:$0xff]
    %v6361 = vld [vmem:[#allocation7 + $0x5f0] sm:$0xff]
    %v6362 = vld [vmem:[#allocation7 + $0x5f8] sm:$0xff]
    %v6363 = vld [vmem:[#allocation7 + $0x600] sm:$0xff]
    %v6364 = vld [vmem:[#allocation7 + $0x608] sm:$0xff]
    %v6365 = vld [vmem:[#allocation7 + $0x610] sm:$0xff]
    %v6366 = vld [vmem:[#allocation7 + $0x618] sm:$0xff]
    %v6367 = vld [vmem:[#allocation7 + $0x620] sm:$0xff]
    %v6368 = vld [vmem:[#allocation7 + $0x628] sm:$0xff]
    %v6369 = vld [vmem:[#allocation7 + $0x630] sm:$0xff]
    %v6370 = vld [vmem:[#allocation7 + $0x638] sm:$0xff]
    %v6371 = vld [vmem:[#allocation7 + $0x640] sm:$0xff]
    %v6372 = vld [vmem:[#allocation7 + $0x648] sm:$0xff]
    %v6373 = vld [vmem:[#allocation7 + $0x650] sm:$0xff]
    %v6374 = vld [vmem:[#allocation7 + $0x658] sm:$0xff]
    %v6375 = vld [vmem:[#allocation7 + $0x660] sm:$0xff]
    %v6376 = vld [vmem:[#allocation7 + $0x668] sm:$0xff]
    %v6377 = vld [vmem:[#allocation7 + $0x670] sm:$0xff]
    %v6378 = vld [vmem:[#allocation7 + $0x678] sm:$0xff]
    %v6379 = vld [vmem:[#allocation7 + $0x680] sm:$0xff]
    %v6380 = vld [vmem:[#allocation7 + $0x688] sm:$0xff]
    %v6381 = vld [vmem:[#allocation7 + $0x690] sm:$0xff]
    %v6382 = vld [vmem:[#allocation7 + $0x698] sm:$0xff]
    %v6383 = vld [vmem:[#allocation7 + $0x6a0] sm:$0xff]
    %v6384 = vld [vmem:[#allocation7 + $0x6a8] sm:$0xff]
    %v6385 = vld [vmem:[#allocation7 + $0x6b0] sm:$0xff]
    %v6386 = vld [vmem:[#allocation7 + $0x6b8] sm:$0xff]
    %v6387 = vld [vmem:[#allocation7 + $0x6c0] sm:$0xff]
    %v6388 = vld [vmem:[#allocation7 + $0x6c8] sm:$0xff]
    %v6389 = vld [vmem:[#allocation7 + $0x6d0] sm:$0xff]
    %v6390 = vld [vmem:[#allocation7 + $0x6d8] sm:$0xff]
    %v6391 = vld [vmem:[#allocation7 + $0x6e0] sm:$0xff]
    %v6392 = vld [vmem:[#allocation7 + $0x6e8] sm:$0xff]
    %v6393 = vld [vmem:[#allocation7 + $0x6f0] sm:$0xff]
    %v6394 = vld [vmem:[#allocation7 + $0x6f8] sm:$0xff]
    %v6395 = vld [vmem:[#allocation7 + $0x700] sm:$0xff]
    %v6396 = vld [vmem:[#allocation7 + $0x708] sm:$0xff]
    %v6397 = vld [vmem:[#allocation7 + $0x710] sm:$0xff]
    %v6398 = vld [vmem:[#allocation7 + $0x718] sm:$0xff]
    %v6399 = vld [vmem:[#allocation7 + $0x720] sm:$0xff]
    %v6400 = vld [vmem:[#allocation7 + $0x728] sm:$0xff]
    %v6401 = vld [vmem:[#allocation7 + $0x730] sm:$0xff]
    %v6402 = vld [vmem:[#allocation7 + $0x738] sm:$0xff]
    %v6403 = vld [vmem:[#allocation7 + $0x740] sm:$0xff]
    %v6404 = vld [vmem:[#allocation7 + $0x748] sm:$0xff]
    %v6405 = vld [vmem:[#allocation7 + $0x750] sm:$0xff]
    %v6406 = vld [vmem:[#allocation7 + $0x758] sm:$0xff]
    %v6407 = vld [vmem:[#allocation7 + $0x760] sm:$0xff]
    %v6408 = vld [vmem:[#allocation7 + $0x768] sm:$0xff]
    %v6409 = vld [vmem:[#allocation7 + $0x770] sm:$0xff]
    %v6410 = vld [vmem:[#allocation7 + $0x778] sm:$0xff]
    %v6411 = vld [vmem:[#allocation7 + $0x780] sm:$0xff]
    %v6412 = vld [vmem:[#allocation7 + $0x788] sm:$0xff]
    %v6413 = vld [vmem:[#allocation7 + $0x790] sm:$0xff]
    %v6414 = vld [vmem:[#allocation7 + $0x798] sm:$0xff]
    %v6415 = vld [vmem:[#allocation7 + $0x7a0] sm:$0xff]
    %v6416 = vld [vmem:[#allocation7 + $0x7a8] sm:$0xff]
    %v6417 = vld [vmem:[#allocation7 + $0x7b0] sm:$0xff]
    %v6418 = vld [vmem:[#allocation7 + $0x7b8] sm:$0xff]
    %v6419 = vld [vmem:[#allocation7 + $0x7c0] sm:$0xff]
    %v6420 = vld [vmem:[#allocation7 + $0x7c8] sm:$0xff]
    %v6421 = vld [vmem:[#allocation7 + $0x7d0] sm:$0xff]
    %v6422 = vld [vmem:[#allocation7 + $0x7d8] sm:$0xff]
    %v6423 = vld [vmem:[#allocation7 + $0x7e0] sm:$0xff]
    %v6424 = vld [vmem:[#allocation7 + $0x7e8] sm:$0xff]
    %v6425 = vld [vmem:[#allocation7 + $0x7f0] sm:$0xff]
    %v6426 = vld [vmem:[#allocation7 + $0x7f8] sm:$0xff]
    %v6427 = vld [vmem:[#allocation7 + $0x800] sm:$0xff]
    %v6428 = vld [vmem:[#allocation7 + $0x808] sm:$0xff]
    %v6429 = vld [vmem:[#allocation7 + $0x810] sm:$0xff]
    %v6430 = vld [vmem:[#allocation7 + $0x818] sm:$0xff]
    %v6431 = vld [vmem:[#allocation7 + $0x820] sm:$0xff]
    %v6432 = vld [vmem:[#allocation7 + $0x828] sm:$0xff]
    %v6433 = vld [vmem:[#allocation7 + $0x830] sm:$0xff]
    %v6434 = vld [vmem:[#allocation7 + $0x838] sm:$0xff]
    %v6435 = vld [vmem:[#allocation7 + $0x840] sm:$0xff]
    %v6436 = vld [vmem:[#allocation7 + $0x848] sm:$0xff]
    %v6437 = vld [vmem:[#allocation7 + $0x850] sm:$0xff]
    %v6438 = vld [vmem:[#allocation7 + $0x858] sm:$0xff]
    %v6439 = vld [vmem:[#allocation7 + $0x860] sm:$0xff]
    %v6440 = vld [vmem:[#allocation7 + $0x868] sm:$0xff]
    %v6441 = vld [vmem:[#allocation7 + $0x870] sm:$0xff]
    %v6442 = vld [vmem:[#allocation7 + $0x878] sm:$0xff]
    %v6443 = vld [vmem:[#allocation7 + $0x880] sm:$0xff]
    %v6444 = vld [vmem:[#allocation7 + $0x888] sm:$0xff]
    %v6445 = vld [vmem:[#allocation7 + $0x890] sm:$0xff]
    %v6446 = vld [vmem:[#allocation7 + $0x898] sm:$0xff]
    %v6447 = vld [vmem:[#allocation7 + $0x8a0] sm:$0xff]
    %v6448 = vld [vmem:[#allocation7 + $0x8a8] sm:$0xff]
    %v6449 = vld [vmem:[#allocation7 + $0x8b0] sm:$0xff]
    %v6450 = vld [vmem:[#allocation7 + $0x8b8] sm:$0xff]
    %v6451 = vld [vmem:[#allocation7 + $0x8c0] sm:$0xff]
    %v6452 = vld [vmem:[#allocation7 + $0x8c8] sm:$0xff]
    %v6453 = vld [vmem:[#allocation7 + $0x8d0] sm:$0xff]
    %v6454 = vld [vmem:[#allocation7 + $0x8d8] sm:$0xff]
    %v6455 = vld [vmem:[#allocation7 + $0x8e0] sm:$0xff]
    %v6456 = vld [vmem:[#allocation7 + $0x8e8] sm:$0xff]
    %v6457 = vld [vmem:[#allocation7 + $0x8f0] sm:$0xff]
    %v6458 = vld [vmem:[#allocation7 + $0x8f8] sm:$0xff]
    %v6459 = vld [vmem:[#allocation8] sm:$0x3f]
    %v6461 = vperm.slane %v6459, 0
    %v6462 = vperm.slane %v6459, 1
    %v6463 = vperm.slane %v6459, 2
    %v6464 = vperm.slane %v6459, 3
    %v6465 = vperm.slane %v6459, 4
    %v6466 = vperm.slane %v6459, 5
    %v6479 = vunpack.c.l.b16 %v119
    %v6480 = vunpack.c.h.b16 %v119
    %v6481 = vunpack.c.l.b16 %v120
    %v6482 = vunpack.c.h.b16 %v120
    %v6483 = vunpack.c.l.b16 %v121
    %v6484 = vunpack.c.h.b16 %v121
    %v6485 = vunpack.c.l.b16 %v122
    %v6486 = vunpack.c.h.b16 %v122
    %v6487 = vunpack.c.l.b16 %v123
    %v6488 = vunpack.c.h.b16 %v123
    %v6489 = vunpack.c.l.b16 %v124
    %v6490 = vunpack.c.h.b16 %v124
    %v6491 = vpack.c.b16 %v6485, %v6479
    %v6492 = vpack.c.b16 %v6486, %v6480
    %v6493 = vpack.c.b16 %v6487, %v6481
    %v6494 = vpack.c.b16 %v6488, %v6482
    %v6495 = vpack.c.b16 %v6489, %v6483
    %v6496 = vpack.c.b16 %v6490, %v6484
    %v6791 = vunpack.c.l.b16 %v6171
    %v6792 = vunpack.c.h.b16 %v6171
    %v6793 = vunpack.c.l.b16 %v6172
    %v6794 = vunpack.c.h.b16 %v6172
    %v6795 = vunpack.c.l.b16 %v6173
    %v6796 = vunpack.c.h.b16 %v6173
    %v6797 = vunpack.c.l.b16 %v6174
    %v6798 = vunpack.c.h.b16 %v6174
    %v6799 = vunpack.c.l.b16 %v6175
    %v6800 = vunpack.c.h.b16 %v6175
    %v6801 = vunpack.c.l.b16 %v6176
    %v6802 = vunpack.c.h.b16 %v6176
    %v6803 = vunpack.c.l.b16 %v6177
    %v6804 = vunpack.c.h.b16 %v6177
    %v6805 = vunpack.c.l.b16 %v6178
    %v6806 = vunpack.c.h.b16 %v6178
    %v6807 = vunpack.c.l.b16 %v6179
    %v6808 = vunpack.c.h.b16 %v6179
    %v6809 = vunpack.c.l.b16 %v6180
    %v6810 = vunpack.c.h.b16 %v6180
    %v6811 = vunpack.c.l.b16 %v6181
    %v6812 = vunpack.c.h.b16 %v6181
    %v6813 = vunpack.c.l.b16 %v6182
    %v6814 = vunpack.c.h.b16 %v6182
    %v6815 = vunpack.c.l.b16 %v6183
    %v6816 = vunpack.c.h.b16 %v6183
    %v6817 = vunpack.c.l.b16 %v6184
    %v6818 = vunpack.c.h.b16 %v6184
    %v6819 = vunpack.c.l.b16 %v6185
    %v6820 = vunpack.c.h.b16 %v6185
    %v6821 = vunpack.c.l.b16 %v6186
    %v6822 = vunpack.c.h.b16 %v6186
    %v6823 = vunpack.c.l.b16 %v6187
    %v6824 = vunpack.c.h.b16 %v6187
    %v6825 = vunpack.c.l.b16 %v6188
    %v6826 = vunpack.c.h.b16 %v6188
    %v6827 = vunpack.c.l.b16 %v6189
    %v6828 = vunpack.c.h.b16 %v6189
    %v6829 = vunpack.c.l.b16 %v6190
    %v6830 = vunpack.c.h.b16 %v6190
    %v6831 = vunpack.c.l.b16 %v6191
    %v6832 = vunpack.c.h.b16 %v6191
    %v6833 = vunpack.c.l.b16 %v6192
    %v6834 = vunpack.c.h.b16 %v6192
    %v6835 = vunpack.c.l.b16 %v6193
    %v6836 = vunpack.c.h.b16 %v6193
    %v6837 = vunpack.c.l.b16 %v6194
    %v6838 = vunpack.c.h.b16 %v6194
    %v6839 = vunpack.c.l.b16 %v6195
    %v6840 = vunpack.c.h.b16 %v6195
    %v6841 = vunpack.c.l.b16 %v6196
    %v6842 = vunpack.c.h.b16 %v6196
    %v6843 = vunpack.c.l.b16 %v6197
    %v6844 = vunpack.c.h.b16 %v6197
    %v6845 = vunpack.c.l.b16 %v6198
    %v6846 = vunpack.c.h.b16 %v6198
    %v6847 = vunpack.c.l.b16 %v6199
    %v6848 = vunpack.c.h.b16 %v6199
    %v6849 = vunpack.c.l.b16 %v6200
    %v6850 = vunpack.c.h.b16 %v6200
    %v6851 = vunpack.c.l.b16 %v6201
    %v6852 = vunpack.c.h.b16 %v6201
    %v6853 = vunpack.c.l.b16 %v6202
    %v6854 = vunpack.c.h.b16 %v6202
    %v6855 = vunpack.c.l.b16 %v6203
    %v6856 = vunpack.c.h.b16 %v6203
    %v6857 = vunpack.c.l.b16 %v6204
    %v6858 = vunpack.c.h.b16 %v6204
    %v6859 = vunpack.c.l.b16 %v6205
    %v6860 = vunpack.c.h.b16 %v6205
    %v6861 = vunpack.c.l.b16 %v6206
    %v6862 = vunpack.c.h.b16 %v6206
    %v6863 = vunpack.c.l.b16 %v6207
    %v6864 = vunpack.c.h.b16 %v6207
    %v6865 = vunpack.c.l.b16 %v6208
    %v6866 = vunpack.c.h.b16 %v6208
    %v6867 = vunpack.c.l.b16 %v6209
    %v6868 = vunpack.c.h.b16 %v6209
    %v6869 = vunpack.c.l.b16 %v6210
    %v6870 = vunpack.c.h.b16 %v6210
    %v6871 = vunpack.c.l.b16 %v6211
    %v6872 = vunpack.c.h.b16 %v6211
    %v6873 = vunpack.c.l.b16 %v6212
    %v6874 = vunpack.c.h.b16 %v6212
    %v6875 = vunpack.c.l.b16 %v6213
    %v6876 = vunpack.c.h.b16 %v6213
    %v6877 = vunpack.c.l.b16 %v6214
    %v6878 = vunpack.c.h.b16 %v6214
    %v6879 = vunpack.c.l.b16 %v6215
    %v6880 = vunpack.c.h.b16 %v6215
    %v6881 = vunpack.c.l.b16 %v6216
    %v6882 = vunpack.c.h.b16 %v6216
    %v6883 = vunpack.c.l.b16 %v6217
    %v6884 = vunpack.c.h.b16 %v6217
    %v6885 = vunpack.c.l.b16 %v6218
    %v6886 = vunpack.c.h.b16 %v6218
    %v6887 = vunpack.c.l.b16 %v6219
    %v6888 = vunpack.c.h.b16 %v6219
    %v6889 = vunpack.c.l.b16 %v6220
    %v6890 = vunpack.c.h.b16 %v6220
    %v6891 = vunpack.c.l.b16 %v6221
    %v6892 = vunpack.c.h.b16 %v6221
    %v6893 = vunpack.c.l.b16 %v6222
    %v6894 = vunpack.c.h.b16 %v6222
    %v6895 = vunpack.c.l.b16 %v6223
    %v6896 = vunpack.c.h.b16 %v6223
    %v6897 = vunpack.c.l.b16 %v6224
    %v6898 = vunpack.c.h.b16 %v6224
    %v6899 = vunpack.c.l.b16 %v6225
    %v6900 = vunpack.c.h.b16 %v6225
    %v6901 = vunpack.c.l.b16 %v6226
    %v6902 = vunpack.c.h.b16 %v6226
    %v6903 = vunpack.c.l.b16 %v6227
    %v6904 = vunpack.c.h.b16 %v6227
    %v6905 = vunpack.c.l.b16 %v6228
    %v6906 = vunpack.c.h.b16 %v6228
    %v6907 = vunpack.c.l.b16 %v6229
    %v6908 = vunpack.c.h.b16 %v6229
    %v6909 = vunpack.c.l.b16 %v6230
    %v6910 = vunpack.c.h.b16 %v6230
    %v6911 = vunpack.c.l.b16 %v6231
    %v6912 = vunpack.c.h.b16 %v6231
    %v6913 = vunpack.c.l.b16 %v6232
    %v6914 = vunpack.c.h.b16 %v6232
    %v6915 = vunpack.c.l.b16 %v6233
    %v6916 = vunpack.c.h.b16 %v6233
    %v6917 = vunpack.c.l.b16 %v6234
    %v6918 = vunpack.c.h.b16 %v6234
    %v6919 = vunpack.c.l.b16 %v6235
    %v6920 = vunpack.c.h.b16 %v6235
    %v6921 = vunpack.c.l.b16 %v6236
    %v6922 = vunpack.c.h.b16 %v6236
    %v6923 = vunpack.c.l.b16 %v6237
    %v6924 = vunpack.c.h.b16 %v6237
    %v6925 = vunpack.c.l.b16 %v6238
    %v6926 = vunpack.c.h.b16 %v6238
    %v6927 = vunpack.c.l.b16 %v6239
    %v6928 = vunpack.c.h.b16 %v6239
    %v6929 = vunpack.c.l.b16 %v6240
    %v6930 = vunpack.c.h.b16 %v6240
    %v6931 = vunpack.c.l.b16 %v6241
    %v6932 = vunpack.c.h.b16 %v6241
    %v6933 = vunpack.c.l.b16 %v6242
    %v6934 = vunpack.c.h.b16 %v6242
    %v6935 = vunpack.c.l.b16 %v6243
    %v6936 = vunpack.c.h.b16 %v6243
    %v6937 = vunpack.c.l.b16 %v6244
    %v6938 = vunpack.c.h.b16 %v6244
    %v6939 = vunpack.c.l.b16 %v6245
    %v6940 = vunpack.c.h.b16 %v6245
    %v6941 = vunpack.c.l.b16 %v6246
    %v6942 = vunpack.c.h.b16 %v6246
    %v6943 = vunpack.c.l.b16 %v6247
    %v6944 = vunpack.c.h.b16 %v6247
    %v6945 = vunpack.c.l.b16 %v6248
    %v6946 = vunpack.c.h.b16 %v6248
    %v6947 = vunpack.c.l.b16 %v6249
    %v6948 = vunpack.c.h.b16 %v6249
    %v6949 = vunpack.c.l.b16 %v6250
    %v6950 = vunpack.c.h.b16 %v6250
    %v6951 = vunpack.c.l.b16 %v6251
    %v6952 = vunpack.c.h.b16 %v6251
    %v6953 = vunpack.c.l.b16 %v6252
    %v6954 = vunpack.c.h.b16 %v6252
    %v6955 = vunpack.c.l.b16 %v6253
    %v6956 = vunpack.c.h.b16 %v6253
    %v6957 = vunpack.c.l.b16 %v6254
    %v6958 = vunpack.c.h.b16 %v6254
    %v6959 = vunpack.c.l.b16 %v6255
    %v6960 = vunpack.c.h.b16 %v6255
    %v6961 = vunpack.c.l.b16 %v6256
    %v6962 = vunpack.c.h.b16 %v6256
    %v6963 = vunpack.c.l.b16 %v6257
    %v6964 = vunpack.c.h.b16 %v6257
    %v6965 = vunpack.c.l.b16 %v6258
    %v6966 = vunpack.c.h.b16 %v6258
    %v6967 = vunpack.c.l.b16 %v6259
    %v6968 = vunpack.c.h.b16 %v6259
    %v6969 = vunpack.c.l.b16 %v6260
    %v6970 = vunpack.c.h.b16 %v6260
    %v6971 = vunpack.c.l.b16 %v6261
    %v6972 = vunpack.c.h.b16 %v6261
    %v6973 = vunpack.c.l.b16 %v6262
    %v6974 = vunpack.c.h.b16 %v6262
    %v6975 = vunpack.c.l.b16 %v6263
    %v6976 = vunpack.c.h.b16 %v6263
    %v6977 = vunpack.c.l.b16 %v6264
    %v6978 = vunpack.c.h.b16 %v6264
    %v6979 = vunpack.c.l.b16 %v6265
    %v6980 = vunpack.c.h.b16 %v6265
    %v6981 = vunpack.c.l.b16 %v6266
    %v6982 = vunpack.c.h.b16 %v6266
    %v6983 = vunpack.c.l.b16 %v6267
    %v6984 = vunpack.c.h.b16 %v6267
    %v6985 = vunpack.c.l.b16 %v6268
    %v6986 = vunpack.c.h.b16 %v6268
    %v6987 = vunpack.c.l.b16 %v6269
    %v6988 = vunpack.c.h.b16 %v6269
    %v6989 = vunpack.c.l.b16 %v6270
    %v6990 = vunpack.c.h.b16 %v6270
    %v6991 = vunpack.c.l.b16 %v6271
    %v6992 = vunpack.c.h.b16 %v6271
    %v6993 = vunpack.c.l.b16 %v6272
    %v6994 = vunpack.c.h.b16 %v6272
    %v6995 = vunpack.c.l.b16 %v6273
    %v6996 = vunpack.c.h.b16 %v6273
    %v6997 = vunpack.c.l.b16 %v6274
    %v6998 = vunpack.c.h.b16 %v6274
    %v6999 = vunpack.c.l.b16 %v6275
    %v7000 = vunpack.c.h.b16 %v6275
    %v7001 = vunpack.c.l.b16 %v6276
    %v7002 = vunpack.c.h.b16 %v6276
    %v7003 = vunpack.c.l.b16 %v6277
    %v7004 = vunpack.c.h.b16 %v6277
    %v7005 = vunpack.c.l.b16 %v6278
    %v7006 = vunpack.c.h.b16 %v6278
    %v7007 = vunpack.c.l.b16 %v6279
    %v7008 = vunpack.c.h.b16 %v6279
    %v7009 = vunpack.c.l.b16 %v6280
    %v7010 = vunpack.c.h.b16 %v6280
    %v7011 = vunpack.c.l.b16 %v6281
    %v7012 = vunpack.c.h.b16 %v6281
    %v7013 = vunpack.c.l.b16 %v6282
    %v7014 = vunpack.c.h.b16 %v6282
    %v7015 = vunpack.c.l.b16 %v6283
    %v7016 = vunpack.c.h.b16 %v6283
    %v7017 = vunpack.c.l.b16 %v6284
    %v7018 = vunpack.c.h.b16 %v6284
    %v7019 = vunpack.c.l.b16 %v6285
    %v7020 = vunpack.c.h.b16 %v6285
    %v7021 = vunpack.c.l.b16 %v6286
    %v7022 = vunpack.c.h.b16 %v6286
    %v7023 = vunpack.c.l.b16 %v6287
    %v7024 = vunpack.c.h.b16 %v6287
    %v7025 = vunpack.c.l.b16 %v6288
    %v7026 = vunpack.c.h.b16 %v6288
    %v7027 = vunpack.c.l.b16 %v6289
    %v7028 = vunpack.c.h.b16 %v6289
    %v7029 = vunpack.c.l.b16 %v6290
    %v7030 = vunpack.c.h.b16 %v6290
    %v7031 = vunpack.c.l.b16 %v6291
    %v7032 = vunpack.c.h.b16 %v6291
    %v7033 = vunpack.c.l.b16 %v6292
    %v7034 = vunpack.c.h.b16 %v6292
    %v7035 = vunpack.c.l.b16 %v6293
    %v7036 = vunpack.c.h.b16 %v6293
    %v7037 = vunpack.c.l.b16 %v6294
    %v7038 = vunpack.c.h.b16 %v6294
    %v7039 = vunpack.c.l.b16 %v6295
    %v7040 = vunpack.c.h.b16 %v6295
    %v7041 = vunpack.c.l.b16 %v6296
    %v7042 = vunpack.c.h.b16 %v6296
    %v7043 = vunpack.c.l.b16 %v6297
    %v7044 = vunpack.c.h.b16 %v6297
    %v7045 = vunpack.c.l.b16 %v6298
    %v7046 = vunpack.c.h.b16 %v6298
    %v7047 = vunpack.c.l.b16 %v6299
    %v7048 = vunpack.c.h.b16 %v6299
    %v7049 = vunpack.c.l.b16 %v6300
    %v7050 = vunpack.c.h.b16 %v6300
    %v7051 = vunpack.c.l.b16 %v6301
    %v7052 = vunpack.c.h.b16 %v6301
    %v7053 = vunpack.c.l.b16 %v6302
    %v7054 = vunpack.c.h.b16 %v6302
    %v7055 = vunpack.c.l.b16 %v6303
    %v7056 = vunpack.c.h.b16 %v6303
    %v7057 = vunpack.c.l.b16 %v6304
    %v7058 = vunpack.c.h.b16 %v6304
    %v7059 = vunpack.c.l.b16 %v6305
    %v7060 = vunpack.c.h.b16 %v6305
    %v7061 = vunpack.c.l.b16 %v6306
    %v7062 = vunpack.c.h.b16 %v6306
    %v7063 = vunpack.c.l.b16 %v6307
    %v7064 = vunpack.c.h.b16 %v6307
    %v7065 = vunpack.c.l.b16 %v6308
    %v7066 = vunpack.c.h.b16 %v6308
    %v7067 = vunpack.c.l.b16 %v6309
    %v7068 = vunpack.c.h.b16 %v6309
    %v7069 = vunpack.c.l.b16 %v6310
    %v7070 = vunpack.c.h.b16 %v6310
    %v7071 = vunpack.c.l.b16 %v6311
    %v7072 = vunpack.c.h.b16 %v6311
    %v7073 = vunpack.c.l.b16 %v6312
    %v7074 = vunpack.c.h.b16 %v6312
    %v7075 = vunpack.c.l.b16 %v6313
    %v7076 = vunpack.c.h.b16 %v6313
    %v7077 = vunpack.c.l.b16 %v6314
    %v7078 = vunpack.c.h.b16 %v6314
    %v7079 = vunpack.c.l.b16 %v6315
    %v7080 = vunpack.c.h.b16 %v6315
    %v7081 = vunpack.c.l.b16 %v6316
    %v7082 = vunpack.c.h.b16 %v6316
    %v7083 = vunpack.c.l.b16 %v6317
    %v7084 = vunpack.c.h.b16 %v6317
    %v7085 = vunpack.c.l.b16 %v6318
    %v7086 = vunpack.c.h.b16 %v6318
    %v7087 = vunpack.c.l.b16 %v6319
    %v7088 = vunpack.c.h.b16 %v6319
    %v7089 = vunpack.c.l.b16 %v6320
    %v7090 = vunpack.c.h.b16 %v6320
    %v7091 = vunpack.c.l.b16 %v6321
    %v7092 = vunpack.c.h.b16 %v6321
    %v7093 = vunpack.c.l.b16 %v6322
    %v7094 = vunpack.c.h.b16 %v6322
    %v7095 = vunpack.c.l.b16 %v6323
    %v7096 = vunpack.c.h.b16 %v6323
    %v7097 = vunpack.c.l.b16 %v6324
    %v7098 = vunpack.c.h.b16 %v6324
    %v7099 = vunpack.c.l.b16 %v6325
    %v7100 = vunpack.c.h.b16 %v6325
    %v7101 = vunpack.c.l.b16 %v6326
    %v7102 = vunpack.c.h.b16 %v6326
    %v7103 = vunpack.c.l.b16 %v6327
    %v7104 = vunpack.c.h.b16 %v6327
    %v7105 = vunpack.c.l.b16 %v6328
    %v7106 = vunpack.c.h.b16 %v6328
    %v7107 = vunpack.c.l.b16 %v6329
    %v7108 = vunpack.c.h.b16 %v6329
    %v7109 = vunpack.c.l.b16 %v6330
    %v7110 = vunpack.c.h.b16 %v6330
    %v7111 = vunpack.c.l.b16 %v6331
    %v7112 = vunpack.c.h.b16 %v6331
    %v7113 = vunpack.c.l.b16 %v6332
    %v7114 = vunpack.c.h.b16 %v6332
    %v7115 = vunpack.c.l.b16 %v6333
    %v7116 = vunpack.c.h.b16 %v6333
    %v7117 = vunpack.c.l.b16 %v6334
    %v7118 = vunpack.c.h.b16 %v6334
    %v7119 = vunpack.c.l.b16 %v6335
    %v7120 = vunpack.c.h.b16 %v6335
    %v7121 = vunpack.c.l.b16 %v6336
    %v7122 = vunpack.c.h.b16 %v6336
    %v7123 = vunpack.c.l.b16 %v6337
    %v7124 = vunpack.c.h.b16 %v6337
    %v7125 = vunpack.c.l.b16 %v6338
    %v7126 = vunpack.c.h.b16 %v6338
    %v7127 = vunpack.c.l.b16 %v6339
    %v7128 = vunpack.c.h.b16 %v6339
    %v7129 = vunpack.c.l.b16 %v6340
    %v7130 = vunpack.c.h.b16 %v6340
    %v7131 = vunpack.c.l.b16 %v6341
    %v7132 = vunpack.c.h.b16 %v6341
    %v7133 = vunpack.c.l.b16 %v6342
    %v7134 = vunpack.c.h.b16 %v6342
    %v7135 = vunpack.c.l.b16 %v6343
    %v7136 = vunpack.c.h.b16 %v6343
    %v7137 = vunpack.c.l.b16 %v6344
    %v7138 = vunpack.c.h.b16 %v6344
    %v7139 = vunpack.c.l.b16 %v6345
    %v7140 = vunpack.c.h.b16 %v6345
    %v7141 = vunpack.c.l.b16 %v6346
    %v7142 = vunpack.c.h.b16 %v6346
    %v7143 = vunpack.c.l.b16 %v6347
    %v7144 = vunpack.c.h.b16 %v6347
    %v7145 = vunpack.c.l.b16 %v6348
    %v7146 = vunpack.c.h.b16 %v6348
    %v7147 = vunpack.c.l.b16 %v6349
    %v7148 = vunpack.c.h.b16 %v6349
    %v7149 = vunpack.c.l.b16 %v6350
    %v7150 = vunpack.c.h.b16 %v6350
    %v7151 = vunpack.c.l.b16 %v6351
    %v7152 = vunpack.c.h.b16 %v6351
    %v7153 = vunpack.c.l.b16 %v6352
    %v7154 = vunpack.c.h.b16 %v6352
    %v7155 = vunpack.c.l.b16 %v6353
    %v7156 = vunpack.c.h.b16 %v6353
    %v7157 = vunpack.c.l.b16 %v6354
    %v7158 = vunpack.c.h.b16 %v6354
    %v7159 = vunpack.c.l.b16 %v6355
    %v7160 = vunpack.c.h.b16 %v6355
    %v7161 = vunpack.c.l.b16 %v6356
    %v7162 = vunpack.c.h.b16 %v6356
    %v7163 = vunpack.c.l.b16 %v6357
    %v7164 = vunpack.c.h.b16 %v6357
    %v7165 = vunpack.c.l.b16 %v6358
    %v7166 = vunpack.c.h.b16 %v6358
    %v7167 = vunpack.c.l.b16 %v6359
    %v7168 = vunpack.c.h.b16 %v6359
    %v7169 = vunpack.c.l.b16 %v6360
    %v7170 = vunpack.c.h.b16 %v6360
    %v7171 = vunpack.c.l.b16 %v6361
    %v7172 = vunpack.c.h.b16 %v6361
    %v7173 = vunpack.c.l.b16 %v6362
    %v7174 = vunpack.c.h.b16 %v6362
    %v7175 = vunpack.c.l.b16 %v6363
    %v7176 = vunpack.c.h.b16 %v6363
    %v7177 = vunpack.c.l.b16 %v6364
    %v7178 = vunpack.c.h.b16 %v6364
    %v7179 = vunpack.c.l.b16 %v6365
    %v7180 = vunpack.c.h.b16 %v6365
    %v7181 = vunpack.c.l.b16 %v6366
    %v7182 = vunpack.c.h.b16 %v6366
    %v7183 = vunpack.c.l.b16 %v6367
    %v7184 = vunpack.c.h.b16 %v6367
    %v7185 = vunpack.c.l.b16 %v6368
    %v7186 = vunpack.c.h.b16 %v6368
    %v7187 = vunpack.c.l.b16 %v6369
    %v7188 = vunpack.c.h.b16 %v6369
    %v7189 = vunpack.c.l.b16 %v6370
    %v7190 = vunpack.c.h.b16 %v6370
    %v7191 = vunpack.c.l.b16 %v6371
    %v7192 = vunpack.c.h.b16 %v6371
    %v7193 = vunpack.c.l.b16 %v6372
    %v7194 = vunpack.c.h.b16 %v6372
    %v7195 = vunpack.c.l.b16 %v6373
    %v7196 = vunpack.c.h.b16 %v6373
    %v7197 = vunpack.c.l.b16 %v6374
    %v7198 = vunpack.c.h.b16 %v6374
    %v7199 = vunpack.c.l.b16 %v6375
    %v7200 = vunpack.c.h.b16 %v6375
    %v7201 = vunpack.c.l.b16 %v6376
    %v7202 = vunpack.c.h.b16 %v6376
    %v7203 = vunpack.c.l.b16 %v6377
    %v7204 = vunpack.c.h.b16 %v6377
    %v7205 = vunpack.c.l.b16 %v6378
    %v7206 = vunpack.c.h.b16 %v6378
    %v7207 = vunpack.c.l.b16 %v6379
    %v7208 = vunpack.c.h.b16 %v6379
    %v7209 = vunpack.c.l.b16 %v6380
    %v7210 = vunpack.c.h.b16 %v6380
    %v7211 = vunpack.c.l.b16 %v6381
    %v7212 = vunpack.c.h.b16 %v6381
    %v7213 = vunpack.c.l.b16 %v6382
    %v7214 = vunpack.c.h.b16 %v6382
    %v7215 = vunpack.c.l.b16 %v6383
    %v7216 = vunpack.c.h.b16 %v6383
    %v7217 = vunpack.c.l.b16 %v6384
    %v7218 = vunpack.c.h.b16 %v6384
    %v7219 = vunpack.c.l.b16 %v6385
    %v7220 = vunpack.c.h.b16 %v6385
    %v7221 = vunpack.c.l.b16 %v6386
    %v7222 = vunpack.c.h.b16 %v6386
    %v7223 = vunpack.c.l.b16 %v6387
    %v7224 = vunpack.c.h.b16 %v6387
    %v7225 = vunpack.c.l.b16 %v6388
    %v7226 = vunpack.c.h.b16 %v6388
    %v7227 = vunpack.c.l.b16 %v6389
    %v7228 = vunpack.c.h.b16 %v6389
    %v7229 = vunpack.c.l.b16 %v6390
    %v7230 = vunpack.c.h.b16 %v6390
    %v7231 = vunpack.c.l.b16 %v6391
    %v7232 = vunpack.c.h.b16 %v6391
    %v7233 = vunpack.c.l.b16 %v6392
    %v7234 = vunpack.c.h.b16 %v6392
    %v7235 = vunpack.c.l.b16 %v6393
    %v7236 = vunpack.c.h.b16 %v6393
    %v7237 = vunpack.c.l.b16 %v6394
    %v7238 = vunpack.c.h.b16 %v6394
    %v7239 = vunpack.c.l.b16 %v6395
    %v7240 = vunpack.c.h.b16 %v6395
    %v7241 = vunpack.c.l.b16 %v6396
    %v7242 = vunpack.c.h.b16 %v6396
    %v7243 = vunpack.c.l.b16 %v6397
    %v7244 = vunpack.c.h.b16 %v6397
    %v7245 = vunpack.c.l.b16 %v6398
    %v7246 = vunpack.c.h.b16 %v6398
    %v7247 = vunpack.c.l.b16 %v6399
    %v7248 = vunpack.c.h.b16 %v6399
    %v7249 = vunpack.c.l.b16 %v6400
    %v7250 = vunpack.c.h.b16 %v6400
    %v7251 = vunpack.c.l.b16 %v6401
    %v7252 = vunpack.c.h.b16 %v6401
    %v7253 = vunpack.c.l.b16 %v6402
    %v7254 = vunpack.c.h.b16 %v6402
    %v7255 = vunpack.c.l.b16 %v6403
    %v7256 = vunpack.c.h.b16 %v6403
    %v7257 = vunpack.c.l.b16 %v6404
    %v7258 = vunpack.c.h.b16 %v6404
    %v7259 = vunpack.c.l.b16 %v6405
    %v7260 = vunpack.c.h.b16 %v6405
    %v7261 = vunpack.c.l.b16 %v6406
    %v7262 = vunpack.c.h.b16 %v6406
    %v7263 = vunpack.c.l.b16 %v6407
    %v7264 = vunpack.c.h.b16 %v6407
    %v7265 = vunpack.c.l.b16 %v6408
    %v7266 = vunpack.c.h.b16 %v6408
    %v7267 = vunpack.c.l.b16 %v6409
    %v7268 = vunpack.c.h.b16 %v6409
    %v7269 = vunpack.c.l.b16 %v6410
    %v7270 = vunpack.c.h.b16 %v6410
    %v7271 = vunpack.c.l.b16 %v6411
    %v7272 = vunpack.c.h.b16 %v6411
    %v7273 = vunpack.c.l.b16 %v6412
    %v7274 = vunpack.c.h.b16 %v6412
    %v7275 = vunpack.c.l.b16 %v6413
    %v7276 = vunpack.c.h.b16 %v6413
    %v7277 = vunpack.c.l.b16 %v6414
    %v7278 = vunpack.c.h.b16 %v6414
    %v7279 = vunpack.c.l.b16 %v6415
    %v7280 = vunpack.c.h.b16 %v6415
    %v7281 = vunpack.c.l.b16 %v6416
    %v7282 = vunpack.c.h.b16 %v6416
    %v7283 = vunpack.c.l.b16 %v6417
    %v7284 = vunpack.c.h.b16 %v6417
    %v7285 = vunpack.c.l.b16 %v6418
    %v7286 = vunpack.c.h.b16 %v6418
    %v7287 = vunpack.c.l.b16 %v6419
    %v7288 = vunpack.c.h.b16 %v6419
    %v7289 = vunpack.c.l.b16 %v6420
    %v7290 = vunpack.c.h.b16 %v6420
    %v7291 = vunpack.c.l.b16 %v6421
    %v7292 = vunpack.c.h.b16 %v6421
    %v7293 = vunpack.c.l.b16 %v6422
    %v7294 = vunpack.c.h.b16 %v6422
    %v7295 = vunpack.c.l.b16 %v6423
    %v7296 = vunpack.c.h.b16 %v6423
    %v7297 = vunpack.c.l.b16 %v6424
    %v7298 = vunpack.c.h.b16 %v6424
    %v7299 = vunpack.c.l.b16 %v6425
    %v7300 = vunpack.c.h.b16 %v6425
    %v7301 = vunpack.c.l.b16 %v6426
    %v7302 = vunpack.c.h.b16 %v6426
    %v7303 = vunpack.c.l.b16 %v6427
    %v7304 = vunpack.c.h.b16 %v6427
    %v7305 = vunpack.c.l.b16 %v6428
    %v7306 = vunpack.c.h.b16 %v6428
    %v7307 = vunpack.c.l.b16 %v6429
    %v7308 = vunpack.c.h.b16 %v6429
    %v7309 = vunpack.c.l.b16 %v6430
    %v7310 = vunpack.c.h.b16 %v6430
    %v7311 = vunpack.c.l.b16 %v6431
    %v7312 = vunpack.c.h.b16 %v6431
    %v7313 = vunpack.c.l.b16 %v6432
    %v7314 = vunpack.c.h.b16 %v6432
    %v7315 = vunpack.c.l.b16 %v6433
    %v7316 = vunpack.c.h.b16 %v6433
    %v7317 = vunpack.c.l.b16 %v6434
    %v7318 = vunpack.c.h.b16 %v6434
    %v7319 = vunpack.c.l.b16 %v6435
    %v7320 = vunpack.c.h.b16 %v6435
    %v7321 = vunpack.c.l.b16 %v6436
    %v7322 = vunpack.c.h.b16 %v6436
    %v7323 = vunpack.c.l.b16 %v6437
    %v7324 = vunpack.c.h.b16 %v6437
    %v7325 = vunpack.c.l.b16 %v6438
    %v7326 = vunpack.c.h.b16 %v6438
    %v7327 = vunpack.c.l.b16 %v6439
    %v7328 = vunpack.c.h.b16 %v6439
    %v7329 = vunpack.c.l.b16 %v6440
    %v7330 = vunpack.c.h.b16 %v6440
    %v7331 = vunpack.c.l.b16 %v6441
    %v7332 = vunpack.c.h.b16 %v6441
    %v7333 = vunpack.c.l.b16 %v6442
    %v7334 = vunpack.c.h.b16 %v6442
    %v7335 = vunpack.c.l.b16 %v6443
    %v7336 = vunpack.c.h.b16 %v6443
    %v7337 = vunpack.c.l.b16 %v6444
    %v7338 = vunpack.c.h.b16 %v6444
    %v7339 = vunpack.c.l.b16 %v6445
    %v7340 = vunpack.c.h.b16 %v6445
    %v7341 = vunpack.c.l.b16 %v6446
    %v7342 = vunpack.c.h.b16 %v6446
    %v7343 = vunpack.c.l.b16 %v6447
    %v7344 = vunpack.c.h.b16 %v6447
    %v7345 = vunpack.c.l.b16 %v6448
    %v7346 = vunpack.c.h.b16 %v6448
    %v7347 = vunpack.c.l.b16 %v6449
    %v7348 = vunpack.c.h.b16 %v6449
    %v7349 = vunpack.c.l.b16 %v6450
    %v7350 = vunpack.c.h.b16 %v6450
    %v7351 = vunpack.c.l.b16 %v6451
    %v7352 = vunpack.c.h.b16 %v6451
    %v7353 = vunpack.c.l.b16 %v6452
    %v7354 = vunpack.c.h.b16 %v6452
    %v7355 = vunpack.c.l.b16 %v6453
    %v7356 = vunpack.c.h.b16 %v6453
    %v7357 = vunpack.c.l.b16 %v6454
    %v7358 = vunpack.c.h.b16 %v6454
    %v7359 = vunpack.c.l.b16 %v6455
    %v7360 = vunpack.c.h.b16 %v6455
    %v7361 = vunpack.c.l.b16 %v6456
    %v7362 = vunpack.c.h.b16 %v6456
    %v7363 = vunpack.c.l.b16 %v6457
    %v7364 = vunpack.c.h.b16 %v6457
    %v7365 = vunpack.c.l.b16 %v6458
    %v7366 = vunpack.c.h.b16 %v6458
    %v7367 = vpack.c.b16 %v6797, %v6791
    %v7368 = vpack.c.b16 %v6798, %v6792
    %v7369 = vpack.c.b16 %v6799, %v6793
    %v7370 = vpack.c.b16 %v6800, %v6794
    %v7371 = vpack.c.b16 %v6801, %v6795
    %v7372 = vpack.c.b16 %v6802, %v6796
    %v7373 = vpack.c.b16 %v6809, %v6803
    %v7374 = vpack.c.b16 %v6810, %v6804
    %v7375 = vpack.c.b16 %v6811, %v6805
    %v7376 = vpack.c.b16 %v6812, %v6806
    %v7377 = vpack.c.b16 %v6813, %v6807
    %v7378 = vpack.c.b16 %v6814, %v6808
    %v7379 = vpack.c.b16 %v6821, %v6815
    %v7380 = vpack.c.b16 %v6822, %v6816
    %v7381 = vpack.c.b16 %v6823, %v6817
    %v7382 = vpack.c.b16 %v6824, %v6818
    %v7383 = vpack.c.b16 %v6825, %v6819
    %v7384 = vpack.c.b16 %v6826, %v6820
    %v7385 = vpack.c.b16 %v6833, %v6827
    %v7386 = vpack.c.b16 %v6834, %v6828
    %v7387 = vpack.c.b16 %v6835, %v6829
    %v7388 = vpack.c.b16 %v6836, %v6830
    %v7389 = vpack.c.b16 %v6837, %v6831
    %v7390 = vpack.c.b16 %v6838, %v6832
    %v7391 = vpack.c.b16 %v6845, %v6839
    %v7392 = vpack.c.b16 %v6846, %v6840
    %v7393 = vpack.c.b16 %v6847, %v6841
    %v7394 = vpack.c.b16 %v6848, %v6842
    %v7395 = vpack.c.b16 %v6849, %v6843
    %v7396 = vpack.c.b16 %v6850, %v6844
    %v7397 = vpack.c.b16 %v6857, %v6851
    %v7398 = vpack.c.b16 %v6858, %v6852
    %v7399 = vpack.c.b16 %v6859, %v6853
    %v7400 = vpack.c.b16 %v6860, %v6854
    %v7401 = vpack.c.b16 %v6861, %v6855
    %v7402 = vpack.c.b16 %v6862, %v6856
    %v7403 = vpack.c.b16 %v6869, %v6863
    %v7404 = vpack.c.b16 %v6870, %v6864
    %v7405 = vpack.c.b16 %v6871, %v6865
    %v7406 = vpack.c.b16 %v6872, %v6866
    %v7407 = vpack.c.b16 %v6873, %v6867
    %v7408 = vpack.c.b16 %v6874, %v6868
    %v7409 = vpack.c.b16 %v6881, %v6875
    %v7410 = vpack.c.b16 %v6882, %v6876
    %v7411 = vpack.c.b16 %v6883, %v6877
    %v7412 = vpack.c.b16 %v6884, %v6878
    %v7413 = vpack.c.b16 %v6885, %v6879
    %v7414 = vpack.c.b16 %v6886, %v6880
    %v7415 = vpack.c.b16 %v6893, %v6887
    %v7416 = vpack.c.b16 %v6894, %v6888
    %v7417 = vpack.c.b16 %v6895, %v6889
    %v7418 = vpack.c.b16 %v6896, %v6890
    %v7419 = vpack.c.b16 %v6897, %v6891
    %v7420 = vpack.c.b16 %v6898, %v6892
    %v7421 = vpack.c.b16 %v6905, %v6899
    %v7422 = vpack.c.b16 %v6906, %v6900
    %v7423 = vpack.c.b16 %v6907, %v6901
    %v7424 = vpack.c.b16 %v6908, %v6902
    %v7425 = vpack.c.b16 %v6909, %v6903
    %v7426 = vpack.c.b16 %v6910, %v6904
    %v7427 = vpack.c.b16 %v6917, %v6911
    %v7428 = vpack.c.b16 %v6918, %v6912
    %v7429 = vpack.c.b16 %v6919, %v6913
    %v7430 = vpack.c.b16 %v6920, %v6914
    %v7431 = vpack.c.b16 %v6921, %v6915
    %v7432 = vpack.c.b16 %v6922, %v6916
    %v7433 = vpack.c.b16 %v6929, %v6923
    %v7434 = vpack.c.b16 %v6930, %v6924
    %v7435 = vpack.c.b16 %v6931, %v6925
    %v7436 = vpack.c.b16 %v6932, %v6926
    %v7437 = vpack.c.b16 %v6933, %v6927
    %v7438 = vpack.c.b16 %v6934, %v6928
    %v7439 = vpack.c.b16 %v6941, %v6935
    %v7440 = vpack.c.b16 %v6942, %v6936
    %v7441 = vpack.c.b16 %v6943, %v6937
    %v7442 = vpack.c.b16 %v6944, %v6938
    %v7443 = vpack.c.b16 %v6945, %v6939
    %v7444 = vpack.c.b16 %v6946, %v6940
    %v7445 = vpack.c.b16 %v6953, %v6947
    %v7446 = vpack.c.b16 %v6954, %v6948
    %v7447 = vpack.c.b16 %v6955, %v6949
    %v7448 = vpack.c.b16 %v6956, %v6950
    %v7449 = vpack.c.b16 %v6957, %v6951
    %v7450 = vpack.c.b16 %v6958, %v6952
    %v7451 = vpack.c.b16 %v6965, %v6959
    %v7452 = vpack.c.b16 %v6966, %v6960
    %v7453 = vpack.c.b16 %v6967, %v6961
    %v7454 = vpack.c.b16 %v6968, %v6962
    %v7455 = vpack.c.b16 %v6969, %v6963
    %v7456 = vpack.c.b16 %v6970, %v6964
    %v7457 = vpack.c.b16 %v6977, %v6971
    %v7458 = vpack.c.b16 %v6978, %v6972
    %v7459 = vpack.c.b16 %v6979, %v6973
    %v7460 = vpack.c.b16 %v6980, %v6974
    %v7461 = vpack.c.b16 %v6981, %v6975
    %v7462 = vpack.c.b16 %v6982, %v6976
    %v7463 = vpack.c.b16 %v6989, %v6983
    %v7464 = vpack.c.b16 %v6990, %v6984
    %v7465 = vpack.c.b16 %v6991, %v6985
    %v7466 = vpack.c.b16 %v6992, %v6986
    %v7467 = vpack.c.b16 %v6993, %v6987
    %v7468 = vpack.c.b16 %v6994, %v6988
    %v7469 = vpack.c.b16 %v7001, %v6995
    %v7470 = vpack.c.b16 %v7002, %v6996
    %v7471 = vpack.c.b16 %v7003, %v6997
    %v7472 = vpack.c.b16 %v7004, %v6998
    %v7473 = vpack.c.b16 %v7005, %v6999
    %v7474 = vpack.c.b16 %v7006, %v7000
    %v7475 = vpack.c.b16 %v7013, %v7007
    %v7476 = vpack.c.b16 %v7014, %v7008
    %v7477 = vpack.c.b16 %v7015, %v7009
    %v7478 = vpack.c.b16 %v7016, %v7010
    %v7479 = vpack.c.b16 %v7017, %v7011
    %v7480 = vpack.c.b16 %v7018, %v7012
    %v7481 = vpack.c.b16 %v7025, %v7019
    %v7482 = vpack.c.b16 %v7026, %v7020
    %v7483 = vpack.c.b16 %v7027, %v7021
    %v7484 = vpack.c.b16 %v7028, %v7022
    %v7485 = vpack.c.b16 %v7029, %v7023
    %v7486 = vpack.c.b16 %v7030, %v7024
    %v7487 = vpack.c.b16 %v7037, %v7031
    %v7488 = vpack.c.b16 %v7038, %v7032
    %v7489 = vpack.c.b16 %v7039, %v7033
    %v7490 = vpack.c.b16 %v7040, %v7034
    %v7491 = vpack.c.b16 %v7041, %v7035
    %v7492 = vpack.c.b16 %v7042, %v7036
    %v7493 = vpack.c.b16 %v7049, %v7043
    %v7494 = vpack.c.b16 %v7050, %v7044
    %v7495 = vpack.c.b16 %v7051, %v7045
    %v7496 = vpack.c.b16 %v7052, %v7046
    %v7497 = vpack.c.b16 %v7053, %v7047
    %v7498 = vpack.c.b16 %v7054, %v7048
    %v7499 = vpack.c.b16 %v7061, %v7055
    %v7500 = vpack.c.b16 %v7062, %v7056
    %v7501 = vpack.c.b16 %v7063, %v7057
    %v7502 = vpack.c.b16 %v7064, %v7058
    %v7503 = vpack.c.b16 %v7065, %v7059
    %v7504 = vpack.c.b16 %v7066, %v7060
    %v7505 = vpack.c.b16 %v7073, %v7067
    %v7506 = vpack.c.b16 %v7074, %v7068
    %v7507 = vpack.c.b16 %v7075, %v7069
    %v7508 = vpack.c.b16 %v7076, %v7070
    %v7509 = vpack.c.b16 %v7077, %v7071
    %v7510 = vpack.c.b16 %v7078, %v7072
    %v7511 = vpack.c.b16 %v7085, %v7079
    %v7512 = vpack.c.b16 %v7086, %v7080
    %v7513 = vpack.c.b16 %v7087, %v7081
    %v7514 = vpack.c.b16 %v7088, %v7082
    %v7515 = vpack.c.b16 %v7089, %v7083
    %v7516 = vpack.c.b16 %v7090, %v7084
    %v7517 = vpack.c.b16 %v7097, %v7091
    %v7518 = vpack.c.b16 %v7098, %v7092
    %v7519 = vpack.c.b16 %v7099, %v7093
    %v7520 = vpack.c.b16 %v7100, %v7094
    %v7521 = vpack.c.b16 %v7101, %v7095
    %v7522 = vpack.c.b16 %v7102, %v7096
    %v7523 = vpack.c.b16 %v7109, %v7103
    %v7524 = vpack.c.b16 %v7110, %v7104
    %v7525 = vpack.c.b16 %v7111, %v7105
    %v7526 = vpack.c.b16 %v7112, %v7106
    %v7527 = vpack.c.b16 %v7113, %v7107
    %v7528 = vpack.c.b16 %v7114, %v7108
    %v7529 = vpack.c.b16 %v7121, %v7115
    %v7530 = vpack.c.b16 %v7122, %v7116
    %v7531 = vpack.c.b16 %v7123, %v7117
    %v7532 = vpack.c.b16 %v7124, %v7118
    %v7533 = vpack.c.b16 %v7125, %v7119
    %v7534 = vpack.c.b16 %v7126, %v7120
    %v7535 = vpack.c.b16 %v7133, %v7127
    %v7536 = vpack.c.b16 %v7134, %v7128
    %v7537 = vpack.c.b16 %v7135, %v7129
    %v7538 = vpack.c.b16 %v7136, %v7130
    %v7539 = vpack.c.b16 %v7137, %v7131
    %v7540 = vpack.c.b16 %v7138, %v7132
    %v7541 = vpack.c.b16 %v7145, %v7139
    %v7542 = vpack.c.b16 %v7146, %v7140
    %v7543 = vpack.c.b16 %v7147, %v7141
    %v7544 = vpack.c.b16 %v7148, %v7142
    %v7545 = vpack.c.b16 %v7149, %v7143
    %v7546 = vpack.c.b16 %v7150, %v7144
    %v7547 = vpack.c.b16 %v7157, %v7151
    %v7548 = vpack.c.b16 %v7158, %v7152
    %v7549 = vpack.c.b16 %v7159, %v7153
    %v7550 = vpack.c.b16 %v7160, %v7154
    %v7551 = vpack.c.b16 %v7161, %v7155
    %v7552 = vpack.c.b16 %v7162, %v7156
    %v7553 = vpack.c.b16 %v7169, %v7163
    %v7554 = vpack.c.b16 %v7170, %v7164
    %v7555 = vpack.c.b16 %v7171, %v7165
    %v7556 = vpack.c.b16 %v7172, %v7166
    %v7557 = vpack.c.b16 %v7173, %v7167
    %v7558 = vpack.c.b16 %v7174, %v7168
    %v7559 = vpack.c.b16 %v7181, %v7175
    %v7560 = vpack.c.b16 %v7182, %v7176
    %v7561 = vpack.c.b16 %v7183, %v7177
    %v7562 = vpack.c.b16 %v7184, %v7178
    %v7563 = vpack.c.b16 %v7185, %v7179
    %v7564 = vpack.c.b16 %v7186, %v7180
    %v7565 = vpack.c.b16 %v7193, %v7187
    %v7566 = vpack.c.b16 %v7194, %v7188
    %v7567 = vpack.c.b16 %v7195, %v7189
    %v7568 = vpack.c.b16 %v7196, %v7190
    %v7569 = vpack.c.b16 %v7197, %v7191
    %v7570 = vpack.c.b16 %v7198, %v7192
    %v7571 = vpack.c.b16 %v7205, %v7199
    %v7572 = vpack.c.b16 %v7206, %v7200
    %v7573 = vpack.c.b16 %v7207, %v7201
    %v7574 = vpack.c.b16 %v7208, %v7202
    %v7575 = vpack.c.b16 %v7209, %v7203
    %v7576 = vpack.c.b16 %v7210, %v7204
    %v7577 = vpack.c.b16 %v7217, %v7211
    %v7578 = vpack.c.b16 %v7218, %v7212
    %v7579 = vpack.c.b16 %v7219, %v7213
    %v7580 = vpack.c.b16 %v7220, %v7214
    %v7581 = vpack.c.b16 %v7221, %v7215
    %v7582 = vpack.c.b16 %v7222, %v7216
    %v7583 = vpack.c.b16 %v7229, %v7223
    %v7584 = vpack.c.b16 %v7230, %v7224
    %v7585 = vpack.c.b16 %v7231, %v7225
    %v7586 = vpack.c.b16 %v7232, %v7226
    %v7587 = vpack.c.b16 %v7233, %v7227
    %v7588 = vpack.c.b16 %v7234, %v7228
    %v7589 = vpack.c.b16 %v7241, %v7235
    %v7590 = vpack.c.b16 %v7242, %v7236
    %v7591 = vpack.c.b16 %v7243, %v7237
    %v7592 = vpack.c.b16 %v7244, %v7238
    %v7593 = vpack.c.b16 %v7245, %v7239
    %v7594 = vpack.c.b16 %v7246, %v7240
    %v7595 = vpack.c.b16 %v7253, %v7247
    %v7596 = vpack.c.b16 %v7254, %v7248
    %v7597 = vpack.c.b16 %v7255, %v7249
    %v7598 = vpack.c.b16 %v7256, %v7250
    %v7599 = vpack.c.b16 %v7257, %v7251
    %v7600 = vpack.c.b16 %v7258, %v7252
    %v7601 = vpack.c.b16 %v7265, %v7259
    %v7602 = vpack.c.b16 %v7266, %v7260
    %v7603 = vpack.c.b16 %v7267, %v7261
    %v7604 = vpack.c.b16 %v7268, %v7262
    %v7605 = vpack.c.b16 %v7269, %v7263
    %v7606 = vpack.c.b16 %v7270, %v7264
    %v7607 = vpack.c.b16 %v7277, %v7271
    %v7608 = vpack.c.b16 %v7278, %v7272
    %v7609 = vpack.c.b16 %v7279, %v7273
    %v7610 = vpack.c.b16 %v7280, %v7274
    %v7611 = vpack.c.b16 %v7281, %v7275
    %v7612 = vpack.c.b16 %v7282, %v7276
    %v7613 = vpack.c.b16 %v7289, %v7283
    %v7614 = vpack.c.b16 %v7290, %v7284
    %v7615 = vpack.c.b16 %v7291, %v7285
    %v7616 = vpack.c.b16 %v7292, %v7286
    %v7617 = vpack.c.b16 %v7293, %v7287
    %v7618 = vpack.c.b16 %v7294, %v7288
    %v7619 = vpack.c.b16 %v7301, %v7295
    %v7620 = vpack.c.b16 %v7302, %v7296
    %v7621 = vpack.c.b16 %v7303, %v7297
    %v7622 = vpack.c.b16 %v7304, %v7298
    %v7623 = vpack.c.b16 %v7305, %v7299
    %v7624 = vpack.c.b16 %v7306, %v7300
    %v7625 = vpack.c.b16 %v7313, %v7307
    %v7626 = vpack.c.b16 %v7314, %v7308
    %v7627 = vpack.c.b16 %v7315, %v7309
    %v7628 = vpack.c.b16 %v7316, %v7310
    %v7629 = vpack.c.b16 %v7317, %v7311
    %v7630 = vpack.c.b16 %v7318, %v7312
    %v7631 = vpack.c.b16 %v7325, %v7319
    %v7632 = vpack.c.b16 %v7326, %v7320
    %v7633 = vpack.c.b16 %v7327, %v7321
    %v7634 = vpack.c.b16 %v7328, %v7322
    %v7635 = vpack.c.b16 %v7329, %v7323
    %v7636 = vpack.c.b16 %v7330, %v7324
    %v7637 = vpack.c.b16 %v7337, %v7331
    %v7638 = vpack.c.b16 %v7338, %v7332
    %v7639 = vpack.c.b16 %v7339, %v7333
    %v7640 = vpack.c.b16 %v7340, %v7334
    %v7641 = vpack.c.b16 %v7341, %v7335
    %v7642 = vpack.c.b16 %v7342, %v7336
    %v7643 = vpack.c.b16 %v7349, %v7343
    %v7644 = vpack.c.b16 %v7350, %v7344
    %v7645 = vpack.c.b16 %v7351, %v7345
    %v7646 = vpack.c.b16 %v7352, %v7346
    %v7647 = vpack.c.b16 %v7353, %v7347
    %v7648 = vpack.c.b16 %v7354, %v7348
    %v7649 = vpack.c.b16 %v7361, %v7355
    %v7650 = vpack.c.b16 %v7362, %v7356
    %v7651 = vpack.c.b16 %v7363, %v7357
    %v7652 = vpack.c.b16 %v7364, %v7358
    %v7653 = vpack.c.b16 %v7365, %v7359
    %v7654 = vpack.c.b16 %v7366, %v7360
    %7943 = vmatpush.bf16.msra.mxu0 %v7409
    %7944 = vmatpush.bf16.msra.mxu0 %v7403
    %7945 = vmatpush.bf16.msra.mxu0 %v7397
    %7946 = vmatpush.bf16.msra.mxu0 %v7391
    %7947 = vmatpush.bf16.msra.mxu0 %v7385
    %7948 = vmatpush.bf16.msra.mxu0 %v7379
    %7949 = vmatpush.bf16.msra.mxu0 %v7373
    %7950 = vmatpush.bf16.msra.mxu0 %v7367
    %7951 = vmatmul.bf16.gmra.mxu0 %v6491
    %v7952 = vpop.f32.mrf.mxu0
    %v7953 = vadd.f32 %v6461, %v7952
    %v7954 = vpop.f32.mrf.mxu0
    %v7955 = vadd.f32 %v6461, %v7954
    %7956 = vdwg.mxu0
    %7957 = vmatpush.bf16.msra.mxu0 %v7457
    %7958 = vmatpush.bf16.msra.mxu0 %v7451
    %7959 = vmatpush.bf16.msra.mxu0 %v7445
    %7960 = vmatpush.bf16.msra.mxu0 %v7439
    %7961 = vmatpush.bf16.msra.mxu0 %v7433
    %7962 = vmatpush.bf16.msra.mxu0 %v7427
    %7963 = vmatpush.bf16.msra.mxu0 %v7421
    %7964 = vmatpush.bf16.msra.mxu0 %v7415
    %7965 = vmatmul.bf16.gmra.mxu0 %v6492
    %v7966 = vpop.f32.mrf.mxu0
    %v7967 = vadd.f32 %v7953, %v7966
    %v7968 = vpop.f32.mrf.mxu0
    %v7969 = vadd.f32 %v7955, %v7968
    %7970 = vdwg.mxu0
    %7971 = vmatpush.bf16.msra.mxu0 %v7505
    %7972 = vmatpush.bf16.msra.mxu0 %v7499
    %7973 = vmatpush.bf16.msra.mxu0 %v7493
    %7974 = vmatpush.bf16.msra.mxu0 %v7487
    %7975 = vmatpush.bf16.msra.mxu0 %v7481
    %7976 = vmatpush.bf16.msra.mxu0 %v7475
    %7977 = vmatpush.bf16.msra.mxu0 %v7469
    %7978 = vmatpush.bf16.msra.mxu0 %v7463
    %7979 = vmatmul.bf16.gmra.mxu0 %v6493
    %v7980 = vpop.f32.mrf.mxu0
    %v7981 = vadd.f32 %v7967, %v7980
    %v7982 = vpop.f32.mrf.mxu0
    %v7983 = vadd.f32 %v7969, %v7982
    %7984 = vdwg.mxu0
    %7985 = vmatpush.bf16.msra.mxu0 %v7553
    %7986 = vmatpush.bf16.msra.mxu0 %v7547
    %7987 = vmatpush.bf16.msra.mxu0 %v7541
    %7988 = vmatpush.bf16.msra.mxu0 %v7535
    %7989 = vmatpush.bf16.msra.mxu0 %v7529
    %7990 = vmatpush.bf16.msra.mxu0 %v7523
    %7991 = vmatpush.bf16.msra.mxu0 %v7517
    %7992 = vmatpush.bf16.msra.mxu0 %v7511
    %7993 = vmatmul.bf16.gmra.mxu0 %v6494
    %v7994 = vpop.f32.mrf.mxu0
    %v7995 = vadd.f32 %v7981, %v7994
    %v7996 = vpop.f32.mrf.mxu0
    %v7997 = vadd.f32 %v7983, %v7996
    %7998 = vdwg.mxu0
    %7999 = vmatpush.bf16.msra.mxu0 %v7601
    %8000 = vmatpush.bf16.msra.mxu0 %v7595
    %8001 = vmatpush.bf16.msra.mxu0 %v7589
    %8002 = vmatpush.bf16.msra.mxu0 %v7583
    %8003 = vmatpush.bf16.msra.mxu0 %v7577
    %8004 = vmatpush.bf16.msra.mxu0 %v7571
    %8005 = vmatpush.bf16.msra.mxu0 %v7565
    %8006 = vmatpush.bf16.msra.mxu0 %v7559
    %8007 = vmatmul.bf16.gmra.mxu0 %v6495
    %v8008 = vpop.f32.mrf.mxu0
    %v8009 = vadd.f32 %v7995, %v8008
    %v8010 = vpop.f32.mrf.mxu0
    %v8011 = vadd.f32 %v7997, %v8010
    %8012 = vdwg.mxu0
    %8013 = vmatpush.bf16.msra.mxu0 %v7649
    %8014 = vmatpush.bf16.msra.mxu0 %v7643
    %8015 = vmatpush.bf16.msra.mxu0 %v7637
    %8016 = vmatpush.bf16.msra.mxu0 %v7631
    %8017 = vmatpush.bf16.msra.mxu0 %v7625
    %8018 = vmatpush.bf16.msra.mxu0 %v7619
    %8019 = vmatpush.bf16.msra.mxu0 %v7613
    %8020 = vmatpush.bf16.msra.mxu0 %v7607
    %8021 = vmatmul.bf16.gmra.mxu0 %v6496
    %v8022 = vpop.f32.mrf.mxu0
    %v8023 = vadd.f32 %v8009, %v8022
    %v8024 = vpop.f32.mrf.mxu0
    %v8025 = vadd.f32 %v8011, %v8024
    %8026 = vdwg.mxu0
    %8027 = vmatpush.bf16.msra.mxu0 %v7410
    %8028 = vmatpush.bf16.msra.mxu0 %v7404
    %8029 = vmatpush.bf16.msra.mxu0 %v7398
    %8030 = vmatpush.bf16.msra.mxu0 %v7392
    %8031 = vmatpush.bf16.msra.mxu0 %v7386
    %8032 = vmatpush.bf16.msra.mxu0 %v7380
    %8033 = vmatpush.bf16.msra.mxu0 %v7374
    %8034 = vmatpush.bf16.msra.mxu0 %v7368
    %8035 = vmatmul.bf16.gmra.mxu0 %v6491
    %v8036 = vpop.f32.mrf.mxu0
    %v8037 = vadd.f32 %v6462, %v8036
    %v8038 = vpop.f32.mrf.mxu0
    %v8039 = vadd.f32 %v6462, %v8038
    %8040 = vdwg.mxu0
    %8041 = vmatpush.bf16.msra.mxu0 %v7458
    %8042 = vmatpush.bf16.msra.mxu0 %v7452
    %8043 = vmatpush.bf16.msra.mxu0 %v7446
    %8044 = vmatpush.bf16.msra.mxu0 %v7440
    %8045 = vmatpush.bf16.msra.mxu0 %v7434
    %8046 = vmatpush.bf16.msra.mxu0 %v7428
    %8047 = vmatpush.bf16.msra.mxu0 %v7422
    %8048 = vmatpush.bf16.msra.mxu0 %v7416
    %8049 = vmatmul.bf16.gmra.mxu0 %v6492
    %v8050 = vpop.f32.mrf.mxu0
    %v8051 = vadd.f32 %v8037, %v8050
    %v8052 = vpop.f32.mrf.mxu0
    %v8053 = vadd.f32 %v8039, %v8052
    %8054 = vdwg.mxu0
    %8055 = vmatpush.bf16.msra.mxu0 %v7506
    %8056 = vmatpush.bf16.msra.mxu0 %v7500
    %8057 = vmatpush.bf16.msra.mxu0 %v7494
    %8058 = vmatpush.bf16.msra.mxu0 %v7488
    %8059 = vmatpush.bf16.msra.mxu0 %v7482
    %8060 = vmatpush.bf16.msra.mxu0 %v7476
    %8061 = vmatpush.bf16.msra.mxu0 %v7470
    %8062 = vmatpush.bf16.msra.mxu0 %v7464
    %8063 = vmatmul.bf16.gmra.mxu0 %v6493
    %v8064 = vpop.f32.mrf.mxu0
    %v8065 = vadd.f32 %v8051, %v8064
    %v8066 = vpop.f32.mrf.mxu0
    %v8067 = vadd.f32 %v8053, %v8066
    %8068 = vdwg.mxu0
    %8069 = vmatpush.bf16.msra.mxu0 %v7554
    %8070 = vmatpush.bf16.msra.mxu0 %v7548
    %8071 = vmatpush.bf16.msra.mxu0 %v7542
    %8072 = vmatpush.bf16.msra.mxu0 %v7536
    %8073 = vmatpush.bf16.msra.mxu0 %v7530
    %8074 = vmatpush.bf16.msra.mxu0 %v7524
    %8075 = vmatpush.bf16.msra.mxu0 %v7518
    %8076 = vmatpush.bf16.msra.mxu0 %v7512
    %8077 = vmatmul.bf16.gmra.mxu0 %v6494
    %v8078 = vpop.f32.mrf.mxu0
    %v8079 = vadd.f32 %v8065, %v8078
    %v8080 = vpop.f32.mrf.mxu0
    %v8081 = vadd.f32 %v8067, %v8080
    %8082 = vdwg.mxu0
    %8083 = vmatpush.bf16.msra.mxu0 %v7602
    %8084 = vmatpush.bf16.msra.mxu0 %v7596
    %8085 = vmatpush.bf16.msra.mxu0 %v7590
    %8086 = vmatpush.bf16.msra.mxu0 %v7584
    %8087 = vmatpush.bf16.msra.mxu0 %v7578
    %8088 = vmatpush.bf16.msra.mxu0 %v7572
    %8089 = vmatpush.bf16.msra.mxu0 %v7566
    %8090 = vmatpush.bf16.msra.mxu0 %v7560
    %8091 = vmatmul.bf16.gmra.mxu0 %v6495
    %v8092 = vpop.f32.mrf.mxu0
    %v8093 = vadd.f32 %v8079, %v8092
    %v8094 = vpop.f32.mrf.mxu0
    %v8095 = vadd.f32 %v8081, %v8094
    %8096 = vdwg.mxu0
    %8097 = vmatpush.bf16.msra.mxu0 %v7650
    %8098 = vmatpush.bf16.msra.mxu0 %v7644
    %8099 = vmatpush.bf16.msra.mxu0 %v7638
    %8100 = vmatpush.bf16.msra.mxu0 %v7632
    %8101 = vmatpush.bf16.msra.mxu0 %v7626
    %8102 = vmatpush.bf16.msra.mxu0 %v7620
    %8103 = vmatpush.bf16.msra.mxu0 %v7614
    %8104 = vmatpush.bf16.msra.mxu0 %v7608
    %8105 = vmatmul.bf16.gmra.mxu0 %v6496
    %v8106 = vpop.f32.mrf.mxu0
    %v8107 = vadd.f32 %v8093, %v8106
    %v8108 = vpop.f32.mrf.mxu0
    %v8109 = vadd.f32 %v8095, %v8108
    %8110 = vdwg.mxu0
    %8111 = vmatpush.bf16.msra.mxu0 %v7411
    %8112 = vmatpush.bf16.msra.mxu0 %v7405
    %8113 = vmatpush.bf16.msra.mxu0 %v7399
    %8114 = vmatpush.bf16.msra.mxu0 %v7393
    %8115 = vmatpush.bf16.msra.mxu0 %v7387
    %8116 = vmatpush.bf16.msra.mxu0 %v7381
    %8117 = vmatpush.bf16.msra.mxu0 %v7375
    %8118 = vmatpush.bf16.msra.mxu0 %v7369
    %8119 = vmatmul.bf16.gmra.mxu0 %v6491
    %v8120 = vpop.f32.mrf.mxu0
    %v8121 = vadd.f32 %v6463, %v8120
    %v8122 = vpop.f32.mrf.mxu0
    %v8123 = vadd.f32 %v6463, %v8122
    %8124 = vdwg.mxu0
    %8125 = vmatpush.bf16.msra.mxu0 %v7459
    %8126 = vmatpush.bf16.msra.mxu0 %v7453
    %8127 = vmatpush.bf16.msra.mxu0 %v7447
    %8128 = vmatpush.bf16.msra.mxu0 %v7441
    %8129 = vmatpush.bf16.msra.mxu0 %v7435
    %8130 = vmatpush.bf16.msra.mxu0 %v7429
    %8131 = vmatpush.bf16.msra.mxu0 %v7423
    %8132 = vmatpush.bf16.msra.mxu0 %v7417
    %8133 = vmatmul.bf16.gmra.mxu0 %v6492
    %v8134 = vpop.f32.mrf.mxu0
    %v8135 = vadd.f32 %v8121, %v8134
    %v8136 = vpop.f32.mrf.mxu0
    %v8137 = vadd.f32 %v8123, %v8136
    %8138 = vdwg.mxu0
    %8139 = vmatpush.bf16.msra.mxu0 %v7507
    %8140 = vmatpush.bf16.msra.mxu0 %v7501
    %8141 = vmatpush.bf16.msra.mxu0 %v7495
    %8142 = vmatpush.bf16.msra.mxu0 %v7489
    %8143 = vmatpush.bf16.msra.mxu0 %v7483
    %8144 = vmatpush.bf16.msra.mxu0 %v7477
    %8145 = vmatpush.bf16.msra.mxu0 %v7471
    %8146 = vmatpush.bf16.msra.mxu0 %v7465
    %8147 = vmatmul.bf16.gmra.mxu0 %v6493
    %v8148 = vpop.f32.mrf.mxu0
    %v8149 = vadd.f32 %v8135, %v8148
    %v8150 = vpop.f32.mrf.mxu0
    %v8151 = vadd.f32 %v8137, %v8150
    %8152 = vdwg.mxu0
    %8153 = vmatpush.bf16.msra.mxu0 %v7555
    %8154 = vmatpush.bf16.msra.mxu0 %v7549
    %8155 = vmatpush.bf16.msra.mxu0 %v7543
    %8156 = vmatpush.bf16.msra.mxu0 %v7537
    %8157 = vmatpush.bf16.msra.mxu0 %v7531
    %8158 = vmatpush.bf16.msra.mxu0 %v7525
    %8159 = vmatpush.bf16.msra.mxu0 %v7519
    %8160 = vmatpush.bf16.msra.mxu0 %v7513
    %8161 = vmatmul.bf16.gmra.mxu0 %v6494
    %v8162 = vpop.f32.mrf.mxu0
    %v8163 = vadd.f32 %v8149, %v8162
    %v8164 = vpop.f32.mrf.mxu0
    %v8165 = vadd.f32 %v8151, %v8164
    %8166 = vdwg.mxu0
    %8167 = vmatpush.bf16.msra.mxu0 %v7603
    %8168 = vmatpush.bf16.msra.mxu0 %v7597
    %8169 = vmatpush.bf16.msra.mxu0 %v7591
    %8170 = vmatpush.bf16.msra.mxu0 %v7585
    %8171 = vmatpush.bf16.msra.mxu0 %v7579
    %8172 = vmatpush.bf16.msra.mxu0 %v7573
    %8173 = vmatpush.bf16.msra.mxu0 %v7567
    %8174 = vmatpush.bf16.msra.mxu0 %v7561
    %8175 = vmatmul.bf16.gmra.mxu0 %v6495
    %v8176 = vpop.f32.mrf.mxu0
    %v8177 = vadd.f32 %v8163, %v8176
    %v8178 = vpop.f32.mrf.mxu0
    %v8179 = vadd.f32 %v8165, %v8178
    %8180 = vdwg.mxu0
    %8181 = vmatpush.bf16.msra.mxu0 %v7651
    %8182 = vmatpush.bf16.msra.mxu0 %v7645
    %8183 = vmatpush.bf16.msra.mxu0 %v7639
    %8184 = vmatpush.bf16.msra.mxu0 %v7633
    %8185 = vmatpush.bf16.msra.mxu0 %v7627
    %8186 = vmatpush.bf16.msra.mxu0 %v7621
    %8187 = vmatpush.bf16.msra.mxu0 %v7615
    %8188 = vmatpush.bf16.msra.mxu0 %v7609
    %8189 = vmatmul.bf16.gmra.mxu0 %v6496
    %v8190 = vpop.f32.mrf.mxu0
    %v8191 = vadd.f32 %v8177, %v8190
    %v8192 = vpop.f32.mrf.mxu0
    %v8193 = vadd.f32 %v8179, %v8192
    %8194 = vdwg.mxu0
    %8195 = vmatpush.bf16.msra.mxu0 %v7412
    %8196 = vmatpush.bf16.msra.mxu0 %v7406
    %8197 = vmatpush.bf16.msra.mxu0 %v7400
    %8198 = vmatpush.bf16.msra.mxu0 %v7394
    %8199 = vmatpush.bf16.msra.mxu0 %v7388
    %8200 = vmatpush.bf16.msra.mxu0 %v7382
    %8201 = vmatpush.bf16.msra.mxu0 %v7376
    %8202 = vmatpush.bf16.msra.mxu0 %v7370
    %8203 = vmatmul.bf16.gmra.mxu0 %v6491
    %v8204 = vpop.f32.mrf.mxu0
    %v8205 = vadd.f32 %v6464, %v8204
    %v8206 = vpop.f32.mrf.mxu0
    %v8207 = vadd.f32 %v6464, %v8206
    %8208 = vdwg.mxu0
    %8209 = vmatpush.bf16.msra.mxu0 %v7460
    %8210 = vmatpush.bf16.msra.mxu0 %v7454
    %8211 = vmatpush.bf16.msra.mxu0 %v7448
    %8212 = vmatpush.bf16.msra.mxu0 %v7442
    %8213 = vmatpush.bf16.msra.mxu0 %v7436
    %8214 = vmatpush.bf16.msra.mxu0 %v7430
    %8215 = vmatpush.bf16.msra.mxu0 %v7424
    %8216 = vmatpush.bf16.msra.mxu0 %v7418
    %8217 = vmatmul.bf16.gmra.mxu0 %v6492
    %v8218 = vpop.f32.mrf.mxu0
    %v8219 = vadd.f32 %v8205, %v8218
    %v8220 = vpop.f32.mrf.mxu0
    %v8221 = vadd.f32 %v8207, %v8220
    %8222 = vdwg.mxu0
    %8223 = vmatpush.bf16.msra.mxu0 %v7508
    %8224 = vmatpush.bf16.msra.mxu0 %v7502
    %8225 = vmatpush.bf16.msra.mxu0 %v7496
    %8226 = vmatpush.bf16.msra.mxu0 %v7490
    %8227 = vmatpush.bf16.msra.mxu0 %v7484
    %8228 = vmatpush.bf16.msra.mxu0 %v7478
    %8229 = vmatpush.bf16.msra.mxu0 %v7472
    %8230 = vmatpush.bf16.msra.mxu0 %v7466
    %8231 = vmatmul.bf16.gmra.mxu0 %v6493
    %v8232 = vpop.f32.mrf.mxu0
    %v8233 = vadd.f32 %v8219, %v8232
    %v8234 = vpop.f32.mrf.mxu0
    %v8235 = vadd.f32 %v8221, %v8234
    %8236 = vdwg.mxu0
    %8237 = vmatpush.bf16.msra.mxu0 %v7556
    %8238 = vmatpush.bf16.msra.mxu0 %v7550
    %8239 = vmatpush.bf16.msra.mxu0 %v7544
    %8240 = vmatpush.bf16.msra.mxu0 %v7538
    %8241 = vmatpush.bf16.msra.mxu0 %v7532
    %8242 = vmatpush.bf16.msra.mxu0 %v7526
    %8243 = vmatpush.bf16.msra.mxu0 %v7520
    %8244 = vmatpush.bf16.msra.mxu0 %v7514
    %8245 = vmatmul.bf16.gmra.mxu0 %v6494
    %v8246 = vpop.f32.mrf.mxu0
    %v8247 = vadd.f32 %v8233, %v8246
    %v8248 = vpop.f32.mrf.mxu0
    %v8249 = vadd.f32 %v8235, %v8248
    %8250 = vdwg.mxu0
    %8251 = vmatpush.bf16.msra.mxu0 %v7604
    %8252 = vmatpush.bf16.msra.mxu0 %v7598
    %8253 = vmatpush.bf16.msra.mxu0 %v7592
    %8254 = vmatpush.bf16.msra.mxu0 %v7586
    %8255 = vmatpush.bf16.msra.mxu0 %v7580
    %8256 = vmatpush.bf16.msra.mxu0 %v7574
    %8257 = vmatpush.bf16.msra.mxu0 %v7568
    %8258 = vmatpush.bf16.msra.mxu0 %v7562
    %8259 = vmatmul.bf16.gmra.mxu0 %v6495
    %v8260 = vpop.f32.mrf.mxu0
    %v8261 = vadd.f32 %v8247, %v8260
    %v8262 = vpop.f32.mrf.mxu0
    %v8263 = vadd.f32 %v8249, %v8262
    %8264 = vdwg.mxu0
    %8265 = vmatpush.bf16.msra.mxu0 %v7652
    %8266 = vmatpush.bf16.msra.mxu0 %v7646
    %8267 = vmatpush.bf16.msra.mxu0 %v7640
    %8268 = vmatpush.bf16.msra.mxu0 %v7634
    %8269 = vmatpush.bf16.msra.mxu0 %v7628
    %8270 = vmatpush.bf16.msra.mxu0 %v7622
    %8271 = vmatpush.bf16.msra.mxu0 %v7616
    %8272 = vmatpush.bf16.msra.mxu0 %v7610
    %8273 = vmatmul.bf16.gmra.mxu0 %v6496
    %v8274 = vpop.f32.mrf.mxu0
    %v8275 = vadd.f32 %v8261, %v8274
    %v8276 = vpop.f32.mrf.mxu0
    %v8277 = vadd.f32 %v8263, %v8276
    %8278 = vdwg.mxu0
    %8279 = vmatpush.bf16.msra.mxu0 %v7413
    %8280 = vmatpush.bf16.msra.mxu0 %v7407
    %8281 = vmatpush.bf16.msra.mxu0 %v7401
    %8282 = vmatpush.bf16.msra.mxu0 %v7395
    %8283 = vmatpush.bf16.msra.mxu0 %v7389
    %8284 = vmatpush.bf16.msra.mxu0 %v7383
    %8285 = vmatpush.bf16.msra.mxu0 %v7377
    %8286 = vmatpush.bf16.msra.mxu0 %v7371
    %8287 = vmatmul.bf16.gmra.mxu0 %v6491
    %v8288 = vpop.f32.mrf.mxu0
    %v8289 = vadd.f32 %v6465, %v8288
    %v8290 = vpop.f32.mrf.mxu0
    %v8291 = vadd.f32 %v6465, %v8290
    %8292 = vdwg.mxu0
    %8293 = vmatpush.bf16.msra.mxu0 %v7461
    %8294 = vmatpush.bf16.msra.mxu0 %v7455
    %8295 = vmatpush.bf16.msra.mxu0 %v7449
    %8296 = vmatpush.bf16.msra.mxu0 %v7443
    %8297 = vmatpush.bf16.msra.mxu0 %v7437
    %8298 = vmatpush.bf16.msra.mxu0 %v7431
    %8299 = vmatpush.bf16.msra.mxu0 %v7425
    %8300 = vmatpush.bf16.msra.mxu0 %v7419
    %8301 = vmatmul.bf16.gmra.mxu0 %v6492
    %v8302 = vpop.f32.mrf.mxu0
    %v8303 = vadd.f32 %v8289, %v8302
    %v8304 = vpop.f32.mrf.mxu0
    %v8305 = vadd.f32 %v8291, %v8304
    %8306 = vdwg.mxu0
    %8307 = vmatpush.bf16.msra.mxu0 %v7509
    %8308 = vmatpush.bf16.msra.mxu0 %v7503
    %8309 = vmatpush.bf16.msra.mxu0 %v7497
    %8310 = vmatpush.bf16.msra.mxu0 %v7491
    %8311 = vmatpush.bf16.msra.mxu0 %v7485
    %8312 = vmatpush.bf16.msra.mxu0 %v7479
    %8313 = vmatpush.bf16.msra.mxu0 %v7473
    %8314 = vmatpush.bf16.msra.mxu0 %v7467
    %8315 = vmatmul.bf16.gmra.mxu0 %v6493
    %v8316 = vpop.f32.mrf.mxu0
    %v8317 = vadd.f32 %v8303, %v8316
    %v8318 = vpop.f32.mrf.mxu0
    %v8319 = vadd.f32 %v8305, %v8318
    %8320 = vdwg.mxu0
    %8321 = vmatpush.bf16.msra.mxu0 %v7557
    %8322 = vmatpush.bf16.msra.mxu0 %v7551
    %8323 = vmatpush.bf16.msra.mxu0 %v7545
    %8324 = vmatpush.bf16.msra.mxu0 %v7539
    %8325 = vmatpush.bf16.msra.mxu0 %v7533
    %8326 = vmatpush.bf16.msra.mxu0 %v7527
    %8327 = vmatpush.bf16.msra.mxu0 %v7521
    %8328 = vmatpush.bf16.msra.mxu0 %v7515
    %8329 = vmatmul.bf16.gmra.mxu0 %v6494
    %v8330 = vpop.f32.mrf.mxu0
    %v8331 = vadd.f32 %v8317, %v8330
    %v8332 = vpop.f32.mrf.mxu0
    %v8333 = vadd.f32 %v8319, %v8332
    %8334 = vdwg.mxu0
    %8335 = vmatpush.bf16.msra.mxu0 %v7605
    %8336 = vmatpush.bf16.msra.mxu0 %v7599
    %8337 = vmatpush.bf16.msra.mxu0 %v7593
    %8338 = vmatpush.bf16.msra.mxu0 %v7587
    %8339 = vmatpush.bf16.msra.mxu0 %v7581
    %8340 = vmatpush.bf16.msra.mxu0 %v7575
    %8341 = vmatpush.bf16.msra.mxu0 %v7569
    %8342 = vmatpush.bf16.msra.mxu0 %v7563
    %8343 = vmatmul.bf16.gmra.mxu0 %v6495
    %v8344 = vpop.f32.mrf.mxu0
    %v8345 = vadd.f32 %v8331, %v8344
    %v8346 = vpop.f32.mrf.mxu0
    %v8347 = vadd.f32 %v8333, %v8346
    %8348 = vdwg.mxu0
    %8349 = vmatpush.bf16.msra.mxu0 %v7653
    %8350 = vmatpush.bf16.msra.mxu0 %v7647
    %8351 = vmatpush.bf16.msra.mxu0 %v7641
    %8352 = vmatpush.bf16.msra.mxu0 %v7635
    %8353 = vmatpush.bf16.msra.mxu0 %v7629
    %8354 = vmatpush.bf16.msra.mxu0 %v7623
    %8355 = vmatpush.bf16.msra.mxu0 %v7617
    %8356 = vmatpush.bf16.msra.mxu0 %v7611
    %8357 = vmatmul.bf16.gmra.mxu0 %v6496
    %v8358 = vpop.f32.mrf.mxu0
    %v8359 = vadd.f32 %v8345, %v8358
    %v8360 = vpop.f32.mrf.mxu0
    %v8361 = vadd.f32 %v8347, %v8360
    %8362 = vdwg.mxu0
    %8363 = vmatpush.bf16.msra.mxu0 %v7414
    %8364 = vmatpush.bf16.msra.mxu0 %v7408
    %8365 = vmatpush.bf16.msra.mxu0 %v7402
    %8366 = vmatpush.bf16.msra.mxu0 %v7396
    %8367 = vmatpush.bf16.msra.mxu0 %v7390
    %8368 = vmatpush.bf16.msra.mxu0 %v7384
    %8369 = vmatpush.bf16.msra.mxu0 %v7378
    %8370 = vmatpush.bf16.msra.mxu0 %v7372
    %8371 = vmatmul.bf16.gmra.mxu0 %v6491
    %v8372 = vpop.f32.mrf.mxu0
    %v8373 = vadd.f32 %v6466, %v8372
    %v8374 = vpop.f32.mrf.mxu0
    %v8375 = vadd.f32 %v6466, %v8374
    %8376 = vdwg.mxu0
    %8377 = vmatpush.bf16.msra.mxu0 %v7462
    %8378 = vmatpush.bf16.msra.mxu0 %v7456
    %8379 = vmatpush.bf16.msra.mxu0 %v7450
    %8380 = vmatpush.bf16.msra.mxu0 %v7444
    %8381 = vmatpush.bf16.msra.mxu0 %v7438
    %8382 = vmatpush.bf16.msra.mxu0 %v7432
    %8383 = vmatpush.bf16.msra.mxu0 %v7426
    %8384 = vmatpush.bf16.msra.mxu0 %v7420
    %8385 = vmatmul.bf16.gmra.mxu0 %v6492
    %v8386 = vpop.f32.mrf.mxu0
    %v8387 = vadd.f32 %v8373, %v8386
    %v8388 = vpop.f32.mrf.mxu0
    %v8389 = vadd.f32 %v8375, %v8388
    %8390 = vdwg.mxu0
    %8391 = vmatpush.bf16.msra.mxu0 %v7510
    %8392 = vmatpush.bf16.msra.mxu0 %v7504
    %8393 = vmatpush.bf16.msra.mxu0 %v7498
    %8394 = vmatpush.bf16.msra.mxu0 %v7492
    %8395 = vmatpush.bf16.msra.mxu0 %v7486
    %8396 = vmatpush.bf16.msra.mxu0 %v7480
    %8397 = vmatpush.bf16.msra.mxu0 %v7474
    %8398 = vmatpush.bf16.msra.mxu0 %v7468
    %8399 = vmatmul.bf16.gmra.mxu0 %v6493
    %v8400 = vpop.f32.mrf.mxu0
    %v8401 = vadd.f32 %v8387, %v8400
    %v8402 = vpop.f32.mrf.mxu0
    %v8403 = vadd.f32 %v8389, %v8402
    %8404 = vdwg.mxu0
    %8405 = vmatpush.bf16.msra.mxu0 %v7558
    %8406 = vmatpush.bf16.msra.mxu0 %v7552
    %8407 = vmatpush.bf16.msra.mxu0 %v7546
    %8408 = vmatpush.bf16.msra.mxu0 %v7540
    %8409 = vmatpush.bf16.msra.mxu0 %v7534
    %8410 = vmatpush.bf16.msra.mxu0 %v7528
    %8411 = vmatpush.bf16.msra.mxu0 %v7522
    %8412 = vmatpush.bf16.msra.mxu0 %v7516
    %8413 = vmatmul.bf16.gmra.mxu0 %v6494
    %v8414 = vpop.f32.mrf.mxu0
    %v8415 = vadd.f32 %v8401, %v8414
    %v8416 = vpop.f32.mrf.mxu0
    %v8417 = vadd.f32 %v8403, %v8416
    %8418 = vdwg.mxu0
    %8419 = vmatpush.bf16.msra.mxu0 %v7606
    %8420 = vmatpush.bf16.msra.mxu0 %v7600
    %8421 = vmatpush.bf16.msra.mxu0 %v7594
    %8422 = vmatpush.bf16.msra.mxu0 %v7588
    %8423 = vmatpush.bf16.msra.mxu0 %v7582
    %8424 = vmatpush.bf16.msra.mxu0 %v7576
    %8425 = vmatpush.bf16.msra.mxu0 %v7570
    %8426 = vmatpush.bf16.msra.mxu0 %v7564
    %8427 = vmatmul.bf16.gmra.mxu0 %v6495
    %v8428 = vpop.f32.mrf.mxu0
    %v8429 = vadd.f32 %v8415, %v8428
    %v8430 = vpop.f32.mrf.mxu0
    %v8431 = vadd.f32 %v8417, %v8430
    %8432 = vdwg.mxu0
    %8433 = vmatpush.bf16.msra.mxu0 %v7654
    %8434 = vmatpush.bf16.msra.mxu0 %v7648
    %8435 = vmatpush.bf16.msra.mxu0 %v7642
    %8436 = vmatpush.bf16.msra.mxu0 %v7636
    %8437 = vmatpush.bf16.msra.mxu0 %v7630
    %8438 = vmatpush.bf16.msra.mxu0 %v7624
    %8439 = vmatpush.bf16.msra.mxu0 %v7618
    %8440 = vmatpush.bf16.msra.mxu0 %v7612
    %8441 = vmatmul.bf16.gmra.mxu0 %v6496
    %v8442 = vpop.f32.mrf.mxu0
    %v8443 = vadd.f32 %v8429, %v8442
    %v8444 = vpop.f32.mrf.mxu0
    %v8445 = vadd.f32 %v8431, %v8444
    %8446 = vdwg.mxu0
    %v8447 = vpack.c.bf16 %v5271, %v5047
    %v8448 = vpack.c.bf16 %v5273, %v5049
    %v8449 = vpack.c.bf16 %v8275, %v8191
    %v8450 = vpack.c.bf16 %v8277, %v8193
    %v8452 = vunpack.c.l.b16 %v8447
    %v8453 = vunpack.c.h.b16 %v8447
    %v8454 = vpack.c.b16 %v8452, %v8452
    %v8455 = vpack.c.b16 %v8453, %v8453
    %v8459 = vunpack.c.l.b16 %v8449
    %v8460 = vunpack.c.h.b16 %v8449
    %v8461 = vpack.c.b16 %v8459, %v8459
    %v8462 = vpack.c.b16 %v8460, %v8460
    %8465 = vmatpush.bf16.xpose.msra.mxu0 0
    %8466 = vmatpush.bf16.xpose.msra.mxu0 0
    %8467 = vmatpush.bf16.xpose.msra.mxu0 0
    %8468 = vmatpush.bf16.xpose.msra.mxu0 0
    %8469 = vmatpush.bf16.xpose.msra.mxu0 0
    %8470 = vmatpush.bf16.xpose.msra.mxu0 0
    %8471 = vmatpush.bf16.xpose.msra.mxu0 0
    %8472 = vmatpush.bf16.xpose.msra.mxu0 %v8461
    %8473 = vmatmul.bf16.gmra.mxu0 %v8454
    %v8474 = vpop.f32.mrf.mxu0
    %v8475 = vadd.f32 0.0, %v8474
    %v8476 = vpop.f32.mrf.mxu0
    %8477 = vdwg.mxu0
    %8478 = vmatpush.bf16.xpose.msra.mxu0 0
    %8479 = vmatpush.bf16.xpose.msra.mxu0 0
    %8480 = vmatpush.bf16.xpose.msra.mxu0 0
    %8481 = vmatpush.bf16.xpose.msra.mxu0 0
    %8482 = vmatpush.bf16.xpose.msra.mxu0 0
    %8483 = vmatpush.bf16.xpose.msra.mxu0 0
    %8484 = vmatpush.bf16.xpose.msra.mxu0 0
    %8485 = vmatpush.bf16.xpose.msra.mxu0 %v8462
    %8486 = vmatmul.bf16.gmra.mxu0 %v8455
    %v8487 = vpop.f32.mrf.mxu0
    %v8488 = vadd.f32 %v8475, %v8487
    %v8489 = vpop.f32.mrf.mxu0
    %8490 = vdwg.mxu0
    %v8492 = vunpack.c.l.b16 %v8448
    %v8493 = vunpack.c.h.b16 %v8448
    %v8494 = vpack.c.b16 %v8492, %v8492
    %v8495 = vpack.c.b16 %v8493, %v8493
    %v8499 = vunpack.c.l.b16 %v8450
    %v8500 = vunpack.c.h.b16 %v8450
    %v8501 = vpack.c.b16 %v8499, %v8499
    %v8502 = vpack.c.b16 %v8500, %v8500
    %8505 = vmatpush.bf16.xpose.msra.mxu0 0
    %8506 = vmatpush.bf16.xpose.msra.mxu0 0
    %8507 = vmatpush.bf16.xpose.msra.mxu0 0
    %8508 = vmatpush.bf16.xpose.msra.mxu0 0
    %8509 = vmatpush.bf16.xpose.msra.mxu0 0
    %8510 = vmatpush.bf16.xpose.msra.mxu0 0
    %8511 = vmatpush.bf16.xpose.msra.mxu0 0
    %8512 = vmatpush.bf16.xpose.msra.mxu0 %v8501
    %8513 = vmatmul.bf16.gmra.mxu0 %v8494
    %v8514 = vpop.f32.mrf.mxu0
    %v8515 = vadd.f32 0.0, %v8514
    %v8516 = vpop.f32.mrf.mxu0
    %8517 = vdwg.mxu0
    %8518 = vmatpush.bf16.xpose.msra.mxu0 0
    %8519 = vmatpush.bf16.xpose.msra.mxu0 0
    %8520 = vmatpush.bf16.xpose.msra.mxu0 0
    %8521 = vmatpush.bf16.xpose.msra.mxu0 0
    %8522 = vmatpush.bf16.xpose.msra.mxu0 0
    %8523 = vmatpush.bf16.xpose.msra.mxu0 0
    %8524 = vmatpush.bf16.xpose.msra.mxu0 0
    %8525 = vmatpush.bf16.xpose.msra.mxu0 %v8502
    %8526 = vmatmul.bf16.gmra.mxu0 %v8495
    %v8527 = vpop.f32.mrf.mxu0
    %v8528 = vadd.f32 %v8515, %v8527
    %v8529 = vpop.f32.mrf.mxu0
    %8530 = vdwg.mxu0
    %v8531 = vmul.f32 %v8488, 0.0625
    %v8532 = vmul.f32 %v8528, 0.0625
    %vm8533 = vcmask 64512
    %v8534 = vsel %vm8533, %v8531, -inf
    %8535 = vmax.xlane.f32.xlu0 %v8534
    %v8536 = vpop.xlane.xlu0 %8535
    %v8537 = vsel %vm8533, %v8532, -inf
    %8538 = vmax.xlane.f32.xlu0 %v8537
    %v8539 = vpop.xlane.xlu0 %8538
    %v8540 = vsub.f32 %v8531, %v8536
    %v8541 = vsub.f32 %v8532, %v8539
    %v8542 = vmul.f32 %v8540, 1.442695
    %v8543 = vpow.pop %v8542
    %v8544 = vmul.f32 %v8541, 1.442695
    %v8545 = vpow.pop %v8544
    %v8546 = vsel %vm8533, %v8543, 0.0
    %8547 = vadd.xlane.f32.xlu0 %v8546
    %v8548 = vpop.xlane.xlu0 %8547
    %v8549 = vsel %vm8533, %v8545, 0.0
    %8550 = vadd.xlane.f32.xlu0 %v8549
    %v8551 = vpop.xlane.xlu0 %8550
    %v8552 = vrcp.pop %v8548
    %v8553 = vrcp.pop %v8551
    %v8554 = vmul.f32 %v8543, %v8552
    %v8555 = vmul.f32 %v8545, %v8553
    %v8556 = vsel %vm8533, %v8554, 0.0
    %v8557 = vrot.slane %v8556, 4
    %v8558 = vadd.f32 %v8556, %v8557
    %v8559 = vrot.slane %v8558, 2
    %v8560 = vadd.f32 %v8558, %v8559
    %v8561 = vrot.slane %v8560, 1
    %v8562 = vadd.f32 %v8560, %v8561
    %v8563 = vsel %vm8533, %v8555, 0.0
    %v8564 = vrot.slane %v8563, 4
    %v8565 = vadd.f32 %v8563, %v8564
    %v8566 = vrot.slane %v8565, 2
    %v8567 = vadd.f32 %v8565, %v8566
    %v8568 = vrot.slane %v8567, 1
    %v8569 = vadd.f32 %v8567, %v8568
    %v8570 = vrcp.pop 8.0
    %v8571 = vmul.f32 8.0, %v8570
    %v8572 = vsub.f32 1.0, %v8571
    %v8573 = vmul.f32 %v8570, %v8572
    %v8574 = vadd.f32 %v8570, %v8573
    %vm8575 = vweird.f32 %v8570
    %v8576 = vsel %vm8575, %v8570, %v8574
    %v8577 = vmul.f32 %v8562, %v8576
    %v8578 = vmul.f32 %v8569, %v8576
    %v8579 = vpack.c.bf16 %v8577, %v8577
    %v8580 = vpack.c.bf16 %v8578, %v8578
    %v8581 = vpack.c.bf16 %v8443, %v8359
    %v8582 = vpack.c.bf16 %v8445, %v8361
    %v8584 = vunpack.c.l.b16 %v8581
    %v8585 = vunpack.c.h.b16 %v8581
    %v8586 = vpack.c.b16 %v8584, %v8584
    %v8587 = vpack.c.b16 %v8585, %v8585
    %v8589 = vsel %vm8533, %v8579, 0
    %vm8591 = vcmask 1043456
    %v8593 = vsel %vm8591, %v8586, 0
    %v8596 = vsel %vm8591, %v8587, 0
    %8598 = vmatpush.bf16.msra.mxu0 0
    %8599 = vmatpush.bf16.msra.mxu0 0
    %8600 = vmatpush.bf16.msra.mxu0 0
    %8601 = vmatpush.bf16.msra.mxu0 0
    %8602 = vmatpush.bf16.msra.mxu0 0
    %8603 = vmatpush.bf16.msra.mxu0 0
    %8604 = vmatpush.bf16.msra.mxu0 0
    %8605 = vmatpush.bf16.msra.mxu0 %v8593
    %8606 = vmatmul.bf16.gmra.mxu0 %v8589
    %v8607 = vpop.f32.mrf.mxu0
    %v8608 = vadd.f32 0.0, %v8607
    %v8609 = vpop.f32.mrf.mxu0
    %8610 = vdwg.mxu0
    %8611 = vmatpush.bf16.msra.mxu0 0
    %8612 = vmatpush.bf16.msra.mxu0 0
    %8613 = vmatpush.bf16.msra.mxu0 0
    %8614 = vmatpush.bf16.msra.mxu0 0
    %8615 = vmatpush.bf16.msra.mxu0 0
    %8616 = vmatpush.bf16.msra.mxu0 0
    %8617 = vmatpush.bf16.msra.mxu0 0
    %8618 = vmatpush.bf16.msra.mxu0 %v8596
    %8619 = vmatmul.bf16.gmra.mxu0 %v8589
    %v8620 = vpop.f32.mrf.mxu0
    %v8621 = vadd.f32 0.0, %v8620
    %v8622 = vpop.f32.mrf.mxu0
    %8623 = vdwg.mxu0
    %v8625 = vunpack.c.l.b16 %v8582
    %v8626 = vunpack.c.h.b16 %v8582
    %v8627 = vpack.c.b16 %v8625, %v8625
    %v8628 = vpack.c.b16 %v8626, %v8626
    %v8630 = vsel %vm8533, %v8580, 0
    %v8633 = vsel %vm8591, %v8627, 0
    %v8636 = vsel %vm8591, %v8628, 0
    %8638 = vmatpush.bf16.msra.mxu0 0
    %8639 = vmatpush.bf16.msra.mxu0 0
    %8640 = vmatpush.bf16.msra.mxu0 0
    %8641 = vmatpush.bf16.msra.mxu0 0
    %8642 = vmatpush.bf16.msra.mxu0 0
    %8643 = vmatpush.bf16.msra.mxu0 0
    %8644 = vmatpush.bf16.msra.mxu0 0
    %8645 = vmatpush.bf16.msra.mxu0 %v8633
    %8646 = vmatmul.bf16.gmra.mxu0 %v8630
    %v8647 = vpop.f32.mrf.mxu0
    %v8648 = vadd.f32 0.0, %v8647
    %v8649 = vpop.f32.mrf.mxu0
    %8650 = vdwg.mxu0
    %8651 = vmatpush.bf16.msra.mxu0 0
    %8652 = vmatpush.bf16.msra.mxu0 0
    %8653 = vmatpush.bf16.msra.mxu0 0
    %8654 = vmatpush.bf16.msra.mxu0 0
    %8655 = vmatpush.bf16.msra.mxu0 0
    %8656 = vmatpush.bf16.msra.mxu0 0
    %8657 = vmatpush.bf16.msra.mxu0 0
    %8658 = vmatpush.bf16.msra.mxu0 %v8636
    %8659 = vmatmul.bf16.gmra.mxu0 %v8630
    %v8660 = vpop.f32.mrf.mxu0
    %v8661 = vadd.f32 0.0, %v8660
    %v8662 = vpop.f32.mrf.mxu0
    %8663 = vdwg.mxu0
    %v8664 = vpack.c.bf16 %v8107, %v8023
    %v8665 = vpack.c.bf16 %v8109, %v8025
    %v8666 = vpack.c.bf16 %v5719, %v5495
    %v8667 = vpack.c.bf16 %v5721, %v5497
    %v8669 = vunpack.c.l.b16 %v8664
    %v8670 = vunpack.c.h.b16 %v8664
    %v8671 = vpack.c.b16 %v8669, %v8669
    %v8672 = vpack.c.b16 %v8670, %v8670
    %v8676 = vunpack.c.l.b16 %v8666
    %v8677 = vunpack.c.h.b16 %v8666
    %v8678 = vpack.c.b16 %v8676, %v8676
    %v8679 = vpack.c.b16 %v8677, %v8677
    %8682 = vmatpush.bf16.xpose.msra.mxu0 0
    %8683 = vmatpush.bf16.xpose.msra.mxu0 0
    %8684 = vmatpush.bf16.xpose.msra.mxu0 0
    %8685 = vmatpush.bf16.xpose.msra.mxu0 0
    %8686 = vmatpush.bf16.xpose.msra.mxu0 0
    %8687 = vmatpush.bf16.xpose.msra.mxu0 0
    %8688 = vmatpush.bf16.xpose.msra.mxu0 0
    %8689 = vmatpush.bf16.xpose.msra.mxu0 %v8678
    %8690 = vmatmul.bf16.gmra.mxu0 %v8671
    %v8691 = vpop.f32.mrf.mxu0
    %v8692 = vadd.f32 0.0, %v8691
    %v8693 = vpop.f32.mrf.mxu0
    %8694 = vdwg.mxu0
    %8695 = vmatpush.bf16.xpose.msra.mxu0 0
    %8696 = vmatpush.bf16.xpose.msra.mxu0 0
    %8697 = vmatpush.bf16.xpose.msra.mxu0 0
    %8698 = vmatpush.bf16.xpose.msra.mxu0 0
    %8699 = vmatpush.bf16.xpose.msra.mxu0 0
    %8700 = vmatpush.bf16.xpose.msra.mxu0 0
    %8701 = vmatpush.bf16.xpose.msra.mxu0 0
    %8702 = vmatpush.bf16.xpose.msra.mxu0 %v8679
    %8703 = vmatmul.bf16.gmra.mxu0 %v8672
    %v8704 = vpop.f32.mrf.mxu0
    %v8705 = vadd.f32 %v8692, %v8704
    %v8706 = vpop.f32.mrf.mxu0
    %8707 = vdwg.mxu0
    %v8709 = vunpack.c.l.b16 %v8665
    %v8710 = vunpack.c.h.b16 %v8665
    %v8711 = vpack.c.b16 %v8709, %v8709
    %v8712 = vpack.c.b16 %v8710, %v8710
    %v8716 = vunpack.c.l.b16 %v8667
    %v8717 = vunpack.c.h.b16 %v8667
    %v8718 = vpack.c.b16 %v8716, %v8716
    %v8719 = vpack.c.b16 %v8717, %v8717
    %8722 = vmatpush.bf16.xpose.msra.mxu0 0
    %8723 = vmatpush.bf16.xpose.msra.mxu0 0
    %8724 = vmatpush.bf16.xpose.msra.mxu0 0
    %8725 = vmatpush.bf16.xpose.msra.mxu0 0
    %8726 = vmatpush.bf16.xpose.msra.mxu0 0
    %8727 = vmatpush.bf16.xpose.msra.mxu0 0
    %8728 = vmatpush.bf16.xpose.msra.mxu0 0
    %8729 = vmatpush.bf16.xpose.msra.mxu0 %v8718
    %8730 = vmatmul.bf16.gmra.mxu0 %v8711
    %v8731 = vpop.f32.mrf.mxu0
    %v8732 = vadd.f32 0.0, %v8731
    %v8733 = vpop.f32.mrf.mxu0
    %8734 = vdwg.mxu0
    %8735 = vmatpush.bf16.xpose.msra.mxu0 0
    %8736 = vmatpush.bf16.xpose.msra.mxu0 0
    %8737 = vmatpush.bf16.xpose.msra.mxu0 0
    %8738 = vmatpush.bf16.xpose.msra.mxu0 0
    %8739 = vmatpush.bf16.xpose.msra.mxu0 0
    %8740 = vmatpush.bf16.xpose.msra.mxu0 0
    %8741 = vmatpush.bf16.xpose.msra.mxu0 0
    %8742 = vmatpush.bf16.xpose.msra.mxu0 %v8719
    %8743 = vmatmul.bf16.gmra.mxu0 %v8712
    %v8744 = vpop.f32.mrf.mxu0
    %v8745 = vadd.f32 %v8732, %v8744
    %v8746 = vpop.f32.mrf.mxu0
    %8747 = vdwg.mxu0
    %v8748 = vmul.f32 %v8705, 0.0625
    %v8749 = vmul.f32 %v8745, 0.0625
    %v8750 = vsel %vm8533, %v8748, -inf
    %8751 = vmax.xlane.f32.xlu0 %v8750
    %v8752 = vpop.xlane.xlu0 %8751
    %v8753 = vsel %vm8533, %v8749, -inf
    %8754 = vmax.xlane.f32.xlu0 %v8753
    %v8755 = vpop.xlane.xlu0 %8754
    %v8756 = vsub.f32 %v8748, %v8752
    %v8757 = vsub.f32 %v8749, %v8755
    %v8758 = vmul.f32 %v8756, 1.442695
    %v8759 = vpow.pop %v8758
    %v8760 = vmul.f32 %v8757, 1.442695
    %v8761 = vpow.pop %v8760
    %v8762 = vsel %vm8533, %v8759, 0.0
    %8763 = vadd.xlane.f32.xlu0 %v8762
    %v8764 = vpop.xlane.xlu0 %8763
    %v8765 = vsel %vm8533, %v8761, 0.0
    %8766 = vadd.xlane.f32.xlu0 %v8765
    %v8767 = vpop.xlane.xlu0 %8766
    %v8768 = vrcp.pop %v8764
    %v8769 = vrcp.pop %v8767
    %v8770 = vmul.f32 %v8759, %v8768
    %v8771 = vmul.f32 %v8761, %v8769
    %v8772 = vsel %vm8533, %v8770, 0.0
    %v8773 = vrot.slane %v8772, 4
    %v8774 = vadd.f32 %v8772, %v8773
    %v8775 = vrot.slane %v8774, 2
    %v8776 = vadd.f32 %v8774, %v8775
    %v8777 = vrot.slane %v8776, 1
    %v8778 = vadd.f32 %v8776, %v8777
    %v8779 = vsel %vm8533, %v8771, 0.0
    %v8780 = vrot.slane %v8779, 4
    %v8781 = vadd.f32 %v8779, %v8780
    %v8782 = vrot.slane %v8781, 2
    %v8783 = vadd.f32 %v8781, %v8782
    %v8784 = vrot.slane %v8783, 1
    %v8785 = vadd.f32 %v8783, %v8784
    %v8786 = vmul.f32 %v8778, %v8576
    %v8787 = vmul.f32 %v8785, %v8576
    %v8788 = vpack.c.bf16 %v8786, %v8786
    %v8789 = vpack.c.bf16 %v8787, %v8787
    %v8790 = vpack.c.bf16 %v6167, %v5943
    %v8791 = vpack.c.bf16 %v6169, %v5945
    %v8793 = vunpack.c.l.b16 %v8790
    %v8794 = vunpack.c.h.b16 %v8790
    %v8795 = vpack.c.b16 %v8793, %v8793
    %v8796 = vpack.c.b16 %v8794, %v8794
    %v8798 = vsel %vm8533, %v8788, 0
    %v8801 = vsel %vm8591, %v8795, 0
    %v8804 = vsel %vm8591, %v8796, 0
    %8806 = vmatpush.bf16.msra.mxu0 0
    %8807 = vmatpush.bf16.msra.mxu0 0
    %8808 = vmatpush.bf16.msra.mxu0 0
    %8809 = vmatpush.bf16.msra.mxu0 0
    %8810 = vmatpush.bf16.msra.mxu0 0
    %8811 = vmatpush.bf16.msra.mxu0 0
    %8812 = vmatpush.bf16.msra.mxu0 0
    %8813 = vmatpush.bf16.msra.mxu0 %v8801
    %8814 = vmatmul.bf16.gmra.mxu0 %v8798
    %v8815 = vpop.f32.mrf.mxu0
    %v8816 = vadd.f32 0.0, %v8815
    %v8817 = vpop.f32.mrf.mxu0
    %8818 = vdwg.mxu0
    %8819 = vmatpush.bf16.msra.mxu0 0
    %8820 = vmatpush.bf16.msra.mxu0 0
    %8821 = vmatpush.bf16.msra.mxu0 0
    %8822 = vmatpush.bf16.msra.mxu0 0
    %8823 = vmatpush.bf16.msra.mxu0 0
    %8824 = vmatpush.bf16.msra.mxu0 0
    %8825 = vmatpush.bf16.msra.mxu0 0
    %8826 = vmatpush.bf16.msra.mxu0 %v8804
    %8827 = vmatmul.bf16.gmra.mxu0 %v8798
    %v8828 = vpop.f32.mrf.mxu0
    %v8829 = vadd.f32 0.0, %v8828
    %v8830 = vpop.f32.mrf.mxu0
    %8831 = vdwg.mxu0
    %v8833 = vunpack.c.l.b16 %v8791
    %v8834 = vunpack.c.h.b16 %v8791
    %v8835 = vpack.c.b16 %v8833, %v8833
    %v8836 = vpack.c.b16 %v8834, %v8834
    %v8838 = vsel %vm8533, %v8789, 0
    %v8841 = vsel %vm8591, %v8835, 0
    %v8844 = vsel %vm8591, %v8836, 0
    %8846 = vmatpush.bf16.msra.mxu0 0
    %8847 = vmatpush.bf16.msra.mxu0 0
    %8848 = vmatpush.bf16.msra.mxu0 0
    %8849 = vmatpush.bf16.msra.mxu0 0
    %8850 = vmatpush.bf16.msra.mxu0 0
    %8851 = vmatpush.bf16.msra.mxu0 0
    %8852 = vmatpush.bf16.msra.mxu0 0
    %8853 = vmatpush.bf16.msra.mxu0 %v8841
    %8854 = vmatmul.bf16.gmra.mxu0 %v8838
    %v8855 = vpop.f32.mrf.mxu0
    %v8856 = vadd.f32 0.0, %v8855
    %v8857 = vpop.f32.mrf.mxu0
    %8858 = vdwg.mxu0
    %8859 = vmatpush.bf16.msra.mxu0 0
    %8860 = vmatpush.bf16.msra.mxu0 0
    %8861 = vmatpush.bf16.msra.mxu0 0
    %8862 = vmatpush.bf16.msra.mxu0 0
    %8863 = vmatpush.bf16.msra.mxu0 0
    %8864 = vmatpush.bf16.msra.mxu0 0
    %8865 = vmatpush.bf16.msra.mxu0 0
    %8866 = vmatpush.bf16.msra.mxu0 %v8844
    %8867 = vmatmul.bf16.gmra.mxu0 %v8838
    %v8868 = vpop.f32.mrf.mxu0
    %v8869 = vadd.f32 0.0, %v8868
    %v8870 = vpop.f32.mrf.mxu0
    %8871 = vdwg.mxu0
    %v8876 = vrot.slane %v8648, 7
    %vm8877 = vcmask 1041409
    %v8878 = vsel %vm8877, %v8876, %v8608
    %v8879 = vrot.slane %v8661, 7
    %v8880 = vsel %vm8877, %v8879, %v8621
    %v8887 = vrot.slane %v8856, 7
    %v8888 = vsel %vm8877, %v8887, %v8816
    %v8889 = vrot.slane %v8869, 7
    %v8890 = vsel %vm8877, %v8889, %v8829
    %v8893 = vld [vmem:[%s6] sm:$0xff]
    %v8894 = vld [vmem:[%s6 + $0x8] sm:$0xff]
    %v8895 = vld [vmem:[%s6 + $0x10] sm:$0xff]
    %v8896 = vld [vmem:[%s6 + $0x18] sm:$0xff]
    %v8897 = vld [vmem:[%s6 + $0x20] sm:$0xff]
    %v8898 = vld [vmem:[%s6 + $0x28] sm:$0xff]
    %v8899 = vld [vmem:[%s6 + $0x30] sm:$0xff]
    %v8900 = vld [vmem:[%s6 + $0x38] sm:$0xff]
    %v8901 = vld [vmem:[%s6 + $0x40] sm:$0xff]
    %v8902 = vld [vmem:[%s6 + $0x48] sm:$0xff]
    %v8903 = vld [vmem:[%s6 + $0x50] sm:$0xff]
    %v8904 = vld [vmem:[%s6 + $0x58] sm:$0xff]
    %v8905 = vld [vmem:[%s6 + $0x60] sm:$0xff]
    %v8906 = vld [vmem:[%s6 + $0x68] sm:$0xff]
    %v8907 = vld [vmem:[%s6 + $0x70] sm:$0xff]
    %v8908 = vld [vmem:[%s6 + $0x78] sm:$0xff]
    %v8909 = vld [vmem:[%s6 + $0x80] sm:$0xff]
    %v8910 = vld [vmem:[%s6 + $0x88] sm:$0xff]
    %v8911 = vld [vmem:[%s6 + $0x90] sm:$0xff]
    %v8912 = vld [vmem:[%s6 + $0x98] sm:$0xff]
    %v8913 = vld [vmem:[%s6 + $0xa0] sm:$0xff]
    %v8914 = vld [vmem:[%s6 + $0xa8] sm:$0xff]
    %v8915 = vld [vmem:[%s6 + $0xb0] sm:$0xff]
    %v8916 = vld [vmem:[%s6 + $0xb8] sm:$0xff]
    %v8917 = vld [vmem:[%s6 + $0xc0] sm:$0xff]
    %v8918 = vld [vmem:[%s6 + $0xc8] sm:$0xff]
    %v8919 = vld [vmem:[%s6 + $0xd0] sm:$0xff]
    %v8920 = vld [vmem:[%s6 + $0xd8] sm:$0xff]
    %v8921 = vld [vmem:[%s6 + $0xe0] sm:$0xff]
    %v8922 = vld [vmem:[%s6 + $0xe8] sm:$0xff]
    %v8923 = vld [vmem:[%s6 + $0xf0] sm:$0xff]
    %v8924 = vld [vmem:[%s6 + $0xf8] sm:$0xff]
    %v8925 = vld [vmem:[%s6 + $0x100] sm:$0xff]
    %v8926 = vld [vmem:[%s6 + $0x108] sm:$0xff]
    %v8927 = vld [vmem:[%s6 + $0x110] sm:$0xff]
    %v8928 = vld [vmem:[%s6 + $0x118] sm:$0xff]
    %v8929 = vld [vmem:[%s6 + $0x120] sm:$0xff]
    %v8930 = vld [vmem:[%s6 + $0x128] sm:$0xff]
    %v8931 = vld [vmem:[%s6 + $0x130] sm:$0xff]
    %v8932 = vld [vmem:[%s6 + $0x138] sm:$0xff]
    %v8933 = vld [vmem:[%s6 + $0x140] sm:$0xff]
    %v8934 = vld [vmem:[%s6 + $0x148] sm:$0xff]
    %v8935 = vld [vmem:[%s6 + $0x150] sm:$0xff]
    %v8936 = vld [vmem:[%s6 + $0x158] sm:$0xff]
    %v8937 = vld [vmem:[%s6 + $0x160] sm:$0xff]
    %v8938 = vld [vmem:[%s6 + $0x168] sm:$0xff]
    %v8939 = vld [vmem:[%s6 + $0x170] sm:$0xff]
    %v8940 = vld [vmem:[%s6 + $0x178] sm:$0xff]
    %v8941 = vld [vmem:[%s6 + $0x180] sm:$0xff]
    %v8942 = vld [vmem:[%s6 + $0x188] sm:$0xff]
    %v8943 = vld [vmem:[%s6 + $0x190] sm:$0xff]
    %v8944 = vld [vmem:[%s6 + $0x198] sm:$0xff]
    %v8945 = vld [vmem:[%s6 + $0x1a0] sm:$0xff]
    %v8946 = vld [vmem:[%s6 + $0x1a8] sm:$0xff]
    %v8947 = vld [vmem:[%s6 + $0x1b0] sm:$0xff]
    %v8948 = vld [vmem:[%s6 + $0x1b8] sm:$0xff]
    %v8949 = vld [vmem:[%s6 + $0x1c0] sm:$0xff]
    %v8950 = vld [vmem:[%s6 + $0x1c8] sm:$0xff]
    %v8951 = vld [vmem:[%s6 + $0x1d0] sm:$0xff]
    %v8952 = vld [vmem:[%s6 + $0x1d8] sm:$0xff]
    %v8953 = vld [vmem:[%s6 + $0x1e0] sm:$0xff]
    %v8954 = vld [vmem:[%s6 + $0x1e8] sm:$0xff]
    %v8955 = vld [vmem:[%s6 + $0x1f0] sm:$0xff]
    %v8956 = vld [vmem:[%s6 + $0x1f8] sm:$0xff]
    %v8957 = vld [vmem:[#allocation10] sm:$0x1]
    %v8959 = vperm.slane %v8957, 0
    %8961 = vmatpush.msra.mxu0 %v8908
    %8962 = vmatpush.msra.mxu0 %v8907
    %8963 = vmatpush.msra.mxu0 %v8906
    %8964 = vmatpush.msra.mxu0 %v8905
    %8965 = vmatpush.msra.mxu0 %v8904
    %8966 = vmatpush.msra.mxu0 %v8903
    %8967 = vmatpush.msra.mxu0 %v8902
    %8968 = vmatpush.msra.mxu0 %v8901
    %8969 = vmatpush.msra.mxu0 %v8900
    %8970 = vmatpush.msra.mxu0 %v8899
    %8971 = vmatpush.msra.mxu0 %v8898
    %8972 = vmatpush.msra.mxu0 %v8897
    %8973 = vmatpush.msra.mxu0 %v8896
    %8974 = vmatpush.msra.mxu0 %v8895
    %8975 = vmatpush.msra.mxu0 %v8894
    %8976 = vmatpush.msra.mxu0 %v8893
    %8977 = vmatmul.f32.gmra.mxu0 %v8878
    %v8978 = vpop.f32.mrf.mxu0
    %v8979 = vadd.f32 %v8959, %v8978
    %8980 = vdwg.mxu0
    %8981 = vmatpush.msra.mxu0 %v8924
    %8982 = vmatpush.msra.mxu0 %v8923
    %8983 = vmatpush.msra.mxu0 %v8922
    %8984 = vmatpush.msra.mxu0 %v8921
    %8985 = vmatpush.msra.mxu0 %v8920
    %8986 = vmatpush.msra.mxu0 %v8919
    %8987 = vmatpush.msra.mxu0 %v8918
    %8988 = vmatpush.msra.mxu0 %v8917
    %8989 = vmatpush.msra.mxu0 %v8916
    %8990 = vmatpush.msra.mxu0 %v8915
    %8991 = vmatpush.msra.mxu0 %v8914
    %8992 = vmatpush.msra.mxu0 %v8913
    %8993 = vmatpush.msra.mxu0 %v8912
    %8994 = vmatpush.msra.mxu0 %v8911
    %8995 = vmatpush.msra.mxu0 %v8910
    %8996 = vmatpush.msra.mxu0 %v8909
    %8997 = vmatmul.f32.gmra.mxu0 %v8880
    %v8998 = vpop.f32.mrf.mxu0
    %v8999 = vadd.f32 %v8979, %v8998
    %9000 = vdwg.mxu0
    %9001 = vmatpush.msra.mxu0 %v8940
    %9002 = vmatpush.msra.mxu0 %v8939
    %9003 = vmatpush.msra.mxu0 %v8938
    %9004 = vmatpush.msra.mxu0 %v8937
    %9005 = vmatpush.msra.mxu0 %v8936
    %9006 = vmatpush.msra.mxu0 %v8935
    %9007 = vmatpush.msra.mxu0 %v8934
    %9008 = vmatpush.msra.mxu0 %v8933
    %9009 = vmatpush.msra.mxu0 %v8932
    %9010 = vmatpush.msra.mxu0 %v8931
    %9011 = vmatpush.msra.mxu0 %v8930
    %9012 = vmatpush.msra.mxu0 %v8929
    %9013 = vmatpush.msra.mxu0 %v8928
    %9014 = vmatpush.msra.mxu0 %v8927
    %9015 = vmatpush.msra.mxu0 %v8926
    %9016 = vmatpush.msra.mxu0 %v8925
    %9017 = vmatmul.f32.gmra.mxu0 %v8888
    %v9018 = vpop.f32.mrf.mxu0
    %v9019 = vadd.f32 %v8999, %v9018
    %9020 = vdwg.mxu0
    %9021 = vmatpush.msra.mxu0 %v8956
    %9022 = vmatpush.msra.mxu0 %v8955
    %9023 = vmatpush.msra.mxu0 %v8954
    %9024 = vmatpush.msra.mxu0 %v8953
    %9025 = vmatpush.msra.mxu0 %v8952
    %9026 = vmatpush.msra.mxu0 %v8951
    %9027 = vmatpush.msra.mxu0 %v8950
    %9028 = vmatpush.msra.mxu0 %v8949
    %9029 = vmatpush.msra.mxu0 %v8948
    %9030 = vmatpush.msra.mxu0 %v8947
    %9031 = vmatpush.msra.mxu0 %v8946
    %9032 = vmatpush.msra.mxu0 %v8945
    %9033 = vmatpush.msra.mxu0 %v8944
    %9034 = vmatpush.msra.mxu0 %v8943
    %9035 = vmatpush.msra.mxu0 %v8942
    %9036 = vmatpush.msra.mxu0 %v8941
    %9037 = vmatmul.f32.gmra.mxu0 %v8890
    %v9038 = vpop.f32.mrf.mxu0
    %v9039 = vadd.f32 %v9019, %v9038
    %9040 = vdwg.mxu0
    %vm9041 = vcmask 9216
    %9042 = vst.msk [vmem:[#allocation11] sm:$0x3] %vm9041, %v9039
    // Predicated region
    $region54: #{new_classifier_forward.1} parent=1 // pred_check
      _
    $region55: #{new_classifier_forward.1} parent=1 // pred_check_branch
      %9044 = sbr.rel (0) target = $region57
    $region56: #{new_classifier_forward.1} parent=1 // pred_region
      %9046 = vsyncadd [#allocation4], 0
      %s9048 = sshll.u32 [#allocation11], 4
      %s9049 = int_to_ptr.vmem [resolvable:$true] %s9048
      %s9050 = sshll.u32 %s8, 4
      %s9051 = int_to_ptr.hbm [resolvable:$true] %s9050
      %9053 = dma.vmem_to_hbm [thread:$0]  %s9049, 32, %s9051, [#allocation4]
    $region57: #{new_classifier_forward.1} parent=1 // pred_fallthru
      _
    // Predicated region
    $region58: #{new_classifier_forward.1} parent=1 // pred_check
      _
    $region59: #{new_classifier_forward.1} parent=1 // pred_check_branch
      %9055 = sbr.rel (0) target = $region61
    $region60: #{new_classifier_forward.1} parent=1 // pred_region
      %9057 = dma.done [#allocation4], 32
    $region61: #{new_classifier_forward.1} parent=1 // pred_fallthru
      _
    %9058 = vsyncpa [#allocation3], 1
    %9059 = vsyncpa [#allocation6], 1
    %9060 = vsyncpa [#allocation9], 1
    %9061 = vsyncpa [#allocation4], 1

</llo_original>
